<compile_context>
chip_gen: v7x
topology: tpu7x:2x2x1
jax: 0.10.0
libtpu: 0.0.40
codegen_flags: <defaults>
</compile_context>

<pallas_src>
import numpy as np
import jax
import jax.numpy as jnp
from jax.experimental import pallas as pl
from jax.experimental.pallas import tpu as pltpu


# ---------------------------------------------------------------------------
# Host-side structural constants (data/weight independent).
# ---------------------------------------------------------------------------
def _linear_resize_matrix(src, dst):
    """1-D linear interpolation matrix (align_corners=True), shape (dst, src)."""
    M = np.zeros((dst, src), dtype=np.float32)
    if dst == 1:
        M[0, 0] = 1.0
        return M
    scale = (src - 1) / (dst - 1)
    for i in range(dst):
        s = i * scale
        i0 = min(int(np.floor(s)), src - 1)
        i1 = min(i0 + 1, src - 1)
        f = s - i0
        M[i, i0] += 1.0 - f
        M[i, i1] += f
    return M


def _shift_matrices(S):
    """SHIFT[t] (S*S, S*S): x_flat @ SHIFT[t] == zero-padded 3x3 tap (dy,dx), t=dy*3+dx."""
    def shift1d(o):
        R = np.zeros((S, S), dtype=np.float32)
        for i in range(S):
            k = i + o
            if 0 <= k < S:
                R[i, k] = 1.0
        return R

    mats = []
    for dy in range(3):
        for dx in range(3):
            M = np.kron(shift1d(dy - 1), shift1d(dx - 1))   # (S*S, S*S)
            mats.append(M.T)
    return np.stack(mats, axis=0).astype(np.float32)         # (9, S*S, S*S)


def _build_constants(S):
    T = 2 * S
    U = _linear_resize_matrix(S, T)                           # (T, S)  upsample
    D = _linear_resize_matrix(T, S)                           # (S, T)  downsample
    UPK = np.kron(U, U).T.astype(np.float32)                  # (S*S, T*T)
    DNK = np.kron(D, D).T.astype(np.float32)                  # (T*T, S*S)
    SHIFT = _shift_matrices(S)                                # (9, S*S, S*S)
    # Lane-concatenated shift operator: columns [t*S*S:(t+1)*S*S] == SHIFT[t].
    SHIFT_CAT = SHIFT.transpose(1, 0, 2).reshape(S * S, 9 * S * S)
    return SHIFT_CAT, UPK, DNK


# ---------------------------------------------------------------------------
# Fused kernel: conv -> up/ELU/down, three times, + residual. One batch tile per step.
# ---------------------------------------------------------------------------
def _fused_kernel(x_ref, shiftc_ref, upk_ref, dnk_ref,
                  w1_ref, b1_ref, w2_ref, b2_ref, w3_ref, b3_ref,
                  out_ref):
    npix = x_ref.shape[-1]

    def conv3x3(h, w_ref, b_ref):
        # h: (R_in, npix); w_ref: (9, R_out, R_in) block-diag over batch tile; b: (R_out, 1)
        rout = w_ref.shape[1]
        # All 9 zero-padded taps in ONE MXU matmul (lane-concatenated shift operator).
        shifted = jnp.dot(h, shiftc_ref[...],
                          preferred_element_type=jnp.float32)        # (R_in, 9*npix)
        acc = jnp.broadcast_to(b_ref[...], (rout, npix))              # bias init
        for t in range(9):                                            # lane-aligned free slices
            acc = acc + jnp.dot(w_ref[t], shifted[:, t * npix:(t + 1) * npix],
                                preferred_element_type=jnp.float32)   # (R_out, npix)
        return acc

    def up_elu_down(h):
        # exact bilinear (align_corners=True) via Kronecker matrices, whole tile at once
        up = jnp.dot(h, upk_ref[...], preferred_element_type=jnp.float32)   # (R, 4*npix)
        # ELU (alpha=1): clamp before exp so the unselected branch never produces inf
        act = jnp.where(up > 0, up, jnp.exp(jnp.minimum(up, 0.0)) - 1.0)
        return jnp.dot(act, dnk_ref[...], preferred_element_type=jnp.float32)  # (R, npix)

    x = x_ref[...]                                             # (NB*in_c, npix)
    h = up_elu_down(conv3x3(x, w1_ref, b1_ref))
    h = up_elu_down(conv3x3(h, w2_ref, b2_ref))
    h = up_elu_down(conv3x3(h, w3_ref, b3_ref))
    out_ref[...] = h + x                                       # residual, lane-dense store


# ---------------------------------------------------------------------------
# Wrapper
# ---------------------------------------------------------------------------
def _pick_batch_tile(N, in_c, hid_c):
    """Largest divisor of N whose row count keeps the MXU reasonably filled (<=128 rows)."""
    max_c = max(in_c, hid_c)
    target = max(1, 128 // max_c)
    nb = 1
    for d in range(1, N + 1):
        if N % d == 0 and d <= target:
            nb = d
    if nb != N and (nb * in_c) % 8 != 0:
        nb = N            # keep partial blocks sublane-aligned (f32 -> multiples of 8 rows)
    return nb


def alias_free_res(x, params, *, batch_tile=None):
    """AliasFreeRes.forward. x: (N, in_c, S, S) float32, square spatial."""
    w1, b1, w2, b2, w3, b3 = params
    N, in_c, S, _ = x.shape
    hid_c = w1.shape[0]
    npix, tpix = S * S, (2 * S) * (2 * S)

    NB = batch_tile if batch_tile is not None else _pick_batch_tile(N, in_c, hid_c)
    assert N % NB == 0

    SHIFT_CAT, UPK, DNK = _build_constants(S)
    shiftc = jnp.asarray(SHIFT_CAT)                            # (npix, 9*npix)
    upk = jnp.asarray(UPK)                                     # (npix, tpix)
    dnk = jnp.asarray(DNK)                                     # (tpix, npix)

    eye = jnp.eye(NB, dtype=jnp.float32)

    def prep_w(w):   # (Cout, Cin, 3, 3) -> (9, NB*Cout, NB*Cin), block-diag over batch tile
        co, ci = w.shape[0], w.shape[1]
        taps = jnp.transpose(w, (2, 3, 0, 1)).reshape(9, co, ci).astype(jnp.float32)
        return jnp.einsum("nm,toc->tnomc", eye, taps).reshape(9, NB * co, NB * ci)

    def prep_b(b):   # (C,) -> (NB*C, 1), tiled across the batch tile
        return jnp.tile(b.reshape(-1, 1).astype(jnp.float32), (NB, 1))

    x_flat = x.astype(jnp.float32).reshape(N * in_c, npix)     # layout plumbing only
    rows = NB * in_c

    c2 = lambda shape: pl.BlockSpec(shape, lambda i: (0, 0))
    c3 = lambda shape: pl.BlockSpec(shape, lambda i: (0, 0, 0))

    out_flat = pl.pallas_call(
        _fused_kernel,
        out_shape=jax.ShapeDtypeStruct((N * in_c, npix), jnp.float32),
        grid=(N // NB,),
        in_specs=[
            pl.BlockSpec((rows, npix), lambda i: (i, 0)),       # x (batch-tile rows)
            c2((npix, 9 * npix)),                               # lane-concatenated shifts
            c2((npix, tpix)),                                   # (U kron U)^T
            c2((tpix, npix)),                                   # (D kron D)^T
            c3((9, NB * hid_c, NB * in_c)),  c2((NB * hid_c, 1)),   # conv1 w, b
            c3((9, NB * hid_c, NB * hid_c)), c2((NB * hid_c, 1)),   # conv2 w, b
            c3((9, NB * in_c, NB * hid_c)),  c2((NB * in_c, 1)),    # conv3 w, b
        ],
        out_specs=pl.BlockSpec((rows, npix), lambda i: (i, 0)),
        compiler_params=pltpu.CompilerParams(
            dimension_semantics=("parallel",),
            vmem_limit_bytes=32 * 1024 * 1024,
        ),
    )(x_flat, shiftc, upk, dnk,
      prep_w(w1), prep_b(b1), prep_w(w2), prep_b(b2), prep_w(w3), prep_b(b3))

    return out_flat.reshape(N, in_c, S, S)


def init_params(key, in_c, hid_c):
    ks = jax.random.split(key, 6)
    scale = 0.1
    w1 = scale * jax.random.normal(ks[0], (hid_c, in_c, 3, 3), jnp.float32)
    b1 = scale * jax.random.normal(ks[1], (hid_c,), jnp.float32)
    w2 = scale * jax.random.normal(ks[2], (hid_c, hid_c, 3, 3), jnp.float32)
    b2 = scale * jax.random.normal(ks[3], (hid_c,), jnp.float32)
    w3 = scale * jax.random.normal(ks[4], (in_c, hid_c, 3, 3), jnp.float32)
    b3 = scale * jax.random.normal(ks[5], (in_c,), jnp.float32)
    return (w1, b1, w2, b2, w3, b3)


# ---------------------------------------------------------------------------
# Pure-JAX reference (correctness spot-check only)
# ---------------------------------------------------------------------------
def _reference(x, params):
    w1, b1, w2, b2, w3, b3 = params
    S = x.shape[-1]
    T = 2 * S
    U = jnp.asarray(_linear_resize_matrix(S, T))
    D = jnp.asarray(_linear_resize_matrix(T, S))
    hi = jax.lax.Precision.HIGHEST

    def conv(h, w, b):
        y = jax.lax.conv_general_dilated(
            h, w, window_strides=(1, 1), padding=((1, 1), (1, 1)),
            dimension_numbers=("NCHW", "OIHW", "NCHW"), precision=hi)
        return y + b[None, :, None, None]

    def interp(h):
        up = jnp.einsum("ai,ncij,bj->ncab", U, h, U, precision=hi)
        act = jnp.where(up > 0, up, jnp.expm1(up))
        return jnp.einsum("ia,ncab,jb->ncij", D, act, D, precision=hi)

    h = interp(conv(x, w1, b1))
    h = interp(conv(h, w2, b2))
    h = interp(conv(h, w3, b3))
    return h + x


if __name__ == "__main__":
    key = jax.random.PRNGKey(0)
    kx, kp = jax.random.split(key)

    N, in_c, hid_c, S = 2, 4, 8, 16
    x = jax.random.normal(kx, (N, in_c, S, S), jnp.float32)
    params = init_params(kp, in_c, hid_c)

    out = jax.block_until_ready(jax.jit(alias_free_res)(x, params))
    assert out.shape == (N, in_c, S, S), out.shape
    assert bool(jnp.all(jnp.isfinite(out)))

    ref = jax.block_until_ready(_reference(x, params))
    err = float(jnp.max(jnp.abs(out - ref)))
    assert err < 5e-3, f"max abs error vs reference: {err}"

    print("KERNEL_OK")
</pallas_src>

<mosaic_0001>
module attributes {stable_mosaic.version = 11 : i64} {
  func.func @_fused_kernel(%arg0: i32, %arg1: memref<8x256xf32, #tpu.memory_space<vmem>>, %arg2: memref<256x2304xf32, #tpu.memory_space<vmem>>, %arg3: memref<256x1024xf32, #tpu.memory_space<vmem>>, %arg4: memref<1024x256xf32, #tpu.memory_space<vmem>>, %arg5: memref<9x16x8xf32, #tpu.memory_space<vmem>>, %arg6: memref<16x1xf32, #tpu.memory_space<vmem>>, %arg7: memref<9x16x16xf32, #tpu.memory_space<vmem>>, %arg8: memref<16x1xf32, #tpu.memory_space<vmem>>, %arg9: memref<9x8x16xf32, #tpu.memory_space<vmem>>, %arg10: memref<8x1xf32, #tpu.memory_space<vmem>>, %arg11: memref<8x256xf32, #tpu.memory_space<vmem>>) attributes {dimension_semantics = [#tpu.dimension_semantics<parallel>], iteration_bounds = array<i64: 1>, scalar_prefetch = 0 : i64, scratch_operands = 0 : i64, tpu.core_type = #tpu.core_type<tc>, window_params = [{transform_indices = @transform_0, window_bounds = array<i64: 8, 256>}, {pipeline_mode = #tpu.pipeline_mode<synchronous>, transform_indices = @transform_1, window_bounds = array<i64: 256, 2304>}, {pipeline_mode = #tpu.pipeline_mode<synchronous>, transform_indices = @transform_2, window_bounds = array<i64: 256, 1024>}, {pipeline_mode = #tpu.pipeline_mode<synchronous>, transform_indices = @transform_3, window_bounds = array<i64: 1024, 256>}, {pipeline_mode = #tpu.pipeline_mode<synchronous>, transform_indices = @transform_4, window_bounds = array<i64: 9, 16, 8>}, {pipeline_mode = #tpu.pipeline_mode<synchronous>, transform_indices = @transform_5, window_bounds = array<i64: 16, 1>}, {pipeline_mode = #tpu.pipeline_mode<synchronous>, transform_indices = @transform_6, window_bounds = array<i64: 9, 16, 16>}, {pipeline_mode = #tpu.pipeline_mode<synchronous>, transform_indices = @transform_7, window_bounds = array<i64: 16, 1>}, {pipeline_mode = #tpu.pipeline_mode<synchronous>, transform_indices = @transform_8, window_bounds = array<i64: 9, 8, 16>}, {pipeline_mode = #tpu.pipeline_mode<synchronous>, transform_indices = @transform_9, window_bounds = array<i64: 8, 1>}, {transform_indices = @transform_10, window_bounds = array<i64: 8, 256>}]} {
    %c0 = arith.constant 0 : index
    %c0_0 = arith.constant 0 : index
    %0 = vector.load %arg1[%c0, %c0_0] : memref<8x256xf32, #tpu.memory_space<vmem>>, vector<8x256xf32>
    %c0_1 = arith.constant 0 : index
    %c0_2 = arith.constant 0 : index
    %1 = vector.load %arg2[%c0_1, %c0_2] : memref<256x2304xf32, #tpu.memory_space<vmem>>, vector<256x2304xf32>
    %cst = arith.constant dense<0.000000e+00> : vector<8x2304xf32>
    %2 = tpu.matmul %0, %1, %cst {dimension_numbers = #tpu.dot_dimension_numbers<[1], [0], [0], [1], [0, 0, 1, 1], [], []>} : vector<8x256xf32>, vector<256x2304xf32>, vector<8x2304xf32> -> vector<8x2304xf32>
    %c0_3 = arith.constant 0 : index
    %c0_4 = arith.constant 0 : index
    %3 = vector.load %arg6[%c0_3, %c0_4] : memref<16x1xf32, #tpu.memory_space<vmem>>, vector<16x1xf32>
    %4 = vector.shape_cast %3 : vector<16x1xf32> to vector<16x1xf32>
    %5 = vector.broadcast %4 : vector<16x1xf32> to vector<16x256xf32>
    %c0_5 = arith.constant 0 : index
    %c0_6 = arith.constant 0 : index
    %c0_7 = arith.constant 0 : index
    %6 = vector.load %arg5[%c0_5, %c0_6, %c0_7] : memref<9x16x8xf32, #tpu.memory_space<vmem>>, vector<1x16x8xf32>
    %7 = vector.shape_cast %6 : vector<1x16x8xf32> to vector<16x8xf32>
    %8 = vector.extract_strided_slice %2 {offsets = [0, 0], sizes = [8, 256], strides = [1, 1]} : vector<8x2304xf32> to vector<8x256xf32>
    %cst_8 = arith.constant dense<0.000000e+00> : vector<16x256xf32>
    %9 = tpu.matmul %7, %8, %cst_8 {dimension_numbers = #tpu.dot_dimension_numbers<[1], [0], [0], [1], [0, 0, 1, 1], [], []>} : vector<16x8xf32>, vector<8x256xf32>, vector<16x256xf32> -> vector<16x256xf32>
    %10 = arith.addf %5, %9 : vector<16x256xf32>
    %c1 = arith.constant 1 : index
    %c0_9 = arith.constant 0 : index
    %c0_10 = arith.constant 0 : index
    %11 = vector.load %arg5[%c1, %c0_9, %c0_10] : memref<9x16x8xf32, #tpu.memory_space<vmem>>, vector<1x16x8xf32>
    %12 = vector.shape_cast %11 : vector<1x16x8xf32> to vector<16x8xf32>
    %13 = vector.extract_strided_slice %2 {offsets = [0, 256], sizes = [8, 256], strides = [1, 1]} : vector<8x2304xf32> to vector<8x256xf32>
    %cst_11 = arith.constant dense<0.000000e+00> : vector<16x256xf32>
    %14 = tpu.matmul %12, %13, %cst_11 {dimension_numbers = #tpu.dot_dimension_numbers<[1], [0], [0], [1], [0, 0, 1, 1], [], []>} : vector<16x8xf32>, vector<8x256xf32>, vector<16x256xf32> -> vector<16x256xf32>
    %15 = arith.addf %10, %14 : vector<16x256xf32>
    %c2 = arith.constant 2 : index
    %c0_12 = arith.constant 0 : index
    %c0_13 = arith.constant 0 : index
    %16 = vector.load %arg5[%c2, %c0_12, %c0_13] : memref<9x16x8xf32, #tpu.memory_space<vmem>>, vector<1x16x8xf32>
    %17 = vector.shape_cast %16 : vector<1x16x8xf32> to vector<16x8xf32>
    %18 = vector.extract_strided_slice %2 {offsets = [0, 512], sizes = [8, 256], strides = [1, 1]} : vector<8x2304xf32> to vector<8x256xf32>
    %cst_14 = arith.constant dense<0.000000e+00> : vector<16x256xf32>
    %19 = tpu.matmul %17, %18, %cst_14 {dimension_numbers = #tpu.dot_dimension_numbers<[1], [0], [0], [1], [0, 0, 1, 1], [], []>} : vector<16x8xf32>, vector<8x256xf32>, vector<16x256xf32> -> vector<16x256xf32>
    %20 = arith.addf %15, %19 : vector<16x256xf32>
    %c3 = arith.constant 3 : index
    %c0_15 = arith.constant 0 : index
    %c0_16 = arith.constant 0 : index
    %21 = vector.load %arg5[%c3, %c0_15, %c0_16] : memref<9x16x8xf32, #tpu.memory_space<vmem>>, vector<1x16x8xf32>
    %22 = vector.shape_cast %21 : vector<1x16x8xf32> to vector<16x8xf32>
    %23 = vector.extract_strided_slice %2 {offsets = [0, 768], sizes = [8, 256], strides = [1, 1]} : vector<8x2304xf32> to vector<8x256xf32>
    %cst_17 = arith.constant dense<0.000000e+00> : vector<16x256xf32>
    %24 = tpu.matmul %22, %23, %cst_17 {dimension_numbers = #tpu.dot_dimension_numbers<[1], [0], [0], [1], [0, 0, 1, 1], [], []>} : vector<16x8xf32>, vector<8x256xf32>, vector<16x256xf32> -> vector<16x256xf32>
    %25 = arith.addf %20, %24 : vector<16x256xf32>
    %c4 = arith.constant 4 : index
    %c0_18 = arith.constant 0 : index
    %c0_19 = arith.constant 0 : index
    %26 = vector.load %arg5[%c4, %c0_18, %c0_19] : memref<9x16x8xf32, #tpu.memory_space<vmem>>, vector<1x16x8xf32>
    %27 = vector.shape_cast %26 : vector<1x16x8xf32> to vector<16x8xf32>
    %28 = vector.extract_strided_slice %2 {offsets = [0, 1024], sizes = [8, 256], strides = [1, 1]} : vector<8x2304xf32> to vector<8x256xf32>
    %cst_20 = arith.constant dense<0.000000e+00> : vector<16x256xf32>
    %29 = tpu.matmul %27, %28, %cst_20 {dimension_numbers = #tpu.dot_dimension_numbers<[1], [0], [0], [1], [0, 0, 1, 1], [], []>} : vector<16x8xf32>, vector<8x256xf32>, vector<16x256xf32> -> vector<16x256xf32>
    %30 = arith.addf %25, %29 : vector<16x256xf32>
    %c5 = arith.constant 5 : index
    %c0_21 = arith.constant 0 : index
    %c0_22 = arith.constant 0 : index
    %31 = vector.load %arg5[%c5, %c0_21, %c0_22] : memref<9x16x8xf32, #tpu.memory_space<vmem>>, vector<1x16x8xf32>
    %32 = vector.shape_cast %31 : vector<1x16x8xf32> to vector<16x8xf32>
    %33 = vector.extract_strided_slice %2 {offsets = [0, 1280], sizes = [8, 256], strides = [1, 1]} : vector<8x2304xf32> to vector<8x256xf32>
    %cst_23 = arith.constant dense<0.000000e+00> : vector<16x256xf32>
    %34 = tpu.matmul %32, %33, %cst_23 {dimension_numbers = #tpu.dot_dimension_numbers<[1], [0], [0], [1], [0, 0, 1, 1], [], []>} : vector<16x8xf32>, vector<8x256xf32>, vector<16x256xf32> -> vector<16x256xf32>
    %35 = arith.addf %30, %34 : vector<16x256xf32>
    %c6 = arith.constant 6 : index
    %c0_24 = arith.constant 0 : index
    %c0_25 = arith.constant 0 : index
    %36 = vector.load %arg5[%c6, %c0_24, %c0_25] : memref<9x16x8xf32, #tpu.memory_space<vmem>>, vector<1x16x8xf32>
    %37 = vector.shape_cast %36 : vector<1x16x8xf32> to vector<16x8xf32>
    %38 = vector.extract_strided_slice %2 {offsets = [0, 1536], sizes = [8, 256], strides = [1, 1]} : vector<8x2304xf32> to vector<8x256xf32>
    %cst_26 = arith.constant dense<0.000000e+00> : vector<16x256xf32>
    %39 = tpu.matmul %37, %38, %cst_26 {dimension_numbers = #tpu.dot_dimension_numbers<[1], [0], [0], [1], [0, 0, 1, 1], [], []>} : vector<16x8xf32>, vector<8x256xf32>, vector<16x256xf32> -> vector<16x256xf32>
    %40 = arith.addf %35, %39 : vector<16x256xf32>
    %c7 = arith.constant 7 : index
    %c0_27 = arith.constant 0 : index
    %c0_28 = arith.constant 0 : index
    %41 = vector.load %arg5[%c7, %c0_27, %c0_28] : memref<9x16x8xf32, #tpu.memory_space<vmem>>, vector<1x16x8xf32>
    %42 = vector.shape_cast %41 : vector<1x16x8xf32> to vector<16x8xf32>
    %43 = vector.extract_strided_slice %2 {offsets = [0, 1792], sizes = [8, 256], strides = [1, 1]} : vector<8x2304xf32> to vector<8x256xf32>
    %cst_29 = arith.constant dense<0.000000e+00> : vector<16x256xf32>
    %44 = tpu.matmul %42, %43, %cst_29 {dimension_numbers = #tpu.dot_dimension_numbers<[1], [0], [0], [1], [0, 0, 1, 1], [], []>} : vector<16x8xf32>, vector<8x256xf32>, vector<16x256xf32> -> vector<16x256xf32>
    %45 = arith.addf %40, %44 : vector<16x256xf32>
    %c8 = arith.constant 8 : index
    %c0_30 = arith.constant 0 : index
    %c0_31 = arith.constant 0 : index
    %46 = vector.load %arg5[%c8, %c0_30, %c0_31] : memref<9x16x8xf32, #tpu.memory_space<vmem>>, vector<1x16x8xf32>
    %47 = vector.shape_cast %46 : vector<1x16x8xf32> to vector<16x8xf32>
    %48 = vector.extract_strided_slice %2 {offsets = [0, 2048], sizes = [8, 256], strides = [1, 1]} : vector<8x2304xf32> to vector<8x256xf32>
    %cst_32 = arith.constant dense<0.000000e+00> : vector<16x256xf32>
    %49 = tpu.matmul %47, %48, %cst_32 {dimension_numbers = #tpu.dot_dimension_numbers<[1], [0], [0], [1], [0, 0, 1, 1], [], []>} : vector<16x8xf32>, vector<8x256xf32>, vector<16x256xf32> -> vector<16x256xf32>
    %50 = arith.addf %45, %49 : vector<16x256xf32>
    %c0_33 = arith.constant 0 : index
    %c0_34 = arith.constant 0 : index
    %51 = vector.load %arg3[%c0_33, %c0_34] : memref<256x1024xf32, #tpu.memory_space<vmem>>, vector<256x1024xf32>
    %cst_35 = arith.constant dense<0.000000e+00> : vector<16x1024xf32>
    %52 = tpu.matmul %50, %51, %cst_35 {dimension_numbers = #tpu.dot_dimension_numbers<[1], [0], [0], [1], [0, 0, 1, 1], [], []>} : vector<16x256xf32>, vector<256x1024xf32>, vector<16x1024xf32> -> vector<16x1024xf32>
    %cst_36 = arith.constant 0.000000e+00 : f32
    %53 = vector.broadcast %cst_36 : f32 to vector<16x1024xf32>
    %54 = arith.cmpf ogt, %52, %53 : vector<16x1024xf32>
    %cst_37 = arith.constant 0.000000e+00 : f32
    %55 = vector.broadcast %cst_37 : f32 to vector<16x1024xf32>
    %56 = arith.minimumf %52, %55 : vector<16x1024xf32>
    %57 = math.exp %56 : vector<16x1024xf32>
    %cst_38 = arith.constant 1.000000e+00 : f32
    %58 = vector.broadcast %cst_38 : f32 to vector<16x1024xf32>
    %59 = arith.subf %57, %58 : vector<16x1024xf32>
    %60 = arith.select %54, %52, %59 : vector<16x1024xi1>, vector<16x1024xf32>
    %c0_39 = arith.constant 0 : index
    %c0_40 = arith.constant 0 : index
    %61 = vector.load %arg4[%c0_39, %c0_40] : memref<1024x256xf32, #tpu.memory_space<vmem>>, vector<1024x256xf32>
    %cst_41 = arith.constant dense<0.000000e+00> : vector<16x256xf32>
    %62 = tpu.matmul %60, %61, %cst_41 {dimension_numbers = #tpu.dot_dimension_numbers<[1], [0], [0], [1], [0, 0, 1, 1], [], []>} : vector<16x1024xf32>, vector<1024x256xf32>, vector<16x256xf32> -> vector<16x256xf32>
    %c0_42 = arith.constant 0 : index
    %c0_43 = arith.constant 0 : index
    %63 = vector.load %arg2[%c0_42, %c0_43] : memref<256x2304xf32, #tpu.memory_space<vmem>>, vector<256x2304xf32>
    %cst_44 = arith.constant dense<0.000000e+00> : vector<16x2304xf32>
    %64 = tpu.matmul %62, %63, %cst_44 {dimension_numbers = #tpu.dot_dimension_numbers<[1], [0], [0], [1], [0, 0, 1, 1], [], []>} : vector<16x256xf32>, vector<256x2304xf32>, vector<16x2304xf32> -> vector<16x2304xf32>
    %c0_45 = arith.constant 0 : index
    %c0_46 = arith.constant 0 : index
    %65 = vector.load %arg8[%c0_45, %c0_46] : memref<16x1xf32, #tpu.memory_space<vmem>>, vector<16x1xf32>
    %66 = vector.shape_cast %65 : vector<16x1xf32> to vector<16x1xf32>
    %67 = vector.broadcast %66 : vector<16x1xf32> to vector<16x256xf32>
    %c0_47 = arith.constant 0 : index
    %c0_48 = arith.constant 0 : index
    %c0_49 = arith.constant 0 : index
    %68 = vector.load %arg7[%c0_47, %c0_48, %c0_49] : memref<9x16x16xf32, #tpu.memory_space<vmem>>, vector<1x16x16xf32>
    %69 = vector.shape_cast %68 : vector<1x16x16xf32> to vector<16x16xf32>
    %70 = vector.extract_strided_slice %64 {offsets = [0, 0], sizes = [16, 256], strides = [1, 1]} : vector<16x2304xf32> to vector<16x256xf32>
    %cst_50 = arith.constant dense<0.000000e+00> : vector<16x256xf32>
    %71 = tpu.matmul %69, %70, %cst_50 {dimension_numbers = #tpu.dot_dimension_numbers<[1], [0], [0], [1], [0, 0, 1, 1], [], []>} : vector<16x16xf32>, vector<16x256xf32>, vector<16x256xf32> -> vector<16x256xf32>
    %72 = arith.addf %67, %71 : vector<16x256xf32>
    %c1_51 = arith.constant 1 : index
    %c0_52 = arith.constant 0 : index
    %c0_53 = arith.constant 0 : index
    %73 = vector.load %arg7[%c1_51, %c0_52, %c0_53] : memref<9x16x16xf32, #tpu.memory_space<vmem>>, vector<1x16x16xf32>
    %74 = vector.shape_cast %73 : vector<1x16x16xf32> to vector<16x16xf32>
    %75 = vector.extract_strided_slice %64 {offsets = [0, 256], sizes = [16, 256], strides = [1, 1]} : vector<16x2304xf32> to vector<16x256xf32>
    %cst_54 = arith.constant dense<0.000000e+00> : vector<16x256xf32>
    %76 = tpu.matmul %74, %75, %cst_54 {dimension_numbers = #tpu.dot_dimension_numbers<[1], [0], [0], [1], [0, 0, 1, 1], [], []>} : vector<16x16xf32>, vector<16x256xf32>, vector<16x256xf32> -> vector<16x256xf32>
    %77 = arith.addf %72, %76 : vector<16x256xf32>
    %c2_55 = arith.constant 2 : index
    %c0_56 = arith.constant 0 : index
    %c0_57 = arith.constant 0 : index
    %78 = vector.load %arg7[%c2_55, %c0_56, %c0_57] : memref<9x16x16xf32, #tpu.memory_space<vmem>>, vector<1x16x16xf32>
    %79 = vector.shape_cast %78 : vector<1x16x16xf32> to vector<16x16xf32>
    %80 = vector.extract_strided_slice %64 {offsets = [0, 512], sizes = [16, 256], strides = [1, 1]} : vector<16x2304xf32> to vector<16x256xf32>
    %cst_58 = arith.constant dense<0.000000e+00> : vector<16x256xf32>
    %81 = tpu.matmul %79, %80, %cst_58 {dimension_numbers = #tpu.dot_dimension_numbers<[1], [0], [0], [1], [0, 0, 1, 1], [], []>} : vector<16x16xf32>, vector<16x256xf32>, vector<16x256xf32> -> vector<16x256xf32>
    %82 = arith.addf %77, %81 : vector<16x256xf32>
    %c3_59 = arith.constant 3 : index
    %c0_60 = arith.constant 0 : index
    %c0_61 = arith.constant 0 : index
    %83 = vector.load %arg7[%c3_59, %c0_60, %c0_61] : memref<9x16x16xf32, #tpu.memory_space<vmem>>, vector<1x16x16xf32>
    %84 = vector.shape_cast %83 : vector<1x16x16xf32> to vector<16x16xf32>
    %85 = vector.extract_strided_slice %64 {offsets = [0, 768], sizes = [16, 256], strides = [1, 1]} : vector<16x2304xf32> to vector<16x256xf32>
    %cst_62 = arith.constant dense<0.000000e+00> : vector<16x256xf32>
    %86 = tpu.matmul %84, %85, %cst_62 {dimension_numbers = #tpu.dot_dimension_numbers<[1], [0], [0], [1], [0, 0, 1, 1], [], []>} : vector<16x16xf32>, vector<16x256xf32>, vector<16x256xf32> -> vector<16x256xf32>
    %87 = arith.addf %82, %86 : vector<16x256xf32>
    %c4_63 = arith.constant 4 : index
    %c0_64 = arith.constant 0 : index
    %c0_65 = arith.constant 0 : index
    %88 = vector.load %arg7[%c4_63, %c0_64, %c0_65] : memref<9x16x16xf32, #tpu.memory_space<vmem>>, vector<1x16x16xf32>
    %89 = vector.shape_cast %88 : vector<1x16x16xf32> to vector<16x16xf32>
    %90 = vector.extract_strided_slice %64 {offsets = [0, 1024], sizes = [16, 256], strides = [1, 1]} : vector<16x2304xf32> to vector<16x256xf32>
    %cst_66 = arith.constant dense<0.000000e+00> : vector<16x256xf32>
    %91 = tpu.matmul %89, %90, %cst_66 {dimension_numbers = #tpu.dot_dimension_numbers<[1], [0], [0], [1], [0, 0, 1, 1], [], []>} : vector<16x16xf32>, vector<16x256xf32>, vector<16x256xf32> -> vector<16x256xf32>
    %92 = arith.addf %87, %91 : vector<16x256xf32>
    %c5_67 = arith.constant 5 : index
    %c0_68 = arith.constant 0 : index
    %c0_69 = arith.constant 0 : index
    %93 = vector.load %arg7[%c5_67, %c0_68, %c0_69] : memref<9x16x16xf32, #tpu.memory_space<vmem>>, vector<1x16x16xf32>
    %94 = vector.shape_cast %93 : vector<1x16x16xf32> to vector<16x16xf32>
    %95 = vector.extract_strided_slice %64 {offsets = [0, 1280], sizes = [16, 256], strides = [1, 1]} : vector<16x2304xf32> to vector<16x256xf32>
    %cst_70 = arith.constant dense<0.000000e+00> : vector<16x256xf32>
    %96 = tpu.matmul %94, %95, %cst_70 {dimension_numbers = #tpu.dot_dimension_numbers<[1], [0], [0], [1], [0, 0, 1, 1], [], []>} : vector<16x16xf32>, vector<16x256xf32>, vector<16x256xf32> -> vector<16x256xf32>
    %97 = arith.addf %92, %96 : vector<16x256xf32>
    %c6_71 = arith.constant 6 : index
    %c0_72 = arith.constant 0 : index
    %c0_73 = arith.constant 0 : index
    %98 = vector.load %arg7[%c6_71, %c0_72, %c0_73] : memref<9x16x16xf32, #tpu.memory_space<vmem>>, vector<1x16x16xf32>
    %99 = vector.shape_cast %98 : vector<1x16x16xf32> to vector<16x16xf32>
    %100 = vector.extract_strided_slice %64 {offsets = [0, 1536], sizes = [16, 256], strides = [1, 1]} : vector<16x2304xf32> to vector<16x256xf32>
    %cst_74 = arith.constant dense<0.000000e+00> : vector<16x256xf32>
    %101 = tpu.matmul %99, %100, %cst_74 {dimension_numbers = #tpu.dot_dimension_numbers<[1], [0], [0], [1], [0, 0, 1, 1], [], []>} : vector<16x16xf32>, vector<16x256xf32>, vector<16x256xf32> -> vector<16x256xf32>
    %102 = arith.addf %97, %101 : vector<16x256xf32>
    %c7_75 = arith.constant 7 : index
    %c0_76 = arith.constant 0 : index
    %c0_77 = arith.constant 0 : index
    %103 = vector.load %arg7[%c7_75, %c0_76, %c0_77] : memref<9x16x16xf32, #tpu.memory_space<vmem>>, vector<1x16x16xf32>
    %104 = vector.shape_cast %103 : vector<1x16x16xf32> to vector<16x16xf32>
    %105 = vector.extract_strided_slice %64 {offsets = [0, 1792], sizes = [16, 256], strides = [1, 1]} : vector<16x2304xf32> to vector<16x256xf32>
    %cst_78 = arith.constant dense<0.000000e+00> : vector<16x256xf32>
    %106 = tpu.matmul %104, %105, %cst_78 {dimension_numbers = #tpu.dot_dimension_numbers<[1], [0], [0], [1], [0, 0, 1, 1], [], []>} : vector<16x16xf32>, vector<16x256xf32>, vector<16x256xf32> -> vector<16x256xf32>
    %107 = arith.addf %102, %106 : vector<16x256xf32>
    %c8_79 = arith.constant 8 : index
    %c0_80 = arith.constant 0 : index
    %c0_81 = arith.constant 0 : index
    %108 = vector.load %arg7[%c8_79, %c0_80, %c0_81] : memref<9x16x16xf32, #tpu.memory_space<vmem>>, vector<1x16x16xf32>
    %109 = vector.shape_cast %108 : vector<1x16x16xf32> to vector<16x16xf32>
    %110 = vector.extract_strided_slice %64 {offsets = [0, 2048], sizes = [16, 256], strides = [1, 1]} : vector<16x2304xf32> to vector<16x256xf32>
    %cst_82 = arith.constant dense<0.000000e+00> : vector<16x256xf32>
    %111 = tpu.matmul %109, %110, %cst_82 {dimension_numbers = #tpu.dot_dimension_numbers<[1], [0], [0], [1], [0, 0, 1, 1], [], []>} : vector<16x16xf32>, vector<16x256xf32>, vector<16x256xf32> -> vector<16x256xf32>
    %112 = arith.addf %107, %111 : vector<16x256xf32>
    %c0_83 = arith.constant 0 : index
    %c0_84 = arith.constant 0 : index
    %113 = vector.load %arg3[%c0_83, %c0_84] : memref<256x1024xf32, #tpu.memory_space<vmem>>, vector<256x1024xf32>
    %cst_85 = arith.constant dense<0.000000e+00> : vector<16x1024xf32>
    %114 = tpu.matmul %112, %113, %cst_85 {dimension_numbers = #tpu.dot_dimension_numbers<[1], [0], [0], [1], [0, 0, 1, 1], [], []>} : vector<16x256xf32>, vector<256x1024xf32>, vector<16x1024xf32> -> vector<16x1024xf32>
    %cst_86 = arith.constant 0.000000e+00 : f32
    %115 = vector.broadcast %cst_86 : f32 to vector<16x1024xf32>
    %116 = arith.cmpf ogt, %114, %115 : vector<16x1024xf32>
    %cst_87 = arith.constant 0.000000e+00 : f32
    %117 = vector.broadcast %cst_87 : f32 to vector<16x1024xf32>
    %118 = arith.minimumf %114, %117 : vector<16x1024xf32>
    %119 = math.exp %118 : vector<16x1024xf32>
    %cst_88 = arith.constant 1.000000e+00 : f32
    %120 = vector.broadcast %cst_88 : f32 to vector<16x1024xf32>
    %121 = arith.subf %119, %120 : vector<16x1024xf32>
    %122 = arith.select %116, %114, %121 : vector<16x1024xi1>, vector<16x1024xf32>
    %c0_89 = arith.constant 0 : index
    %c0_90 = arith.constant 0 : index
    %123 = vector.load %arg4[%c0_89, %c0_90] : memref<1024x256xf32, #tpu.memory_space<vmem>>, vector<1024x256xf32>
    %cst_91 = arith.constant dense<0.000000e+00> : vector<16x256xf32>
    %124 = tpu.matmul %122, %123, %cst_91 {dimension_numbers = #tpu.dot_dimension_numbers<[1], [0], [0], [1], [0, 0, 1, 1], [], []>} : vector<16x1024xf32>, vector<1024x256xf32>, vector<16x256xf32> -> vector<16x256xf32>
    %c0_92 = arith.constant 0 : index
    %c0_93 = arith.constant 0 : index
    %125 = vector.load %arg2[%c0_92, %c0_93] : memref<256x2304xf32, #tpu.memory_space<vmem>>, vector<256x2304xf32>
    %cst_94 = arith.constant dense<0.000000e+00> : vector<16x2304xf32>
    %126 = tpu.matmul %124, %125, %cst_94 {dimension_numbers = #tpu.dot_dimension_numbers<[1], [0], [0], [1], [0, 0, 1, 1], [], []>} : vector<16x256xf32>, vector<256x2304xf32>, vector<16x2304xf32> -> vector<16x2304xf32>
    %c0_95 = arith.constant 0 : index
    %c0_96 = arith.constant 0 : index
    %127 = vector.load %arg10[%c0_95, %c0_96] : memref<8x1xf32, #tpu.memory_space<vmem>>, vector<8x1xf32>
    %128 = vector.shape_cast %127 : vector<8x1xf32> to vector<8x1xf32>
    %129 = vector.broadcast %128 : vector<8x1xf32> to vector<8x256xf32>
    %c0_97 = arith.constant 0 : index
    %c0_98 = arith.constant 0 : index
    %c0_99 = arith.constant 0 : index
    %130 = vector.load %arg9[%c0_97, %c0_98, %c0_99] : memref<9x8x16xf32, #tpu.memory_space<vmem>>, vector<1x8x16xf32>
    %131 = vector.shape_cast %130 : vector<1x8x16xf32> to vector<8x16xf32>
    %132 = vector.extract_strided_slice %126 {offsets = [0, 0], sizes = [16, 256], strides = [1, 1]} : vector<16x2304xf32> to vector<16x256xf32>
    %cst_100 = arith.constant dense<0.000000e+00> : vector<8x256xf32>
    %133 = tpu.matmul %131, %132, %cst_100 {dimension_numbers = #tpu.dot_dimension_numbers<[1], [0], [0], [1], [0, 0, 1, 1], [], []>} : vector<8x16xf32>, vector<16x256xf32>, vector<8x256xf32> -> vector<8x256xf32>
    %134 = arith.addf %129, %133 : vector<8x256xf32>
    %c1_101 = arith.constant 1 : index
    %c0_102 = arith.constant 0 : index
    %c0_103 = arith.constant 0 : index
    %135 = vector.load %arg9[%c1_101, %c0_102, %c0_103] : memref<9x8x16xf32, #tpu.memory_space<vmem>>, vector<1x8x16xf32>
    %136 = vector.shape_cast %135 : vector<1x8x16xf32> to vector<8x16xf32>
    %137 = vector.extract_strided_slice %126 {offsets = [0, 256], sizes = [16, 256], strides = [1, 1]} : vector<16x2304xf32> to vector<16x256xf32>
    %cst_104 = arith.constant dense<0.000000e+00> : vector<8x256xf32>
    %138 = tpu.matmul %136, %137, %cst_104 {dimension_numbers = #tpu.dot_dimension_numbers<[1], [0], [0], [1], [0, 0, 1, 1], [], []>} : vector<8x16xf32>, vector<16x256xf32>, vector<8x256xf32> -> vector<8x256xf32>
    %139 = arith.addf %134, %138 : vector<8x256xf32>
    %c2_105 = arith.constant 2 : index
    %c0_106 = arith.constant 0 : index
    %c0_107 = arith.constant 0 : index
    %140 = vector.load %arg9[%c2_105, %c0_106, %c0_107] : memref<9x8x16xf32, #tpu.memory_space<vmem>>, vector<1x8x16xf32>
    %141 = vector.shape_cast %140 : vector<1x8x16xf32> to vector<8x16xf32>
    %142 = vector.extract_strided_slice %126 {offsets = [0, 512], sizes = [16, 256], strides = [1, 1]} : vector<16x2304xf32> to vector<16x256xf32>
    %cst_108 = arith.constant dense<0.000000e+00> : vector<8x256xf32>
    %143 = tpu.matmul %141, %142, %cst_108 {dimension_numbers = #tpu.dot_dimension_numbers<[1], [0], [0], [1], [0, 0, 1, 1], [], []>} : vector<8x16xf32>, vector<16x256xf32>, vector<8x256xf32> -> vector<8x256xf32>
    %144 = arith.addf %139, %143 : vector<8x256xf32>
    %c3_109 = arith.constant 3 : index
    %c0_110 = arith.constant 0 : index
    %c0_111 = arith.constant 0 : index
    %145 = vector.load %arg9[%c3_109, %c0_110, %c0_111] : memref<9x8x16xf32, #tpu.memory_space<vmem>>, vector<1x8x16xf32>
    %146 = vector.shape_cast %145 : vector<1x8x16xf32> to vector<8x16xf32>
    %147 = vector.extract_strided_slice %126 {offsets = [0, 768], sizes = [16, 256], strides = [1, 1]} : vector<16x2304xf32> to vector<16x256xf32>
    %cst_112 = arith.constant dense<0.000000e+00> : vector<8x256xf32>
    %148 = tpu.matmul %146, %147, %cst_112 {dimension_numbers = #tpu.dot_dimension_numbers<[1], [0], [0], [1], [0, 0, 1, 1], [], []>} : vector<8x16xf32>, vector<16x256xf32>, vector<8x256xf32> -> vector<8x256xf32>
    %149 = arith.addf %144, %148 : vector<8x256xf32>
    %c4_113 = arith.constant 4 : index
    %c0_114 = arith.constant 0 : index
    %c0_115 = arith.constant 0 : index
    %150 = vector.load %arg9[%c4_113, %c0_114, %c0_115] : memref<9x8x16xf32, #tpu.memory_space<vmem>>, vector<1x8x16xf32>
    %151 = vector.shape_cast %150 : vector<1x8x16xf32> to vector<8x16xf32>
    %152 = vector.extract_strided_slice %126 {offsets = [0, 1024], sizes = [16, 256], strides = [1, 1]} : vector<16x2304xf32> to vector<16x256xf32>
    %cst_116 = arith.constant dense<0.000000e+00> : vector<8x256xf32>
    %153 = tpu.matmul %151, %152, %cst_116 {dimension_numbers = #tpu.dot_dimension_numbers<[1], [0], [0], [1], [0, 0, 1, 1], [], []>} : vector<8x16xf32>, vector<16x256xf32>, vector<8x256xf32> -> vector<8x256xf32>
    %154 = arith.addf %149, %153 : vector<8x256xf32>
    %c5_117 = arith.constant 5 : index
    %c0_118 = arith.constant 0 : index
    %c0_119 = arith.constant 0 : index
    %155 = vector.load %arg9[%c5_117, %c0_118, %c0_119] : memref<9x8x16xf32, #tpu.memory_space<vmem>>, vector<1x8x16xf32>
    %156 = vector.shape_cast %155 : vector<1x8x16xf32> to vector<8x16xf32>
    %157 = vector.extract_strided_slice %126 {offsets = [0, 1280], sizes = [16, 256], strides = [1, 1]} : vector<16x2304xf32> to vector<16x256xf32>
    %cst_120 = arith.constant dense<0.000000e+00> : vector<8x256xf32>
    %158 = tpu.matmul %156, %157, %cst_120 {dimension_numbers = #tpu.dot_dimension_numbers<[1], [0], [0], [1], [0, 0, 1, 1], [], []>} : vector<8x16xf32>, vector<16x256xf32>, vector<8x256xf32> -> vector<8x256xf32>
    %159 = arith.addf %154, %158 : vector<8x256xf32>
    %c6_121 = arith.constant 6 : index
    %c0_122 = arith.constant 0 : index
    %c0_123 = arith.constant 0 : index
    %160 = vector.load %arg9[%c6_121, %c0_122, %c0_123] : memref<9x8x16xf32, #tpu.memory_space<vmem>>, vector<1x8x16xf32>
    %161 = vector.shape_cast %160 : vector<1x8x16xf32> to vector<8x16xf32>
    %162 = vector.extract_strided_slice %126 {offsets = [0, 1536], sizes = [16, 256], strides = [1, 1]} : vector<16x2304xf32> to vector<16x256xf32>
    %cst_124 = arith.constant dense<0.000000e+00> : vector<8x256xf32>
    %163 = tpu.matmul %161, %162, %cst_124 {dimension_numbers = #tpu.dot_dimension_numbers<[1], [0], [0], [1], [0, 0, 1, 1], [], []>} : vector<8x16xf32>, vector<16x256xf32>, vector<8x256xf32> -> vector<8x256xf32>
    %164 = arith.addf %159, %163 : vector<8x256xf32>
    %c7_125 = arith.constant 7 : index
    %c0_126 = arith.constant 0 : index
    %c0_127 = arith.constant 0 : index
    %165 = vector.load %arg9[%c7_125, %c0_126, %c0_127] : memref<9x8x16xf32, #tpu.memory_space<vmem>>, vector<1x8x16xf32>
    %166 = vector.shape_cast %165 : vector<1x8x16xf32> to vector<8x16xf32>
    %167 = vector.extract_strided_slice %126 {offsets = [0, 1792], sizes = [16, 256], strides = [1, 1]} : vector<16x2304xf32> to vector<16x256xf32>
    %cst_128 = arith.constant dense<0.000000e+00> : vector<8x256xf32>
    %168 = tpu.matmul %166, %167, %cst_128 {dimension_numbers = #tpu.dot_dimension_numbers<[1], [0], [0], [1], [0, 0, 1, 1], [], []>} : vector<8x16xf32>, vector<16x256xf32>, vector<8x256xf32> -> vector<8x256xf32>
    %169 = arith.addf %164, %168 : vector<8x256xf32>
    %c8_129 = arith.constant 8 : index
    %c0_130 = arith.constant 0 : index
    %c0_131 = arith.constant 0 : index
    %170 = vector.load %arg9[%c8_129, %c0_130, %c0_131] : memref<9x8x16xf32, #tpu.memory_space<vmem>>, vector<1x8x16xf32>
    %171 = vector.shape_cast %170 : vector<1x8x16xf32> to vector<8x16xf32>
    %172 = vector.extract_strided_slice %126 {offsets = [0, 2048], sizes = [16, 256], strides = [1, 1]} : vector<16x2304xf32> to vector<16x256xf32>
    %cst_132 = arith.constant dense<0.000000e+00> : vector<8x256xf32>
    %173 = tpu.matmul %171, %172, %cst_132 {dimension_numbers = #tpu.dot_dimension_numbers<[1], [0], [0], [1], [0, 0, 1, 1], [], []>} : vector<8x16xf32>, vector<16x256xf32>, vector<8x256xf32> -> vector<8x256xf32>
    %174 = arith.addf %169, %173 : vector<8x256xf32>
    %c0_133 = arith.constant 0 : index
    %c0_134 = arith.constant 0 : index
    %175 = vector.load %arg3[%c0_133, %c0_134] : memref<256x1024xf32, #tpu.memory_space<vmem>>, vector<256x1024xf32>
    %cst_135 = arith.constant dense<0.000000e+00> : vector<8x1024xf32>
    %176 = tpu.matmul %174, %175, %cst_135 {dimension_numbers = #tpu.dot_dimension_numbers<[1], [0], [0], [1], [0, 0, 1, 1], [], []>} : vector<8x256xf32>, vector<256x1024xf32>, vector<8x1024xf32> -> vector<8x1024xf32>
    %cst_136 = arith.constant 0.000000e+00 : f32
    %177 = vector.broadcast %cst_136 : f32 to vector<8x1024xf32>
    %178 = arith.cmpf ogt, %176, %177 : vector<8x1024xf32>
    %cst_137 = arith.constant 0.000000e+00 : f32
    %179 = vector.broadcast %cst_137 : f32 to vector<8x1024xf32>
    %180 = arith.minimumf %176, %179 : vector<8x1024xf32>
    %181 = math.exp %180 : vector<8x1024xf32>
    %cst_138 = arith.constant 1.000000e+00 : f32
    %182 = vector.broadcast %cst_138 : f32 to vector<8x1024xf32>
    %183 = arith.subf %181, %182 : vector<8x1024xf32>
    %184 = arith.select %178, %176, %183 : vector<8x1024xi1>, vector<8x1024xf32>
    %c0_139 = arith.constant 0 : index
    %c0_140 = arith.constant 0 : index
    %185 = vector.load %arg4[%c0_139, %c0_140] : memref<1024x256xf32, #tpu.memory_space<vmem>>, vector<1024x256xf32>
    %cst_141 = arith.constant dense<0.000000e+00> : vector<8x256xf32>
    %186 = tpu.matmul %184, %185, %cst_141 {dimension_numbers = #tpu.dot_dimension_numbers<[1], [0], [0], [1], [0, 0, 1, 1], [], []>} : vector<8x1024xf32>, vector<1024x256xf32>, vector<8x256xf32> -> vector<8x256xf32>
    %187 = arith.addf %186, %0 : vector<8x256xf32>
    %c0_142 = arith.constant 0 : index
    %c0_143 = arith.constant 0 : index
    %188 = vector.load %arg11[%c0_142, %c0_143] : memref<8x256xf32, #tpu.memory_space<vmem>>, vector<8x256xf32>
    tpu.vector_store %arg11[%c0_142, %c0_143], %187 {strides = array<i32>} : memref<8x256xf32, #tpu.memory_space<vmem>>, vector<8x256xf32>,
    return
  }
  func.func @transform_0(%arg0: i32) -> (i32, i32) {
    %c0_i32 = arith.constant 0 : i32
    %c0_i32_0 = arith.constant 0 : i32
    return %arg0, %c0_i32 : i32, i32
  }
  func.func @transform_1(%arg0: i32) -> (i32, i32) {
    %c0_i32 = arith.constant 0 : i32
    %c0_i32_0 = arith.constant 0 : i32
    %c0_i32_1 = arith.constant 0 : i32
    return %c0_i32, %c0_i32_0 : i32, i32
  }
  func.func @transform_2(%arg0: i32) -> (i32, i32) {
    %c0_i32 = arith.constant 0 : i32
    %c0_i32_0 = arith.constant 0 : i32
    %c0_i32_1 = arith.constant 0 : i32
    return %c0_i32, %c0_i32_0 : i32, i32
  }
  func.func @transform_3(%arg0: i32) -> (i32, i32) {
    %c0_i32 = arith.constant 0 : i32
    %c0_i32_0 = arith.constant 0 : i32
    %c0_i32_1 = arith.constant 0 : i32
    return %c0_i32, %c0_i32_0 : i32, i32
  }
  func.func @transform_4(%arg0: i32) -> (i32, i32, i32) {
    %c0_i32 = arith.constant 0 : i32
    %c0_i32_0 = arith.constant 0 : i32
    %c0_i32_1 = arith.constant 0 : i32
    %c0_i32_2 = arith.constant 0 : i32
    return %c0_i32, %c0_i32_0, %c0_i32_1 : i32, i32, i32
  }
  func.func @transform_5(%arg0: i32) -> (i32, i32) {
    %c0_i32 = arith.constant 0 : i32
    %c0_i32_0 = arith.constant 0 : i32
    %c0_i32_1 = arith.constant 0 : i32
    return %c0_i32, %c0_i32_0 : i32, i32
  }
  func.func @transform_6(%arg0: i32) -> (i32, i32, i32) {
    %c0_i32 = arith.constant 0 : i32
    %c0_i32_0 = arith.constant 0 : i32
    %c0_i32_1 = arith.constant 0 : i32
    %c0_i32_2 = arith.constant 0 : i32
    return %c0_i32, %c0_i32_0, %c0_i32_1 : i32, i32, i32
  }
  func.func @transform_7(%arg0: i32) -> (i32, i32) {
    %c0_i32 = arith.constant 0 : i32
    %c0_i32_0 = arith.constant 0 : i32
    %c0_i32_1 = arith.constant 0 : i32
    return %c0_i32, %c0_i32_0 : i32, i32
  }
  func.func @transform_8(%arg0: i32) -> (i32, i32, i32) {
    %c0_i32 = arith.constant 0 : i32
    %c0_i32_0 = arith.constant 0 : i32
    %c0_i32_1 = arith.constant 0 : i32
    %c0_i32_2 = arith.constant 0 : i32
    return %c0_i32, %c0_i32_0, %c0_i32_1 : i32, i32, i32
  }
  func.func @transform_9(%arg0: i32) -> (i32, i32) {
    %c0_i32 = arith.constant 0 : i32
    %c0_i32_0 = arith.constant 0 : i32
    %c0_i32_1 = arith.constant 0 : i32
    return %c0_i32, %c0_i32_0 : i32, i32
  }
  func.func @transform_10(%arg0: i32) -> (i32, i32) {
    %c0_i32 = arith.constant 0 : i32
    %c0_i32_0 = arith.constant 0 : i32
    return %arg0, %c0_i32 : i32, i32
  }
}

</mosaic_0001>

<llo_original>
// kernel: alias_free_res.1
$region0: #{alias_free_res.1}
  #allocation0 [shape = 'u32[]', space=smem, size = 0x4, offset = 0x4, fixed_abs, tag = 'smem constant byte address 0x4 - core index']
  #allocation1 [shape = 'u32[144,128]{1,0:T(1,128)}', space=vmem, size = 0x12000, scoped, tag = 'internal scratch']
  %s0 = inlined_call_operand.vmem [shape: f32[8,256], index: 0, kind: input, shape index: {}]
  %s1 = inlined_call_operand.hbm [shape: f32[256,2304], index: 1, kind: input, shape index: {}]
  %s2 = inlined_call_operand.hbm [shape: f32[256,1024], index: 2, kind: input, shape index: {}]
  %s3 = inlined_call_operand.hbm [shape: f32[1024,256], index: 3, kind: input, shape index: {}]
  %s4 = inlined_call_operand.vmem [shape: f32[9,16,8], index: 4, kind: input, shape index: {}]
  %s5 = inlined_call_operand.vmem [shape: f32[16,1], index: 5, kind: input, shape index: {}]
  %s6 = inlined_call_operand.vmem [shape: f32[9,16,16], index: 6, kind: input, shape index: {}]
  %s7 = inlined_call_operand.vmem [shape: f32[16,1], index: 7, kind: input, shape index: {}]
  %s8 = inlined_call_operand.vmem [shape: f32[9,8,16], index: 8, kind: input, shape index: {}]
  %s9 = inlined_call_operand.vmem [shape: f32[8,1], index: 9, kind: input, shape index: {}]
  %s10 = inlined_call_operand.vmem [shape: f32[8,256], index: 10, kind: output, shape index: {}]
  %s11 = sld [smem:[#allocation0]]
  $region62: #{alias_free_res.1} parent=0
    _
  %s13 = ssub.s32 1, %s11
  %s14 = scalar_select 0, %s13, %s11
  $region1: #{alias_free_res.1} parent=0
    #allocation2 [shape = 'u8[2359296]{0}', space=vmem, size = 0x240000, scoped, tag = 'input window, operand 1, single buffered']
    #allocation3 [shape = 's32[1]{0}', space=sflag, size = 0x4, scoped, tag = 'scoped memory for alias_free_res.1']
    #allocation4 [shape = 'u8[1048576]{0}', space=vmem, size = 0x100000, scoped, tag = 'input window, operand 2, single buffered']
    #allocation5 [shape = 's32[1]{0}', space=sflag, size = 0x4, scoped, tag = 'scoped memory for alias_free_res.1']
    #allocation6 [shape = 'u8[1048576]{0}', space=vmem, size = 0x100000, scoped, tag = 'input window, operand 3, single buffered']
    %15 = vsyncpa [#allocation3], 0
    %16 = vsyncpa [#allocation5], 0
    // Predicated region
    $region2: #{alias_free_res.1} parent=1 // pred_check
      _
    $region3: #{alias_free_res.1} parent=1 // pred_check_branch
      %18 = sbr.rel (0) target = $region5
    $region4: #{alias_free_res.1} parent=1 // pred_region
      _
    $region5: #{alias_free_res.1} parent=1 // pred_fallthru
      _
    // Predicated region
    $region6: #{alias_free_res.1} parent=1 // pred_check
      _
    $region7: #{alias_free_res.1} parent=1 // pred_check_branch
      %20 = sbr.rel (0) target = $region9
    $region8: #{alias_free_res.1} parent=1 // pred_region
      %s22 = ssub.s32 73728, 73728
      %23 = vsyncadd [#allocation3], %s22
      %s24 = sshll.u32 [#allocation2], 4
      %s25 = int_to_ptr.vmem [resolvable:$true] %s24
      %30 = dma.hbm_to_vmem [thread:$0]  %s1, 73728, %s25, [#allocation3], 2304, 2304, 144
    $region9: #{alias_free_res.1} parent=1 // pred_fallthru
      _
    // Predicated region
    $region10: #{alias_free_res.1} parent=1 // pred_check
      _
    $region11: #{alias_free_res.1} parent=1 // pred_check_branch
      %32 = sbr.rel (0) target = $region13
    $region12: #{alias_free_res.1} parent=1 // pred_region
      %s34 = ssub.s32 32768, 32768
      %35 = vsyncadd [#allocation5], %s34
      %s36 = sshll.u32 [#allocation4], 4
      %s37 = int_to_ptr.vmem [resolvable:$true] %s36
      %42 = dma.hbm_to_vmem [thread:$0]  %s2, 32768, %s37, [#allocation5], 1024, 1024, 64
    $region13: #{alias_free_res.1} parent=1 // pred_fallthru
      _
    // Predicated region
    $region14: #{alias_free_res.1} parent=1 // pred_check
      _
    $region15: #{alias_free_res.1} parent=1 // pred_check_branch
      %44 = sbr.rel (0) target = $region17
    $region16: #{alias_free_res.1} parent=1 // pred_region
      %s46 = ssub.s32 32768, 32768
      %47 = vsyncadd [#allocation5], %s46
      %s48 = sshll.u32 [#allocation6], 4
      %s49 = int_to_ptr.vmem [resolvable:$true] %s48
      %54 = dma.hbm_to_vmem [thread:$0]  %s3, 32768, %s49, [#allocation5], 256, 256, 16
    $region17: #{alias_free_res.1} parent=1 // pred_fallthru
      _
    // Predicated region
    $region18: #{alias_free_res.1} parent=1 // pred_check
      _
    $region19: #{alias_free_res.1} parent=1 // pred_check_branch
      %56 = sbr.rel (0) target = $region21
    $region20: #{alias_free_res.1} parent=1 // pred_region
      _
    $region21: #{alias_free_res.1} parent=1 // pred_fallthru
      _
    // Predicated region
    $region22: #{alias_free_res.1} parent=1 // pred_check
      _
    $region23: #{alias_free_res.1} parent=1 // pred_check_branch
      %58 = sbr.rel (0) target = $region25
    $region24: #{alias_free_res.1} parent=1 // pred_region
      _
    $region25: #{alias_free_res.1} parent=1 // pred_fallthru
      _
    // Predicated region
    $region26: #{alias_free_res.1} parent=1 // pred_check
      _
    $region27: #{alias_free_res.1} parent=1 // pred_check_branch
      %60 = sbr.rel (0) target = $region29
    $region28: #{alias_free_res.1} parent=1 // pred_region
      _
    $region29: #{alias_free_res.1} parent=1 // pred_fallthru
      _
    // Predicated region
    $region30: #{alias_free_res.1} parent=1 // pred_check
      _
    $region31: #{alias_free_res.1} parent=1 // pred_check_branch
      %62 = sbr.rel (0) target = $region33
    $region32: #{alias_free_res.1} parent=1 // pred_region
      _
    $region33: #{alias_free_res.1} parent=1 // pred_fallthru
      _
    // Predicated region
    $region34: #{alias_free_res.1} parent=1 // pred_check
      _
    $region35: #{alias_free_res.1} parent=1 // pred_check_branch
      %64 = sbr.rel (0) target = $region37
    $region36: #{alias_free_res.1} parent=1 // pred_region
      _
    $region37: #{alias_free_res.1} parent=1 // pred_fallthru
      _
    // Predicated region
    $region38: #{alias_free_res.1} parent=1 // pred_check
      _
    $region39: #{alias_free_res.1} parent=1 // pred_check_branch
      %66 = sbr.rel (0) target = $region41
    $region40: #{alias_free_res.1} parent=1 // pred_region
      _
    $region41: #{alias_free_res.1} parent=1 // pred_fallthru
      _
    // Predicated region
    $region42: #{alias_free_res.1} parent=1 // pred_check
      _
    $region43: #{alias_free_res.1} parent=1 // pred_check_branch
      %68 = sbr.rel (0) target = $region45
    $region44: #{alias_free_res.1} parent=1 // pred_region
      %69 = dma.done [#allocation3], 73728
    $region45: #{alias_free_res.1} parent=1 // pred_fallthru
      _
    // Predicated region
    $region46: #{alias_free_res.1} parent=1 // pred_check
      _
    $region47: #{alias_free_res.1} parent=1 // pred_check_branch
      %71 = sbr.rel (0) target = $region49
    $region48: #{alias_free_res.1} parent=1 // pred_region
      %72 = dma.done [#allocation5], 32768
    $region49: #{alias_free_res.1} parent=1 // pred_fallthru
      _
    // Predicated region
    $region50: #{alias_free_res.1} parent=1 // pred_check
      _
    $region51: #{alias_free_res.1} parent=1 // pred_check_branch
      %74 = sbr.rel (0) target = $region53
    $region52: #{alias_free_res.1} parent=1 // pred_region
      %75 = dma.done [#allocation5], 32768
    $region53: #{alias_free_res.1} parent=1 // pred_fallthru
      _
    %v76 = vld [vmem:[%s0] sm:$0xff]
    %v77 = vld [vmem:[%s0 + $0x8] sm:$0xff]
    %v78 = vld [vmem:[#allocation2] sm:$0xff]
    %v79 = vld [vmem:[#allocation2 + $0x8] sm:$0xff]
    %v80 = vld [vmem:[#allocation2 + $0x10] sm:$0xff]
    %v81 = vld [vmem:[#allocation2 + $0x18] sm:$0xff]
    %v82 = vld [vmem:[#allocation2 + $0x20] sm:$0xff]
    %v83 = vld [vmem:[#allocation2 + $0x28] sm:$0xff]
    %v84 = vld [vmem:[#allocation2 + $0x30] sm:$0xff]
    %v85 = vld [vmem:[#allocation2 + $0x38] sm:$0xff]
    %v86 = vld [vmem:[#allocation2 + $0x40] sm:$0xff]
    %v87 = vld [vmem:[#allocation2 + $0x48] sm:$0xff]
    %v88 = vld [vmem:[#allocation2 + $0x50] sm:$0xff]
    %v89 = vld [vmem:[#allocation2 + $0x58] sm:$0xff]
    %v90 = vld [vmem:[#allocation2 + $0x60] sm:$0xff]
    %v91 = vld [vmem:[#allocation2 + $0x68] sm:$0xff]
    %v92 = vld [vmem:[#allocation2 + $0x70] sm:$0xff]
    %v93 = vld [vmem:[#allocation2 + $0x78] sm:$0xff]
    %v94 = vld [vmem:[#allocation2 + $0x80] sm:$0xff]
    %v95 = vld [vmem:[#allocation2 + $0x88] sm:$0xff]
    %v96 = vld [vmem:[#allocation2 + $0x90] sm:$0xff]
    %v97 = vld [vmem:[#allocation2 + $0x98] sm:$0xff]
    %v98 = vld [vmem:[#allocation2 + $0xa0] sm:$0xff]
    %v99 = vld [vmem:[#allocation2 + $0xa8] sm:$0xff]
    %v100 = vld [vmem:[#allocation2 + $0xb0] sm:$0xff]
    %v101 = vld [vmem:[#allocation2 + $0xb8] sm:$0xff]
    %v102 = vld [vmem:[#allocation2 + $0xc0] sm:$0xff]
    %v103 = vld [vmem:[#allocation2 + $0xc8] sm:$0xff]
    %v104 = vld [vmem:[#allocation2 + $0xd0] sm:$0xff]
    %v105 = vld [vmem:[#allocation2 + $0xd8] sm:$0xff]
    %v106 = vld [vmem:[#allocation2 + $0xe0] sm:$0xff]
    %v107 = vld [vmem:[#allocation2 + $0xe8] sm:$0xff]
    %v108 = vld [vmem:[#allocation2 + $0xf0] sm:$0xff]
    %v109 = vld [vmem:[#allocation2 + $0xf8] sm:$0xff]
    %v110 = vld [vmem:[#allocation2 + $0x100] sm:$0xff]
    %v111 = vld [vmem:[#allocation2 + $0x108] sm:$0xff]
    %v112 = vld [vmem:[#allocation2 + $0x110] sm:$0xff]
    %v113 = vld [vmem:[#allocation2 + $0x118] sm:$0xff]
    %v114 = vld [vmem:[#allocation2 + $0x120] sm:$0xff]
    %v115 = vld [vmem:[#allocation2 + $0x128] sm:$0xff]
    %v116 = vld [vmem:[#allocation2 + $0x130] sm:$0xff]
    %v117 = vld [vmem:[#allocation2 + $0x138] sm:$0xff]
    %v118 = vld [vmem:[#allocation2 + $0x140] sm:$0xff]
    %v119 = vld [vmem:[#allocation2 + $0x148] sm:$0xff]
    %v120 = vld [vmem:[#allocation2 + $0x150] sm:$0xff]
    %v121 = vld [vmem:[#allocation2 + $0x158] sm:$0xff]
    %v122 = vld [vmem:[#allocation2 + $0x160] sm:$0xff]
    %v123 = vld [vmem:[#allocation2 + $0x168] sm:$0xff]
    %v124 = vld [vmem:[#allocation2 + $0x170] sm:$0xff]
    %v125 = vld [vmem:[#allocation2 + $0x178] sm:$0xff]
    %v126 = vld [vmem:[#allocation2 + $0x180] sm:$0xff]
    %v127 = vld [vmem:[#allocation2 + $0x188] sm:$0xff]
    %v128 = vld [vmem:[#allocation2 + $0x190] sm:$0xff]
    %v129 = vld [vmem:[#allocation2 + $0x198] sm:$0xff]
    %v130 = vld [vmem:[#allocation2 + $0x1a0] sm:$0xff]
    %v131 = vld [vmem:[#allocation2 + $0x1a8] sm:$0xff]
    %v132 = vld [vmem:[#allocation2 + $0x1b0] sm:$0xff]
    %v133 = vld [vmem:[#allocation2 + $0x1b8] sm:$0xff]
    %v134 = vld [vmem:[#allocation2 + $0x1c0] sm:$0xff]
    %v135 = vld [vmem:[#allocation2 + $0x1c8] sm:$0xff]
    %v136 = vld [vmem:[#allocation2 + $0x1d0] sm:$0xff]
    %v137 = vld [vmem:[#allocation2 + $0x1d8] sm:$0xff]
    %v138 = vld [vmem:[#allocation2 + $0x1e0] sm:$0xff]
    %v139 = vld [vmem:[#allocation2 + $0x1e8] sm:$0xff]
    %v140 = vld [vmem:[#allocation2 + $0x1f0] sm:$0xff]
    %v141 = vld [vmem:[#allocation2 + $0x1f8] sm:$0xff]
    %v142 = vld [vmem:[#allocation2 + $0x200] sm:$0xff]
    %v143 = vld [vmem:[#allocation2 + $0x208] sm:$0xff]
    %v144 = vld [vmem:[#allocation2 + $0x210] sm:$0xff]
    %v145 = vld [vmem:[#allocation2 + $0x218] sm:$0xff]
    %v146 = vld [vmem:[#allocation2 + $0x220] sm:$0xff]
    %v147 = vld [vmem:[#allocation2 + $0x228] sm:$0xff]
    %v148 = vld [vmem:[#allocation2 + $0x230] sm:$0xff]
    %v149 = vld [vmem:[#allocation2 + $0x238] sm:$0xff]
    %v150 = vld [vmem:[#allocation2 + $0x240] sm:$0xff]
    %v151 = vld [vmem:[#allocation2 + $0x248] sm:$0xff]
    %v152 = vld [vmem:[#allocation2 + $0x250] sm:$0xff]
    %v153 = vld [vmem:[#allocation2 + $0x258] sm:$0xff]
    %v154 = vld [vmem:[#allocation2 + $0x260] sm:$0xff]
    %v155 = vld [vmem:[#allocation2 + $0x268] sm:$0xff]
    %v156 = vld [vmem:[#allocation2 + $0x270] sm:$0xff]
    %v157 = vld [vmem:[#allocation2 + $0x278] sm:$0xff]
    %v158 = vld [vmem:[#allocation2 + $0x280] sm:$0xff]
    %v159 = vld [vmem:[#allocation2 + $0x288] sm:$0xff]
    %v160 = vld [vmem:[#allocation2 + $0x290] sm:$0xff]
    %v161 = vld [vmem:[#allocation2 + $0x298] sm:$0xff]
    %v162 = vld [vmem:[#allocation2 + $0x2a0] sm:$0xff]
    %v163 = vld [vmem:[#allocation2 + $0x2a8] sm:$0xff]
    %v164 = vld [vmem:[#allocation2 + $0x2b0] sm:$0xff]
    %v165 = vld [vmem:[#allocation2 + $0x2b8] sm:$0xff]
    %v166 = vld [vmem:[#allocation2 + $0x2c0] sm:$0xff]
    %v167 = vld [vmem:[#allocation2 + $0x2c8] sm:$0xff]
    %v168 = vld [vmem:[#allocation2 + $0x2d0] sm:$0xff]
    %v169 = vld [vmem:[#allocation2 + $0x2d8] sm:$0xff]
    %v170 = vld [vmem:[#allocation2 + $0x2e0] sm:$0xff]
    %v171 = vld [vmem:[#allocation2 + $0x2e8] sm:$0xff]
    %v172 = vld [vmem:[#allocation2 + $0x2f0] sm:$0xff]
    %v173 = vld [vmem:[#allocation2 + $0x2f8] sm:$0xff]
    %v174 = vld [vmem:[#allocation2 + $0x300] sm:$0xff]
    %v175 = vld [vmem:[#allocation2 + $0x308] sm:$0xff]
    %v176 = vld [vmem:[#allocation2 + $0x310] sm:$0xff]
    %v177 = vld [vmem:[#allocation2 + $0x318] sm:$0xff]
    %v178 = vld [vmem:[#allocation2 + $0x320] sm:$0xff]
    %v179 = vld [vmem:[#allocation2 + $0x328] sm:$0xff]
    %v180 = vld [vmem:[#allocation2 + $0x330] sm:$0xff]
    %v181 = vld [vmem:[#allocation2 + $0x338] sm:$0xff]
    %v182 = vld [vmem:[#allocation2 + $0x340] sm:$0xff]
    %v183 = vld [vmem:[#allocation2 + $0x348] sm:$0xff]
    %v184 = vld [vmem:[#allocation2 + $0x350] sm:$0xff]
    %v185 = vld [vmem:[#allocation2 + $0x358] sm:$0xff]
    %v186 = vld [vmem:[#allocation2 + $0x360] sm:$0xff]
    %v187 = vld [vmem:[#allocation2 + $0x368] sm:$0xff]
    %v188 = vld [vmem:[#allocation2 + $0x370] sm:$0xff]
    %v189 = vld [vmem:[#allocation2 + $0x378] sm:$0xff]
    %v190 = vld [vmem:[#allocation2 + $0x380] sm:$0xff]
    %v191 = vld [vmem:[#allocation2 + $0x388] sm:$0xff]
    %v192 = vld [vmem:[#allocation2 + $0x390] sm:$0xff]
    %v193 = vld [vmem:[#allocation2 + $0x398] sm:$0xff]
    %v194 = vld [vmem:[#allocation2 + $0x3a0] sm:$0xff]
    %v195 = vld [vmem:[#allocation2 + $0x3a8] sm:$0xff]
    %v196 = vld [vmem:[#allocation2 + $0x3b0] sm:$0xff]
    %v197 = vld [vmem:[#allocation2 + $0x3b8] sm:$0xff]
    %v198 = vld [vmem:[#allocation2 + $0x3c0] sm:$0xff]
    %v199 = vld [vmem:[#allocation2 + $0x3c8] sm:$0xff]
    %v200 = vld [vmem:[#allocation2 + $0x3d0] sm:$0xff]
    %v201 = vld [vmem:[#allocation2 + $0x3d8] sm:$0xff]
    %v202 = vld [vmem:[#allocation2 + $0x3e0] sm:$0xff]
    %v203 = vld [vmem:[#allocation2 + $0x3e8] sm:$0xff]
    %v204 = vld [vmem:[#allocation2 + $0x3f0] sm:$0xff]
    %v205 = vld [vmem:[#allocation2 + $0x3f8] sm:$0xff]
    %v206 = vld [vmem:[#allocation2 + $0x400] sm:$0xff]
    %v207 = vld [vmem:[#allocation2 + $0x408] sm:$0xff]
    %v208 = vld [vmem:[#allocation2 + $0x410] sm:$0xff]
    %v209 = vld [vmem:[#allocation2 + $0x418] sm:$0xff]
    %v210 = vld [vmem:[#allocation2 + $0x420] sm:$0xff]
    %v211 = vld [vmem:[#allocation2 + $0x428] sm:$0xff]
    %v212 = vld [vmem:[#allocation2 + $0x430] sm:$0xff]
    %v213 = vld [vmem:[#allocation2 + $0x438] sm:$0xff]
    %v214 = vld [vmem:[#allocation2 + $0x440] sm:$0xff]
    %v215 = vld [vmem:[#allocation2 + $0x448] sm:$0xff]
    %v216 = vld [vmem:[#allocation2 + $0x450] sm:$0xff]
    %v217 = vld [vmem:[#allocation2 + $0x458] sm:$0xff]
    %v218 = vld [vmem:[#allocation2 + $0x460] sm:$0xff]
    %v219 = vld [vmem:[#allocation2 + $0x468] sm:$0xff]
    %v220 = vld [vmem:[#allocation2 + $0x470] sm:$0xff]
    %v221 = vld [vmem:[#allocation2 + $0x478] sm:$0xff]
    %v222 = vld [vmem:[#allocation2 + $0x480] sm:$0xff]
    %v223 = vld [vmem:[#allocation2 + $0x488] sm:$0xff]
    %v224 = vld [vmem:[#allocation2 + $0x490] sm:$0xff]
    %v225 = vld [vmem:[#allocation2 + $0x498] sm:$0xff]
    %v226 = vld [vmem:[#allocation2 + $0x4a0] sm:$0xff]
    %v227 = vld [vmem:[#allocation2 + $0x4a8] sm:$0xff]
    %v228 = vld [vmem:[#allocation2 + $0x4b0] sm:$0xff]
    %v229 = vld [vmem:[#allocation2 + $0x4b8] sm:$0xff]
    %v230 = vld [vmem:[#allocation2 + $0x4c0] sm:$0xff]
    %v231 = vld [vmem:[#allocation2 + $0x4c8] sm:$0xff]
    %v232 = vld [vmem:[#allocation2 + $0x4d0] sm:$0xff]
    %v233 = vld [vmem:[#allocation2 + $0x4d8] sm:$0xff]
    %v234 = vld [vmem:[#allocation2 + $0x4e0] sm:$0xff]
    %v235 = vld [vmem:[#allocation2 + $0x4e8] sm:$0xff]
    %v236 = vld [vmem:[#allocation2 + $0x4f0] sm:$0xff]
    %v237 = vld [vmem:[#allocation2 + $0x4f8] sm:$0xff]
    %v238 = vld [vmem:[#allocation2 + $0x500] sm:$0xff]
    %v239 = vld [vmem:[#allocation2 + $0x508] sm:$0xff]
    %v240 = vld [vmem:[#allocation2 + $0x510] sm:$0xff]
    %v241 = vld [vmem:[#allocation2 + $0x518] sm:$0xff]
    %v242 = vld [vmem:[#allocation2 + $0x520] sm:$0xff]
    %v243 = vld [vmem:[#allocation2 + $0x528] sm:$0xff]
    %v244 = vld [vmem:[#allocation2 + $0x530] sm:$0xff]
    %v245 = vld [vmem:[#allocation2 + $0x538] sm:$0xff]
    %v246 = vld [vmem:[#allocation2 + $0x540] sm:$0xff]
    %v247 = vld [vmem:[#allocation2 + $0x548] sm:$0xff]
    %v248 = vld [vmem:[#allocation2 + $0x550] sm:$0xff]
    %v249 = vld [vmem:[#allocation2 + $0x558] sm:$0xff]
    %v250 = vld [vmem:[#allocation2 + $0x560] sm:$0xff]
    %v251 = vld [vmem:[#allocation2 + $0x568] sm:$0xff]
    %v252 = vld [vmem:[#allocation2 + $0x570] sm:$0xff]
    %v253 = vld [vmem:[#allocation2 + $0x578] sm:$0xff]
    %v254 = vld [vmem:[#allocation2 + $0x580] sm:$0xff]
    %v255 = vld [vmem:[#allocation2 + $0x588] sm:$0xff]
    %v256 = vld [vmem:[#allocation2 + $0x590] sm:$0xff]
    %v257 = vld [vmem:[#allocation2 + $0x598] sm:$0xff]
    %v258 = vld [vmem:[#allocation2 + $0x5a0] sm:$0xff]
    %v259 = vld [vmem:[#allocation2 + $0x5a8] sm:$0xff]
    %v260 = vld [vmem:[#allocation2 + $0x5b0] sm:$0xff]
    %v261 = vld [vmem:[#allocation2 + $0x5b8] sm:$0xff]
    %v262 = vld [vmem:[#allocation2 + $0x5c0] sm:$0xff]
    %v263 = vld [vmem:[#allocation2 + $0x5c8] sm:$0xff]
    %v264 = vld [vmem:[#allocation2 + $0x5d0] sm:$0xff]
    %v265 = vld [vmem:[#allocation2 + $0x5d8] sm:$0xff]
    %v266 = vld [vmem:[#allocation2 + $0x5e0] sm:$0xff]
    %v267 = vld [vmem:[#allocation2 + $0x5e8] sm:$0xff]
    %v268 = vld [vmem:[#allocation2 + $0x5f0] sm:$0xff]
    %v269 = vld [vmem:[#allocation2 + $0x5f8] sm:$0xff]
    %v270 = vld [vmem:[#allocation2 + $0x600] sm:$0xff]
    %v271 = vld [vmem:[#allocation2 + $0x608] sm:$0xff]
    %v272 = vld [vmem:[#allocation2 + $0x610] sm:$0xff]
    %v273 = vld [vmem:[#allocation2 + $0x618] sm:$0xff]
    %v274 = vld [vmem:[#allocation2 + $0x620] sm:$0xff]
    %v275 = vld [vmem:[#allocation2 + $0x628] sm:$0xff]
    %v276 = vld [vmem:[#allocation2 + $0x630] sm:$0xff]
    %v277 = vld [vmem:[#allocation2 + $0x638] sm:$0xff]
    %v278 = vld [vmem:[#allocation2 + $0x640] sm:$0xff]
    %v279 = vld [vmem:[#allocation2 + $0x648] sm:$0xff]
    %v280 = vld [vmem:[#allocation2 + $0x650] sm:$0xff]
    %v281 = vld [vmem:[#allocation2 + $0x658] sm:$0xff]
    %v282 = vld [vmem:[#allocation2 + $0x660] sm:$0xff]
    %v283 = vld [vmem:[#allocation2 + $0x668] sm:$0xff]
    %v284 = vld [vmem:[#allocation2 + $0x670] sm:$0xff]
    %v285 = vld [vmem:[#allocation2 + $0x678] sm:$0xff]
    %v286 = vld [vmem:[#allocation2 + $0x680] sm:$0xff]
    %v287 = vld [vmem:[#allocation2 + $0x688] sm:$0xff]
    %v288 = vld [vmem:[#allocation2 + $0x690] sm:$0xff]
    %v289 = vld [vmem:[#allocation2 + $0x698] sm:$0xff]
    %v290 = vld [vmem:[#allocation2 + $0x6a0] sm:$0xff]
    %v291 = vld [vmem:[#allocation2 + $0x6a8] sm:$0xff]
    %v292 = vld [vmem:[#allocation2 + $0x6b0] sm:$0xff]
    %v293 = vld [vmem:[#allocation2 + $0x6b8] sm:$0xff]
    %v294 = vld [vmem:[#allocation2 + $0x6c0] sm:$0xff]
    %v295 = vld [vmem:[#allocation2 + $0x6c8] sm:$0xff]
    %v296 = vld [vmem:[#allocation2 + $0x6d0] sm:$0xff]
    %v297 = vld [vmem:[#allocation2 + $0x6d8] sm:$0xff]
    %v298 = vld [vmem:[#allocation2 + $0x6e0] sm:$0xff]
    %v299 = vld [vmem:[#allocation2 + $0x6e8] sm:$0xff]
    %v300 = vld [vmem:[#allocation2 + $0x6f0] sm:$0xff]
    %v301 = vld [vmem:[#allocation2 + $0x6f8] sm:$0xff]
    %v302 = vld [vmem:[#allocation2 + $0x700] sm:$0xff]
    %v303 = vld [vmem:[#allocation2 + $0x708] sm:$0xff]
    %v304 = vld [vmem:[#allocation2 + $0x710] sm:$0xff]
    %v305 = vld [vmem:[#allocation2 + $0x718] sm:$0xff]
    %v306 = vld [vmem:[#allocation2 + $0x720] sm:$0xff]
    %v307 = vld [vmem:[#allocation2 + $0x728] sm:$0xff]
    %v308 = vld [vmem:[#allocation2 + $0x730] sm:$0xff]
    %v309 = vld [vmem:[#allocation2 + $0x738] sm:$0xff]
    %v310 = vld [vmem:[#allocation2 + $0x740] sm:$0xff]
    %v311 = vld [vmem:[#allocation2 + $0x748] sm:$0xff]
    %v312 = vld [vmem:[#allocation2 + $0x750] sm:$0xff]
    %v313 = vld [vmem:[#allocation2 + $0x758] sm:$0xff]
    %v314 = vld [vmem:[#allocation2 + $0x760] sm:$0xff]
    %v315 = vld [vmem:[#allocation2 + $0x768] sm:$0xff]
    %v316 = vld [vmem:[#allocation2 + $0x770] sm:$0xff]
    %v317 = vld [vmem:[#allocation2 + $0x778] sm:$0xff]
    %v318 = vld [vmem:[#allocation2 + $0x780] sm:$0xff]
    %v319 = vld [vmem:[#allocation2 + $0x788] sm:$0xff]
    %v320 = vld [vmem:[#allocation2 + $0x790] sm:$0xff]
    %v321 = vld [vmem:[#allocation2 + $0x798] sm:$0xff]
    %v322 = vld [vmem:[#allocation2 + $0x7a0] sm:$0xff]
    %v323 = vld [vmem:[#allocation2 + $0x7a8] sm:$0xff]
    %v324 = vld [vmem:[#allocation2 + $0x7b0] sm:$0xff]
    %v325 = vld [vmem:[#allocation2 + $0x7b8] sm:$0xff]
    %v326 = vld [vmem:[#allocation2 + $0x7c0] sm:$0xff]
    %v327 = vld [vmem:[#allocation2 + $0x7c8] sm:$0xff]
    %v328 = vld [vmem:[#allocation2 + $0x7d0] sm:$0xff]
    %v329 = vld [vmem:[#allocation2 + $0x7d8] sm:$0xff]
    %v330 = vld [vmem:[#allocation2 + $0x7e0] sm:$0xff]
    %v331 = vld [vmem:[#allocation2 + $0x7e8] sm:$0xff]
    %v332 = vld [vmem:[#allocation2 + $0x7f0] sm:$0xff]
    %v333 = vld [vmem:[#allocation2 + $0x7f8] sm:$0xff]
    %v334 = vld [vmem:[#allocation2 + $0x800] sm:$0xff]
    %v335 = vld [vmem:[#allocation2 + $0x808] sm:$0xff]
    %v336 = vld [vmem:[#allocation2 + $0x810] sm:$0xff]
    %v337 = vld [vmem:[#allocation2 + $0x818] sm:$0xff]
    %v338 = vld [vmem:[#allocation2 + $0x820] sm:$0xff]
    %v339 = vld [vmem:[#allocation2 + $0x828] sm:$0xff]
    %v340 = vld [vmem:[#allocation2 + $0x830] sm:$0xff]
    %v341 = vld [vmem:[#allocation2 + $0x838] sm:$0xff]
    %v342 = vld [vmem:[#allocation2 + $0x840] sm:$0xff]
    %v343 = vld [vmem:[#allocation2 + $0x848] sm:$0xff]
    %v344 = vld [vmem:[#allocation2 + $0x850] sm:$0xff]
    %v345 = vld [vmem:[#allocation2 + $0x858] sm:$0xff]
    %v346 = vld [vmem:[#allocation2 + $0x860] sm:$0xff]
    %v347 = vld [vmem:[#allocation2 + $0x868] sm:$0xff]
    %v348 = vld [vmem:[#allocation2 + $0x870] sm:$0xff]
    %v349 = vld [vmem:[#allocation2 + $0x878] sm:$0xff]
    %v350 = vld [vmem:[#allocation2 + $0x880] sm:$0xff]
    %v351 = vld [vmem:[#allocation2 + $0x888] sm:$0xff]
    %v352 = vld [vmem:[#allocation2 + $0x890] sm:$0xff]
    %v353 = vld [vmem:[#allocation2 + $0x898] sm:$0xff]
    %v354 = vld [vmem:[#allocation2 + $0x8a0] sm:$0xff]
    %v355 = vld [vmem:[#allocation2 + $0x8a8] sm:$0xff]
    %v356 = vld [vmem:[#allocation2 + $0x8b0] sm:$0xff]
    %v357 = vld [vmem:[#allocation2 + $0x8b8] sm:$0xff]
    %v358 = vld [vmem:[#allocation2 + $0x8c0] sm:$0xff]
    %v359 = vld [vmem:[#allocation2 + $0x8c8] sm:$0xff]
    %v360 = vld [vmem:[#allocation2 + $0x8d0] sm:$0xff]
    %v361 = vld [vmem:[#allocation2 + $0x8d8] sm:$0xff]
    %v362 = vld [vmem:[#allocation2 + $0x8e0] sm:$0xff]
    %v363 = vld [vmem:[#allocation2 + $0x8e8] sm:$0xff]
    %v364 = vld [vmem:[#allocation2 + $0x8f0] sm:$0xff]
    %v365 = vld [vmem:[#allocation2 + $0x8f8] sm:$0xff]
    %v366 = vld [vmem:[#allocation2 + $0x900] sm:$0xff]
    %v367 = vld [vmem:[#allocation2 + $0x908] sm:$0xff]
    %v368 = vld [vmem:[#allocation2 + $0x910] sm:$0xff]
    %v369 = vld [vmem:[#allocation2 + $0x918] sm:$0xff]
    %v370 = vld [vmem:[#allocation2 + $0x920] sm:$0xff]
    %v371 = vld [vmem:[#allocation2 + $0x928] sm:$0xff]
    %v372 = vld [vmem:[#allocation2 + $0x930] sm:$0xff]
    %v373 = vld [vmem:[#allocation2 + $0x938] sm:$0xff]
    %v374 = vld [vmem:[#allocation2 + $0x940] sm:$0xff]
    %v375 = vld [vmem:[#allocation2 + $0x948] sm:$0xff]
    %v376 = vld [vmem:[#allocation2 + $0x950] sm:$0xff]
    %v377 = vld [vmem:[#allocation2 + $0x958] sm:$0xff]
    %v378 = vld [vmem:[#allocation2 + $0x960] sm:$0xff]
    %v379 = vld [vmem:[#allocation2 + $0x968] sm:$0xff]
    %v380 = vld [vmem:[#allocation2 + $0x970] sm:$0xff]
    %v381 = vld [vmem:[#allocation2 + $0x978] sm:$0xff]
    %v382 = vld [vmem:[#allocation2 + $0x980] sm:$0xff]
    %v383 = vld [vmem:[#allocation2 + $0x988] sm:$0xff]
    %v384 = vld [vmem:[#allocation2 + $0x990] sm:$0xff]
    %v385 = vld [vmem:[#allocation2 + $0x998] sm:$0xff]
    %v386 = vld [vmem:[#allocation2 + $0x9a0] sm:$0xff]
    %v387 = vld [vmem:[#allocation2 + $0x9a8] sm:$0xff]
    %v388 = vld [vmem:[#allocation2 + $0x9b0] sm:$0xff]
    %v389 = vld [vmem:[#allocation2 + $0x9b8] sm:$0xff]
    %v390 = vld [vmem:[#allocation2 + $0x9c0] sm:$0xff]
    %v391 = vld [vmem:[#allocation2 + $0x9c8] sm:$0xff]
    %v392 = vld [vmem:[#allocation2 + $0x9d0] sm:$0xff]
    %v393 = vld [vmem:[#allocation2 + $0x9d8] sm:$0xff]
    %v394 = vld [vmem:[#allocation2 + $0x9e0] sm:$0xff]
    %v395 = vld [vmem:[#allocation2 + $0x9e8] sm:$0xff]
    %v396 = vld [vmem:[#allocation2 + $0x9f0] sm:$0xff]
    %v397 = vld [vmem:[#allocation2 + $0x9f8] sm:$0xff]
    %v398 = vld [vmem:[#allocation2 + $0xa00] sm:$0xff]
    %v399 = vld [vmem:[#allocation2 + $0xa08] sm:$0xff]
    %v400 = vld [vmem:[#allocation2 + $0xa10] sm:$0xff]
    %v401 = vld [vmem:[#allocation2 + $0xa18] sm:$0xff]
    %v402 = vld [vmem:[#allocation2 + $0xa20] sm:$0xff]
    %v403 = vld [vmem:[#allocation2 + $0xa28] sm:$0xff]
    %v404 = vld [vmem:[#allocation2 + $0xa30] sm:$0xff]
    %v405 = vld [vmem:[#allocation2 + $0xa38] sm:$0xff]
    %v406 = vld [vmem:[#allocation2 + $0xa40] sm:$0xff]
    %v407 = vld [vmem:[#allocation2 + $0xa48] sm:$0xff]
    %v408 = vld [vmem:[#allocation2 + $0xa50] sm:$0xff]
    %v409 = vld [vmem:[#allocation2 + $0xa58] sm:$0xff]
    %v410 = vld [vmem:[#allocation2 + $0xa60] sm:$0xff]
    %v411 = vld [vmem:[#allocation2 + $0xa68] sm:$0xff]
    %v412 = vld [vmem:[#allocation2 + $0xa70] sm:$0xff]
    %v413 = vld [vmem:[#allocation2 + $0xa78] sm:$0xff]
    %v414 = vld [vmem:[#allocation2 + $0xa80] sm:$0xff]
    %v415 = vld [vmem:[#allocation2 + $0xa88] sm:$0xff]
    %v416 = vld [vmem:[#allocation2 + $0xa90] sm:$0xff]
    %v417 = vld [vmem:[#allocation2 + $0xa98] sm:$0xff]
    %v418 = vld [vmem:[#allocation2 + $0xaa0] sm:$0xff]
    %v419 = vld [vmem:[#allocation2 + $0xaa8] sm:$0xff]
    %v420 = vld [vmem:[#allocation2 + $0xab0] sm:$0xff]
    %v421 = vld [vmem:[#allocation2 + $0xab8] sm:$0xff]
    %v422 = vld [vmem:[#allocation2 + $0xac0] sm:$0xff]
    %v423 = vld [vmem:[#allocation2 + $0xac8] sm:$0xff]
    %v424 = vld [vmem:[#allocation2 + $0xad0] sm:$0xff]
    %v425 = vld [vmem:[#allocation2 + $0xad8] sm:$0xff]
    %v426 = vld [vmem:[#allocation2 + $0xae0] sm:$0xff]
    %v427 = vld [vmem:[#allocation2 + $0xae8] sm:$0xff]
    %v428 = vld [vmem:[#allocation2 + $0xaf0] sm:$0xff]
    %v429 = vld [vmem:[#allocation2 + $0xaf8] sm:$0xff]
    %v430 = vld [vmem:[#allocation2 + $0xb00] sm:$0xff]
    %v431 = vld [vmem:[#allocation2 + $0xb08] sm:$0xff]
    %v432 = vld [vmem:[#allocation2 + $0xb10] sm:$0xff]
    %v433 = vld [vmem:[#allocation2 + $0xb18] sm:$0xff]
    %v434 = vld [vmem:[#allocation2 + $0xb20] sm:$0xff]
    %v435 = vld [vmem:[#allocation2 + $0xb28] sm:$0xff]
    %v436 = vld [vmem:[#allocation2 + $0xb30] sm:$0xff]
    %v437 = vld [vmem:[#allocation2 + $0xb38] sm:$0xff]
    %v438 = vld [vmem:[#allocation2 + $0xb40] sm:$0xff]
    %v439 = vld [vmem:[#allocation2 + $0xb48] sm:$0xff]
    %v440 = vld [vmem:[#allocation2 + $0xb50] sm:$0xff]
    %v441 = vld [vmem:[#allocation2 + $0xb58] sm:$0xff]
    %v442 = vld [vmem:[#allocation2 + $0xb60] sm:$0xff]
    %v443 = vld [vmem:[#allocation2 + $0xb68] sm:$0xff]
    %v444 = vld [vmem:[#allocation2 + $0xb70] sm:$0xff]
    %v445 = vld [vmem:[#allocation2 + $0xb78] sm:$0xff]
    %v446 = vld [vmem:[#allocation2 + $0xb80] sm:$0xff]
    %v447 = vld [vmem:[#allocation2 + $0xb88] sm:$0xff]
    %v448 = vld [vmem:[#allocation2 + $0xb90] sm:$0xff]
    %v449 = vld [vmem:[#allocation2 + $0xb98] sm:$0xff]
    %v450 = vld [vmem:[#allocation2 + $0xba0] sm:$0xff]
    %v451 = vld [vmem:[#allocation2 + $0xba8] sm:$0xff]
    %v452 = vld [vmem:[#allocation2 + $0xbb0] sm:$0xff]
    %v453 = vld [vmem:[#allocation2 + $0xbb8] sm:$0xff]
    %v454 = vld [vmem:[#allocation2 + $0xbc0] sm:$0xff]
    %v455 = vld [vmem:[#allocation2 + $0xbc8] sm:$0xff]
    %v456 = vld [vmem:[#allocation2 + $0xbd0] sm:$0xff]
    %v457 = vld [vmem:[#allocation2 + $0xbd8] sm:$0xff]
    %v458 = vld [vmem:[#allocation2 + $0xbe0] sm:$0xff]
    %v459 = vld [vmem:[#allocation2 + $0xbe8] sm:$0xff]
    %v460 = vld [vmem:[#allocation2 + $0xbf0] sm:$0xff]
    %v461 = vld [vmem:[#allocation2 + $0xbf8] sm:$0xff]
    %v462 = vld [vmem:[#allocation2 + $0xc00] sm:$0xff]
    %v463 = vld [vmem:[#allocation2 + $0xc08] sm:$0xff]
    %v464 = vld [vmem:[#allocation2 + $0xc10] sm:$0xff]
    %v465 = vld [vmem:[#allocation2 + $0xc18] sm:$0xff]
    %v466 = vld [vmem:[#allocation2 + $0xc20] sm:$0xff]
    %v467 = vld [vmem:[#allocation2 + $0xc28] sm:$0xff]
    %v468 = vld [vmem:[#allocation2 + $0xc30] sm:$0xff]
    %v469 = vld [vmem:[#allocation2 + $0xc38] sm:$0xff]
    %v470 = vld [vmem:[#allocation2 + $0xc40] sm:$0xff]
    %v471 = vld [vmem:[#allocation2 + $0xc48] sm:$0xff]
    %v472 = vld [vmem:[#allocation2 + $0xc50] sm:$0xff]
    %v473 = vld [vmem:[#allocation2 + $0xc58] sm:$0xff]
    %v474 = vld [vmem:[#allocation2 + $0xc60] sm:$0xff]
    %v475 = vld [vmem:[#allocation2 + $0xc68] sm:$0xff]
    %v476 = vld [vmem:[#allocation2 + $0xc70] sm:$0xff]
    %v477 = vld [vmem:[#allocation2 + $0xc78] sm:$0xff]
    %v478 = vld [vmem:[#allocation2 + $0xc80] sm:$0xff]
    %v479 = vld [vmem:[#allocation2 + $0xc88] sm:$0xff]
    %v480 = vld [vmem:[#allocation2 + $0xc90] sm:$0xff]
    %v481 = vld [vmem:[#allocation2 + $0xc98] sm:$0xff]
    %v482 = vld [vmem:[#allocation2 + $0xca0] sm:$0xff]
    %v483 = vld [vmem:[#allocation2 + $0xca8] sm:$0xff]
    %v484 = vld [vmem:[#allocation2 + $0xcb0] sm:$0xff]
    %v485 = vld [vmem:[#allocation2 + $0xcb8] sm:$0xff]
    %v486 = vld [vmem:[#allocation2 + $0xcc0] sm:$0xff]
    %v487 = vld [vmem:[#allocation2 + $0xcc8] sm:$0xff]
    %v488 = vld [vmem:[#allocation2 + $0xcd0] sm:$0xff]
    %v489 = vld [vmem:[#allocation2 + $0xcd8] sm:$0xff]
    %v490 = vld [vmem:[#allocation2 + $0xce0] sm:$0xff]
    %v491 = vld [vmem:[#allocation2 + $0xce8] sm:$0xff]
    %v492 = vld [vmem:[#allocation2 + $0xcf0] sm:$0xff]
    %v493 = vld [vmem:[#allocation2 + $0xcf8] sm:$0xff]
    %v494 = vld [vmem:[#allocation2 + $0xd00] sm:$0xff]
    %v495 = vld [vmem:[#allocation2 + $0xd08] sm:$0xff]
    %v496 = vld [vmem:[#allocation2 + $0xd10] sm:$0xff]
    %v497 = vld [vmem:[#allocation2 + $0xd18] sm:$0xff]
    %v498 = vld [vmem:[#allocation2 + $0xd20] sm:$0xff]
    %v499 = vld [vmem:[#allocation2 + $0xd28] sm:$0xff]
    %v500 = vld [vmem:[#allocation2 + $0xd30] sm:$0xff]
    %v501 = vld [vmem:[#allocation2 + $0xd38] sm:$0xff]
    %v502 = vld [vmem:[#allocation2 + $0xd40] sm:$0xff]
    %v503 = vld [vmem:[#allocation2 + $0xd48] sm:$0xff]
    %v504 = vld [vmem:[#allocation2 + $0xd50] sm:$0xff]
    %v505 = vld [vmem:[#allocation2 + $0xd58] sm:$0xff]
    %v506 = vld [vmem:[#allocation2 + $0xd60] sm:$0xff]
    %v507 = vld [vmem:[#allocation2 + $0xd68] sm:$0xff]
    %v508 = vld [vmem:[#allocation2 + $0xd70] sm:$0xff]
    %v509 = vld [vmem:[#allocation2 + $0xd78] sm:$0xff]
    %v510 = vld [vmem:[#allocation2 + $0xd80] sm:$0xff]
    %v511 = vld [vmem:[#allocation2 + $0xd88] sm:$0xff]
    %v512 = vld [vmem:[#allocation2 + $0xd90] sm:$0xff]
    %v513 = vld [vmem:[#allocation2 + $0xd98] sm:$0xff]
    %v514 = vld [vmem:[#allocation2 + $0xda0] sm:$0xff]
    %v515 = vld [vmem:[#allocation2 + $0xda8] sm:$0xff]
    %v516 = vld [vmem:[#allocation2 + $0xdb0] sm:$0xff]
    %v517 = vld [vmem:[#allocation2 + $0xdb8] sm:$0xff]
    %v518 = vld [vmem:[#allocation2 + $0xdc0] sm:$0xff]
    %v519 = vld [vmem:[#allocation2 + $0xdc8] sm:$0xff]
    %v520 = vld [vmem:[#allocation2 + $0xdd0] sm:$0xff]
    %v521 = vld [vmem:[#allocation2 + $0xdd8] sm:$0xff]
    %v522 = vld [vmem:[#allocation2 + $0xde0] sm:$0xff]
    %v523 = vld [vmem:[#allocation2 + $0xde8] sm:$0xff]
    %v524 = vld [vmem:[#allocation2 + $0xdf0] sm:$0xff]
    %v525 = vld [vmem:[#allocation2 + $0xdf8] sm:$0xff]
    %v526 = vld [vmem:[#allocation2 + $0xe00] sm:$0xff]
    %v527 = vld [vmem:[#allocation2 + $0xe08] sm:$0xff]
    %v528 = vld [vmem:[#allocation2 + $0xe10] sm:$0xff]
    %v529 = vld [vmem:[#allocation2 + $0xe18] sm:$0xff]
    %v530 = vld [vmem:[#allocation2 + $0xe20] sm:$0xff]
    %v531 = vld [vmem:[#allocation2 + $0xe28] sm:$0xff]
    %v532 = vld [vmem:[#allocation2 + $0xe30] sm:$0xff]
    %v533 = vld [vmem:[#allocation2 + $0xe38] sm:$0xff]
    %v534 = vld [vmem:[#allocation2 + $0xe40] sm:$0xff]
    %v535 = vld [vmem:[#allocation2 + $0xe48] sm:$0xff]
    %v536 = vld [vmem:[#allocation2 + $0xe50] sm:$0xff]
    %v537 = vld [vmem:[#allocation2 + $0xe58] sm:$0xff]
    %v538 = vld [vmem:[#allocation2 + $0xe60] sm:$0xff]
    %v539 = vld [vmem:[#allocation2 + $0xe68] sm:$0xff]
    %v540 = vld [vmem:[#allocation2 + $0xe70] sm:$0xff]
    %v541 = vld [vmem:[#allocation2 + $0xe78] sm:$0xff]
    %v542 = vld [vmem:[#allocation2 + $0xe80] sm:$0xff]
    %v543 = vld [vmem:[#allocation2 + $0xe88] sm:$0xff]
    %v544 = vld [vmem:[#allocation2 + $0xe90] sm:$0xff]
    %v545 = vld [vmem:[#allocation2 + $0xe98] sm:$0xff]
    %v546 = vld [vmem:[#allocation2 + $0xea0] sm:$0xff]
    %v547 = vld [vmem:[#allocation2 + $0xea8] sm:$0xff]
    %v548 = vld [vmem:[#allocation2 + $0xeb0] sm:$0xff]
    %v549 = vld [vmem:[#allocation2 + $0xeb8] sm:$0xff]
    %v550 = vld [vmem:[#allocation2 + $0xec0] sm:$0xff]
    %v551 = vld [vmem:[#allocation2 + $0xec8] sm:$0xff]
    %v552 = vld [vmem:[#allocation2 + $0xed0] sm:$0xff]
    %v553 = vld [vmem:[#allocation2 + $0xed8] sm:$0xff]
    %v554 = vld [vmem:[#allocation2 + $0xee0] sm:$0xff]
    %v555 = vld [vmem:[#allocation2 + $0xee8] sm:$0xff]
    %v556 = vld [vmem:[#allocation2 + $0xef0] sm:$0xff]
    %v557 = vld [vmem:[#allocation2 + $0xef8] sm:$0xff]
    %v558 = vld [vmem:[#allocation2 + $0xf00] sm:$0xff]
    %v559 = vld [vmem:[#allocation2 + $0xf08] sm:$0xff]
    %v560 = vld [vmem:[#allocation2 + $0xf10] sm:$0xff]
    %v561 = vld [vmem:[#allocation2 + $0xf18] sm:$0xff]
    %v562 = vld [vmem:[#allocation2 + $0xf20] sm:$0xff]
    %v563 = vld [vmem:[#allocation2 + $0xf28] sm:$0xff]
    %v564 = vld [vmem:[#allocation2 + $0xf30] sm:$0xff]
    %v565 = vld [vmem:[#allocation2 + $0xf38] sm:$0xff]
    %v566 = vld [vmem:[#allocation2 + $0xf40] sm:$0xff]
    %v567 = vld [vmem:[#allocation2 + $0xf48] sm:$0xff]
    %v568 = vld [vmem:[#allocation2 + $0xf50] sm:$0xff]
    %v569 = vld [vmem:[#allocation2 + $0xf58] sm:$0xff]
    %v570 = vld [vmem:[#allocation2 + $0xf60] sm:$0xff]
    %v571 = vld [vmem:[#allocation2 + $0xf68] sm:$0xff]
    %v572 = vld [vmem:[#allocation2 + $0xf70] sm:$0xff]
    %v573 = vld [vmem:[#allocation2 + $0xf78] sm:$0xff]
    %v574 = vld [vmem:[#allocation2 + $0xf80] sm:$0xff]
    %v575 = vld [vmem:[#allocation2 + $0xf88] sm:$0xff]
    %v576 = vld [vmem:[#allocation2 + $0xf90] sm:$0xff]
    %v577 = vld [vmem:[#allocation2 + $0xf98] sm:$0xff]
    %v578 = vld [vmem:[#allocation2 + $0xfa0] sm:$0xff]
    %v579 = vld [vmem:[#allocation2 + $0xfa8] sm:$0xff]
    %v580 = vld [vmem:[#allocation2 + $0xfb0] sm:$0xff]
    %v581 = vld [vmem:[#allocation2 + $0xfb8] sm:$0xff]
    %v582 = vld [vmem:[#allocation2 + $0xfc0] sm:$0xff]
    %v583 = vld [vmem:[#allocation2 + $0xfc8] sm:$0xff]
    %v584 = vld [vmem:[#allocation2 + $0xfd0] sm:$0xff]
    %v585 = vld [vmem:[#allocation2 + $0xfd8] sm:$0xff]
    %v586 = vld [vmem:[#allocation2 + $0xfe0] sm:$0xff]
    %v587 = vld [vmem:[#allocation2 + $0xfe8] sm:$0xff]
    %v588 = vld [vmem:[#allocation2 + $0xff0] sm:$0xff]
    %v589 = vld [vmem:[#allocation2 + $0xff8] sm:$0xff]
    %v590 = vld [vmem:[#allocation2 + $0x1000] sm:$0xff]
    %v591 = vld [vmem:[#allocation2 + $0x1008] sm:$0xff]
    %v592 = vld [vmem:[#allocation2 + $0x1010] sm:$0xff]
    %v593 = vld [vmem:[#allocation2 + $0x1018] sm:$0xff]
    %v594 = vld [vmem:[#allocation2 + $0x1020] sm:$0xff]
    %v595 = vld [vmem:[#allocation2 + $0x1028] sm:$0xff]
    %v596 = vld [vmem:[#allocation2 + $0x1030] sm:$0xff]
    %v597 = vld [vmem:[#allocation2 + $0x1038] sm:$0xff]
    %v598 = vld [vmem:[#allocation2 + $0x1040] sm:$0xff]
    %v599 = vld [vmem:[#allocation2 + $0x1048] sm:$0xff]
    %v600 = vld [vmem:[#allocation2 + $0x1050] sm:$0xff]
    %v601 = vld [vmem:[#allocation2 + $0x1058] sm:$0xff]
    %v602 = vld [vmem:[#allocation2 + $0x1060] sm:$0xff]
    %v603 = vld [vmem:[#allocation2 + $0x1068] sm:$0xff]
    %v604 = vld [vmem:[#allocation2 + $0x1070] sm:$0xff]
    %v605 = vld [vmem:[#allocation2 + $0x1078] sm:$0xff]
    %v606 = vld [vmem:[#allocation2 + $0x1080] sm:$0xff]
    %v607 = vld [vmem:[#allocation2 + $0x1088] sm:$0xff]
    %v608 = vld [vmem:[#allocation2 + $0x1090] sm:$0xff]
    %v609 = vld [vmem:[#allocation2 + $0x1098] sm:$0xff]
    %v610 = vld [vmem:[#allocation2 + $0x10a0] sm:$0xff]
    %v611 = vld [vmem:[#allocation2 + $0x10a8] sm:$0xff]
    %v612 = vld [vmem:[#allocation2 + $0x10b0] sm:$0xff]
    %v613 = vld [vmem:[#allocation2 + $0x10b8] sm:$0xff]
    %v614 = vld [vmem:[#allocation2 + $0x10c0] sm:$0xff]
    %v615 = vld [vmem:[#allocation2 + $0x10c8] sm:$0xff]
    %v616 = vld [vmem:[#allocation2 + $0x10d0] sm:$0xff]
    %v617 = vld [vmem:[#allocation2 + $0x10d8] sm:$0xff]
    %v618 = vld [vmem:[#allocation2 + $0x10e0] sm:$0xff]
    %v619 = vld [vmem:[#allocation2 + $0x10e8] sm:$0xff]
    %v620 = vld [vmem:[#allocation2 + $0x10f0] sm:$0xff]
    %v621 = vld [vmem:[#allocation2 + $0x10f8] sm:$0xff]
    %v622 = vld [vmem:[#allocation2 + $0x1100] sm:$0xff]
    %v623 = vld [vmem:[#allocation2 + $0x1108] sm:$0xff]
    %v624 = vld [vmem:[#allocation2 + $0x1110] sm:$0xff]
    %v625 = vld [vmem:[#allocation2 + $0x1118] sm:$0xff]
    %v626 = vld [vmem:[#allocation2 + $0x1120] sm:$0xff]
    %v627 = vld [vmem:[#allocation2 + $0x1128] sm:$0xff]
    %v628 = vld [vmem:[#allocation2 + $0x1130] sm:$0xff]
    %v629 = vld [vmem:[#allocation2 + $0x1138] sm:$0xff]
    %v630 = vld [vmem:[#allocation2 + $0x1140] sm:$0xff]
    %v631 = vld [vmem:[#allocation2 + $0x1148] sm:$0xff]
    %v632 = vld [vmem:[#allocation2 + $0x1150] sm:$0xff]
    %v633 = vld [vmem:[#allocation2 + $0x1158] sm:$0xff]
    %v634 = vld [vmem:[#allocation2 + $0x1160] sm:$0xff]
    %v635 = vld [vmem:[#allocation2 + $0x1168] sm:$0xff]
    %v636 = vld [vmem:[#allocation2 + $0x1170] sm:$0xff]
    %v637 = vld [vmem:[#allocation2 + $0x1178] sm:$0xff]
    %v638 = vld [vmem:[#allocation2 + $0x1180] sm:$0xff]
    %v639 = vld [vmem:[#allocation2 + $0x1188] sm:$0xff]
    %v640 = vld [vmem:[#allocation2 + $0x1190] sm:$0xff]
    %v641 = vld [vmem:[#allocation2 + $0x1198] sm:$0xff]
    %v642 = vld [vmem:[#allocation2 + $0x11a0] sm:$0xff]
    %v643 = vld [vmem:[#allocation2 + $0x11a8] sm:$0xff]
    %v644 = vld [vmem:[#allocation2 + $0x11b0] sm:$0xff]
    %v645 = vld [vmem:[#allocation2 + $0x11b8] sm:$0xff]
    %v646 = vld [vmem:[#allocation2 + $0x11c0] sm:$0xff]
    %v647 = vld [vmem:[#allocation2 + $0x11c8] sm:$0xff]
    %v648 = vld [vmem:[#allocation2 + $0x11d0] sm:$0xff]
    %v649 = vld [vmem:[#allocation2 + $0x11d8] sm:$0xff]
    %v650 = vld [vmem:[#allocation2 + $0x11e0] sm:$0xff]
    %v651 = vld [vmem:[#allocation2 + $0x11e8] sm:$0xff]
    %v652 = vld [vmem:[#allocation2 + $0x11f0] sm:$0xff]
    %v653 = vld [vmem:[#allocation2 + $0x11f8] sm:$0xff]
    %654 = vmatprep.subr.mxu0 %v79
    %655 = vmatpush1.msra.mxu0 %v78
    %656 = vmatprep.subr.mxu0 %v97
    %657 = vmatpush1.msra.mxu0 %v96
    %658 = vmatprep.subr.mxu0 %v115
    %659 = vmatpush1.msra.mxu0 %v114
    %660 = vmatprep.subr.mxu0 %v133
    %661 = vmatpush1.msra.mxu0 %v132
    %662 = vmatprep.subr.mxu0 %v151
    %663 = vmatpush1.msra.mxu0 %v150
    %664 = vmatprep.subr.mxu0 %v169
    %665 = vmatpush1.msra.mxu0 %v168
    %666 = vmatprep.subr.mxu0 %v187
    %667 = vmatpush1.msra.mxu0 %v186
    %668 = vmatprep.subr.mxu0 %v205
    %669 = vmatpush1.msra.mxu0 %v204
    %670 = vmatprep.subr.mxu0 %v223
    %671 = vmatpush1.msra.mxu0 %v222
    %672 = vmatprep.subr.mxu0 %v241
    %673 = vmatpush1.msra.mxu0 %v240
    %674 = vmatprep.subr.mxu0 %v259
    %675 = vmatpush1.msra.mxu0 %v258
    %676 = vmatprep.subr.mxu0 %v277
    %677 = vmatpush1.msra.mxu0 %v276
    %678 = vmatprep.subr.mxu0 %v295
    %679 = vmatpush1.msra.mxu0 %v294
    %680 = vmatprep.subr.mxu0 %v313
    %681 = vmatpush1.msra.mxu0 %v312
    %682 = vmatprep.subr.mxu0 %v331
    %683 = vmatpush1.msra.mxu0 %v330
    %684 = vmatprep.subr.mxu0 %v349
    %685 = vmatpush1.msra.mxu0 %v348
    %686 = vmatprep.subr.mxu0 %v367
    %687 = vmatpush1.msra.mxu0 %v366
    %688 = vmatprep.subr.mxu0 %v385
    %689 = vmatpush1.msra.mxu0 %v384
    %690 = vmatprep.subr.mxu0 %v403
    %691 = vmatpush1.msra.mxu0 %v402
    %692 = vmatprep.subr.mxu0 %v421
    %693 = vmatpush1.msra.mxu0 %v420
    %694 = vmatprep.subr.mxu0 %v439
    %695 = vmatpush1.msra.mxu0 %v438
    %696 = vmatprep.subr.mxu0 %v457
    %697 = vmatpush1.msra.mxu0 %v456
    %698 = vmatprep.subr.mxu0 %v475
    %699 = vmatpush1.msra.mxu0 %v474
    %700 = vmatprep.subr.mxu0 %v493
    %701 = vmatpush1.msra.mxu0 %v492
    %702 = vmatprep.subr.mxu0 %v511
    %703 = vmatpush1.msra.mxu0 %v510
    %704 = vmatprep.subr.mxu0 %v529
    %705 = vmatpush1.msra.mxu0 %v528
    %706 = vmatprep.subr.mxu0 %v547
    %707 = vmatpush1.msra.mxu0 %v546
    %708 = vmatprep.subr.mxu0 %v565
    %709 = vmatpush1.msra.mxu0 %v564
    %710 = vmatprep.subr.mxu0 %v583
    %711 = vmatpush1.msra.mxu0 %v582
    %712 = vmatprep.subr.mxu0 %v601
    %713 = vmatpush1.msra.mxu0 %v600
    %714 = vmatprep.subr.mxu0 %v619
    %715 = vmatpush1.msra.mxu0 %v618
    %716 = vmatprep.subr.mxu0 %v637
    %717 = vmatpush1.msra.mxu0 %v636
    %718 = vmatprep.mubr.f32.mxu0 %v77
    %719 = vmatmul.mubr.f32.gmra.mrb[0].mxu0 %v76
    %v720 = vpop.f32.mrb[0].mxu0
    %v721 = vadd.f32 0.0, %v720
    %v722 = vpop.f32.mrb[0].mxu0
    %v723 = vadd.f32 0.0, %v722
    %724 = vdwg.mxu0
    %725 = vmatprep.subr.mxu0 %v81
    %726 = vmatpush1.msra.mxu0 %v80
    %727 = vmatprep.subr.mxu0 %v99
    %728 = vmatpush1.msra.mxu0 %v98
    %729 = vmatprep.subr.mxu0 %v117
    %730 = vmatpush1.msra.mxu0 %v116
    %731 = vmatprep.subr.mxu0 %v135
    %732 = vmatpush1.msra.mxu0 %v134
    %733 = vmatprep.subr.mxu0 %v153
    %734 = vmatpush1.msra.mxu0 %v152
    %735 = vmatprep.subr.mxu0 %v171
    %736 = vmatpush1.msra.mxu0 %v170
    %737 = vmatprep.subr.mxu0 %v189
    %738 = vmatpush1.msra.mxu0 %v188
    %739 = vmatprep.subr.mxu0 %v207
    %740 = vmatpush1.msra.mxu0 %v206
    %741 = vmatprep.subr.mxu0 %v225
    %742 = vmatpush1.msra.mxu0 %v224
    %743 = vmatprep.subr.mxu0 %v243
    %744 = vmatpush1.msra.mxu0 %v242
    %745 = vmatprep.subr.mxu0 %v261
    %746 = vmatpush1.msra.mxu0 %v260
    %747 = vmatprep.subr.mxu0 %v279
    %748 = vmatpush1.msra.mxu0 %v278
    %749 = vmatprep.subr.mxu0 %v297
    %750 = vmatpush1.msra.mxu0 %v296
    %751 = vmatprep.subr.mxu0 %v315
    %752 = vmatpush1.msra.mxu0 %v314
    %753 = vmatprep.subr.mxu0 %v333
    %754 = vmatpush1.msra.mxu0 %v332
    %755 = vmatprep.subr.mxu0 %v351
    %756 = vmatpush1.msra.mxu0 %v350
    %757 = vmatprep.subr.mxu0 %v369
    %758 = vmatpush1.msra.mxu0 %v368
    %759 = vmatprep.subr.mxu0 %v387
    %760 = vmatpush1.msra.mxu0 %v386
    %761 = vmatprep.subr.mxu0 %v405
    %762 = vmatpush1.msra.mxu0 %v404
    %763 = vmatprep.subr.mxu0 %v423
    %764 = vmatpush1.msra.mxu0 %v422
    %765 = vmatprep.subr.mxu0 %v441
    %766 = vmatpush1.msra.mxu0 %v440
    %767 = vmatprep.subr.mxu0 %v459
    %768 = vmatpush1.msra.mxu0 %v458
    %769 = vmatprep.subr.mxu0 %v477
    %770 = vmatpush1.msra.mxu0 %v476
    %771 = vmatprep.subr.mxu0 %v495
    %772 = vmatpush1.msra.mxu0 %v494
    %773 = vmatprep.subr.mxu0 %v513
    %774 = vmatpush1.msra.mxu0 %v512
    %775 = vmatprep.subr.mxu0 %v531
    %776 = vmatpush1.msra.mxu0 %v530
    %777 = vmatprep.subr.mxu0 %v549
    %778 = vmatpush1.msra.mxu0 %v548
    %779 = vmatprep.subr.mxu0 %v567
    %780 = vmatpush1.msra.mxu0 %v566
    %781 = vmatprep.subr.mxu0 %v585
    %782 = vmatpush1.msra.mxu0 %v584
    %783 = vmatprep.subr.mxu0 %v603
    %784 = vmatpush1.msra.mxu0 %v602
    %785 = vmatprep.subr.mxu0 %v621
    %786 = vmatpush1.msra.mxu0 %v620
    %787 = vmatprep.subr.mxu0 %v639
    %788 = vmatpush1.msra.mxu0 %v638
    %789 = vmatprep.mubr.f32.mxu0 %v77
    %790 = vmatmul.mubr.f32.gmra.mrb[0].mxu0 %v76
    %v791 = vpop.f32.mrb[0].mxu0
    %v792 = vadd.f32 0.0, %v791
    %v793 = vpop.f32.mrb[0].mxu0
    %v794 = vadd.f32 0.0, %v793
    %795 = vdwg.mxu0
    %796 = vmatprep.subr.mxu0 %v83
    %797 = vmatpush1.msra.mxu0 %v82
    %798 = vmatprep.subr.mxu0 %v101
    %799 = vmatpush1.msra.mxu0 %v100
    %800 = vmatprep.subr.mxu0 %v119
    %801 = vmatpush1.msra.mxu0 %v118
    %802 = vmatprep.subr.mxu0 %v137
    %803 = vmatpush1.msra.mxu0 %v136
    %804 = vmatprep.subr.mxu0 %v155
    %805 = vmatpush1.msra.mxu0 %v154
    %806 = vmatprep.subr.mxu0 %v173
    %807 = vmatpush1.msra.mxu0 %v172
    %808 = vmatprep.subr.mxu0 %v191
    %809 = vmatpush1.msra.mxu0 %v190
    %810 = vmatprep.subr.mxu0 %v209
    %811 = vmatpush1.msra.mxu0 %v208
    %812 = vmatprep.subr.mxu0 %v227
    %813 = vmatpush1.msra.mxu0 %v226
    %814 = vmatprep.subr.mxu0 %v245
    %815 = vmatpush1.msra.mxu0 %v244
    %816 = vmatprep.subr.mxu0 %v263
    %817 = vmatpush1.msra.mxu0 %v262
    %818 = vmatprep.subr.mxu0 %v281
    %819 = vmatpush1.msra.mxu0 %v280
    %820 = vmatprep.subr.mxu0 %v299
    %821 = vmatpush1.msra.mxu0 %v298
    %822 = vmatprep.subr.mxu0 %v317
    %823 = vmatpush1.msra.mxu0 %v316
    %824 = vmatprep.subr.mxu0 %v335
    %825 = vmatpush1.msra.mxu0 %v334
    %826 = vmatprep.subr.mxu0 %v353
    %827 = vmatpush1.msra.mxu0 %v352
    %828 = vmatprep.subr.mxu0 %v371
    %829 = vmatpush1.msra.mxu0 %v370
    %830 = vmatprep.subr.mxu0 %v389
    %831 = vmatpush1.msra.mxu0 %v388
    %832 = vmatprep.subr.mxu0 %v407
    %833 = vmatpush1.msra.mxu0 %v406
    %834 = vmatprep.subr.mxu0 %v425
    %835 = vmatpush1.msra.mxu0 %v424
    %836 = vmatprep.subr.mxu0 %v443
    %837 = vmatpush1.msra.mxu0 %v442
    %838 = vmatprep.subr.mxu0 %v461
    %839 = vmatpush1.msra.mxu0 %v460
    %840 = vmatprep.subr.mxu0 %v479
    %841 = vmatpush1.msra.mxu0 %v478
    %842 = vmatprep.subr.mxu0 %v497
    %843 = vmatpush1.msra.mxu0 %v496
    %844 = vmatprep.subr.mxu0 %v515
    %845 = vmatpush1.msra.mxu0 %v514
    %846 = vmatprep.subr.mxu0 %v533
    %847 = vmatpush1.msra.mxu0 %v532
    %848 = vmatprep.subr.mxu0 %v551
    %849 = vmatpush1.msra.mxu0 %v550
    %850 = vmatprep.subr.mxu0 %v569
    %851 = vmatpush1.msra.mxu0 %v568
    %852 = vmatprep.subr.mxu0 %v587
    %853 = vmatpush1.msra.mxu0 %v586
    %854 = vmatprep.subr.mxu0 %v605
    %855 = vmatpush1.msra.mxu0 %v604
    %856 = vmatprep.subr.mxu0 %v623
    %857 = vmatpush1.msra.mxu0 %v622
    %858 = vmatprep.subr.mxu0 %v641
    %859 = vmatpush1.msra.mxu0 %v640
    %860 = vmatprep.mubr.f32.mxu0 %v77
    %861 = vmatmul.mubr.f32.gmra.mrb[0].mxu0 %v76
    %v862 = vpop.f32.mrb[0].mxu0
    %v863 = vadd.f32 0.0, %v862
    %v864 = vpop.f32.mrb[0].mxu0
    %v865 = vadd.f32 0.0, %v864
    %866 = vdwg.mxu0
    %867 = vmatprep.subr.mxu0 %v85
    %868 = vmatpush1.msra.mxu0 %v84
    %869 = vmatprep.subr.mxu0 %v103
    %870 = vmatpush1.msra.mxu0 %v102
    %871 = vmatprep.subr.mxu0 %v121
    %872 = vmatpush1.msra.mxu0 %v120
    %873 = vmatprep.subr.mxu0 %v139
    %874 = vmatpush1.msra.mxu0 %v138
    %875 = vmatprep.subr.mxu0 %v157
    %876 = vmatpush1.msra.mxu0 %v156
    %877 = vmatprep.subr.mxu0 %v175
    %878 = vmatpush1.msra.mxu0 %v174
    %879 = vmatprep.subr.mxu0 %v193
    %880 = vmatpush1.msra.mxu0 %v192
    %881 = vmatprep.subr.mxu0 %v211
    %882 = vmatpush1.msra.mxu0 %v210
    %883 = vmatprep.subr.mxu0 %v229
    %884 = vmatpush1.msra.mxu0 %v228
    %885 = vmatprep.subr.mxu0 %v247
    %886 = vmatpush1.msra.mxu0 %v246
    %887 = vmatprep.subr.mxu0 %v265
    %888 = vmatpush1.msra.mxu0 %v264
    %889 = vmatprep.subr.mxu0 %v283
    %890 = vmatpush1.msra.mxu0 %v282
    %891 = vmatprep.subr.mxu0 %v301
    %892 = vmatpush1.msra.mxu0 %v300
    %893 = vmatprep.subr.mxu0 %v319
    %894 = vmatpush1.msra.mxu0 %v318
    %895 = vmatprep.subr.mxu0 %v337
    %896 = vmatpush1.msra.mxu0 %v336
    %897 = vmatprep.subr.mxu0 %v355
    %898 = vmatpush1.msra.mxu0 %v354
    %899 = vmatprep.subr.mxu0 %v373
    %900 = vmatpush1.msra.mxu0 %v372
    %901 = vmatprep.subr.mxu0 %v391
    %902 = vmatpush1.msra.mxu0 %v390
    %903 = vmatprep.subr.mxu0 %v409
    %904 = vmatpush1.msra.mxu0 %v408
    %905 = vmatprep.subr.mxu0 %v427
    %906 = vmatpush1.msra.mxu0 %v426
    %907 = vmatprep.subr.mxu0 %v445
    %908 = vmatpush1.msra.mxu0 %v444
    %909 = vmatprep.subr.mxu0 %v463
    %910 = vmatpush1.msra.mxu0 %v462
    %911 = vmatprep.subr.mxu0 %v481
    %912 = vmatpush1.msra.mxu0 %v480
    %913 = vmatprep.subr.mxu0 %v499
    %914 = vmatpush1.msra.mxu0 %v498
    %915 = vmatprep.subr.mxu0 %v517
    %916 = vmatpush1.msra.mxu0 %v516
    %917 = vmatprep.subr.mxu0 %v535
    %918 = vmatpush1.msra.mxu0 %v534
    %919 = vmatprep.subr.mxu0 %v553
    %920 = vmatpush1.msra.mxu0 %v552
    %921 = vmatprep.subr.mxu0 %v571
    %922 = vmatpush1.msra.mxu0 %v570
    %923 = vmatprep.subr.mxu0 %v589
    %924 = vmatpush1.msra.mxu0 %v588
    %925 = vmatprep.subr.mxu0 %v607
    %926 = vmatpush1.msra.mxu0 %v606
    %927 = vmatprep.subr.mxu0 %v625
    %928 = vmatpush1.msra.mxu0 %v624
    %929 = vmatprep.subr.mxu0 %v643
    %930 = vmatpush1.msra.mxu0 %v642
    %931 = vmatprep.mubr.f32.mxu0 %v77
    %932 = vmatmul.mubr.f32.gmra.mrb[0].mxu0 %v76
    %v933 = vpop.f32.mrb[0].mxu0
    %v934 = vadd.f32 0.0, %v933
    %v935 = vpop.f32.mrb[0].mxu0
    %v936 = vadd.f32 0.0, %v935
    %937 = vdwg.mxu0
    %938 = vmatprep.subr.mxu0 %v87
    %939 = vmatpush1.msra.mxu0 %v86
    %940 = vmatprep.subr.mxu0 %v105
    %941 = vmatpush1.msra.mxu0 %v104
    %942 = vmatprep.subr.mxu0 %v123
    %943 = vmatpush1.msra.mxu0 %v122
    %944 = vmatprep.subr.mxu0 %v141
    %945 = vmatpush1.msra.mxu0 %v140
    %946 = vmatprep.subr.mxu0 %v159
    %947 = vmatpush1.msra.mxu0 %v158
    %948 = vmatprep.subr.mxu0 %v177
    %949 = vmatpush1.msra.mxu0 %v176
    %950 = vmatprep.subr.mxu0 %v195
    %951 = vmatpush1.msra.mxu0 %v194
    %952 = vmatprep.subr.mxu0 %v213
    %953 = vmatpush1.msra.mxu0 %v212
    %954 = vmatprep.subr.mxu0 %v231
    %955 = vmatpush1.msra.mxu0 %v230
    %956 = vmatprep.subr.mxu0 %v249
    %957 = vmatpush1.msra.mxu0 %v248
    %958 = vmatprep.subr.mxu0 %v267
    %959 = vmatpush1.msra.mxu0 %v266
    %960 = vmatprep.subr.mxu0 %v285
    %961 = vmatpush1.msra.mxu0 %v284
    %962 = vmatprep.subr.mxu0 %v303
    %963 = vmatpush1.msra.mxu0 %v302
    %964 = vmatprep.subr.mxu0 %v321
    %965 = vmatpush1.msra.mxu0 %v320
    %966 = vmatprep.subr.mxu0 %v339
    %967 = vmatpush1.msra.mxu0 %v338
    %968 = vmatprep.subr.mxu0 %v357
    %969 = vmatpush1.msra.mxu0 %v356
    %970 = vmatprep.subr.mxu0 %v375
    %971 = vmatpush1.msra.mxu0 %v374
    %972 = vmatprep.subr.mxu0 %v393
    %973 = vmatpush1.msra.mxu0 %v392
    %974 = vmatprep.subr.mxu0 %v411
    %975 = vmatpush1.msra.mxu0 %v410
    %976 = vmatprep.subr.mxu0 %v429
    %977 = vmatpush1.msra.mxu0 %v428
    %978 = vmatprep.subr.mxu0 %v447
    %979 = vmatpush1.msra.mxu0 %v446
    %980 = vmatprep.subr.mxu0 %v465
    %981 = vmatpush1.msra.mxu0 %v464
    %982 = vmatprep.subr.mxu0 %v483
    %983 = vmatpush1.msra.mxu0 %v482
    %984 = vmatprep.subr.mxu0 %v501
    %985 = vmatpush1.msra.mxu0 %v500
    %986 = vmatprep.subr.mxu0 %v519
    %987 = vmatpush1.msra.mxu0 %v518
    %988 = vmatprep.subr.mxu0 %v537
    %989 = vmatpush1.msra.mxu0 %v536
    %990 = vmatprep.subr.mxu0 %v555
    %991 = vmatpush1.msra.mxu0 %v554
    %992 = vmatprep.subr.mxu0 %v573
    %993 = vmatpush1.msra.mxu0 %v572
    %994 = vmatprep.subr.mxu0 %v591
    %995 = vmatpush1.msra.mxu0 %v590
    %996 = vmatprep.subr.mxu0 %v609
    %997 = vmatpush1.msra.mxu0 %v608
    %998 = vmatprep.subr.mxu0 %v627
    %999 = vmatpush1.msra.mxu0 %v626
    %1000 = vmatprep.subr.mxu0 %v645
    %1001 = vmatpush1.msra.mxu0 %v644
    %1002 = vmatprep.mubr.f32.mxu0 %v77
    %1003 = vmatmul.mubr.f32.gmra.mrb[0].mxu0 %v76
    %v1004 = vpop.f32.mrb[0].mxu0
    %v1005 = vadd.f32 0.0, %v1004
    %v1006 = vpop.f32.mrb[0].mxu0
    %v1007 = vadd.f32 0.0, %v1006
    %1008 = vdwg.mxu0
    %1009 = vmatprep.subr.mxu0 %v89
    %1010 = vmatpush1.msra.mxu0 %v88
    %1011 = vmatprep.subr.mxu0 %v107
    %1012 = vmatpush1.msra.mxu0 %v106
    %1013 = vmatprep.subr.mxu0 %v125
    %1014 = vmatpush1.msra.mxu0 %v124
    %1015 = vmatprep.subr.mxu0 %v143
    %1016 = vmatpush1.msra.mxu0 %v142
    %1017 = vmatprep.subr.mxu0 %v161
    %1018 = vmatpush1.msra.mxu0 %v160
    %1019 = vmatprep.subr.mxu0 %v179
    %1020 = vmatpush1.msra.mxu0 %v178
    %1021 = vmatprep.subr.mxu0 %v197
    %1022 = vmatpush1.msra.mxu0 %v196
    %1023 = vmatprep.subr.mxu0 %v215
    %1024 = vmatpush1.msra.mxu0 %v214
    %1025 = vmatprep.subr.mxu0 %v233
    %1026 = vmatpush1.msra.mxu0 %v232
    %1027 = vmatprep.subr.mxu0 %v251
    %1028 = vmatpush1.msra.mxu0 %v250
    %1029 = vmatprep.subr.mxu0 %v269
    %1030 = vmatpush1.msra.mxu0 %v268
    %1031 = vmatprep.subr.mxu0 %v287
    %1032 = vmatpush1.msra.mxu0 %v286
    %1033 = vmatprep.subr.mxu0 %v305
    %1034 = vmatpush1.msra.mxu0 %v304
    %1035 = vmatprep.subr.mxu0 %v323
    %1036 = vmatpush1.msra.mxu0 %v322
    %1037 = vmatprep.subr.mxu0 %v341
    %1038 = vmatpush1.msra.mxu0 %v340
    %1039 = vmatprep.subr.mxu0 %v359
    %1040 = vmatpush1.msra.mxu0 %v358
    %1041 = vmatprep.subr.mxu0 %v377
    %1042 = vmatpush1.msra.mxu0 %v376
    %1043 = vmatprep.subr.mxu0 %v395
    %1044 = vmatpush1.msra.mxu0 %v394
    %1045 = vmatprep.subr.mxu0 %v413
    %1046 = vmatpush1.msra.mxu0 %v412
    %1047 = vmatprep.subr.mxu0 %v431
    %1048 = vmatpush1.msra.mxu0 %v430
    %1049 = vmatprep.subr.mxu0 %v449
    %1050 = vmatpush1.msra.mxu0 %v448
    %1051 = vmatprep.subr.mxu0 %v467
    %1052 = vmatpush1.msra.mxu0 %v466
    %1053 = vmatprep.subr.mxu0 %v485
    %1054 = vmatpush1.msra.mxu0 %v484
    %1055 = vmatprep.subr.mxu0 %v503
    %1056 = vmatpush1.msra.mxu0 %v502
    %1057 = vmatprep.subr.mxu0 %v521
    %1058 = vmatpush1.msra.mxu0 %v520
    %1059 = vmatprep.subr.mxu0 %v539
    %1060 = vmatpush1.msra.mxu0 %v538
    %1061 = vmatprep.subr.mxu0 %v557
    %1062 = vmatpush1.msra.mxu0 %v556
    %1063 = vmatprep.subr.mxu0 %v575
    %1064 = vmatpush1.msra.mxu0 %v574
    %1065 = vmatprep.subr.mxu0 %v593
    %1066 = vmatpush1.msra.mxu0 %v592
    %1067 = vmatprep.subr.mxu0 %v611
    %1068 = vmatpush1.msra.mxu0 %v610
    %1069 = vmatprep.subr.mxu0 %v629
    %1070 = vmatpush1.msra.mxu0 %v628
    %1071 = vmatprep.subr.mxu0 %v647
    %1072 = vmatpush1.msra.mxu0 %v646
    %1073 = vmatprep.mubr.f32.mxu0 %v77
    %1074 = vmatmul.mubr.f32.gmra.mrb[0].mxu0 %v76
    %v1075 = vpop.f32.mrb[0].mxu0
    %v1076 = vadd.f32 0.0, %v1075
    %v1077 = vpop.f32.mrb[0].mxu0
    %v1078 = vadd.f32 0.0, %v1077
    %1079 = vdwg.mxu0
    %1080 = vmatprep.subr.mxu0 %v91
    %1081 = vmatpush1.msra.mxu0 %v90
    %1082 = vmatprep.subr.mxu0 %v109
    %1083 = vmatpush1.msra.mxu0 %v108
    %1084 = vmatprep.subr.mxu0 %v127
    %1085 = vmatpush1.msra.mxu0 %v126
    %1086 = vmatprep.subr.mxu0 %v145
    %1087 = vmatpush1.msra.mxu0 %v144
    %1088 = vmatprep.subr.mxu0 %v163
    %1089 = vmatpush1.msra.mxu0 %v162
    %1090 = vmatprep.subr.mxu0 %v181
    %1091 = vmatpush1.msra.mxu0 %v180
    %1092 = vmatprep.subr.mxu0 %v199
    %1093 = vmatpush1.msra.mxu0 %v198
    %1094 = vmatprep.subr.mxu0 %v217
    %1095 = vmatpush1.msra.mxu0 %v216
    %1096 = vmatprep.subr.mxu0 %v235
    %1097 = vmatpush1.msra.mxu0 %v234
    %1098 = vmatprep.subr.mxu0 %v253
    %1099 = vmatpush1.msra.mxu0 %v252
    %1100 = vmatprep.subr.mxu0 %v271
    %1101 = vmatpush1.msra.mxu0 %v270
    %1102 = vmatprep.subr.mxu0 %v289
    %1103 = vmatpush1.msra.mxu0 %v288
    %1104 = vmatprep.subr.mxu0 %v307
    %1105 = vmatpush1.msra.mxu0 %v306
    %1106 = vmatprep.subr.mxu0 %v325
    %1107 = vmatpush1.msra.mxu0 %v324
    %1108 = vmatprep.subr.mxu0 %v343
    %1109 = vmatpush1.msra.mxu0 %v342
    %1110 = vmatprep.subr.mxu0 %v361
    %1111 = vmatpush1.msra.mxu0 %v360
    %1112 = vmatprep.subr.mxu0 %v379
    %1113 = vmatpush1.msra.mxu0 %v378
    %1114 = vmatprep.subr.mxu0 %v397
    %1115 = vmatpush1.msra.mxu0 %v396
    %1116 = vmatprep.subr.mxu0 %v415
    %1117 = vmatpush1.msra.mxu0 %v414
    %1118 = vmatprep.subr.mxu0 %v433
    %1119 = vmatpush1.msra.mxu0 %v432
    %1120 = vmatprep.subr.mxu0 %v451
    %1121 = vmatpush1.msra.mxu0 %v450
    %1122 = vmatprep.subr.mxu0 %v469
    %1123 = vmatpush1.msra.mxu0 %v468
    %1124 = vmatprep.subr.mxu0 %v487
    %1125 = vmatpush1.msra.mxu0 %v486
    %1126 = vmatprep.subr.mxu0 %v505
    %1127 = vmatpush1.msra.mxu0 %v504
    %1128 = vmatprep.subr.mxu0 %v523
    %1129 = vmatpush1.msra.mxu0 %v522
    %1130 = vmatprep.subr.mxu0 %v541
    %1131 = vmatpush1.msra.mxu0 %v540
    %1132 = vmatprep.subr.mxu0 %v559
    %1133 = vmatpush1.msra.mxu0 %v558
    %1134 = vmatprep.subr.mxu0 %v577
    %1135 = vmatpush1.msra.mxu0 %v576
    %1136 = vmatprep.subr.mxu0 %v595
    %1137 = vmatpush1.msra.mxu0 %v594
    %1138 = vmatprep.subr.mxu0 %v613
    %1139 = vmatpush1.msra.mxu0 %v612
    %1140 = vmatprep.subr.mxu0 %v631
    %1141 = vmatpush1.msra.mxu0 %v630
    %1142 = vmatprep.subr.mxu0 %v649
    %1143 = vmatpush1.msra.mxu0 %v648
    %1144 = vmatprep.mubr.f32.mxu0 %v77
    %1145 = vmatmul.mubr.f32.gmra.mrb[0].mxu0 %v76
    %v1146 = vpop.f32.mrb[0].mxu0
    %v1147 = vadd.f32 0.0, %v1146
    %v1148 = vpop.f32.mrb[0].mxu0
    %v1149 = vadd.f32 0.0, %v1148
    %1150 = vdwg.mxu0
    %1151 = vmatprep.subr.mxu0 %v93
    %1152 = vmatpush1.msra.mxu0 %v92
    %1153 = vmatprep.subr.mxu0 %v111
    %1154 = vmatpush1.msra.mxu0 %v110
    %1155 = vmatprep.subr.mxu0 %v129
    %1156 = vmatpush1.msra.mxu0 %v128
    %1157 = vmatprep.subr.mxu0 %v147
    %1158 = vmatpush1.msra.mxu0 %v146
    %1159 = vmatprep.subr.mxu0 %v165
    %1160 = vmatpush1.msra.mxu0 %v164
    %1161 = vmatprep.subr.mxu0 %v183
    %1162 = vmatpush1.msra.mxu0 %v182
    %1163 = vmatprep.subr.mxu0 %v201
    %1164 = vmatpush1.msra.mxu0 %v200
    %1165 = vmatprep.subr.mxu0 %v219
    %1166 = vmatpush1.msra.mxu0 %v218
    %1167 = vmatprep.subr.mxu0 %v237
    %1168 = vmatpush1.msra.mxu0 %v236
    %1169 = vmatprep.subr.mxu0 %v255
    %1170 = vmatpush1.msra.mxu0 %v254
    %1171 = vmatprep.subr.mxu0 %v273
    %1172 = vmatpush1.msra.mxu0 %v272
    %1173 = vmatprep.subr.mxu0 %v291
    %1174 = vmatpush1.msra.mxu0 %v290
    %1175 = vmatprep.subr.mxu0 %v309
    %1176 = vmatpush1.msra.mxu0 %v308
    %1177 = vmatprep.subr.mxu0 %v327
    %1178 = vmatpush1.msra.mxu0 %v326
    %1179 = vmatprep.subr.mxu0 %v345
    %1180 = vmatpush1.msra.mxu0 %v344
    %1181 = vmatprep.subr.mxu0 %v363
    %1182 = vmatpush1.msra.mxu0 %v362
    %1183 = vmatprep.subr.mxu0 %v381
    %1184 = vmatpush1.msra.mxu0 %v380
    %1185 = vmatprep.subr.mxu0 %v399
    %1186 = vmatpush1.msra.mxu0 %v398
    %1187 = vmatprep.subr.mxu0 %v417
    %1188 = vmatpush1.msra.mxu0 %v416
    %1189 = vmatprep.subr.mxu0 %v435
    %1190 = vmatpush1.msra.mxu0 %v434
    %1191 = vmatprep.subr.mxu0 %v453
    %1192 = vmatpush1.msra.mxu0 %v452
    %1193 = vmatprep.subr.mxu0 %v471
    %1194 = vmatpush1.msra.mxu0 %v470
    %1195 = vmatprep.subr.mxu0 %v489
    %1196 = vmatpush1.msra.mxu0 %v488
    %1197 = vmatprep.subr.mxu0 %v507
    %1198 = vmatpush1.msra.mxu0 %v506
    %1199 = vmatprep.subr.mxu0 %v525
    %1200 = vmatpush1.msra.mxu0 %v524
    %1201 = vmatprep.subr.mxu0 %v543
    %1202 = vmatpush1.msra.mxu0 %v542
    %1203 = vmatprep.subr.mxu0 %v561
    %1204 = vmatpush1.msra.mxu0 %v560
    %1205 = vmatprep.subr.mxu0 %v579
    %1206 = vmatpush1.msra.mxu0 %v578
    %1207 = vmatprep.subr.mxu0 %v597
    %1208 = vmatpush1.msra.mxu0 %v596
    %1209 = vmatprep.subr.mxu0 %v615
    %1210 = vmatpush1.msra.mxu0 %v614
    %1211 = vmatprep.subr.mxu0 %v633
    %1212 = vmatpush1.msra.mxu0 %v632
    %1213 = vmatprep.subr.mxu0 %v651
    %1214 = vmatpush1.msra.mxu0 %v650
    %1215 = vmatprep.mubr.f32.mxu0 %v77
    %1216 = vmatmul.mubr.f32.gmra.mrb[0].mxu0 %v76
    %v1217 = vpop.f32.mrb[0].mxu0
    %v1218 = vadd.f32 0.0, %v1217
    %v1219 = vpop.f32.mrb[0].mxu0
    %v1220 = vadd.f32 0.0, %v1219
    %1221 = vdwg.mxu0
    %1222 = vmatprep.subr.mxu0 %v95
    %1223 = vmatpush1.msra.mxu0 %v94
    %1224 = vmatprep.subr.mxu0 %v113
    %1225 = vmatpush1.msra.mxu0 %v112
    %1226 = vmatprep.subr.mxu0 %v131
    %1227 = vmatpush1.msra.mxu0 %v130
    %1228 = vmatprep.subr.mxu0 %v149
    %1229 = vmatpush1.msra.mxu0 %v148
    %1230 = vmatprep.subr.mxu0 %v167
    %1231 = vmatpush1.msra.mxu0 %v166
    %1232 = vmatprep.subr.mxu0 %v185
    %1233 = vmatpush1.msra.mxu0 %v184
    %1234 = vmatprep.subr.mxu0 %v203
    %1235 = vmatpush1.msra.mxu0 %v202
    %1236 = vmatprep.subr.mxu0 %v221
    %1237 = vmatpush1.msra.mxu0 %v220
    %1238 = vmatprep.subr.mxu0 %v239
    %1239 = vmatpush1.msra.mxu0 %v238
    %1240 = vmatprep.subr.mxu0 %v257
    %1241 = vmatpush1.msra.mxu0 %v256
    %1242 = vmatprep.subr.mxu0 %v275
    %1243 = vmatpush1.msra.mxu0 %v274
    %1244 = vmatprep.subr.mxu0 %v293
    %1245 = vmatpush1.msra.mxu0 %v292
    %1246 = vmatprep.subr.mxu0 %v311
    %1247 = vmatpush1.msra.mxu0 %v310
    %1248 = vmatprep.subr.mxu0 %v329
    %1249 = vmatpush1.msra.mxu0 %v328
    %1250 = vmatprep.subr.mxu0 %v347
    %1251 = vmatpush1.msra.mxu0 %v346
    %1252 = vmatprep.subr.mxu0 %v365
    %1253 = vmatpush1.msra.mxu0 %v364
    %1254 = vmatprep.subr.mxu0 %v383
    %1255 = vmatpush1.msra.mxu0 %v382
    %1256 = vmatprep.subr.mxu0 %v401
    %1257 = vmatpush1.msra.mxu0 %v400
    %1258 = vmatprep.subr.mxu0 %v419
    %1259 = vmatpush1.msra.mxu0 %v418
    %1260 = vmatprep.subr.mxu0 %v437
    %1261 = vmatpush1.msra.mxu0 %v436
    %1262 = vmatprep.subr.mxu0 %v455
    %1263 = vmatpush1.msra.mxu0 %v454
    %1264 = vmatprep.subr.mxu0 %v473
    %1265 = vmatpush1.msra.mxu0 %v472
    %1266 = vmatprep.subr.mxu0 %v491
    %1267 = vmatpush1.msra.mxu0 %v490
    %1268 = vmatprep.subr.mxu0 %v509
    %1269 = vmatpush1.msra.mxu0 %v508
    %1270 = vmatprep.subr.mxu0 %v527
    %1271 = vmatpush1.msra.mxu0 %v526
    %1272 = vmatprep.subr.mxu0 %v545
    %1273 = vmatpush1.msra.mxu0 %v544
    %1274 = vmatprep.subr.mxu0 %v563
    %1275 = vmatpush1.msra.mxu0 %v562
    %1276 = vmatprep.subr.mxu0 %v581
    %1277 = vmatpush1.msra.mxu0 %v580
    %1278 = vmatprep.subr.mxu0 %v599
    %1279 = vmatpush1.msra.mxu0 %v598
    %1280 = vmatprep.subr.mxu0 %v617
    %1281 = vmatpush1.msra.mxu0 %v616
    %1282 = vmatprep.subr.mxu0 %v635
    %1283 = vmatpush1.msra.mxu0 %v634
    %1284 = vmatprep.subr.mxu0 %v653
    %1285 = vmatpush1.msra.mxu0 %v652
    %1286 = vmatprep.mubr.f32.mxu0 %v77
    %1287 = vmatmul.mubr.f32.gmra.mrb[0].mxu0 %v76
    %v1288 = vpop.f32.mrb[0].mxu0
    %v1289 = vadd.f32 0.0, %v1288
    %v1290 = vpop.f32.mrb[0].mxu0
    %v1291 = vadd.f32 0.0, %v1290
    %1292 = vdwg.mxu0
    %v1293 = vld [vmem:[%s5] sm:$0xff]
    %v1294 = vld [vmem:[%s5 + $0x8] sm:$0xff]
    %1296 = vset.pattern.permute.xlu0 0
    %1297 = vperm.xlu0 %1296, %v1293
    %v1298 = vpop.permute.xlu0 %1297
    %1301 = vset.pattern.permute.xlu0 0
    %1302 = vperm.xlu0 %1301, %v1294
    %v1303 = vpop.permute.xlu0 %1302
    %v1305 = vld [vmem:[%s4] sm:$0xff]
    %v1306 = vld [vmem:[%s4 + $0x8] sm:$0xff]
    %vm1307 = vcmask 64512
    %v1309 = vsel %vm1307, %v1305, 0
    %v1312 = vsel %vm1307, %v1306, 0
    %1314 = vmatprep.subr.mxu0 %v723
    %1315 = vmatpush1.msra.mxu0 %v721
    %1316 = vmatprep.subr.mxu0 0.0
    %1317 = vmatpush1.msra.mxu0 0.0
    %1318 = vmatprep.subr.mxu0 0.0
    %1319 = vmatpush1.msra.mxu0 0.0
    %1320 = vmatprep.subr.mxu0 0.0
    %1321 = vmatpush1.msra.mxu0 0.0
    %1322 = vmatprep.subr.mxu0 0.0
    %1323 = vmatpush1.msra.mxu0 0.0
    %1324 = vmatprep.subr.mxu0 0.0
    %1325 = vmatpush1.msra.mxu0 0.0
    %1326 = vmatprep.subr.mxu0 0.0
    %1327 = vmatpush1.msra.mxu0 0.0
    %1328 = vmatprep.subr.mxu0 0.0
    %1329 = vmatpush1.msra.mxu0 0.0
    %1330 = vmatprep.subr.mxu0 0.0
    %1331 = vmatpush1.msra.mxu0 0.0
    %1332 = vmatprep.subr.mxu0 0.0
    %1333 = vmatpush1.msra.mxu0 0.0
    %1334 = vmatprep.subr.mxu0 0.0
    %1335 = vmatpush1.msra.mxu0 0.0
    %1336 = vmatprep.subr.mxu0 0.0
    %1337 = vmatpush1.msra.mxu0 0.0
    %1338 = vmatprep.subr.mxu0 0.0
    %1339 = vmatpush1.msra.mxu0 0.0
    %1340 = vmatprep.subr.mxu0 0.0
    %1341 = vmatpush1.msra.mxu0 0.0
    %1342 = vmatprep.subr.mxu0 0.0
    %1343 = vmatpush1.msra.mxu0 0.0
    %1344 = vmatprep.subr.mxu0 0.0
    %1345 = vmatpush1.msra.mxu0 0.0
    %1346 = vmatprep.subr.mxu0 0.0
    %1347 = vmatpush1.msra.mxu0 0.0
    %1348 = vmatprep.subr.mxu0 0.0
    %1349 = vmatpush1.msra.mxu0 0.0
    %1350 = vmatprep.subr.mxu0 0.0
    %1351 = vmatpush1.msra.mxu0 0.0
    %1352 = vmatprep.subr.mxu0 0.0
    %1353 = vmatpush1.msra.mxu0 0.0
    %1354 = vmatprep.subr.mxu0 0.0
    %1355 = vmatpush1.msra.mxu0 0.0
    %1356 = vmatprep.subr.mxu0 0.0
    %1357 = vmatpush1.msra.mxu0 0.0
    %1358 = vmatprep.subr.mxu0 0.0
    %1359 = vmatpush1.msra.mxu0 0.0
    %1360 = vmatprep.subr.mxu0 0.0
    %1361 = vmatpush1.msra.mxu0 0.0
    %1362 = vmatprep.subr.mxu0 0.0
    %1363 = vmatpush1.msra.mxu0 0.0
    %1364 = vmatprep.subr.mxu0 0.0
    %1365 = vmatpush1.msra.mxu0 0.0
    %1366 = vmatprep.subr.mxu0 0.0
    %1367 = vmatpush1.msra.mxu0 0.0
    %1368 = vmatprep.subr.mxu0 0.0
    %1369 = vmatpush1.msra.mxu0 0.0
    %1370 = vmatprep.subr.mxu0 0.0
    %1371 = vmatpush1.msra.mxu0 0.0
    %1372 = vmatprep.subr.mxu0 0.0
    %1373 = vmatpush1.msra.mxu0 0.0
    %1374 = vmatprep.subr.mxu0 0.0
    %1375 = vmatpush1.msra.mxu0 0.0
    %1376 = vmatprep.subr.mxu0 0.0
    %1377 = vmatpush1.msra.mxu0 0.0
    %1378 = vmatprep.mubr.f32.mxu0 0.0
    %1379 = vmatmul.mubr.f32.gmra.mrb[0].mxu0 %v1309
    %v1380 = vpop.f32.mrb[0].mxu0
    %v1381 = vadd.f32 0.0, %v1380
    %v1382 = vpop.f32.mrb[0].mxu0
    %v1383 = vadd.f32 0.0, %v1382
    %1384 = vmatprep.mubr.f32.mxu0 0.0
    %1385 = vmatmul.mubr.f32.gmra.mrb[0].mxu0 %v1312
    %v1386 = vpop.f32.mrb[0].mxu0
    %v1387 = vadd.f32 0.0, %v1386
    %v1388 = vpop.f32.mrb[0].mxu0
    %v1389 = vadd.f32 0.0, %v1388
    %1390 = vdwg.mxu0
    %v1391 = vadd.f32 %v1298, %v1381
    %v1392 = vadd.f32 %v1298, %v1383
    %v1393 = vadd.f32 %v1303, %v1387
    %v1394 = vadd.f32 %v1303, %v1389
    %s1395 = scalar_lea.vmem %s4, 16
    %v1396 = vld [vmem:[%s1395] sm:$0xff]
    %v1397 = vld [vmem:[%s1395 + $0x8] sm:$0xff]
    %v1399 = vsel %vm1307, %v1396, 0
    %v1402 = vsel %vm1307, %v1397, 0
    %1404 = vmatprep.subr.mxu0 %v794
    %1405 = vmatpush1.msra.mxu0 %v792
    %1406 = vmatprep.subr.mxu0 0.0
    %1407 = vmatpush1.msra.mxu0 0.0
    %1408 = vmatprep.subr.mxu0 0.0
    %1409 = vmatpush1.msra.mxu0 0.0
    %1410 = vmatprep.subr.mxu0 0.0
    %1411 = vmatpush1.msra.mxu0 0.0
    %1412 = vmatprep.subr.mxu0 0.0
    %1413 = vmatpush1.msra.mxu0 0.0
    %1414 = vmatprep.subr.mxu0 0.0
    %1415 = vmatpush1.msra.mxu0 0.0
    %1416 = vmatprep.subr.mxu0 0.0
    %1417 = vmatpush1.msra.mxu0 0.0
    %1418 = vmatprep.subr.mxu0 0.0
    %1419 = vmatpush1.msra.mxu0 0.0
    %1420 = vmatprep.subr.mxu0 0.0
    %1421 = vmatpush1.msra.mxu0 0.0
    %1422 = vmatprep.subr.mxu0 0.0
    %1423 = vmatpush1.msra.mxu0 0.0
    %1424 = vmatprep.subr.mxu0 0.0
    %1425 = vmatpush1.msra.mxu0 0.0
    %1426 = vmatprep.subr.mxu0 0.0
    %1427 = vmatpush1.msra.mxu0 0.0
    %1428 = vmatprep.subr.mxu0 0.0
    %1429 = vmatpush1.msra.mxu0 0.0
    %1430 = vmatprep.subr.mxu0 0.0
    %1431 = vmatpush1.msra.mxu0 0.0
    %1432 = vmatprep.subr.mxu0 0.0
    %1433 = vmatpush1.msra.mxu0 0.0
    %1434 = vmatprep.subr.mxu0 0.0
    %1435 = vmatpush1.msra.mxu0 0.0
    %1436 = vmatprep.subr.mxu0 0.0
    %1437 = vmatpush1.msra.mxu0 0.0
    %1438 = vmatprep.subr.mxu0 0.0
    %1439 = vmatpush1.msra.mxu0 0.0
    %1440 = vmatprep.subr.mxu0 0.0
    %1441 = vmatpush1.msra.mxu0 0.0
    %1442 = vmatprep.subr.mxu0 0.0
    %1443 = vmatpush1.msra.mxu0 0.0
    %1444 = vmatprep.subr.mxu0 0.0
    %1445 = vmatpush1.msra.mxu0 0.0
    %1446 = vmatprep.subr.mxu0 0.0
    %1447 = vmatpush1.msra.mxu0 0.0
    %1448 = vmatprep.subr.mxu0 0.0
    %1449 = vmatpush1.msra.mxu0 0.0
    %1450 = vmatprep.subr.mxu0 0.0
    %1451 = vmatpush1.msra.mxu0 0.0
    %1452 = vmatprep.subr.mxu0 0.0
    %1453 = vmatpush1.msra.mxu0 0.0
    %1454 = vmatprep.subr.mxu0 0.0
    %1455 = vmatpush1.msra.mxu0 0.0
    %1456 = vmatprep.subr.mxu0 0.0
    %1457 = vmatpush1.msra.mxu0 0.0
    %1458 = vmatprep.subr.mxu0 0.0
    %1459 = vmatpush1.msra.mxu0 0.0
    %1460 = vmatprep.subr.mxu0 0.0
    %1461 = vmatpush1.msra.mxu0 0.0
    %1462 = vmatprep.subr.mxu0 0.0
    %1463 = vmatpush1.msra.mxu0 0.0
    %1464 = vmatprep.subr.mxu0 0.0
    %1465 = vmatpush1.msra.mxu0 0.0
    %1466 = vmatprep.subr.mxu0 0.0
    %1467 = vmatpush1.msra.mxu0 0.0
    %1468 = vmatprep.mubr.f32.mxu0 0.0
    %1469 = vmatmul.mubr.f32.gmra.mrb[0].mxu0 %v1399
    %v1470 = vpop.f32.mrb[0].mxu0
    %v1471 = vadd.f32 0.0, %v1470
    %v1472 = vpop.f32.mrb[0].mxu0
    %v1473 = vadd.f32 0.0, %v1472
    %1474 = vmatprep.mubr.f32.mxu0 0.0
    %1475 = vmatmul.mubr.f32.gmra.mrb[0].mxu0 %v1402
    %v1476 = vpop.f32.mrb[0].mxu0
    %v1477 = vadd.f32 0.0, %v1476
    %v1478 = vpop.f32.mrb[0].mxu0
    %v1479 = vadd.f32 0.0, %v1478
    %1480 = vdwg.mxu0
    %v1481 = vadd.f32 %v1391, %v1471
    %v1482 = vadd.f32 %v1392, %v1473
    %v1483 = vadd.f32 %v1393, %v1477
    %v1484 = vadd.f32 %v1394, %v1479
    %s1485 = scalar_lea.vmem %s4, 32
    %v1486 = vld [vmem:[%s1485] sm:$0xff]
    %v1487 = vld [vmem:[%s1485 + $0x8] sm:$0xff]
    %v1489 = vsel %vm1307, %v1486, 0
    %v1492 = vsel %vm1307, %v1487, 0
    %1494 = vmatprep.subr.mxu0 %v865
    %1495 = vmatpush1.msra.mxu0 %v863
    %1496 = vmatprep.subr.mxu0 0.0
    %1497 = vmatpush1.msra.mxu0 0.0
    %1498 = vmatprep.subr.mxu0 0.0
    %1499 = vmatpush1.msra.mxu0 0.0
    %1500 = vmatprep.subr.mxu0 0.0
    %1501 = vmatpush1.msra.mxu0 0.0
    %1502 = vmatprep.subr.mxu0 0.0
    %1503 = vmatpush1.msra.mxu0 0.0
    %1504 = vmatprep.subr.mxu0 0.0
    %1505 = vmatpush1.msra.mxu0 0.0
    %1506 = vmatprep.subr.mxu0 0.0
    %1507 = vmatpush1.msra.mxu0 0.0
    %1508 = vmatprep.subr.mxu0 0.0
    %1509 = vmatpush1.msra.mxu0 0.0
    %1510 = vmatprep.subr.mxu0 0.0
    %1511 = vmatpush1.msra.mxu0 0.0
    %1512 = vmatprep.subr.mxu0 0.0
    %1513 = vmatpush1.msra.mxu0 0.0
    %1514 = vmatprep.subr.mxu0 0.0
    %1515 = vmatpush1.msra.mxu0 0.0
    %1516 = vmatprep.subr.mxu0 0.0
    %1517 = vmatpush1.msra.mxu0 0.0
    %1518 = vmatprep.subr.mxu0 0.0
    %1519 = vmatpush1.msra.mxu0 0.0
    %1520 = vmatprep.subr.mxu0 0.0
    %1521 = vmatpush1.msra.mxu0 0.0
    %1522 = vmatprep.subr.mxu0 0.0
    %1523 = vmatpush1.msra.mxu0 0.0
    %1524 = vmatprep.subr.mxu0 0.0
    %1525 = vmatpush1.msra.mxu0 0.0
    %1526 = vmatprep.subr.mxu0 0.0
    %1527 = vmatpush1.msra.mxu0 0.0
    %1528 = vmatprep.subr.mxu0 0.0
    %1529 = vmatpush1.msra.mxu0 0.0
    %1530 = vmatprep.subr.mxu0 0.0
    %1531 = vmatpush1.msra.mxu0 0.0
    %1532 = vmatprep.subr.mxu0 0.0
    %1533 = vmatpush1.msra.mxu0 0.0
    %1534 = vmatprep.subr.mxu0 0.0
    %1535 = vmatpush1.msra.mxu0 0.0
    %1536 = vmatprep.subr.mxu0 0.0
    %1537 = vmatpush1.msra.mxu0 0.0
    %1538 = vmatprep.subr.mxu0 0.0
    %1539 = vmatpush1.msra.mxu0 0.0
    %1540 = vmatprep.subr.mxu0 0.0
    %1541 = vmatpush1.msra.mxu0 0.0
    %1542 = vmatprep.subr.mxu0 0.0
    %1543 = vmatpush1.msra.mxu0 0.0
    %1544 = vmatprep.subr.mxu0 0.0
    %1545 = vmatpush1.msra.mxu0 0.0
    %1546 = vmatprep.subr.mxu0 0.0
    %1547 = vmatpush1.msra.mxu0 0.0
    %1548 = vmatprep.subr.mxu0 0.0
    %1549 = vmatpush1.msra.mxu0 0.0
    %1550 = vmatprep.subr.mxu0 0.0
    %1551 = vmatpush1.msra.mxu0 0.0
    %1552 = vmatprep.subr.mxu0 0.0
    %1553 = vmatpush1.msra.mxu0 0.0
    %1554 = vmatprep.subr.mxu0 0.0
    %1555 = vmatpush1.msra.mxu0 0.0
    %1556 = vmatprep.subr.mxu0 0.0
    %1557 = vmatpush1.msra.mxu0 0.0
    %1558 = vmatprep.mubr.f32.mxu0 0.0
    %1559 = vmatmul.mubr.f32.gmra.mrb[0].mxu0 %v1489
    %v1560 = vpop.f32.mrb[0].mxu0
    %v1561 = vadd.f32 0.0, %v1560
    %v1562 = vpop.f32.mrb[0].mxu0
    %v1563 = vadd.f32 0.0, %v1562
    %1564 = vmatprep.mubr.f32.mxu0 0.0
    %1565 = vmatmul.mubr.f32.gmra.mrb[0].mxu0 %v1492
    %v1566 = vpop.f32.mrb[0].mxu0
    %v1567 = vadd.f32 0.0, %v1566
    %v1568 = vpop.f32.mrb[0].mxu0
    %v1569 = vadd.f32 0.0, %v1568
    %1570 = vdwg.mxu0
    %v1571 = vadd.f32 %v1481, %v1561
    %v1572 = vadd.f32 %v1482, %v1563
    %v1573 = vadd.f32 %v1483, %v1567
    %v1574 = vadd.f32 %v1484, %v1569
    %s1575 = scalar_lea.vmem %s4, 48
    %v1576 = vld [vmem:[%s1575] sm:$0xff]
    %v1577 = vld [vmem:[%s1575 + $0x8] sm:$0xff]
    %v1579 = vsel %vm1307, %v1576, 0
    %v1582 = vsel %vm1307, %v1577, 0
    %1584 = vmatprep.subr.mxu0 %v936
    %1585 = vmatpush1.msra.mxu0 %v934
    %1586 = vmatprep.subr.mxu0 0.0
    %1587 = vmatpush1.msra.mxu0 0.0
    %1588 = vmatprep.subr.mxu0 0.0
    %1589 = vmatpush1.msra.mxu0 0.0
    %1590 = vmatprep.subr.mxu0 0.0
    %1591 = vmatpush1.msra.mxu0 0.0
    %1592 = vmatprep.subr.mxu0 0.0
    %1593 = vmatpush1.msra.mxu0 0.0
    %1594 = vmatprep.subr.mxu0 0.0
    %1595 = vmatpush1.msra.mxu0 0.0
    %1596 = vmatprep.subr.mxu0 0.0
    %1597 = vmatpush1.msra.mxu0 0.0
    %1598 = vmatprep.subr.mxu0 0.0
    %1599 = vmatpush1.msra.mxu0 0.0
    %1600 = vmatprep.subr.mxu0 0.0
    %1601 = vmatpush1.msra.mxu0 0.0
    %1602 = vmatprep.subr.mxu0 0.0
    %1603 = vmatpush1.msra.mxu0 0.0
    %1604 = vmatprep.subr.mxu0 0.0
    %1605 = vmatpush1.msra.mxu0 0.0
    %1606 = vmatprep.subr.mxu0 0.0
    %1607 = vmatpush1.msra.mxu0 0.0
    %1608 = vmatprep.subr.mxu0 0.0
    %1609 = vmatpush1.msra.mxu0 0.0
    %1610 = vmatprep.subr.mxu0 0.0
    %1611 = vmatpush1.msra.mxu0 0.0
    %1612 = vmatprep.subr.mxu0 0.0
    %1613 = vmatpush1.msra.mxu0 0.0
    %1614 = vmatprep.subr.mxu0 0.0
    %1615 = vmatpush1.msra.mxu0 0.0
    %1616 = vmatprep.subr.mxu0 0.0
    %1617 = vmatpush1.msra.mxu0 0.0
    %1618 = vmatprep.subr.mxu0 0.0
    %1619 = vmatpush1.msra.mxu0 0.0
    %1620 = vmatprep.subr.mxu0 0.0
    %1621 = vmatpush1.msra.mxu0 0.0
    %1622 = vmatprep.subr.mxu0 0.0
    %1623 = vmatpush1.msra.mxu0 0.0
    %1624 = vmatprep.subr.mxu0 0.0
    %1625 = vmatpush1.msra.mxu0 0.0
    %1626 = vmatprep.subr.mxu0 0.0
    %1627 = vmatpush1.msra.mxu0 0.0
    %1628 = vmatprep.subr.mxu0 0.0
    %1629 = vmatpush1.msra.mxu0 0.0
    %1630 = vmatprep.subr.mxu0 0.0
    %1631 = vmatpush1.msra.mxu0 0.0
    %1632 = vmatprep.subr.mxu0 0.0
    %1633 = vmatpush1.msra.mxu0 0.0
    %1634 = vmatprep.subr.mxu0 0.0
    %1635 = vmatpush1.msra.mxu0 0.0
    %1636 = vmatprep.subr.mxu0 0.0
    %1637 = vmatpush1.msra.mxu0 0.0
    %1638 = vmatprep.subr.mxu0 0.0
    %1639 = vmatpush1.msra.mxu0 0.0
    %1640 = vmatprep.subr.mxu0 0.0
    %1641 = vmatpush1.msra.mxu0 0.0
    %1642 = vmatprep.subr.mxu0 0.0
    %1643 = vmatpush1.msra.mxu0 0.0
    %1644 = vmatprep.subr.mxu0 0.0
    %1645 = vmatpush1.msra.mxu0 0.0
    %1646 = vmatprep.subr.mxu0 0.0
    %1647 = vmatpush1.msra.mxu0 0.0
    %1648 = vmatprep.mubr.f32.mxu0 0.0
    %1649 = vmatmul.mubr.f32.gmra.mrb[0].mxu0 %v1579
    %v1650 = vpop.f32.mrb[0].mxu0
    %v1651 = vadd.f32 0.0, %v1650
    %v1652 = vpop.f32.mrb[0].mxu0
    %v1653 = vadd.f32 0.0, %v1652
    %1654 = vmatprep.mubr.f32.mxu0 0.0
    %1655 = vmatmul.mubr.f32.gmra.mrb[0].mxu0 %v1582
    %v1656 = vpop.f32.mrb[0].mxu0
    %v1657 = vadd.f32 0.0, %v1656
    %v1658 = vpop.f32.mrb[0].mxu0
    %v1659 = vadd.f32 0.0, %v1658
    %1660 = vdwg.mxu0
    %v1661 = vadd.f32 %v1571, %v1651
    %v1662 = vadd.f32 %v1572, %v1653
    %v1663 = vadd.f32 %v1573, %v1657
    %v1664 = vadd.f32 %v1574, %v1659
    %s1665 = scalar_lea.vmem %s4, 64
    %v1666 = vld [vmem:[%s1665] sm:$0xff]
    %v1667 = vld [vmem:[%s1665 + $0x8] sm:$0xff]
    %v1669 = vsel %vm1307, %v1666, 0
    %v1672 = vsel %vm1307, %v1667, 0
    %1674 = vmatprep.subr.mxu0 %v1007
    %1675 = vmatpush1.msra.mxu0 %v1005
    %1676 = vmatprep.subr.mxu0 0.0
    %1677 = vmatpush1.msra.mxu0 0.0
    %1678 = vmatprep.subr.mxu0 0.0
    %1679 = vmatpush1.msra.mxu0 0.0
    %1680 = vmatprep.subr.mxu0 0.0
    %1681 = vmatpush1.msra.mxu0 0.0
    %1682 = vmatprep.subr.mxu0 0.0
    %1683 = vmatpush1.msra.mxu0 0.0
    %1684 = vmatprep.subr.mxu0 0.0
    %1685 = vmatpush1.msra.mxu0 0.0
    %1686 = vmatprep.subr.mxu0 0.0
    %1687 = vmatpush1.msra.mxu0 0.0
    %1688 = vmatprep.subr.mxu0 0.0
    %1689 = vmatpush1.msra.mxu0 0.0
    %1690 = vmatprep.subr.mxu0 0.0
    %1691 = vmatpush1.msra.mxu0 0.0
    %1692 = vmatprep.subr.mxu0 0.0
    %1693 = vmatpush1.msra.mxu0 0.0
    %1694 = vmatprep.subr.mxu0 0.0
    %1695 = vmatpush1.msra.mxu0 0.0
    %1696 = vmatprep.subr.mxu0 0.0
    %1697 = vmatpush1.msra.mxu0 0.0
    %1698 = vmatprep.subr.mxu0 0.0
    %1699 = vmatpush1.msra.mxu0 0.0
    %1700 = vmatprep.subr.mxu0 0.0
    %1701 = vmatpush1.msra.mxu0 0.0
    %1702 = vmatprep.subr.mxu0 0.0
    %1703 = vmatpush1.msra.mxu0 0.0
    %1704 = vmatprep.subr.mxu0 0.0
    %1705 = vmatpush1.msra.mxu0 0.0
    %1706 = vmatprep.subr.mxu0 0.0
    %1707 = vmatpush1.msra.mxu0 0.0
    %1708 = vmatprep.subr.mxu0 0.0
    %1709 = vmatpush1.msra.mxu0 0.0
    %1710 = vmatprep.subr.mxu0 0.0
    %1711 = vmatpush1.msra.mxu0 0.0
    %1712 = vmatprep.subr.mxu0 0.0
    %1713 = vmatpush1.msra.mxu0 0.0
    %1714 = vmatprep.subr.mxu0 0.0
    %1715 = vmatpush1.msra.mxu0 0.0
    %1716 = vmatprep.subr.mxu0 0.0
    %1717 = vmatpush1.msra.mxu0 0.0
    %1718 = vmatprep.subr.mxu0 0.0
    %1719 = vmatpush1.msra.mxu0 0.0
    %1720 = vmatprep.subr.mxu0 0.0
    %1721 = vmatpush1.msra.mxu0 0.0
    %1722 = vmatprep.subr.mxu0 0.0
    %1723 = vmatpush1.msra.mxu0 0.0
    %1724 = vmatprep.subr.mxu0 0.0
    %1725 = vmatpush1.msra.mxu0 0.0
    %1726 = vmatprep.subr.mxu0 0.0
    %1727 = vmatpush1.msra.mxu0 0.0
    %1728 = vmatprep.subr.mxu0 0.0
    %1729 = vmatpush1.msra.mxu0 0.0
    %1730 = vmatprep.subr.mxu0 0.0
    %1731 = vmatpush1.msra.mxu0 0.0
    %1732 = vmatprep.subr.mxu0 0.0
    %1733 = vmatpush1.msra.mxu0 0.0
    %1734 = vmatprep.subr.mxu0 0.0
    %1735 = vmatpush1.msra.mxu0 0.0
    %1736 = vmatprep.subr.mxu0 0.0
    %1737 = vmatpush1.msra.mxu0 0.0
    %1738 = vmatprep.mubr.f32.mxu0 0.0
    %1739 = vmatmul.mubr.f32.gmra.mrb[0].mxu0 %v1669
    %v1740 = vpop.f32.mrb[0].mxu0
    %v1741 = vadd.f32 0.0, %v1740
    %v1742 = vpop.f32.mrb[0].mxu0
    %v1743 = vadd.f32 0.0, %v1742
    %1744 = vmatprep.mubr.f32.mxu0 0.0
    %1745 = vmatmul.mubr.f32.gmra.mrb[0].mxu0 %v1672
    %v1746 = vpop.f32.mrb[0].mxu0
    %v1747 = vadd.f32 0.0, %v1746
    %v1748 = vpop.f32.mrb[0].mxu0
    %v1749 = vadd.f32 0.0, %v1748
    %1750 = vdwg.mxu0
    %v1751 = vadd.f32 %v1661, %v1741
    %v1752 = vadd.f32 %v1662, %v1743
    %v1753 = vadd.f32 %v1663, %v1747
    %v1754 = vadd.f32 %v1664, %v1749
    %s1755 = scalar_lea.vmem %s4, 80
    %v1756 = vld [vmem:[%s1755] sm:$0xff]
    %v1757 = vld [vmem:[%s1755 + $0x8] sm:$0xff]
    %v1759 = vsel %vm1307, %v1756, 0
    %v1762 = vsel %vm1307, %v1757, 0
    %1764 = vmatprep.subr.mxu0 %v1078
    %1765 = vmatpush1.msra.mxu0 %v1076
    %1766 = vmatprep.subr.mxu0 0.0
    %1767 = vmatpush1.msra.mxu0 0.0
    %1768 = vmatprep.subr.mxu0 0.0
    %1769 = vmatpush1.msra.mxu0 0.0
    %1770 = vmatprep.subr.mxu0 0.0
    %1771 = vmatpush1.msra.mxu0 0.0
    %1772 = vmatprep.subr.mxu0 0.0
    %1773 = vmatpush1.msra.mxu0 0.0
    %1774 = vmatprep.subr.mxu0 0.0
    %1775 = vmatpush1.msra.mxu0 0.0
    %1776 = vmatprep.subr.mxu0 0.0
    %1777 = vmatpush1.msra.mxu0 0.0
    %1778 = vmatprep.subr.mxu0 0.0
    %1779 = vmatpush1.msra.mxu0 0.0
    %1780 = vmatprep.subr.mxu0 0.0
    %1781 = vmatpush1.msra.mxu0 0.0
    %1782 = vmatprep.subr.mxu0 0.0
    %1783 = vmatpush1.msra.mxu0 0.0
    %1784 = vmatprep.subr.mxu0 0.0
    %1785 = vmatpush1.msra.mxu0 0.0
    %1786 = vmatprep.subr.mxu0 0.0
    %1787 = vmatpush1.msra.mxu0 0.0
    %1788 = vmatprep.subr.mxu0 0.0
    %1789 = vmatpush1.msra.mxu0 0.0
    %1790 = vmatprep.subr.mxu0 0.0
    %1791 = vmatpush1.msra.mxu0 0.0
    %1792 = vmatprep.subr.mxu0 0.0
    %1793 = vmatpush1.msra.mxu0 0.0
    %1794 = vmatprep.subr.mxu0 0.0
    %1795 = vmatpush1.msra.mxu0 0.0
    %1796 = vmatprep.subr.mxu0 0.0
    %1797 = vmatpush1.msra.mxu0 0.0
    %1798 = vmatprep.subr.mxu0 0.0
    %1799 = vmatpush1.msra.mxu0 0.0
    %1800 = vmatprep.subr.mxu0 0.0
    %1801 = vmatpush1.msra.mxu0 0.0
    %1802 = vmatprep.subr.mxu0 0.0
    %1803 = vmatpush1.msra.mxu0 0.0
    %1804 = vmatprep.subr.mxu0 0.0
    %1805 = vmatpush1.msra.mxu0 0.0
    %1806 = vmatprep.subr.mxu0 0.0
    %1807 = vmatpush1.msra.mxu0 0.0
    %1808 = vmatprep.subr.mxu0 0.0
    %1809 = vmatpush1.msra.mxu0 0.0
    %1810 = vmatprep.subr.mxu0 0.0
    %1811 = vmatpush1.msra.mxu0 0.0
    %1812 = vmatprep.subr.mxu0 0.0
    %1813 = vmatpush1.msra.mxu0 0.0
    %1814 = vmatprep.subr.mxu0 0.0
    %1815 = vmatpush1.msra.mxu0 0.0
    %1816 = vmatprep.subr.mxu0 0.0
    %1817 = vmatpush1.msra.mxu0 0.0
    %1818 = vmatprep.subr.mxu0 0.0
    %1819 = vmatpush1.msra.mxu0 0.0
    %1820 = vmatprep.subr.mxu0 0.0
    %1821 = vmatpush1.msra.mxu0 0.0
    %1822 = vmatprep.subr.mxu0 0.0
    %1823 = vmatpush1.msra.mxu0 0.0
    %1824 = vmatprep.subr.mxu0 0.0
    %1825 = vmatpush1.msra.mxu0 0.0
    %1826 = vmatprep.subr.mxu0 0.0
    %1827 = vmatpush1.msra.mxu0 0.0
    %1828 = vmatprep.mubr.f32.mxu0 0.0
    %1829 = vmatmul.mubr.f32.gmra.mrb[0].mxu0 %v1759
    %v1830 = vpop.f32.mrb[0].mxu0
    %v1831 = vadd.f32 0.0, %v1830
    %v1832 = vpop.f32.mrb[0].mxu0
    %v1833 = vadd.f32 0.0, %v1832
    %1834 = vmatprep.mubr.f32.mxu0 0.0
    %1835 = vmatmul.mubr.f32.gmra.mrb[0].mxu0 %v1762
    %v1836 = vpop.f32.mrb[0].mxu0
    %v1837 = vadd.f32 0.0, %v1836
    %v1838 = vpop.f32.mrb[0].mxu0
    %v1839 = vadd.f32 0.0, %v1838
    %1840 = vdwg.mxu0
    %v1841 = vadd.f32 %v1751, %v1831
    %v1842 = vadd.f32 %v1752, %v1833
    %v1843 = vadd.f32 %v1753, %v1837
    %v1844 = vadd.f32 %v1754, %v1839
    %s1845 = scalar_lea.vmem %s4, 96
    %v1846 = vld [vmem:[%s1845] sm:$0xff]
    %v1847 = vld [vmem:[%s1845 + $0x8] sm:$0xff]
    %v1849 = vsel %vm1307, %v1846, 0
    %v1852 = vsel %vm1307, %v1847, 0
    %1854 = vmatprep.subr.mxu0 %v1149
    %1855 = vmatpush1.msra.mxu0 %v1147
    %1856 = vmatprep.subr.mxu0 0.0
    %1857 = vmatpush1.msra.mxu0 0.0
    %1858 = vmatprep.subr.mxu0 0.0
    %1859 = vmatpush1.msra.mxu0 0.0
    %1860 = vmatprep.subr.mxu0 0.0
    %1861 = vmatpush1.msra.mxu0 0.0
    %1862 = vmatprep.subr.mxu0 0.0
    %1863 = vmatpush1.msra.mxu0 0.0
    %1864 = vmatprep.subr.mxu0 0.0
    %1865 = vmatpush1.msra.mxu0 0.0
    %1866 = vmatprep.subr.mxu0 0.0
    %1867 = vmatpush1.msra.mxu0 0.0
    %1868 = vmatprep.subr.mxu0 0.0
    %1869 = vmatpush1.msra.mxu0 0.0
    %1870 = vmatprep.subr.mxu0 0.0
    %1871 = vmatpush1.msra.mxu0 0.0
    %1872 = vmatprep.subr.mxu0 0.0
    %1873 = vmatpush1.msra.mxu0 0.0
    %1874 = vmatprep.subr.mxu0 0.0
    %1875 = vmatpush1.msra.mxu0 0.0
    %1876 = vmatprep.subr.mxu0 0.0
    %1877 = vmatpush1.msra.mxu0 0.0
    %1878 = vmatprep.subr.mxu0 0.0
    %1879 = vmatpush1.msra.mxu0 0.0
    %1880 = vmatprep.subr.mxu0 0.0
    %1881 = vmatpush1.msra.mxu0 0.0
    %1882 = vmatprep.subr.mxu0 0.0
    %1883 = vmatpush1.msra.mxu0 0.0
    %1884 = vmatprep.subr.mxu0 0.0
    %1885 = vmatpush1.msra.mxu0 0.0
    %1886 = vmatprep.subr.mxu0 0.0
    %1887 = vmatpush1.msra.mxu0 0.0
    %1888 = vmatprep.subr.mxu0 0.0
    %1889 = vmatpush1.msra.mxu0 0.0
    %1890 = vmatprep.subr.mxu0 0.0
    %1891 = vmatpush1.msra.mxu0 0.0
    %1892 = vmatprep.subr.mxu0 0.0
    %1893 = vmatpush1.msra.mxu0 0.0
    %1894 = vmatprep.subr.mxu0 0.0
    %1895 = vmatpush1.msra.mxu0 0.0
    %1896 = vmatprep.subr.mxu0 0.0
    %1897 = vmatpush1.msra.mxu0 0.0
    %1898 = vmatprep.subr.mxu0 0.0
    %1899 = vmatpush1.msra.mxu0 0.0
    %1900 = vmatprep.subr.mxu0 0.0
    %1901 = vmatpush1.msra.mxu0 0.0
    %1902 = vmatprep.subr.mxu0 0.0
    %1903 = vmatpush1.msra.mxu0 0.0
    %1904 = vmatprep.subr.mxu0 0.0
    %1905 = vmatpush1.msra.mxu0 0.0
    %1906 = vmatprep.subr.mxu0 0.0
    %1907 = vmatpush1.msra.mxu0 0.0
    %1908 = vmatprep.subr.mxu0 0.0
    %1909 = vmatpush1.msra.mxu0 0.0
    %1910 = vmatprep.subr.mxu0 0.0
    %1911 = vmatpush1.msra.mxu0 0.0
    %1912 = vmatprep.subr.mxu0 0.0
    %1913 = vmatpush1.msra.mxu0 0.0
    %1914 = vmatprep.subr.mxu0 0.0
    %1915 = vmatpush1.msra.mxu0 0.0
    %1916 = vmatprep.subr.mxu0 0.0
    %1917 = vmatpush1.msra.mxu0 0.0
    %1918 = vmatprep.mubr.f32.mxu0 0.0
    %1919 = vmatmul.mubr.f32.gmra.mrb[0].mxu0 %v1849
    %v1920 = vpop.f32.mrb[0].mxu0
    %v1921 = vadd.f32 0.0, %v1920
    %v1922 = vpop.f32.mrb[0].mxu0
    %v1923 = vadd.f32 0.0, %v1922
    %1924 = vmatprep.mubr.f32.mxu0 0.0
    %1925 = vmatmul.mubr.f32.gmra.mrb[0].mxu0 %v1852
    %v1926 = vpop.f32.mrb[0].mxu0
    %v1927 = vadd.f32 0.0, %v1926
    %v1928 = vpop.f32.mrb[0].mxu0
    %v1929 = vadd.f32 0.0, %v1928
    %1930 = vdwg.mxu0
    %v1931 = vadd.f32 %v1841, %v1921
    %v1932 = vadd.f32 %v1842, %v1923
    %v1933 = vadd.f32 %v1843, %v1927
    %v1934 = vadd.f32 %v1844, %v1929
    %s1935 = scalar_lea.vmem %s4, 112
    %v1936 = vld [vmem:[%s1935] sm:$0xff]
    %v1937 = vld [vmem:[%s1935 + $0x8] sm:$0xff]
    %v1939 = vsel %vm1307, %v1936, 0
    %v1942 = vsel %vm1307, %v1937, 0
    %1944 = vmatprep.subr.mxu0 %v1220
    %1945 = vmatpush1.msra.mxu0 %v1218
    %1946 = vmatprep.subr.mxu0 0.0
    %1947 = vmatpush1.msra.mxu0 0.0
    %1948 = vmatprep.subr.mxu0 0.0
    %1949 = vmatpush1.msra.mxu0 0.0
    %1950 = vmatprep.subr.mxu0 0.0
    %1951 = vmatpush1.msra.mxu0 0.0
    %1952 = vmatprep.subr.mxu0 0.0
    %1953 = vmatpush1.msra.mxu0 0.0
    %1954 = vmatprep.subr.mxu0 0.0
    %1955 = vmatpush1.msra.mxu0 0.0
    %1956 = vmatprep.subr.mxu0 0.0
    %1957 = vmatpush1.msra.mxu0 0.0
    %1958 = vmatprep.subr.mxu0 0.0
    %1959 = vmatpush1.msra.mxu0 0.0
    %1960 = vmatprep.subr.mxu0 0.0
    %1961 = vmatpush1.msra.mxu0 0.0
    %1962 = vmatprep.subr.mxu0 0.0
    %1963 = vmatpush1.msra.mxu0 0.0
    %1964 = vmatprep.subr.mxu0 0.0
    %1965 = vmatpush1.msra.mxu0 0.0
    %1966 = vmatprep.subr.mxu0 0.0
    %1967 = vmatpush1.msra.mxu0 0.0
    %1968 = vmatprep.subr.mxu0 0.0
    %1969 = vmatpush1.msra.mxu0 0.0
    %1970 = vmatprep.subr.mxu0 0.0
    %1971 = vmatpush1.msra.mxu0 0.0
    %1972 = vmatprep.subr.mxu0 0.0
    %1973 = vmatpush1.msra.mxu0 0.0
    %1974 = vmatprep.subr.mxu0 0.0
    %1975 = vmatpush1.msra.mxu0 0.0
    %1976 = vmatprep.subr.mxu0 0.0
    %1977 = vmatpush1.msra.mxu0 0.0
    %1978 = vmatprep.subr.mxu0 0.0
    %1979 = vmatpush1.msra.mxu0 0.0
    %1980 = vmatprep.subr.mxu0 0.0
    %1981 = vmatpush1.msra.mxu0 0.0
    %1982 = vmatprep.subr.mxu0 0.0
    %1983 = vmatpush1.msra.mxu0 0.0
    %1984 = vmatprep.subr.mxu0 0.0
    %1985 = vmatpush1.msra.mxu0 0.0
    %1986 = vmatprep.subr.mxu0 0.0
    %1987 = vmatpush1.msra.mxu0 0.0
    %1988 = vmatprep.subr.mxu0 0.0
    %1989 = vmatpush1.msra.mxu0 0.0
    %1990 = vmatprep.subr.mxu0 0.0
    %1991 = vmatpush1.msra.mxu0 0.0
    %1992 = vmatprep.subr.mxu0 0.0
    %1993 = vmatpush1.msra.mxu0 0.0
    %1994 = vmatprep.subr.mxu0 0.0
    %1995 = vmatpush1.msra.mxu0 0.0
    %1996 = vmatprep.subr.mxu0 0.0
    %1997 = vmatpush1.msra.mxu0 0.0
    %1998 = vmatprep.subr.mxu0 0.0
    %1999 = vmatpush1.msra.mxu0 0.0
    %2000 = vmatprep.subr.mxu0 0.0
    %2001 = vmatpush1.msra.mxu0 0.0
    %2002 = vmatprep.subr.mxu0 0.0
    %2003 = vmatpush1.msra.mxu0 0.0
    %2004 = vmatprep.subr.mxu0 0.0
    %2005 = vmatpush1.msra.mxu0 0.0
    %2006 = vmatprep.subr.mxu0 0.0
    %2007 = vmatpush1.msra.mxu0 0.0
    %2008 = vmatprep.mubr.f32.mxu0 0.0
    %2009 = vmatmul.mubr.f32.gmra.mrb[0].mxu0 %v1939
    %v2010 = vpop.f32.mrb[0].mxu0
    %v2011 = vadd.f32 0.0, %v2010
    %v2012 = vpop.f32.mrb[0].mxu0
    %v2013 = vadd.f32 0.0, %v2012
    %2014 = vmatprep.mubr.f32.mxu0 0.0
    %2015 = vmatmul.mubr.f32.gmra.mrb[0].mxu0 %v1942
    %v2016 = vpop.f32.mrb[0].mxu0
    %v2017 = vadd.f32 0.0, %v2016
    %v2018 = vpop.f32.mrb[0].mxu0
    %v2019 = vadd.f32 0.0, %v2018
    %2020 = vdwg.mxu0
    %v2021 = vadd.f32 %v1931, %v2011
    %v2022 = vadd.f32 %v1932, %v2013
    %v2023 = vadd.f32 %v1933, %v2017
    %v2024 = vadd.f32 %v1934, %v2019
    %s2025 = scalar_lea.vmem %s4, 128
    %v2026 = vld [vmem:[%s2025] sm:$0xff]
    %v2027 = vld [vmem:[%s2025 + $0x8] sm:$0xff]
    %v2029 = vsel %vm1307, %v2026, 0
    %v2032 = vsel %vm1307, %v2027, 0
    %2034 = vmatprep.subr.mxu0 %v1291
    %2035 = vmatpush1.msra.mxu0 %v1289
    %2036 = vmatprep.subr.mxu0 0.0
    %2037 = vmatpush1.msra.mxu0 0.0
    %2038 = vmatprep.subr.mxu0 0.0
    %2039 = vmatpush1.msra.mxu0 0.0
    %2040 = vmatprep.subr.mxu0 0.0
    %2041 = vmatpush1.msra.mxu0 0.0
    %2042 = vmatprep.subr.mxu0 0.0
    %2043 = vmatpush1.msra.mxu0 0.0
    %2044 = vmatprep.subr.mxu0 0.0
    %2045 = vmatpush1.msra.mxu0 0.0
    %2046 = vmatprep.subr.mxu0 0.0
    %2047 = vmatpush1.msra.mxu0 0.0
    %2048 = vmatprep.subr.mxu0 0.0
    %2049 = vmatpush1.msra.mxu0 0.0
    %2050 = vmatprep.subr.mxu0 0.0
    %2051 = vmatpush1.msra.mxu0 0.0
    %2052 = vmatprep.subr.mxu0 0.0
    %2053 = vmatpush1.msra.mxu0 0.0
    %2054 = vmatprep.subr.mxu0 0.0
    %2055 = vmatpush1.msra.mxu0 0.0
    %2056 = vmatprep.subr.mxu0 0.0
    %2057 = vmatpush1.msra.mxu0 0.0
    %2058 = vmatprep.subr.mxu0 0.0
    %2059 = vmatpush1.msra.mxu0 0.0
    %2060 = vmatprep.subr.mxu0 0.0
    %2061 = vmatpush1.msra.mxu0 0.0
    %2062 = vmatprep.subr.mxu0 0.0
    %2063 = vmatpush1.msra.mxu0 0.0
    %2064 = vmatprep.subr.mxu0 0.0
    %2065 = vmatpush1.msra.mxu0 0.0
    %2066 = vmatprep.subr.mxu0 0.0
    %2067 = vmatpush1.msra.mxu0 0.0
    %2068 = vmatprep.subr.mxu0 0.0
    %2069 = vmatpush1.msra.mxu0 0.0
    %2070 = vmatprep.subr.mxu0 0.0
    %2071 = vmatpush1.msra.mxu0 0.0
    %2072 = vmatprep.subr.mxu0 0.0
    %2073 = vmatpush1.msra.mxu0 0.0
    %2074 = vmatprep.subr.mxu0 0.0
    %2075 = vmatpush1.msra.mxu0 0.0
    %2076 = vmatprep.subr.mxu0 0.0
    %2077 = vmatpush1.msra.mxu0 0.0
    %2078 = vmatprep.subr.mxu0 0.0
    %2079 = vmatpush1.msra.mxu0 0.0
    %2080 = vmatprep.subr.mxu0 0.0
    %2081 = vmatpush1.msra.mxu0 0.0
    %2082 = vmatprep.subr.mxu0 0.0
    %2083 = vmatpush1.msra.mxu0 0.0
    %2084 = vmatprep.subr.mxu0 0.0
    %2085 = vmatpush1.msra.mxu0 0.0
    %2086 = vmatprep.subr.mxu0 0.0
    %2087 = vmatpush1.msra.mxu0 0.0
    %2088 = vmatprep.subr.mxu0 0.0
    %2089 = vmatpush1.msra.mxu0 0.0
    %2090 = vmatprep.subr.mxu0 0.0
    %2091 = vmatpush1.msra.mxu0 0.0
    %2092 = vmatprep.subr.mxu0 0.0
    %2093 = vmatpush1.msra.mxu0 0.0
    %2094 = vmatprep.subr.mxu0 0.0
    %2095 = vmatpush1.msra.mxu0 0.0
    %2096 = vmatprep.subr.mxu0 0.0
    %2097 = vmatpush1.msra.mxu0 0.0
    %2098 = vmatprep.mubr.f32.mxu0 0.0
    %2099 = vmatmul.mubr.f32.gmra.mrb[0].mxu0 %v2029
    %v2100 = vpop.f32.mrb[0].mxu0
    %v2101 = vadd.f32 0.0, %v2100
    %v2102 = vpop.f32.mrb[0].mxu0
    %v2103 = vadd.f32 0.0, %v2102
    %2104 = vmatprep.mubr.f32.mxu0 0.0
    %2105 = vmatmul.mubr.f32.gmra.mrb[0].mxu0 %v2032
    %v2106 = vpop.f32.mrb[0].mxu0
    %v2107 = vadd.f32 0.0, %v2106
    %v2108 = vpop.f32.mrb[0].mxu0
    %v2109 = vadd.f32 0.0, %v2108
    %2110 = vdwg.mxu0
    %v2111 = vadd.f32 %v2021, %v2101
    %v2112 = vadd.f32 %v2022, %v2103
    %v2113 = vadd.f32 %v2023, %v2107
    %v2114 = vadd.f32 %v2024, %v2109
    %v2115 = vld [vmem:[#allocation4] sm:$0xff]
    %v2116 = vld [vmem:[#allocation4 + $0x8] sm:$0xff]
    %v2117 = vld [vmem:[#allocation4 + $0x10] sm:$0xff]
    %v2118 = vld [vmem:[#allocation4 + $0x18] sm:$0xff]
    %v2119 = vld [vmem:[#allocation4 + $0x20] sm:$0xff]
    %v2120 = vld [vmem:[#allocation4 + $0x28] sm:$0xff]
    %v2121 = vld [vmem:[#allocation4 + $0x30] sm:$0xff]
    %v2122 = vld [vmem:[#allocation4 + $0x38] sm:$0xff]
    %v2123 = vld [vmem:[#allocation4 + $0x40] sm:$0xff]
    %v2124 = vld [vmem:[#allocation4 + $0x48] sm:$0xff]
    %v2125 = vld [vmem:[#allocation4 + $0x50] sm:$0xff]
    %v2126 = vld [vmem:[#allocation4 + $0x58] sm:$0xff]
    %v2127 = vld [vmem:[#allocation4 + $0x60] sm:$0xff]
    %v2128 = vld [vmem:[#allocation4 + $0x68] sm:$0xff]
    %v2129 = vld [vmem:[#allocation4 + $0x70] sm:$0xff]
    %v2130 = vld [vmem:[#allocation4 + $0x78] sm:$0xff]
    %v2131 = vld [vmem:[#allocation4 + $0x80] sm:$0xff]
    %v2132 = vld [vmem:[#allocation4 + $0x88] sm:$0xff]
    %v2133 = vld [vmem:[#allocation4 + $0x90] sm:$0xff]
    %v2134 = vld [vmem:[#allocation4 + $0x98] sm:$0xff]
    %v2135 = vld [vmem:[#allocation4 + $0xa0] sm:$0xff]
    %v2136 = vld [vmem:[#allocation4 + $0xa8] sm:$0xff]
    %v2137 = vld [vmem:[#allocation4 + $0xb0] sm:$0xff]
    %v2138 = vld [vmem:[#allocation4 + $0xb8] sm:$0xff]
    %v2139 = vld [vmem:[#allocation4 + $0xc0] sm:$0xff]
    %v2140 = vld [vmem:[#allocation4 + $0xc8] sm:$0xff]
    %v2141 = vld [vmem:[#allocation4 + $0xd0] sm:$0xff]
    %v2142 = vld [vmem:[#allocation4 + $0xd8] sm:$0xff]
    %v2143 = vld [vmem:[#allocation4 + $0xe0] sm:$0xff]
    %v2144 = vld [vmem:[#allocation4 + $0xe8] sm:$0xff]
    %v2145 = vld [vmem:[#allocation4 + $0xf0] sm:$0xff]
    %v2146 = vld [vmem:[#allocation4 + $0xf8] sm:$0xff]
    %v2147 = vld [vmem:[#allocation4 + $0x100] sm:$0xff]
    %v2148 = vld [vmem:[#allocation4 + $0x108] sm:$0xff]
    %v2149 = vld [vmem:[#allocation4 + $0x110] sm:$0xff]
    %v2150 = vld [vmem:[#allocation4 + $0x118] sm:$0xff]
    %v2151 = vld [vmem:[#allocation4 + $0x120] sm:$0xff]
    %v2152 = vld [vmem:[#allocation4 + $0x128] sm:$0xff]
    %v2153 = vld [vmem:[#allocation4 + $0x130] sm:$0xff]
    %v2154 = vld [vmem:[#allocation4 + $0x138] sm:$0xff]
    %v2155 = vld [vmem:[#allocation4 + $0x140] sm:$0xff]
    %v2156 = vld [vmem:[#allocation4 + $0x148] sm:$0xff]
    %v2157 = vld [vmem:[#allocation4 + $0x150] sm:$0xff]
    %v2158 = vld [vmem:[#allocation4 + $0x158] sm:$0xff]
    %v2159 = vld [vmem:[#allocation4 + $0x160] sm:$0xff]
    %v2160 = vld [vmem:[#allocation4 + $0x168] sm:$0xff]
    %v2161 = vld [vmem:[#allocation4 + $0x170] sm:$0xff]
    %v2162 = vld [vmem:[#allocation4 + $0x178] sm:$0xff]
    %v2163 = vld [vmem:[#allocation4 + $0x180] sm:$0xff]
    %v2164 = vld [vmem:[#allocation4 + $0x188] sm:$0xff]
    %v2165 = vld [vmem:[#allocation4 + $0x190] sm:$0xff]
    %v2166 = vld [vmem:[#allocation4 + $0x198] sm:$0xff]
    %v2167 = vld [vmem:[#allocation4 + $0x1a0] sm:$0xff]
    %v2168 = vld [vmem:[#allocation4 + $0x1a8] sm:$0xff]
    %v2169 = vld [vmem:[#allocation4 + $0x1b0] sm:$0xff]
    %v2170 = vld [vmem:[#allocation4 + $0x1b8] sm:$0xff]
    %v2171 = vld [vmem:[#allocation4 + $0x1c0] sm:$0xff]
    %v2172 = vld [vmem:[#allocation4 + $0x1c8] sm:$0xff]
    %v2173 = vld [vmem:[#allocation4 + $0x1d0] sm:$0xff]
    %v2174 = vld [vmem:[#allocation4 + $0x1d8] sm:$0xff]
    %v2175 = vld [vmem:[#allocation4 + $0x1e0] sm:$0xff]
    %v2176 = vld [vmem:[#allocation4 + $0x1e8] sm:$0xff]
    %v2177 = vld [vmem:[#allocation4 + $0x1f0] sm:$0xff]
    %v2178 = vld [vmem:[#allocation4 + $0x1f8] sm:$0xff]
    %v2179 = vld [vmem:[#allocation4 + $0x200] sm:$0xff]
    %v2180 = vld [vmem:[#allocation4 + $0x208] sm:$0xff]
    %v2181 = vld [vmem:[#allocation4 + $0x210] sm:$0xff]
    %v2182 = vld [vmem:[#allocation4 + $0x218] sm:$0xff]
    %v2183 = vld [vmem:[#allocation4 + $0x220] sm:$0xff]
    %v2184 = vld [vmem:[#allocation4 + $0x228] sm:$0xff]
    %v2185 = vld [vmem:[#allocation4 + $0x230] sm:$0xff]
    %v2186 = vld [vmem:[#allocation4 + $0x238] sm:$0xff]
    %v2187 = vld [vmem:[#allocation4 + $0x240] sm:$0xff]
    %v2188 = vld [vmem:[#allocation4 + $0x248] sm:$0xff]
    %v2189 = vld [vmem:[#allocation4 + $0x250] sm:$0xff]
    %v2190 = vld [vmem:[#allocation4 + $0x258] sm:$0xff]
    %v2191 = vld [vmem:[#allocation4 + $0x260] sm:$0xff]
    %v2192 = vld [vmem:[#allocation4 + $0x268] sm:$0xff]
    %v2193 = vld [vmem:[#allocation4 + $0x270] sm:$0xff]
    %v2194 = vld [vmem:[#allocation4 + $0x278] sm:$0xff]
    %v2195 = vld [vmem:[#allocation4 + $0x280] sm:$0xff]
    %v2196 = vld [vmem:[#allocation4 + $0x288] sm:$0xff]
    %v2197 = vld [vmem:[#allocation4 + $0x290] sm:$0xff]
    %v2198 = vld [vmem:[#allocation4 + $0x298] sm:$0xff]
    %v2199 = vld [vmem:[#allocation4 + $0x2a0] sm:$0xff]
    %v2200 = vld [vmem:[#allocation4 + $0x2a8] sm:$0xff]
    %v2201 = vld [vmem:[#allocation4 + $0x2b0] sm:$0xff]
    %v2202 = vld [vmem:[#allocation4 + $0x2b8] sm:$0xff]
    %v2203 = vld [vmem:[#allocation4 + $0x2c0] sm:$0xff]
    %v2204 = vld [vmem:[#allocation4 + $0x2c8] sm:$0xff]
    %v2205 = vld [vmem:[#allocation4 + $0x2d0] sm:$0xff]
    %v2206 = vld [vmem:[#allocation4 + $0x2d8] sm:$0xff]
    %v2207 = vld [vmem:[#allocation4 + $0x2e0] sm:$0xff]
    %v2208 = vld [vmem:[#allocation4 + $0x2e8] sm:$0xff]
    %v2209 = vld [vmem:[#allocation4 + $0x2f0] sm:$0xff]
    %v2210 = vld [vmem:[#allocation4 + $0x2f8] sm:$0xff]
    %v2211 = vld [vmem:[#allocation4 + $0x300] sm:$0xff]
    %v2212 = vld [vmem:[#allocation4 + $0x308] sm:$0xff]
    %v2213 = vld [vmem:[#allocation4 + $0x310] sm:$0xff]
    %v2214 = vld [vmem:[#allocation4 + $0x318] sm:$0xff]
    %v2215 = vld [vmem:[#allocation4 + $0x320] sm:$0xff]
    %v2216 = vld [vmem:[#allocation4 + $0x328] sm:$0xff]
    %v2217 = vld [vmem:[#allocation4 + $0x330] sm:$0xff]
    %v2218 = vld [vmem:[#allocation4 + $0x338] sm:$0xff]
    %v2219 = vld [vmem:[#allocation4 + $0x340] sm:$0xff]
    %v2220 = vld [vmem:[#allocation4 + $0x348] sm:$0xff]
    %v2221 = vld [vmem:[#allocation4 + $0x350] sm:$0xff]
    %v2222 = vld [vmem:[#allocation4 + $0x358] sm:$0xff]
    %v2223 = vld [vmem:[#allocation4 + $0x360] sm:$0xff]
    %v2224 = vld [vmem:[#allocation4 + $0x368] sm:$0xff]
    %v2225 = vld [vmem:[#allocation4 + $0x370] sm:$0xff]
    %v2226 = vld [vmem:[#allocation4 + $0x378] sm:$0xff]
    %v2227 = vld [vmem:[#allocation4 + $0x380] sm:$0xff]
    %v2228 = vld [vmem:[#allocation4 + $0x388] sm:$0xff]
    %v2229 = vld [vmem:[#allocation4 + $0x390] sm:$0xff]
    %v2230 = vld [vmem:[#allocation4 + $0x398] sm:$0xff]
    %v2231 = vld [vmem:[#allocation4 + $0x3a0] sm:$0xff]
    %v2232 = vld [vmem:[#allocation4 + $0x3a8] sm:$0xff]
    %v2233 = vld [vmem:[#allocation4 + $0x3b0] sm:$0xff]
    %v2234 = vld [vmem:[#allocation4 + $0x3b8] sm:$0xff]
    %v2235 = vld [vmem:[#allocation4 + $0x3c0] sm:$0xff]
    %v2236 = vld [vmem:[#allocation4 + $0x3c8] sm:$0xff]
    %v2237 = vld [vmem:[#allocation4 + $0x3d0] sm:$0xff]
    %v2238 = vld [vmem:[#allocation4 + $0x3d8] sm:$0xff]
    %v2239 = vld [vmem:[#allocation4 + $0x3e0] sm:$0xff]
    %v2240 = vld [vmem:[#allocation4 + $0x3e8] sm:$0xff]
    %v2241 = vld [vmem:[#allocation4 + $0x3f0] sm:$0xff]
    %v2242 = vld [vmem:[#allocation4 + $0x3f8] sm:$0xff]
    %v2243 = vld [vmem:[#allocation4 + $0x400] sm:$0xff]
    %v2244 = vld [vmem:[#allocation4 + $0x408] sm:$0xff]
    %v2245 = vld [vmem:[#allocation4 + $0x410] sm:$0xff]
    %v2246 = vld [vmem:[#allocation4 + $0x418] sm:$0xff]
    %v2247 = vld [vmem:[#allocation4 + $0x420] sm:$0xff]
    %v2248 = vld [vmem:[#allocation4 + $0x428] sm:$0xff]
    %v2249 = vld [vmem:[#allocation4 + $0x430] sm:$0xff]
    %v2250 = vld [vmem:[#allocation4 + $0x438] sm:$0xff]
    %v2251 = vld [vmem:[#allocation4 + $0x440] sm:$0xff]
    %v2252 = vld [vmem:[#allocation4 + $0x448] sm:$0xff]
    %v2253 = vld [vmem:[#allocation4 + $0x450] sm:$0xff]
    %v2254 = vld [vmem:[#allocation4 + $0x458] sm:$0xff]
    %v2255 = vld [vmem:[#allocation4 + $0x460] sm:$0xff]
    %v2256 = vld [vmem:[#allocation4 + $0x468] sm:$0xff]
    %v2257 = vld [vmem:[#allocation4 + $0x470] sm:$0xff]
    %v2258 = vld [vmem:[#allocation4 + $0x478] sm:$0xff]
    %v2259 = vld [vmem:[#allocation4 + $0x480] sm:$0xff]
    %v2260 = vld [vmem:[#allocation4 + $0x488] sm:$0xff]
    %v2261 = vld [vmem:[#allocation4 + $0x490] sm:$0xff]
    %v2262 = vld [vmem:[#allocation4 + $0x498] sm:$0xff]
    %v2263 = vld [vmem:[#allocation4 + $0x4a0] sm:$0xff]
    %v2264 = vld [vmem:[#allocation4 + $0x4a8] sm:$0xff]
    %v2265 = vld [vmem:[#allocation4 + $0x4b0] sm:$0xff]
    %v2266 = vld [vmem:[#allocation4 + $0x4b8] sm:$0xff]
    %v2267 = vld [vmem:[#allocation4 + $0x4c0] sm:$0xff]
    %v2268 = vld [vmem:[#allocation4 + $0x4c8] sm:$0xff]
    %v2269 = vld [vmem:[#allocation4 + $0x4d0] sm:$0xff]
    %v2270 = vld [vmem:[#allocation4 + $0x4d8] sm:$0xff]
    %v2271 = vld [vmem:[#allocation4 + $0x4e0] sm:$0xff]
    %v2272 = vld [vmem:[#allocation4 + $0x4e8] sm:$0xff]
    %v2273 = vld [vmem:[#allocation4 + $0x4f0] sm:$0xff]
    %v2274 = vld [vmem:[#allocation4 + $0x4f8] sm:$0xff]
    %v2275 = vld [vmem:[#allocation4 + $0x500] sm:$0xff]
    %v2276 = vld [vmem:[#allocation4 + $0x508] sm:$0xff]
    %v2277 = vld [vmem:[#allocation4 + $0x510] sm:$0xff]
    %v2278 = vld [vmem:[#allocation4 + $0x518] sm:$0xff]
    %v2279 = vld [vmem:[#allocation4 + $0x520] sm:$0xff]
    %v2280 = vld [vmem:[#allocation4 + $0x528] sm:$0xff]
    %v2281 = vld [vmem:[#allocation4 + $0x530] sm:$0xff]
    %v2282 = vld [vmem:[#allocation4 + $0x538] sm:$0xff]
    %v2283 = vld [vmem:[#allocation4 + $0x540] sm:$0xff]
    %v2284 = vld [vmem:[#allocation4 + $0x548] sm:$0xff]
    %v2285 = vld [vmem:[#allocation4 + $0x550] sm:$0xff]
    %v2286 = vld [vmem:[#allocation4 + $0x558] sm:$0xff]
    %v2287 = vld [vmem:[#allocation4 + $0x560] sm:$0xff]
    %v2288 = vld [vmem:[#allocation4 + $0x568] sm:$0xff]
    %v2289 = vld [vmem:[#allocation4 + $0x570] sm:$0xff]
    %v2290 = vld [vmem:[#allocation4 + $0x578] sm:$0xff]
    %v2291 = vld [vmem:[#allocation4 + $0x580] sm:$0xff]
    %v2292 = vld [vmem:[#allocation4 + $0x588] sm:$0xff]
    %v2293 = vld [vmem:[#allocation4 + $0x590] sm:$0xff]
    %v2294 = vld [vmem:[#allocation4 + $0x598] sm:$0xff]
    %v2295 = vld [vmem:[#allocation4 + $0x5a0] sm:$0xff]
    %v2296 = vld [vmem:[#allocation4 + $0x5a8] sm:$0xff]
    %v2297 = vld [vmem:[#allocation4 + $0x5b0] sm:$0xff]
    %v2298 = vld [vmem:[#allocation4 + $0x5b8] sm:$0xff]
    %v2299 = vld [vmem:[#allocation4 + $0x5c0] sm:$0xff]
    %v2300 = vld [vmem:[#allocation4 + $0x5c8] sm:$0xff]
    %v2301 = vld [vmem:[#allocation4 + $0x5d0] sm:$0xff]
    %v2302 = vld [vmem:[#allocation4 + $0x5d8] sm:$0xff]
    %v2303 = vld [vmem:[#allocation4 + $0x5e0] sm:$0xff]
    %v2304 = vld [vmem:[#allocation4 + $0x5e8] sm:$0xff]
    %v2305 = vld [vmem:[#allocation4 + $0x5f0] sm:$0xff]
    %v2306 = vld [vmem:[#allocation4 + $0x5f8] sm:$0xff]
    %v2307 = vld [vmem:[#allocation4 + $0x600] sm:$0xff]
    %v2308 = vld [vmem:[#allocation4 + $0x608] sm:$0xff]
    %v2309 = vld [vmem:[#allocation4 + $0x610] sm:$0xff]
    %v2310 = vld [vmem:[#allocation4 + $0x618] sm:$0xff]
    %v2311 = vld [vmem:[#allocation4 + $0x620] sm:$0xff]
    %v2312 = vld [vmem:[#allocation4 + $0x628] sm:$0xff]
    %v2313 = vld [vmem:[#allocation4 + $0x630] sm:$0xff]
    %v2314 = vld [vmem:[#allocation4 + $0x638] sm:$0xff]
    %v2315 = vld [vmem:[#allocation4 + $0x640] sm:$0xff]
    %v2316 = vld [vmem:[#allocation4 + $0x648] sm:$0xff]
    %v2317 = vld [vmem:[#allocation4 + $0x650] sm:$0xff]
    %v2318 = vld [vmem:[#allocation4 + $0x658] sm:$0xff]
    %v2319 = vld [vmem:[#allocation4 + $0x660] sm:$0xff]
    %v2320 = vld [vmem:[#allocation4 + $0x668] sm:$0xff]
    %v2321 = vld [vmem:[#allocation4 + $0x670] sm:$0xff]
    %v2322 = vld [vmem:[#allocation4 + $0x678] sm:$0xff]
    %v2323 = vld [vmem:[#allocation4 + $0x680] sm:$0xff]
    %v2324 = vld [vmem:[#allocation4 + $0x688] sm:$0xff]
    %v2325 = vld [vmem:[#allocation4 + $0x690] sm:$0xff]
    %v2326 = vld [vmem:[#allocation4 + $0x698] sm:$0xff]
    %v2327 = vld [vmem:[#allocation4 + $0x6a0] sm:$0xff]
    %v2328 = vld [vmem:[#allocation4 + $0x6a8] sm:$0xff]
    %v2329 = vld [vmem:[#allocation4 + $0x6b0] sm:$0xff]
    %v2330 = vld [vmem:[#allocation4 + $0x6b8] sm:$0xff]
    %v2331 = vld [vmem:[#allocation4 + $0x6c0] sm:$0xff]
    %v2332 = vld [vmem:[#allocation4 + $0x6c8] sm:$0xff]
    %v2333 = vld [vmem:[#allocation4 + $0x6d0] sm:$0xff]
    %v2334 = vld [vmem:[#allocation4 + $0x6d8] sm:$0xff]
    %v2335 = vld [vmem:[#allocation4 + $0x6e0] sm:$0xff]
    %v2336 = vld [vmem:[#allocation4 + $0x6e8] sm:$0xff]
    %v2337 = vld [vmem:[#allocation4 + $0x6f0] sm:$0xff]
    %v2338 = vld [vmem:[#allocation4 + $0x6f8] sm:$0xff]
    %v2339 = vld [vmem:[#allocation4 + $0x700] sm:$0xff]
    %v2340 = vld [vmem:[#allocation4 + $0x708] sm:$0xff]
    %v2341 = vld [vmem:[#allocation4 + $0x710] sm:$0xff]
    %v2342 = vld [vmem:[#allocation4 + $0x718] sm:$0xff]
    %v2343 = vld [vmem:[#allocation4 + $0x720] sm:$0xff]
    %v2344 = vld [vmem:[#allocation4 + $0x728] sm:$0xff]
    %v2345 = vld [vmem:[#allocation4 + $0x730] sm:$0xff]
    %v2346 = vld [vmem:[#allocation4 + $0x738] sm:$0xff]
    %v2347 = vld [vmem:[#allocation4 + $0x740] sm:$0xff]
    %v2348 = vld [vmem:[#allocation4 + $0x748] sm:$0xff]
    %v2349 = vld [vmem:[#allocation4 + $0x750] sm:$0xff]
    %v2350 = vld [vmem:[#allocation4 + $0x758] sm:$0xff]
    %v2351 = vld [vmem:[#allocation4 + $0x760] sm:$0xff]
    %v2352 = vld [vmem:[#allocation4 + $0x768] sm:$0xff]
    %v2353 = vld [vmem:[#allocation4 + $0x770] sm:$0xff]
    %v2354 = vld [vmem:[#allocation4 + $0x778] sm:$0xff]
    %v2355 = vld [vmem:[#allocation4 + $0x780] sm:$0xff]
    %v2356 = vld [vmem:[#allocation4 + $0x788] sm:$0xff]
    %v2357 = vld [vmem:[#allocation4 + $0x790] sm:$0xff]
    %v2358 = vld [vmem:[#allocation4 + $0x798] sm:$0xff]
    %v2359 = vld [vmem:[#allocation4 + $0x7a0] sm:$0xff]
    %v2360 = vld [vmem:[#allocation4 + $0x7a8] sm:$0xff]
    %v2361 = vld [vmem:[#allocation4 + $0x7b0] sm:$0xff]
    %v2362 = vld [vmem:[#allocation4 + $0x7b8] sm:$0xff]
    %v2363 = vld [vmem:[#allocation4 + $0x7c0] sm:$0xff]
    %v2364 = vld [vmem:[#allocation4 + $0x7c8] sm:$0xff]
    %v2365 = vld [vmem:[#allocation4 + $0x7d0] sm:$0xff]
    %v2366 = vld [vmem:[#allocation4 + $0x7d8] sm:$0xff]
    %v2367 = vld [vmem:[#allocation4 + $0x7e0] sm:$0xff]
    %v2368 = vld [vmem:[#allocation4 + $0x7e8] sm:$0xff]
    %v2369 = vld [vmem:[#allocation4 + $0x7f0] sm:$0xff]
    %v2370 = vld [vmem:[#allocation4 + $0x7f8] sm:$0xff]
    %2371 = vmatprep.subr.mxu0 %v2116
    %2372 = vmatpush1.msra.mxu0 %v2115
    %2373 = vmatprep.subr.mxu0 %v2124
    %2374 = vmatpush1.msra.mxu0 %v2123
    %2375 = vmatprep.subr.mxu0 %v2132
    %2376 = vmatpush1.msra.mxu0 %v2131
    %2377 = vmatprep.subr.mxu0 %v2140
    %2378 = vmatpush1.msra.mxu0 %v2139
    %2379 = vmatprep.subr.mxu0 %v2148
    %2380 = vmatpush1.msra.mxu0 %v2147
    %2381 = vmatprep.subr.mxu0 %v2156
    %2382 = vmatpush1.msra.mxu0 %v2155
    %2383 = vmatprep.subr.mxu0 %v2164
    %2384 = vmatpush1.msra.mxu0 %v2163
    %2385 = vmatprep.subr.mxu0 %v2172
    %2386 = vmatpush1.msra.mxu0 %v2171
    %2387 = vmatprep.subr.mxu0 %v2180
    %2388 = vmatpush1.msra.mxu0 %v2179
    %2389 = vmatprep.subr.mxu0 %v2188
    %2390 = vmatpush1.msra.mxu0 %v2187
    %2391 = vmatprep.subr.mxu0 %v2196
    %2392 = vmatpush1.msra.mxu0 %v2195
    %2393 = vmatprep.subr.mxu0 %v2204
    %2394 = vmatpush1.msra.mxu0 %v2203
    %2395 = vmatprep.subr.mxu0 %v2212
    %2396 = vmatpush1.msra.mxu0 %v2211
    %2397 = vmatprep.subr.mxu0 %v2220
    %2398 = vmatpush1.msra.mxu0 %v2219
    %2399 = vmatprep.subr.mxu0 %v2228
    %2400 = vmatpush1.msra.mxu0 %v2227
    %2401 = vmatprep.subr.mxu0 %v2236
    %2402 = vmatpush1.msra.mxu0 %v2235
    %2403 = vmatprep.subr.mxu0 %v2244
    %2404 = vmatpush1.msra.mxu0 %v2243
    %2405 = vmatprep.subr.mxu0 %v2252
    %2406 = vmatpush1.msra.mxu0 %v2251
    %2407 = vmatprep.subr.mxu0 %v2260
    %2408 = vmatpush1.msra.mxu0 %v2259
    %2409 = vmatprep.subr.mxu0 %v2268
    %2410 = vmatpush1.msra.mxu0 %v2267
    %2411 = vmatprep.subr.mxu0 %v2276
    %2412 = vmatpush1.msra.mxu0 %v2275
    %2413 = vmatprep.subr.mxu0 %v2284
    %2414 = vmatpush1.msra.mxu0 %v2283
    %2415 = vmatprep.subr.mxu0 %v2292
    %2416 = vmatpush1.msra.mxu0 %v2291
    %2417 = vmatprep.subr.mxu0 %v2300
    %2418 = vmatpush1.msra.mxu0 %v2299
    %2419 = vmatprep.subr.mxu0 %v2308
    %2420 = vmatpush1.msra.mxu0 %v2307
    %2421 = vmatprep.subr.mxu0 %v2316
    %2422 = vmatpush1.msra.mxu0 %v2315
    %2423 = vmatprep.subr.mxu0 %v2324
    %2424 = vmatpush1.msra.mxu0 %v2323
    %2425 = vmatprep.subr.mxu0 %v2332
    %2426 = vmatpush1.msra.mxu0 %v2331
    %2427 = vmatprep.subr.mxu0 %v2340
    %2428 = vmatpush1.msra.mxu0 %v2339
    %2429 = vmatprep.subr.mxu0 %v2348
    %2430 = vmatpush1.msra.mxu0 %v2347
    %2431 = vmatprep.subr.mxu0 %v2356
    %2432 = vmatpush1.msra.mxu0 %v2355
    %2433 = vmatprep.subr.mxu0 %v2364
    %2434 = vmatpush1.msra.mxu0 %v2363
    %2435 = vmatprep.mubr.f32.mxu0 %v2112
    %2436 = vmatmul.mubr.f32.gmra.mrb[0].mxu0 %v2111
    %v2437 = vpop.f32.mrb[0].mxu0
    %v2438 = vadd.f32 0.0, %v2437
    %v2439 = vpop.f32.mrb[0].mxu0
    %v2440 = vadd.f32 0.0, %v2439
    %2441 = vmatprep.mubr.f32.mxu0 %v2114
    %2442 = vmatmul.mubr.f32.gmra.mrb[0].mxu0 %v2113
    %v2443 = vpop.f32.mrb[0].mxu0
    %v2444 = vadd.f32 0.0, %v2443
    %v2445 = vpop.f32.mrb[0].mxu0
    %v2446 = vadd.f32 0.0, %v2445
    %2447 = vdwg.mxu0
    %2448 = vmatprep.subr.mxu0 %v2118
    %2449 = vmatpush1.msra.mxu0 %v2117
    %2450 = vmatprep.subr.mxu0 %v2126
    %2451 = vmatpush1.msra.mxu0 %v2125
    %2452 = vmatprep.subr.mxu0 %v2134
    %2453 = vmatpush1.msra.mxu0 %v2133
    %2454 = vmatprep.subr.mxu0 %v2142
    %2455 = vmatpush1.msra.mxu0 %v2141
    %2456 = vmatprep.subr.mxu0 %v2150
    %2457 = vmatpush1.msra.mxu0 %v2149
    %2458 = vmatprep.subr.mxu0 %v2158
    %2459 = vmatpush1.msra.mxu0 %v2157
    %2460 = vmatprep.subr.mxu0 %v2166
    %2461 = vmatpush1.msra.mxu0 %v2165
    %2462 = vmatprep.subr.mxu0 %v2174
    %2463 = vmatpush1.msra.mxu0 %v2173
    %2464 = vmatprep.subr.mxu0 %v2182
    %2465 = vmatpush1.msra.mxu0 %v2181
    %2466 = vmatprep.subr.mxu0 %v2190
    %2467 = vmatpush1.msra.mxu0 %v2189
    %2468 = vmatprep.subr.mxu0 %v2198
    %2469 = vmatpush1.msra.mxu0 %v2197
    %2470 = vmatprep.subr.mxu0 %v2206
    %2471 = vmatpush1.msra.mxu0 %v2205
    %2472 = vmatprep.subr.mxu0 %v2214
    %2473 = vmatpush1.msra.mxu0 %v2213
    %2474 = vmatprep.subr.mxu0 %v2222
    %2475 = vmatpush1.msra.mxu0 %v2221
    %2476 = vmatprep.subr.mxu0 %v2230
    %2477 = vmatpush1.msra.mxu0 %v2229
    %2478 = vmatprep.subr.mxu0 %v2238
    %2479 = vmatpush1.msra.mxu0 %v2237
    %2480 = vmatprep.subr.mxu0 %v2246
    %2481 = vmatpush1.msra.mxu0 %v2245
    %2482 = vmatprep.subr.mxu0 %v2254
    %2483 = vmatpush1.msra.mxu0 %v2253
    %2484 = vmatprep.subr.mxu0 %v2262
    %2485 = vmatpush1.msra.mxu0 %v2261
    %2486 = vmatprep.subr.mxu0 %v2270
    %2487 = vmatpush1.msra.mxu0 %v2269
    %2488 = vmatprep.subr.mxu0 %v2278
    %2489 = vmatpush1.msra.mxu0 %v2277
    %2490 = vmatprep.subr.mxu0 %v2286
    %2491 = vmatpush1.msra.mxu0 %v2285
    %2492 = vmatprep.subr.mxu0 %v2294
    %2493 = vmatpush1.msra.mxu0 %v2293
    %2494 = vmatprep.subr.mxu0 %v2302
    %2495 = vmatpush1.msra.mxu0 %v2301
    %2496 = vmatprep.subr.mxu0 %v2310
    %2497 = vmatpush1.msra.mxu0 %v2309
    %2498 = vmatprep.subr.mxu0 %v2318
    %2499 = vmatpush1.msra.mxu0 %v2317
    %2500 = vmatprep.subr.mxu0 %v2326
    %2501 = vmatpush1.msra.mxu0 %v2325
    %2502 = vmatprep.subr.mxu0 %v2334
    %2503 = vmatpush1.msra.mxu0 %v2333
    %2504 = vmatprep.subr.mxu0 %v2342
    %2505 = vmatpush1.msra.mxu0 %v2341
    %2506 = vmatprep.subr.mxu0 %v2350
    %2507 = vmatpush1.msra.mxu0 %v2349
    %2508 = vmatprep.subr.mxu0 %v2358
    %2509 = vmatpush1.msra.mxu0 %v2357
    %2510 = vmatprep.subr.mxu0 %v2366
    %2511 = vmatpush1.msra.mxu0 %v2365
    %2512 = vmatprep.mubr.f32.mxu0 %v2112
    %2513 = vmatmul.mubr.f32.gmra.mrb[0].mxu0 %v2111
    %v2514 = vpop.f32.mrb[0].mxu0
    %v2515 = vadd.f32 0.0, %v2514
    %v2516 = vpop.f32.mrb[0].mxu0
    %v2517 = vadd.f32 0.0, %v2516
    %2518 = vmatprep.mubr.f32.mxu0 %v2114
    %2519 = vmatmul.mubr.f32.gmra.mrb[0].mxu0 %v2113
    %v2520 = vpop.f32.mrb[0].mxu0
    %v2521 = vadd.f32 0.0, %v2520
    %v2522 = vpop.f32.mrb[0].mxu0
    %v2523 = vadd.f32 0.0, %v2522
    %2524 = vdwg.mxu0
    %2525 = vmatprep.subr.mxu0 %v2120
    %2526 = vmatpush1.msra.mxu0 %v2119
    %2527 = vmatprep.subr.mxu0 %v2128
    %2528 = vmatpush1.msra.mxu0 %v2127
    %2529 = vmatprep.subr.mxu0 %v2136
    %2530 = vmatpush1.msra.mxu0 %v2135
    %2531 = vmatprep.subr.mxu0 %v2144
    %2532 = vmatpush1.msra.mxu0 %v2143
    %2533 = vmatprep.subr.mxu0 %v2152
    %2534 = vmatpush1.msra.mxu0 %v2151
    %2535 = vmatprep.subr.mxu0 %v2160
    %2536 = vmatpush1.msra.mxu0 %v2159
    %2537 = vmatprep.subr.mxu0 %v2168
    %2538 = vmatpush1.msra.mxu0 %v2167
    %2539 = vmatprep.subr.mxu0 %v2176
    %2540 = vmatpush1.msra.mxu0 %v2175
    %2541 = vmatprep.subr.mxu0 %v2184
    %2542 = vmatpush1.msra.mxu0 %v2183
    %2543 = vmatprep.subr.mxu0 %v2192
    %2544 = vmatpush1.msra.mxu0 %v2191
    %2545 = vmatprep.subr.mxu0 %v2200
    %2546 = vmatpush1.msra.mxu0 %v2199
    %2547 = vmatprep.subr.mxu0 %v2208
    %2548 = vmatpush1.msra.mxu0 %v2207
    %2549 = vmatprep.subr.mxu0 %v2216
    %2550 = vmatpush1.msra.mxu0 %v2215
    %2551 = vmatprep.subr.mxu0 %v2224
    %2552 = vmatpush1.msra.mxu0 %v2223
    %2553 = vmatprep.subr.mxu0 %v2232
    %2554 = vmatpush1.msra.mxu0 %v2231
    %2555 = vmatprep.subr.mxu0 %v2240
    %2556 = vmatpush1.msra.mxu0 %v2239
    %2557 = vmatprep.subr.mxu0 %v2248
    %2558 = vmatpush1.msra.mxu0 %v2247
    %2559 = vmatprep.subr.mxu0 %v2256
    %2560 = vmatpush1.msra.mxu0 %v2255
    %2561 = vmatprep.subr.mxu0 %v2264
    %2562 = vmatpush1.msra.mxu0 %v2263
    %2563 = vmatprep.subr.mxu0 %v2272
    %2564 = vmatpush1.msra.mxu0 %v2271
    %2565 = vmatprep.subr.mxu0 %v2280
    %2566 = vmatpush1.msra.mxu0 %v2279
    %2567 = vmatprep.subr.mxu0 %v2288
    %2568 = vmatpush1.msra.mxu0 %v2287
    %2569 = vmatprep.subr.mxu0 %v2296
    %2570 = vmatpush1.msra.mxu0 %v2295
    %2571 = vmatprep.subr.mxu0 %v2304
    %2572 = vmatpush1.msra.mxu0 %v2303
    %2573 = vmatprep.subr.mxu0 %v2312
    %2574 = vmatpush1.msra.mxu0 %v2311
    %2575 = vmatprep.subr.mxu0 %v2320
    %2576 = vmatpush1.msra.mxu0 %v2319
    %2577 = vmatprep.subr.mxu0 %v2328
    %2578 = vmatpush1.msra.mxu0 %v2327
    %2579 = vmatprep.subr.mxu0 %v2336
    %2580 = vmatpush1.msra.mxu0 %v2335
    %2581 = vmatprep.subr.mxu0 %v2344
    %2582 = vmatpush1.msra.mxu0 %v2343
    %2583 = vmatprep.subr.mxu0 %v2352
    %2584 = vmatpush1.msra.mxu0 %v2351
    %2585 = vmatprep.subr.mxu0 %v2360
    %2586 = vmatpush1.msra.mxu0 %v2359
    %2587 = vmatprep.subr.mxu0 %v2368
    %2588 = vmatpush1.msra.mxu0 %v2367
    %2589 = vmatprep.mubr.f32.mxu0 %v2112
    %2590 = vmatmul.mubr.f32.gmra.mrb[0].mxu0 %v2111
    %v2591 = vpop.f32.mrb[0].mxu0
    %v2592 = vadd.f32 0.0, %v2591
    %v2593 = vpop.f32.mrb[0].mxu0
    %v2594 = vadd.f32 0.0, %v2593
    %2595 = vmatprep.mubr.f32.mxu0 %v2114
    %2596 = vmatmul.mubr.f32.gmra.mrb[0].mxu0 %v2113
    %v2597 = vpop.f32.mrb[0].mxu0
    %v2598 = vadd.f32 0.0, %v2597
    %v2599 = vpop.f32.mrb[0].mxu0
    %v2600 = vadd.f32 0.0, %v2599
    %2601 = vdwg.mxu0
    %2602 = vmatprep.subr.mxu0 %v2122
    %2603 = vmatpush1.msra.mxu0 %v2121
    %2604 = vmatprep.subr.mxu0 %v2130
    %2605 = vmatpush1.msra.mxu0 %v2129
    %2606 = vmatprep.subr.mxu0 %v2138
    %2607 = vmatpush1.msra.mxu0 %v2137
    %2608 = vmatprep.subr.mxu0 %v2146
    %2609 = vmatpush1.msra.mxu0 %v2145
    %2610 = vmatprep.subr.mxu0 %v2154
    %2611 = vmatpush1.msra.mxu0 %v2153
    %2612 = vmatprep.subr.mxu0 %v2162
    %2613 = vmatpush1.msra.mxu0 %v2161
    %2614 = vmatprep.subr.mxu0 %v2170
    %2615 = vmatpush1.msra.mxu0 %v2169
    %2616 = vmatprep.subr.mxu0 %v2178
    %2617 = vmatpush1.msra.mxu0 %v2177
    %2618 = vmatprep.subr.mxu0 %v2186
    %2619 = vmatpush1.msra.mxu0 %v2185
    %2620 = vmatprep.subr.mxu0 %v2194
    %2621 = vmatpush1.msra.mxu0 %v2193
    %2622 = vmatprep.subr.mxu0 %v2202
    %2623 = vmatpush1.msra.mxu0 %v2201
    %2624 = vmatprep.subr.mxu0 %v2210
    %2625 = vmatpush1.msra.mxu0 %v2209
    %2626 = vmatprep.subr.mxu0 %v2218
    %2627 = vmatpush1.msra.mxu0 %v2217
    %2628 = vmatprep.subr.mxu0 %v2226
    %2629 = vmatpush1.msra.mxu0 %v2225
    %2630 = vmatprep.subr.mxu0 %v2234
    %2631 = vmatpush1.msra.mxu0 %v2233
    %2632 = vmatprep.subr.mxu0 %v2242
    %2633 = vmatpush1.msra.mxu0 %v2241
    %2634 = vmatprep.subr.mxu0 %v2250
    %2635 = vmatpush1.msra.mxu0 %v2249
    %2636 = vmatprep.subr.mxu0 %v2258
    %2637 = vmatpush1.msra.mxu0 %v2257
    %2638 = vmatprep.subr.mxu0 %v2266
    %2639 = vmatpush1.msra.mxu0 %v2265
    %2640 = vmatprep.subr.mxu0 %v2274
    %2641 = vmatpush1.msra.mxu0 %v2273
    %2642 = vmatprep.subr.mxu0 %v2282
    %2643 = vmatpush1.msra.mxu0 %v2281
    %2644 = vmatprep.subr.mxu0 %v2290
    %2645 = vmatpush1.msra.mxu0 %v2289
    %2646 = vmatprep.subr.mxu0 %v2298
    %2647 = vmatpush1.msra.mxu0 %v2297
    %2648 = vmatprep.subr.mxu0 %v2306
    %2649 = vmatpush1.msra.mxu0 %v2305
    %2650 = vmatprep.subr.mxu0 %v2314
    %2651 = vmatpush1.msra.mxu0 %v2313
    %2652 = vmatprep.subr.mxu0 %v2322
    %2653 = vmatpush1.msra.mxu0 %v2321
    %2654 = vmatprep.subr.mxu0 %v2330
    %2655 = vmatpush1.msra.mxu0 %v2329
    %2656 = vmatprep.subr.mxu0 %v2338
    %2657 = vmatpush1.msra.mxu0 %v2337
    %2658 = vmatprep.subr.mxu0 %v2346
    %2659 = vmatpush1.msra.mxu0 %v2345
    %2660 = vmatprep.subr.mxu0 %v2354
    %2661 = vmatpush1.msra.mxu0 %v2353
    %2662 = vmatprep.subr.mxu0 %v2362
    %2663 = vmatpush1.msra.mxu0 %v2361
    %2664 = vmatprep.subr.mxu0 %v2370
    %2665 = vmatpush1.msra.mxu0 %v2369
    %2666 = vmatprep.mubr.f32.mxu0 %v2112
    %2667 = vmatmul.mubr.f32.gmra.mrb[0].mxu0 %v2111
    %v2668 = vpop.f32.mrb[0].mxu0
    %v2669 = vadd.f32 0.0, %v2668
    %v2670 = vpop.f32.mrb[0].mxu0
    %v2671 = vadd.f32 0.0, %v2670
    %2672 = vmatprep.mubr.f32.mxu0 %v2114
    %2673 = vmatmul.mubr.f32.gmra.mrb[0].mxu0 %v2113
    %v2674 = vpop.f32.mrb[0].mxu0
    %v2675 = vadd.f32 0.0, %v2674
    %v2676 = vpop.f32.mrb[0].mxu0
    %v2677 = vadd.f32 0.0, %v2676
    %2678 = vdwg.mxu0
    %vm2679 = vcmp.gt.f32.partialorder %v2438, 0.0
    %vm2680 = vcmp.gt.f32.partialorder %v2440, 0.0
    %vm2681 = vcmp.gt.f32.partialorder %v2515, 0.0
    %vm2682 = vcmp.gt.f32.partialorder %v2517, 0.0
    %vm2683 = vcmp.gt.f32.partialorder %v2592, 0.0
    %vm2684 = vcmp.gt.f32.partialorder %v2594, 0.0
    %vm2685 = vcmp.gt.f32.partialorder %v2669, 0.0
    %vm2686 = vcmp.gt.f32.partialorder %v2671, 0.0
    %vm2687 = vcmp.gt.f32.partialorder %v2444, 0.0
    %vm2688 = vcmp.gt.f32.partialorder %v2446, 0.0
    %vm2689 = vcmp.gt.f32.partialorder %v2521, 0.0
    %vm2690 = vcmp.gt.f32.partialorder %v2523, 0.0
    %vm2691 = vcmp.gt.f32.partialorder %v2598, 0.0
    %vm2692 = vcmp.gt.f32.partialorder %v2600, 0.0
    %vm2693 = vcmp.gt.f32.partialorder %v2675, 0.0
    %vm2694 = vcmp.gt.f32.partialorder %v2677, 0.0
    %v2695 = vmin.f32 %v2438, 0.0
    %v2696 = vmin.f32 %v2440, 0.0
    %v2697 = vmin.f32 %v2515, 0.0
    %v2698 = vmin.f32 %v2517, 0.0
    %v2699 = vmin.f32 %v2592, 0.0
    %v2700 = vmin.f32 %v2594, 0.0
    %v2701 = vmin.f32 %v2669, 0.0
    %v2702 = vmin.f32 %v2671, 0.0
    %v2703 = vmin.f32 %v2444, 0.0
    %v2704 = vmin.f32 %v2446, 0.0
    %v2705 = vmin.f32 %v2521, 0.0
    %v2706 = vmin.f32 %v2523, 0.0
    %v2707 = vmin.f32 %v2598, 0.0
    %v2708 = vmin.f32 %v2600, 0.0
    %v2709 = vmin.f32 %v2675, 0.0
    %v2710 = vmin.f32 %v2677, 0.0
    %v2711 = vmul.f32 %v2695, 1.442695
    %v2712 = vpow.pop %v2711
    %v2713 = vmul.f32 %v2696, 1.442695
    %v2714 = vpow.pop %v2713
    %v2715 = vmul.f32 %v2697, 1.442695
    %v2716 = vpow.pop %v2715
    %v2717 = vmul.f32 %v2698, 1.442695
    %v2718 = vpow.pop %v2717
    %v2719 = vmul.f32 %v2699, 1.442695
    %v2720 = vpow.pop %v2719
    %v2721 = vmul.f32 %v2700, 1.442695
    %v2722 = vpow.pop %v2721
    %v2723 = vmul.f32 %v2701, 1.442695
    %v2724 = vpow.pop %v2723
    %v2725 = vmul.f32 %v2702, 1.442695
    %v2726 = vpow.pop %v2725
    %v2727 = vmul.f32 %v2703, 1.442695
    %v2728 = vpow.pop %v2727
    %v2729 = vmul.f32 %v2704, 1.442695
    %v2730 = vpow.pop %v2729
    %v2731 = vmul.f32 %v2705, 1.442695
    %v2732 = vpow.pop %v2731
    %v2733 = vmul.f32 %v2706, 1.442695
    %v2734 = vpow.pop %v2733
    %v2735 = vmul.f32 %v2707, 1.442695
    %v2736 = vpow.pop %v2735
    %v2737 = vmul.f32 %v2708, 1.442695
    %v2738 = vpow.pop %v2737
    %v2739 = vmul.f32 %v2709, 1.442695
    %v2740 = vpow.pop %v2739
    %v2741 = vmul.f32 %v2710, 1.442695
    %v2742 = vpow.pop %v2741
    %v2743 = vsub.f32 %v2712, 1.0
    %v2744 = vsub.f32 %v2714, 1.0
    %v2745 = vsub.f32 %v2716, 1.0
    %v2746 = vsub.f32 %v2718, 1.0
    %v2747 = vsub.f32 %v2720, 1.0
    %v2748 = vsub.f32 %v2722, 1.0
    %v2749 = vsub.f32 %v2724, 1.0
    %v2750 = vsub.f32 %v2726, 1.0
    %v2751 = vsub.f32 %v2728, 1.0
    %v2752 = vsub.f32 %v2730, 1.0
    %v2753 = vsub.f32 %v2732, 1.0
    %v2754 = vsub.f32 %v2734, 1.0
    %v2755 = vsub.f32 %v2736, 1.0
    %v2756 = vsub.f32 %v2738, 1.0
    %v2757 = vsub.f32 %v2740, 1.0
    %v2758 = vsub.f32 %v2742, 1.0
    %v2759 = vsel %vm2679, %v2438, %v2743
    %v2760 = vsel %vm2680, %v2440, %v2744
    %v2761 = vsel %vm2681, %v2515, %v2745
    %v2762 = vsel %vm2682, %v2517, %v2746
    %v2763 = vsel %vm2683, %v2592, %v2747
    %v2764 = vsel %vm2684, %v2594, %v2748
    %v2765 = vsel %vm2685, %v2669, %v2749
    %v2766 = vsel %vm2686, %v2671, %v2750
    %v2767 = vsel %vm2687, %v2444, %v2751
    %v2768 = vsel %vm2688, %v2446, %v2752
    %v2769 = vsel %vm2689, %v2521, %v2753
    %v2770 = vsel %vm2690, %v2523, %v2754
    %v2771 = vsel %vm2691, %v2598, %v2755
    %v2772 = vsel %vm2692, %v2600, %v2756
    %v2773 = vsel %vm2693, %v2675, %v2757
    %v2774 = vsel %vm2694, %v2677, %v2758
    %v2775 = vld [vmem:[#allocation6] sm:$0xff]
    %v2776 = vld [vmem:[#allocation6 + $0x8] sm:$0xff]
    %v2777 = vld [vmem:[#allocation6 + $0x10] sm:$0xff]
    %v2778 = vld [vmem:[#allocation6 + $0x18] sm:$0xff]
    %v2779 = vld [vmem:[#allocation6 + $0x20] sm:$0xff]
    %v2780 = vld [vmem:[#allocation6 + $0x28] sm:$0xff]
    %v2781 = vld [vmem:[#allocation6 + $0x30] sm:$0xff]
    %v2782 = vld [vmem:[#allocation6 + $0x38] sm:$0xff]
    %v2783 = vld [vmem:[#allocation6 + $0x40] sm:$0xff]
    %v2784 = vld [vmem:[#allocation6 + $0x48] sm:$0xff]
    %v2785 = vld [vmem:[#allocation6 + $0x50] sm:$0xff]
    %v2786 = vld [vmem:[#allocation6 + $0x58] sm:$0xff]
    %v2787 = vld [vmem:[#allocation6 + $0x60] sm:$0xff]
    %v2788 = vld [vmem:[#allocation6 + $0x68] sm:$0xff]
    %v2789 = vld [vmem:[#allocation6 + $0x70] sm:$0xff]
    %v2790 = vld [vmem:[#allocation6 + $0x78] sm:$0xff]
    %v2791 = vld [vmem:[#allocation6 + $0x80] sm:$0xff]
    %v2792 = vld [vmem:[#allocation6 + $0x88] sm:$0xff]
    %v2793 = vld [vmem:[#allocation6 + $0x90] sm:$0xff]
    %v2794 = vld [vmem:[#allocation6 + $0x98] sm:$0xff]
    %v2795 = vld [vmem:[#allocation6 + $0xa0] sm:$0xff]
    %v2796 = vld [vmem:[#allocation6 + $0xa8] sm:$0xff]
    %v2797 = vld [vmem:[#allocation6 + $0xb0] sm:$0xff]
    %v2798 = vld [vmem:[#allocation6 + $0xb8] sm:$0xff]
    %v2799 = vld [vmem:[#allocation6 + $0xc0] sm:$0xff]
    %v2800 = vld [vmem:[#allocation6 + $0xc8] sm:$0xff]
    %v2801 = vld [vmem:[#allocation6 + $0xd0] sm:$0xff]
    %v2802 = vld [vmem:[#allocation6 + $0xd8] sm:$0xff]
    %v2803 = vld [vmem:[#allocation6 + $0xe0] sm:$0xff]
    %v2804 = vld [vmem:[#allocation6 + $0xe8] sm:$0xff]
    %v2805 = vld [vmem:[#allocation6 + $0xf0] sm:$0xff]
    %v2806 = vld [vmem:[#allocation6 + $0xf8] sm:$0xff]
    %v2807 = vld [vmem:[#allocation6 + $0x100] sm:$0xff]
    %v2808 = vld [vmem:[#allocation6 + $0x108] sm:$0xff]
    %v2809 = vld [vmem:[#allocation6 + $0x110] sm:$0xff]
    %v2810 = vld [vmem:[#allocation6 + $0x118] sm:$0xff]
    %v2811 = vld [vmem:[#allocation6 + $0x120] sm:$0xff]
    %v2812 = vld [vmem:[#allocation6 + $0x128] sm:$0xff]
    %v2813 = vld [vmem:[#allocation6 + $0x130] sm:$0xff]
    %v2814 = vld [vmem:[#allocation6 + $0x138] sm:$0xff]
    %v2815 = vld [vmem:[#allocation6 + $0x140] sm:$0xff]
    %v2816 = vld [vmem:[#allocation6 + $0x148] sm:$0xff]
    %v2817 = vld [vmem:[#allocation6 + $0x150] sm:$0xff]
    %v2818 = vld [vmem:[#allocation6 + $0x158] sm:$0xff]
    %v2819 = vld [vmem:[#allocation6 + $0x160] sm:$0xff]
    %v2820 = vld [vmem:[#allocation6 + $0x168] sm:$0xff]
    %v2821 = vld [vmem:[#allocation6 + $0x170] sm:$0xff]
    %v2822 = vld [vmem:[#allocation6 + $0x178] sm:$0xff]
    %v2823 = vld [vmem:[#allocation6 + $0x180] sm:$0xff]
    %v2824 = vld [vmem:[#allocation6 + $0x188] sm:$0xff]
    %v2825 = vld [vmem:[#allocation6 + $0x190] sm:$0xff]
    %v2826 = vld [vmem:[#allocation6 + $0x198] sm:$0xff]
    %v2827 = vld [vmem:[#allocation6 + $0x1a0] sm:$0xff]
    %v2828 = vld [vmem:[#allocation6 + $0x1a8] sm:$0xff]
    %v2829 = vld [vmem:[#allocation6 + $0x1b0] sm:$0xff]
    %v2830 = vld [vmem:[#allocation6 + $0x1b8] sm:$0xff]
    %v2831 = vld [vmem:[#allocation6 + $0x1c0] sm:$0xff]
    %v2832 = vld [vmem:[#allocation6 + $0x1c8] sm:$0xff]
    %v2833 = vld [vmem:[#allocation6 + $0x1d0] sm:$0xff]
    %v2834 = vld [vmem:[#allocation6 + $0x1d8] sm:$0xff]
    %v2835 = vld [vmem:[#allocation6 + $0x1e0] sm:$0xff]
    %v2836 = vld [vmem:[#allocation6 + $0x1e8] sm:$0xff]
    %v2837 = vld [vmem:[#allocation6 + $0x1f0] sm:$0xff]
    %v2838 = vld [vmem:[#allocation6 + $0x1f8] sm:$0xff]
    %v2839 = vld [vmem:[#allocation6 + $0x200] sm:$0xff]
    %v2840 = vld [vmem:[#allocation6 + $0x208] sm:$0xff]
    %v2841 = vld [vmem:[#allocation6 + $0x210] sm:$0xff]
    %v2842 = vld [vmem:[#allocation6 + $0x218] sm:$0xff]
    %v2843 = vld [vmem:[#allocation6 + $0x220] sm:$0xff]
    %v2844 = vld [vmem:[#allocation6 + $0x228] sm:$0xff]
    %v2845 = vld [vmem:[#allocation6 + $0x230] sm:$0xff]
    %v2846 = vld [vmem:[#allocation6 + $0x238] sm:$0xff]
    %v2847 = vld [vmem:[#allocation6 + $0x240] sm:$0xff]
    %v2848 = vld [vmem:[#allocation6 + $0x248] sm:$0xff]
    %v2849 = vld [vmem:[#allocation6 + $0x250] sm:$0xff]
    %v2850 = vld [vmem:[#allocation6 + $0x258] sm:$0xff]
    %v2851 = vld [vmem:[#allocation6 + $0x260] sm:$0xff]
    %v2852 = vld [vmem:[#allocation6 + $0x268] sm:$0xff]
    %v2853 = vld [vmem:[#allocation6 + $0x270] sm:$0xff]
    %v2854 = vld [vmem:[#allocation6 + $0x278] sm:$0xff]
    %v2855 = vld [vmem:[#allocation6 + $0x280] sm:$0xff]
    %v2856 = vld [vmem:[#allocation6 + $0x288] sm:$0xff]
    %v2857 = vld [vmem:[#allocation6 + $0x290] sm:$0xff]
    %v2858 = vld [vmem:[#allocation6 + $0x298] sm:$0xff]
    %v2859 = vld [vmem:[#allocation6 + $0x2a0] sm:$0xff]
    %v2860 = vld [vmem:[#allocation6 + $0x2a8] sm:$0xff]
    %v2861 = vld [vmem:[#allocation6 + $0x2b0] sm:$0xff]
    %v2862 = vld [vmem:[#allocation6 + $0x2b8] sm:$0xff]
    %v2863 = vld [vmem:[#allocation6 + $0x2c0] sm:$0xff]
    %v2864 = vld [vmem:[#allocation6 + $0x2c8] sm:$0xff]
    %v2865 = vld [vmem:[#allocation6 + $0x2d0] sm:$0xff]
    %v2866 = vld [vmem:[#allocation6 + $0x2d8] sm:$0xff]
    %v2867 = vld [vmem:[#allocation6 + $0x2e0] sm:$0xff]
    %v2868 = vld [vmem:[#allocation6 + $0x2e8] sm:$0xff]
    %v2869 = vld [vmem:[#allocation6 + $0x2f0] sm:$0xff]
    %v2870 = vld [vmem:[#allocation6 + $0x2f8] sm:$0xff]
    %v2871 = vld [vmem:[#allocation6 + $0x300] sm:$0xff]
    %v2872 = vld [vmem:[#allocation6 + $0x308] sm:$0xff]
    %v2873 = vld [vmem:[#allocation6 + $0x310] sm:$0xff]
    %v2874 = vld [vmem:[#allocation6 + $0x318] sm:$0xff]
    %v2875 = vld [vmem:[#allocation6 + $0x320] sm:$0xff]
    %v2876 = vld [vmem:[#allocation6 + $0x328] sm:$0xff]
    %v2877 = vld [vmem:[#allocation6 + $0x330] sm:$0xff]
    %v2878 = vld [vmem:[#allocation6 + $0x338] sm:$0xff]
    %v2879 = vld [vmem:[#allocation6 + $0x340] sm:$0xff]
    %v2880 = vld [vmem:[#allocation6 + $0x348] sm:$0xff]
    %v2881 = vld [vmem:[#allocation6 + $0x350] sm:$0xff]
    %v2882 = vld [vmem:[#allocation6 + $0x358] sm:$0xff]
    %v2883 = vld [vmem:[#allocation6 + $0x360] sm:$0xff]
    %v2884 = vld [vmem:[#allocation6 + $0x368] sm:$0xff]
    %v2885 = vld [vmem:[#allocation6 + $0x370] sm:$0xff]
    %v2886 = vld [vmem:[#allocation6 + $0x378] sm:$0xff]
    %v2887 = vld [vmem:[#allocation6 + $0x380] sm:$0xff]
    %v2888 = vld [vmem:[#allocation6 + $0x388] sm:$0xff]
    %v2889 = vld [vmem:[#allocation6 + $0x390] sm:$0xff]
    %v2890 = vld [vmem:[#allocation6 + $0x398] sm:$0xff]
    %v2891 = vld [vmem:[#allocation6 + $0x3a0] sm:$0xff]
    %v2892 = vld [vmem:[#allocation6 + $0x3a8] sm:$0xff]
    %v2893 = vld [vmem:[#allocation6 + $0x3b0] sm:$0xff]
    %v2894 = vld [vmem:[#allocation6 + $0x3b8] sm:$0xff]
    %v2895 = vld [vmem:[#allocation6 + $0x3c0] sm:$0xff]
    %v2896 = vld [vmem:[#allocation6 + $0x3c8] sm:$0xff]
    %v2897 = vld [vmem:[#allocation6 + $0x3d0] sm:$0xff]
    %v2898 = vld [vmem:[#allocation6 + $0x3d8] sm:$0xff]
    %v2899 = vld [vmem:[#allocation6 + $0x3e0] sm:$0xff]
    %v2900 = vld [vmem:[#allocation6 + $0x3e8] sm:$0xff]
    %v2901 = vld [vmem:[#allocation6 + $0x3f0] sm:$0xff]
    %v2902 = vld [vmem:[#allocation6 + $0x3f8] sm:$0xff]
    %v2903 = vld [vmem:[#allocation6 + $0x400] sm:$0xff]
    %v2904 = vld [vmem:[#allocation6 + $0x408] sm:$0xff]
    %v2905 = vld [vmem:[#allocation6 + $0x410] sm:$0xff]
    %v2906 = vld [vmem:[#allocation6 + $0x418] sm:$0xff]
    %v2907 = vld [vmem:[#allocation6 + $0x420] sm:$0xff]
    %v2908 = vld [vmem:[#allocation6 + $0x428] sm:$0xff]
    %v2909 = vld [vmem:[#allocation6 + $0x430] sm:$0xff]
    %v2910 = vld [vmem:[#allocation6 + $0x438] sm:$0xff]
    %v2911 = vld [vmem:[#allocation6 + $0x440] sm:$0xff]
    %v2912 = vld [vmem:[#allocation6 + $0x448] sm:$0xff]
    %v2913 = vld [vmem:[#allocation6 + $0x450] sm:$0xff]
    %v2914 = vld [vmem:[#allocation6 + $0x458] sm:$0xff]
    %v2915 = vld [vmem:[#allocation6 + $0x460] sm:$0xff]
    %v2916 = vld [vmem:[#allocation6 + $0x468] sm:$0xff]
    %v2917 = vld [vmem:[#allocation6 + $0x470] sm:$0xff]
    %v2918 = vld [vmem:[#allocation6 + $0x478] sm:$0xff]
    %v2919 = vld [vmem:[#allocation6 + $0x480] sm:$0xff]
    %v2920 = vld [vmem:[#allocation6 + $0x488] sm:$0xff]
    %v2921 = vld [vmem:[#allocation6 + $0x490] sm:$0xff]
    %v2922 = vld [vmem:[#allocation6 + $0x498] sm:$0xff]
    %v2923 = vld [vmem:[#allocation6 + $0x4a0] sm:$0xff]
    %v2924 = vld [vmem:[#allocation6 + $0x4a8] sm:$0xff]
    %v2925 = vld [vmem:[#allocation6 + $0x4b0] sm:$0xff]
    %v2926 = vld [vmem:[#allocation6 + $0x4b8] sm:$0xff]
    %v2927 = vld [vmem:[#allocation6 + $0x4c0] sm:$0xff]
    %v2928 = vld [vmem:[#allocation6 + $0x4c8] sm:$0xff]
    %v2929 = vld [vmem:[#allocation6 + $0x4d0] sm:$0xff]
    %v2930 = vld [vmem:[#allocation6 + $0x4d8] sm:$0xff]
    %v2931 = vld [vmem:[#allocation6 + $0x4e0] sm:$0xff]
    %v2932 = vld [vmem:[#allocation6 + $0x4e8] sm:$0xff]
    %v2933 = vld [vmem:[#allocation6 + $0x4f0] sm:$0xff]
    %v2934 = vld [vmem:[#allocation6 + $0x4f8] sm:$0xff]
    %v2935 = vld [vmem:[#allocation6 + $0x500] sm:$0xff]
    %v2936 = vld [vmem:[#allocation6 + $0x508] sm:$0xff]
    %v2937 = vld [vmem:[#allocation6 + $0x510] sm:$0xff]
    %v2938 = vld [vmem:[#allocation6 + $0x518] sm:$0xff]
    %v2939 = vld [vmem:[#allocation6 + $0x520] sm:$0xff]
    %v2940 = vld [vmem:[#allocation6 + $0x528] sm:$0xff]
    %v2941 = vld [vmem:[#allocation6 + $0x530] sm:$0xff]
    %v2942 = vld [vmem:[#allocation6 + $0x538] sm:$0xff]
    %v2943 = vld [vmem:[#allocation6 + $0x540] sm:$0xff]
    %v2944 = vld [vmem:[#allocation6 + $0x548] sm:$0xff]
    %v2945 = vld [vmem:[#allocation6 + $0x550] sm:$0xff]
    %v2946 = vld [vmem:[#allocation6 + $0x558] sm:$0xff]
    %v2947 = vld [vmem:[#allocation6 + $0x560] sm:$0xff]
    %v2948 = vld [vmem:[#allocation6 + $0x568] sm:$0xff]
    %v2949 = vld [vmem:[#allocation6 + $0x570] sm:$0xff]
    %v2950 = vld [vmem:[#allocation6 + $0x578] sm:$0xff]
    %v2951 = vld [vmem:[#allocation6 + $0x580] sm:$0xff]
    %v2952 = vld [vmem:[#allocation6 + $0x588] sm:$0xff]
    %v2953 = vld [vmem:[#allocation6 + $0x590] sm:$0xff]
    %v2954 = vld [vmem:[#allocation6 + $0x598] sm:$0xff]
    %v2955 = vld [vmem:[#allocation6 + $0x5a0] sm:$0xff]
    %v2956 = vld [vmem:[#allocation6 + $0x5a8] sm:$0xff]
    %v2957 = vld [vmem:[#allocation6 + $0x5b0] sm:$0xff]
    %v2958 = vld [vmem:[#allocation6 + $0x5b8] sm:$0xff]
    %v2959 = vld [vmem:[#allocation6 + $0x5c0] sm:$0xff]
    %v2960 = vld [vmem:[#allocation6 + $0x5c8] sm:$0xff]
    %v2961 = vld [vmem:[#allocation6 + $0x5d0] sm:$0xff]
    %v2962 = vld [vmem:[#allocation6 + $0x5d8] sm:$0xff]
    %v2963 = vld [vmem:[#allocation6 + $0x5e0] sm:$0xff]
    %v2964 = vld [vmem:[#allocation6 + $0x5e8] sm:$0xff]
    %v2965 = vld [vmem:[#allocation6 + $0x5f0] sm:$0xff]
    %v2966 = vld [vmem:[#allocation6 + $0x5f8] sm:$0xff]
    %v2967 = vld [vmem:[#allocation6 + $0x600] sm:$0xff]
    %v2968 = vld [vmem:[#allocation6 + $0x608] sm:$0xff]
    %v2969 = vld [vmem:[#allocation6 + $0x610] sm:$0xff]
    %v2970 = vld [vmem:[#allocation6 + $0x618] sm:$0xff]
    %v2971 = vld [vmem:[#allocation6 + $0x620] sm:$0xff]
    %v2972 = vld [vmem:[#allocation6 + $0x628] sm:$0xff]
    %v2973 = vld [vmem:[#allocation6 + $0x630] sm:$0xff]
    %v2974 = vld [vmem:[#allocation6 + $0x638] sm:$0xff]
    %v2975 = vld [vmem:[#allocation6 + $0x640] sm:$0xff]
    %v2976 = vld [vmem:[#allocation6 + $0x648] sm:$0xff]
    %v2977 = vld [vmem:[#allocation6 + $0x650] sm:$0xff]
    %v2978 = vld [vmem:[#allocation6 + $0x658] sm:$0xff]
    %v2979 = vld [vmem:[#allocation6 + $0x660] sm:$0xff]
    %v2980 = vld [vmem:[#allocation6 + $0x668] sm:$0xff]
    %v2981 = vld [vmem:[#allocation6 + $0x670] sm:$0xff]
    %v2982 = vld [vmem:[#allocation6 + $0x678] sm:$0xff]
    %v2983 = vld [vmem:[#allocation6 + $0x680] sm:$0xff]
    %v2984 = vld [vmem:[#allocation6 + $0x688] sm:$0xff]
    %v2985 = vld [vmem:[#allocation6 + $0x690] sm:$0xff]
    %v2986 = vld [vmem:[#allocation6 + $0x698] sm:$0xff]
    %v2987 = vld [vmem:[#allocation6 + $0x6a0] sm:$0xff]
    %v2988 = vld [vmem:[#allocation6 + $0x6a8] sm:$0xff]
    %v2989 = vld [vmem:[#allocation6 + $0x6b0] sm:$0xff]
    %v2990 = vld [vmem:[#allocation6 + $0x6b8] sm:$0xff]
    %v2991 = vld [vmem:[#allocation6 + $0x6c0] sm:$0xff]
    %v2992 = vld [vmem:[#allocation6 + $0x6c8] sm:$0xff]
    %v2993 = vld [vmem:[#allocation6 + $0x6d0] sm:$0xff]
    %v2994 = vld [vmem:[#allocation6 + $0x6d8] sm:$0xff]
    %v2995 = vld [vmem:[#allocation6 + $0x6e0] sm:$0xff]
    %v2996 = vld [vmem:[#allocation6 + $0x6e8] sm:$0xff]
    %v2997 = vld [vmem:[#allocation6 + $0x6f0] sm:$0xff]
    %v2998 = vld [vmem:[#allocation6 + $0x6f8] sm:$0xff]
    %v2999 = vld [vmem:[#allocation6 + $0x700] sm:$0xff]
    %v3000 = vld [vmem:[#allocation6 + $0x708] sm:$0xff]
    %v3001 = vld [vmem:[#allocation6 + $0x710] sm:$0xff]
    %v3002 = vld [vmem:[#allocation6 + $0x718] sm:$0xff]
    %v3003 = vld [vmem:[#allocation6 + $0x720] sm:$0xff]
    %v3004 = vld [vmem:[#allocation6 + $0x728] sm:$0xff]
    %v3005 = vld [vmem:[#allocation6 + $0x730] sm:$0xff]
    %v3006 = vld [vmem:[#allocation6 + $0x738] sm:$0xff]
    %v3007 = vld [vmem:[#allocation6 + $0x740] sm:$0xff]
    %v3008 = vld [vmem:[#allocation6 + $0x748] sm:$0xff]
    %v3009 = vld [vmem:[#allocation6 + $0x750] sm:$0xff]
    %v3010 = vld [vmem:[#allocation6 + $0x758] sm:$0xff]
    %v3011 = vld [vmem:[#allocation6 + $0x760] sm:$0xff]
    %v3012 = vld [vmem:[#allocation6 + $0x768] sm:$0xff]
    %v3013 = vld [vmem:[#allocation6 + $0x770] sm:$0xff]
    %v3014 = vld [vmem:[#allocation6 + $0x778] sm:$0xff]
    %v3015 = vld [vmem:[#allocation6 + $0x780] sm:$0xff]
    %v3016 = vld [vmem:[#allocation6 + $0x788] sm:$0xff]
    %v3017 = vld [vmem:[#allocation6 + $0x790] sm:$0xff]
    %v3018 = vld [vmem:[#allocation6 + $0x798] sm:$0xff]
    %v3019 = vld [vmem:[#allocation6 + $0x7a0] sm:$0xff]
    %v3020 = vld [vmem:[#allocation6 + $0x7a8] sm:$0xff]
    %v3021 = vld [vmem:[#allocation6 + $0x7b0] sm:$0xff]
    %v3022 = vld [vmem:[#allocation6 + $0x7b8] sm:$0xff]
    %v3023 = vld [vmem:[#allocation6 + $0x7c0] sm:$0xff]
    %v3024 = vld [vmem:[#allocation6 + $0x7c8] sm:$0xff]
    %v3025 = vld [vmem:[#allocation6 + $0x7d0] sm:$0xff]
    %v3026 = vld [vmem:[#allocation6 + $0x7d8] sm:$0xff]
    %v3027 = vld [vmem:[#allocation6 + $0x7e0] sm:$0xff]
    %v3028 = vld [vmem:[#allocation6 + $0x7e8] sm:$0xff]
    %v3029 = vld [vmem:[#allocation6 + $0x7f0] sm:$0xff]
    %v3030 = vld [vmem:[#allocation6 + $0x7f8] sm:$0xff]
    %3031 = vmatprep.subr.mxu0 %v2776
    %3032 = vmatpush1.msra.mxu0 %v2775
    %3033 = vmatprep.subr.mxu0 %v2778
    %3034 = vmatpush1.msra.mxu0 %v2777
    %3035 = vmatprep.subr.mxu0 %v2780
    %3036 = vmatpush1.msra.mxu0 %v2779
    %3037 = vmatprep.subr.mxu0 %v2782
    %3038 = vmatpush1.msra.mxu0 %v2781
    %3039 = vmatprep.subr.mxu0 %v2784
    %3040 = vmatpush1.msra.mxu0 %v2783
    %3041 = vmatprep.subr.mxu0 %v2786
    %3042 = vmatpush1.msra.mxu0 %v2785
    %3043 = vmatprep.subr.mxu0 %v2788
    %3044 = vmatpush1.msra.mxu0 %v2787
    %3045 = vmatprep.subr.mxu0 %v2790
    %3046 = vmatpush1.msra.mxu0 %v2789
    %3047 = vmatprep.subr.mxu0 %v2792
    %3048 = vmatpush1.msra.mxu0 %v2791
    %3049 = vmatprep.subr.mxu0 %v2794
    %3050 = vmatpush1.msra.mxu0 %v2793
    %3051 = vmatprep.subr.mxu0 %v2796
    %3052 = vmatpush1.msra.mxu0 %v2795
    %3053 = vmatprep.subr.mxu0 %v2798
    %3054 = vmatpush1.msra.mxu0 %v2797
    %3055 = vmatprep.subr.mxu0 %v2800
    %3056 = vmatpush1.msra.mxu0 %v2799
    %3057 = vmatprep.subr.mxu0 %v2802
    %3058 = vmatpush1.msra.mxu0 %v2801
    %3059 = vmatprep.subr.mxu0 %v2804
    %3060 = vmatpush1.msra.mxu0 %v2803
    %3061 = vmatprep.subr.mxu0 %v2806
    %3062 = vmatpush1.msra.mxu0 %v2805
    %3063 = vmatprep.subr.mxu0 %v2808
    %3064 = vmatpush1.msra.mxu0 %v2807
    %3065 = vmatprep.subr.mxu0 %v2810
    %3066 = vmatpush1.msra.mxu0 %v2809
    %3067 = vmatprep.subr.mxu0 %v2812
    %3068 = vmatpush1.msra.mxu0 %v2811
    %3069 = vmatprep.subr.mxu0 %v2814
    %3070 = vmatpush1.msra.mxu0 %v2813
    %3071 = vmatprep.subr.mxu0 %v2816
    %3072 = vmatpush1.msra.mxu0 %v2815
    %3073 = vmatprep.subr.mxu0 %v2818
    %3074 = vmatpush1.msra.mxu0 %v2817
    %3075 = vmatprep.subr.mxu0 %v2820
    %3076 = vmatpush1.msra.mxu0 %v2819
    %3077 = vmatprep.subr.mxu0 %v2822
    %3078 = vmatpush1.msra.mxu0 %v2821
    %3079 = vmatprep.subr.mxu0 %v2824
    %3080 = vmatpush1.msra.mxu0 %v2823
    %3081 = vmatprep.subr.mxu0 %v2826
    %3082 = vmatpush1.msra.mxu0 %v2825
    %3083 = vmatprep.subr.mxu0 %v2828
    %3084 = vmatpush1.msra.mxu0 %v2827
    %3085 = vmatprep.subr.mxu0 %v2830
    %3086 = vmatpush1.msra.mxu0 %v2829
    %3087 = vmatprep.subr.mxu0 %v2832
    %3088 = vmatpush1.msra.mxu0 %v2831
    %3089 = vmatprep.subr.mxu0 %v2834
    %3090 = vmatpush1.msra.mxu0 %v2833
    %3091 = vmatprep.subr.mxu0 %v2836
    %3092 = vmatpush1.msra.mxu0 %v2835
    %3093 = vmatprep.subr.mxu0 %v2838
    %3094 = vmatpush1.msra.mxu0 %v2837
    %3095 = vmatprep.mubr.f32.mxu0 %v2760
    %3096 = vmatmul.mubr.f32.gmra.mrb[0].mxu0 %v2759
    %v3097 = vpop.f32.mrb[0].mxu0
    %v3098 = vadd.f32 0.0, %v3097
    %v3099 = vpop.f32.mrb[0].mxu0
    %v3100 = vadd.f32 0.0, %v3099
    %3101 = vmatprep.mubr.f32.mxu0 %v2768
    %3102 = vmatmul.mubr.f32.gmra.mrb[0].mxu0 %v2767
    %v3103 = vpop.f32.mrb[0].mxu0
    %v3104 = vadd.f32 0.0, %v3103
    %v3105 = vpop.f32.mrb[0].mxu0
    %v3106 = vadd.f32 0.0, %v3105
    %3107 = vdwg.mxu0
    %3108 = vmatprep.subr.mxu0 %v2840
    %3109 = vmatpush1.msra.mxu0 %v2839
    %3110 = vmatprep.subr.mxu0 %v2842
    %3111 = vmatpush1.msra.mxu0 %v2841
    %3112 = vmatprep.subr.mxu0 %v2844
    %3113 = vmatpush1.msra.mxu0 %v2843
    %3114 = vmatprep.subr.mxu0 %v2846
    %3115 = vmatpush1.msra.mxu0 %v2845
    %3116 = vmatprep.subr.mxu0 %v2848
    %3117 = vmatpush1.msra.mxu0 %v2847
    %3118 = vmatprep.subr.mxu0 %v2850
    %3119 = vmatpush1.msra.mxu0 %v2849
    %3120 = vmatprep.subr.mxu0 %v2852
    %3121 = vmatpush1.msra.mxu0 %v2851
    %3122 = vmatprep.subr.mxu0 %v2854
    %3123 = vmatpush1.msra.mxu0 %v2853
    %3124 = vmatprep.subr.mxu0 %v2856
    %3125 = vmatpush1.msra.mxu0 %v2855
    %3126 = vmatprep.subr.mxu0 %v2858
    %3127 = vmatpush1.msra.mxu0 %v2857
    %3128 = vmatprep.subr.mxu0 %v2860
    %3129 = vmatpush1.msra.mxu0 %v2859
    %3130 = vmatprep.subr.mxu0 %v2862
    %3131 = vmatpush1.msra.mxu0 %v2861
    %3132 = vmatprep.subr.mxu0 %v2864
    %3133 = vmatpush1.msra.mxu0 %v2863
    %3134 = vmatprep.subr.mxu0 %v2866
    %3135 = vmatpush1.msra.mxu0 %v2865
    %3136 = vmatprep.subr.mxu0 %v2868
    %3137 = vmatpush1.msra.mxu0 %v2867
    %3138 = vmatprep.subr.mxu0 %v2870
    %3139 = vmatpush1.msra.mxu0 %v2869
    %3140 = vmatprep.subr.mxu0 %v2872
    %3141 = vmatpush1.msra.mxu0 %v2871
    %3142 = vmatprep.subr.mxu0 %v2874
    %3143 = vmatpush1.msra.mxu0 %v2873
    %3144 = vmatprep.subr.mxu0 %v2876
    %3145 = vmatpush1.msra.mxu0 %v2875
    %3146 = vmatprep.subr.mxu0 %v2878
    %3147 = vmatpush1.msra.mxu0 %v2877
    %3148 = vmatprep.subr.mxu0 %v2880
    %3149 = vmatpush1.msra.mxu0 %v2879
    %3150 = vmatprep.subr.mxu0 %v2882
    %3151 = vmatpush1.msra.mxu0 %v2881
    %3152 = vmatprep.subr.mxu0 %v2884
    %3153 = vmatpush1.msra.mxu0 %v2883
    %3154 = vmatprep.subr.mxu0 %v2886
    %3155 = vmatpush1.msra.mxu0 %v2885
    %3156 = vmatprep.subr.mxu0 %v2888
    %3157 = vmatpush1.msra.mxu0 %v2887
    %3158 = vmatprep.subr.mxu0 %v2890
    %3159 = vmatpush1.msra.mxu0 %v2889
    %3160 = vmatprep.subr.mxu0 %v2892
    %3161 = vmatpush1.msra.mxu0 %v2891
    %3162 = vmatprep.subr.mxu0 %v2894
    %3163 = vmatpush1.msra.mxu0 %v2893
    %3164 = vmatprep.subr.mxu0 %v2896
    %3165 = vmatpush1.msra.mxu0 %v2895
    %3166 = vmatprep.subr.mxu0 %v2898
    %3167 = vmatpush1.msra.mxu0 %v2897
    %3168 = vmatprep.subr.mxu0 %v2900
    %3169 = vmatpush1.msra.mxu0 %v2899
    %3170 = vmatprep.subr.mxu0 %v2902
    %3171 = vmatpush1.msra.mxu0 %v2901
    %3172 = vmatprep.mubr.f32.mxu0 %v2762
    %3173 = vmatmul.mubr.f32.gmra.mrb[0].mxu0 %v2761
    %v3174 = vpop.f32.mrb[0].mxu0
    %v3175 = vadd.f32 %v3098, %v3174
    %v3176 = vpop.f32.mrb[0].mxu0
    %v3177 = vadd.f32 %v3100, %v3176
    %3178 = vmatprep.mubr.f32.mxu0 %v2770
    %3179 = vmatmul.mubr.f32.gmra.mrb[0].mxu0 %v2769
    %v3180 = vpop.f32.mrb[0].mxu0
    %v3181 = vadd.f32 %v3104, %v3180
    %v3182 = vpop.f32.mrb[0].mxu0
    %v3183 = vadd.f32 %v3106, %v3182
    %3184 = vdwg.mxu0
    %3185 = vmatprep.subr.mxu0 %v2904
    %3186 = vmatpush1.msra.mxu0 %v2903
    %3187 = vmatprep.subr.mxu0 %v2906
    %3188 = vmatpush1.msra.mxu0 %v2905
    %3189 = vmatprep.subr.mxu0 %v2908
    %3190 = vmatpush1.msra.mxu0 %v2907
    %3191 = vmatprep.subr.mxu0 %v2910
    %3192 = vmatpush1.msra.mxu0 %v2909
    %3193 = vmatprep.subr.mxu0 %v2912
    %3194 = vmatpush1.msra.mxu0 %v2911
    %3195 = vmatprep.subr.mxu0 %v2914
    %3196 = vmatpush1.msra.mxu0 %v2913
    %3197 = vmatprep.subr.mxu0 %v2916
    %3198 = vmatpush1.msra.mxu0 %v2915
    %3199 = vmatprep.subr.mxu0 %v2918
    %3200 = vmatpush1.msra.mxu0 %v2917
    %3201 = vmatprep.subr.mxu0 %v2920
    %3202 = vmatpush1.msra.mxu0 %v2919
    %3203 = vmatprep.subr.mxu0 %v2922
    %3204 = vmatpush1.msra.mxu0 %v2921
    %3205 = vmatprep.subr.mxu0 %v2924
    %3206 = vmatpush1.msra.mxu0 %v2923
    %3207 = vmatprep.subr.mxu0 %v2926
    %3208 = vmatpush1.msra.mxu0 %v2925
    %3209 = vmatprep.subr.mxu0 %v2928
    %3210 = vmatpush1.msra.mxu0 %v2927
    %3211 = vmatprep.subr.mxu0 %v2930
    %3212 = vmatpush1.msra.mxu0 %v2929
    %3213 = vmatprep.subr.mxu0 %v2932
    %3214 = vmatpush1.msra.mxu0 %v2931
    %3215 = vmatprep.subr.mxu0 %v2934
    %3216 = vmatpush1.msra.mxu0 %v2933
    %3217 = vmatprep.subr.mxu0 %v2936
    %3218 = vmatpush1.msra.mxu0 %v2935
    %3219 = vmatprep.subr.mxu0 %v2938
    %3220 = vmatpush1.msra.mxu0 %v2937
    %3221 = vmatprep.subr.mxu0 %v2940
    %3222 = vmatpush1.msra.mxu0 %v2939
    %3223 = vmatprep.subr.mxu0 %v2942
    %3224 = vmatpush1.msra.mxu0 %v2941
    %3225 = vmatprep.subr.mxu0 %v2944
    %3226 = vmatpush1.msra.mxu0 %v2943
    %3227 = vmatprep.subr.mxu0 %v2946
    %3228 = vmatpush1.msra.mxu0 %v2945
    %3229 = vmatprep.subr.mxu0 %v2948
    %3230 = vmatpush1.msra.mxu0 %v2947
    %3231 = vmatprep.subr.mxu0 %v2950
    %3232 = vmatpush1.msra.mxu0 %v2949
    %3233 = vmatprep.subr.mxu0 %v2952
    %3234 = vmatpush1.msra.mxu0 %v2951
    %3235 = vmatprep.subr.mxu0 %v2954
    %3236 = vmatpush1.msra.mxu0 %v2953
    %3237 = vmatprep.subr.mxu0 %v2956
    %3238 = vmatpush1.msra.mxu0 %v2955
    %3239 = vmatprep.subr.mxu0 %v2958
    %3240 = vmatpush1.msra.mxu0 %v2957
    %3241 = vmatprep.subr.mxu0 %v2960
    %3242 = vmatpush1.msra.mxu0 %v2959
    %3243 = vmatprep.subr.mxu0 %v2962
    %3244 = vmatpush1.msra.mxu0 %v2961
    %3245 = vmatprep.subr.mxu0 %v2964
    %3246 = vmatpush1.msra.mxu0 %v2963
    %3247 = vmatprep.subr.mxu0 %v2966
    %3248 = vmatpush1.msra.mxu0 %v2965
    %3249 = vmatprep.mubr.f32.mxu0 %v2764
    %3250 = vmatmul.mubr.f32.gmra.mrb[0].mxu0 %v2763
    %v3251 = vpop.f32.mrb[0].mxu0
    %v3252 = vadd.f32 %v3175, %v3251
    %v3253 = vpop.f32.mrb[0].mxu0
    %v3254 = vadd.f32 %v3177, %v3253
    %3255 = vmatprep.mubr.f32.mxu0 %v2772
    %3256 = vmatmul.mubr.f32.gmra.mrb[0].mxu0 %v2771
    %v3257 = vpop.f32.mrb[0].mxu0
    %v3258 = vadd.f32 %v3181, %v3257
    %v3259 = vpop.f32.mrb[0].mxu0
    %v3260 = vadd.f32 %v3183, %v3259
    %3261 = vdwg.mxu0
    %3262 = vmatprep.subr.mxu0 %v2968
    %3263 = vmatpush1.msra.mxu0 %v2967
    %3264 = vmatprep.subr.mxu0 %v2970
    %3265 = vmatpush1.msra.mxu0 %v2969
    %3266 = vmatprep.subr.mxu0 %v2972
    %3267 = vmatpush1.msra.mxu0 %v2971
    %3268 = vmatprep.subr.mxu0 %v2974
    %3269 = vmatpush1.msra.mxu0 %v2973
    %3270 = vmatprep.subr.mxu0 %v2976
    %3271 = vmatpush1.msra.mxu0 %v2975
    %3272 = vmatprep.subr.mxu0 %v2978
    %3273 = vmatpush1.msra.mxu0 %v2977
    %3274 = vmatprep.subr.mxu0 %v2980
    %3275 = vmatpush1.msra.mxu0 %v2979
    %3276 = vmatprep.subr.mxu0 %v2982
    %3277 = vmatpush1.msra.mxu0 %v2981
    %3278 = vmatprep.subr.mxu0 %v2984
    %3279 = vmatpush1.msra.mxu0 %v2983
    %3280 = vmatprep.subr.mxu0 %v2986
    %3281 = vmatpush1.msra.mxu0 %v2985
    %3282 = vmatprep.subr.mxu0 %v2988
    %3283 = vmatpush1.msra.mxu0 %v2987
    %3284 = vmatprep.subr.mxu0 %v2990
    %3285 = vmatpush1.msra.mxu0 %v2989
    %3286 = vmatprep.subr.mxu0 %v2992
    %3287 = vmatpush1.msra.mxu0 %v2991
    %3288 = vmatprep.subr.mxu0 %v2994
    %3289 = vmatpush1.msra.mxu0 %v2993
    %3290 = vmatprep.subr.mxu0 %v2996
    %3291 = vmatpush1.msra.mxu0 %v2995
    %3292 = vmatprep.subr.mxu0 %v2998
    %3293 = vmatpush1.msra.mxu0 %v2997
    %3294 = vmatprep.subr.mxu0 %v3000
    %3295 = vmatpush1.msra.mxu0 %v2999
    %3296 = vmatprep.subr.mxu0 %v3002
    %3297 = vmatpush1.msra.mxu0 %v3001
    %3298 = vmatprep.subr.mxu0 %v3004
    %3299 = vmatpush1.msra.mxu0 %v3003
    %3300 = vmatprep.subr.mxu0 %v3006
    %3301 = vmatpush1.msra.mxu0 %v3005
    %3302 = vmatprep.subr.mxu0 %v3008
    %3303 = vmatpush1.msra.mxu0 %v3007
    %3304 = vmatprep.subr.mxu0 %v3010
    %3305 = vmatpush1.msra.mxu0 %v3009
    %3306 = vmatprep.subr.mxu0 %v3012
    %3307 = vmatpush1.msra.mxu0 %v3011
    %3308 = vmatprep.subr.mxu0 %v3014
    %3309 = vmatpush1.msra.mxu0 %v3013
    %3310 = vmatprep.subr.mxu0 %v3016
    %3311 = vmatpush1.msra.mxu0 %v3015
    %3312 = vmatprep.subr.mxu0 %v3018
    %3313 = vmatpush1.msra.mxu0 %v3017
    %3314 = vmatprep.subr.mxu0 %v3020
    %3315 = vmatpush1.msra.mxu0 %v3019
    %3316 = vmatprep.subr.mxu0 %v3022
    %3317 = vmatpush1.msra.mxu0 %v3021
    %3318 = vmatprep.subr.mxu0 %v3024
    %3319 = vmatpush1.msra.mxu0 %v3023
    %3320 = vmatprep.subr.mxu0 %v3026
    %3321 = vmatpush1.msra.mxu0 %v3025
    %3322 = vmatprep.subr.mxu0 %v3028
    %3323 = vmatpush1.msra.mxu0 %v3027
    %3324 = vmatprep.subr.mxu0 %v3030
    %3325 = vmatpush1.msra.mxu0 %v3029
    %3326 = vmatprep.mubr.f32.mxu0 %v2766
    %3327 = vmatmul.mubr.f32.gmra.mrb[0].mxu0 %v2765
    %v3328 = vpop.f32.mrb[0].mxu0
    %v3329 = vadd.f32 %v3252, %v3328
    %v3330 = vpop.f32.mrb[0].mxu0
    %v3331 = vadd.f32 %v3254, %v3330
    %3332 = vmatprep.mubr.f32.mxu0 %v2774
    %3333 = vmatmul.mubr.f32.gmra.mrb[0].mxu0 %v2773
    %v3334 = vpop.f32.mrb[0].mxu0
    %v3335 = vadd.f32 %v3258, %v3334
    %v3336 = vpop.f32.mrb[0].mxu0
    %v3337 = vadd.f32 %v3260, %v3336
    %3338 = vdwg.mxu0
    %3339 = vmatprep.subr.mxu0 %v79
    %3340 = vmatpush1.msra.mxu0 %v78
    %3341 = vmatprep.subr.mxu0 %v97
    %3342 = vmatpush1.msra.mxu0 %v96
    %3343 = vmatprep.subr.mxu0 %v115
    %3344 = vmatpush1.msra.mxu0 %v114
    %3345 = vmatprep.subr.mxu0 %v133
    %3346 = vmatpush1.msra.mxu0 %v132
    %3347 = vmatprep.subr.mxu0 %v151
    %3348 = vmatpush1.msra.mxu0 %v150
    %3349 = vmatprep.subr.mxu0 %v169
    %3350 = vmatpush1.msra.mxu0 %v168
    %3351 = vmatprep.subr.mxu0 %v187
    %3352 = vmatpush1.msra.mxu0 %v186
    %3353 = vmatprep.subr.mxu0 %v205
    %3354 = vmatpush1.msra.mxu0 %v204
    %3355 = vmatprep.subr.mxu0 %v223
    %3356 = vmatpush1.msra.mxu0 %v222
    %3357 = vmatprep.subr.mxu0 %v241
    %3358 = vmatpush1.msra.mxu0 %v240
    %3359 = vmatprep.subr.mxu0 %v259
    %3360 = vmatpush1.msra.mxu0 %v258
    %3361 = vmatprep.subr.mxu0 %v277
    %3362 = vmatpush1.msra.mxu0 %v276
    %3363 = vmatprep.subr.mxu0 %v295
    %3364 = vmatpush1.msra.mxu0 %v294
    %3365 = vmatprep.subr.mxu0 %v313
    %3366 = vmatpush1.msra.mxu0 %v312
    %3367 = vmatprep.subr.mxu0 %v331
    %3368 = vmatpush1.msra.mxu0 %v330
    %3369 = vmatprep.subr.mxu0 %v349
    %3370 = vmatpush1.msra.mxu0 %v348
    %3371 = vmatprep.subr.mxu0 %v367
    %3372 = vmatpush1.msra.mxu0 %v366
    %3373 = vmatprep.subr.mxu0 %v385
    %3374 = vmatpush1.msra.mxu0 %v384
    %3375 = vmatprep.subr.mxu0 %v403
    %3376 = vmatpush1.msra.mxu0 %v402
    %3377 = vmatprep.subr.mxu0 %v421
    %3378 = vmatpush1.msra.mxu0 %v420
    %3379 = vmatprep.subr.mxu0 %v439
    %3380 = vmatpush1.msra.mxu0 %v438
    %3381 = vmatprep.subr.mxu0 %v457
    %3382 = vmatpush1.msra.mxu0 %v456
    %3383 = vmatprep.subr.mxu0 %v475
    %3384 = vmatpush1.msra.mxu0 %v474
    %3385 = vmatprep.subr.mxu0 %v493
    %3386 = vmatpush1.msra.mxu0 %v492
    %3387 = vmatprep.subr.mxu0 %v511
    %3388 = vmatpush1.msra.mxu0 %v510
    %3389 = vmatprep.subr.mxu0 %v529
    %3390 = vmatpush1.msra.mxu0 %v528
    %3391 = vmatprep.subr.mxu0 %v547
    %3392 = vmatpush1.msra.mxu0 %v546
    %3393 = vmatprep.subr.mxu0 %v565
    %3394 = vmatpush1.msra.mxu0 %v564
    %3395 = vmatprep.subr.mxu0 %v583
    %3396 = vmatpush1.msra.mxu0 %v582
    %3397 = vmatprep.subr.mxu0 %v601
    %3398 = vmatpush1.msra.mxu0 %v600
    %3399 = vmatprep.subr.mxu0 %v619
    %3400 = vmatpush1.msra.mxu0 %v618
    %3401 = vmatprep.subr.mxu0 %v637
    %3402 = vmatpush1.msra.mxu0 %v636
    %3403 = vmatprep.mubr.f32.mxu0 %v3331
    %3404 = vmatmul.mubr.f32.gmra.mrb[0].mxu0 %v3329
    %v3405 = vpop.f32.mrb[0].mxu0
    %v3406 = vadd.f32 0.0, %v3405
    %v3407 = vpop.f32.mrb[0].mxu0
    %v3408 = vadd.f32 0.0, %v3407
    %3409 = vmatprep.mubr.f32.mxu0 %v3337
    %3410 = vmatmul.mubr.f32.gmra.mrb[0].mxu0 %v3335
    %v3411 = vpop.f32.mrb[0].mxu0
    %v3412 = vadd.f32 0.0, %v3411
    %v3413 = vpop.f32.mrb[0].mxu0
    %v3414 = vadd.f32 0.0, %v3413
    %3415 = vdwg.mxu0
    %3416 = vmatprep.subr.mxu0 %v81
    %3417 = vmatpush1.msra.mxu0 %v80
    %3418 = vmatprep.subr.mxu0 %v99
    %3419 = vmatpush1.msra.mxu0 %v98
    %3420 = vmatprep.subr.mxu0 %v117
    %3421 = vmatpush1.msra.mxu0 %v116
    %3422 = vmatprep.subr.mxu0 %v135
    %3423 = vmatpush1.msra.mxu0 %v134
    %3424 = vmatprep.subr.mxu0 %v153
    %3425 = vmatpush1.msra.mxu0 %v152
    %3426 = vmatprep.subr.mxu0 %v171
    %3427 = vmatpush1.msra.mxu0 %v170
    %3428 = vmatprep.subr.mxu0 %v189
    %3429 = vmatpush1.msra.mxu0 %v188
    %3430 = vmatprep.subr.mxu0 %v207
    %3431 = vmatpush1.msra.mxu0 %v206
    %3432 = vmatprep.subr.mxu0 %v225
    %3433 = vmatpush1.msra.mxu0 %v224
    %3434 = vmatprep.subr.mxu0 %v243
    %3435 = vmatpush1.msra.mxu0 %v242
    %3436 = vmatprep.subr.mxu0 %v261
    %3437 = vmatpush1.msra.mxu0 %v260
    %3438 = vmatprep.subr.mxu0 %v279
    %3439 = vmatpush1.msra.mxu0 %v278
    %3440 = vmatprep.subr.mxu0 %v297
    %3441 = vmatpush1.msra.mxu0 %v296
    %3442 = vmatprep.subr.mxu0 %v315
    %3443 = vmatpush1.msra.mxu0 %v314
    %3444 = vmatprep.subr.mxu0 %v333
    %3445 = vmatpush1.msra.mxu0 %v332
    %3446 = vmatprep.subr.mxu0 %v351
    %3447 = vmatpush1.msra.mxu0 %v350
    %3448 = vmatprep.subr.mxu0 %v369
    %3449 = vmatpush1.msra.mxu0 %v368
    %3450 = vmatprep.subr.mxu0 %v387
    %3451 = vmatpush1.msra.mxu0 %v386
    %3452 = vmatprep.subr.mxu0 %v405
    %3453 = vmatpush1.msra.mxu0 %v404
    %3454 = vmatprep.subr.mxu0 %v423
    %3455 = vmatpush1.msra.mxu0 %v422
    %3456 = vmatprep.subr.mxu0 %v441
    %3457 = vmatpush1.msra.mxu0 %v440
    %3458 = vmatprep.subr.mxu0 %v459
    %3459 = vmatpush1.msra.mxu0 %v458
    %3460 = vmatprep.subr.mxu0 %v477
    %3461 = vmatpush1.msra.mxu0 %v476
    %3462 = vmatprep.subr.mxu0 %v495
    %3463 = vmatpush1.msra.mxu0 %v494
    %3464 = vmatprep.subr.mxu0 %v513
    %3465 = vmatpush1.msra.mxu0 %v512
    %3466 = vmatprep.subr.mxu0 %v531
    %3467 = vmatpush1.msra.mxu0 %v530
    %3468 = vmatprep.subr.mxu0 %v549
    %3469 = vmatpush1.msra.mxu0 %v548
    %3470 = vmatprep.subr.mxu0 %v567
    %3471 = vmatpush1.msra.mxu0 %v566
    %3472 = vmatprep.subr.mxu0 %v585
    %3473 = vmatpush1.msra.mxu0 %v584
    %3474 = vmatprep.subr.mxu0 %v603
    %3475 = vmatpush1.msra.mxu0 %v602
    %3476 = vmatprep.subr.mxu0 %v621
    %3477 = vmatpush1.msra.mxu0 %v620
    %3478 = vmatprep.subr.mxu0 %v639
    %3479 = vmatpush1.msra.mxu0 %v638
    %3480 = vmatprep.mubr.f32.mxu0 %v3331
    %3481 = vmatmul.mubr.f32.gmra.mrb[0].mxu0 %v3329
    %v3482 = vpop.f32.mrb[0].mxu0
    %v3483 = vadd.f32 0.0, %v3482
    %v3484 = vpop.f32.mrb[0].mxu0
    %v3485 = vadd.f32 0.0, %v3484
    %3486 = vmatprep.mubr.f32.mxu0 %v3337
    %3487 = vmatmul.mubr.f32.gmra.mrb[0].mxu0 %v3335
    %v3488 = vpop.f32.mrb[0].mxu0
    %v3489 = vadd.f32 0.0, %v3488
    %v3490 = vpop.f32.mrb[0].mxu0
    %v3491 = vadd.f32 0.0, %v3490
    %3492 = vdwg.mxu0
    %3493 = vmatprep.subr.mxu0 %v83
    %3494 = vmatpush1.msra.mxu0 %v82
    %3495 = vmatprep.subr.mxu0 %v101
    %3496 = vmatpush1.msra.mxu0 %v100
    %3497 = vmatprep.subr.mxu0 %v119
    %3498 = vmatpush1.msra.mxu0 %v118
    %3499 = vmatprep.subr.mxu0 %v137
    %3500 = vmatpush1.msra.mxu0 %v136
    %3501 = vmatprep.subr.mxu0 %v155
    %3502 = vmatpush1.msra.mxu0 %v154
    %3503 = vmatprep.subr.mxu0 %v173
    %3504 = vmatpush1.msra.mxu0 %v172
    %3505 = vmatprep.subr.mxu0 %v191
    %3506 = vmatpush1.msra.mxu0 %v190
    %3507 = vmatprep.subr.mxu0 %v209
    %3508 = vmatpush1.msra.mxu0 %v208
    %3509 = vmatprep.subr.mxu0 %v227
    %3510 = vmatpush1.msra.mxu0 %v226
    %3511 = vmatprep.subr.mxu0 %v245
    %3512 = vmatpush1.msra.mxu0 %v244
    %3513 = vmatprep.subr.mxu0 %v263
    %3514 = vmatpush1.msra.mxu0 %v262
    %3515 = vmatprep.subr.mxu0 %v281
    %3516 = vmatpush1.msra.mxu0 %v280
    %3517 = vmatprep.subr.mxu0 %v299
    %3518 = vmatpush1.msra.mxu0 %v298
    %3519 = vmatprep.subr.mxu0 %v317
    %3520 = vmatpush1.msra.mxu0 %v316
    %3521 = vmatprep.subr.mxu0 %v335
    %3522 = vmatpush1.msra.mxu0 %v334
    %3523 = vmatprep.subr.mxu0 %v353
    %3524 = vmatpush1.msra.mxu0 %v352
    %3525 = vmatprep.subr.mxu0 %v371
    %3526 = vmatpush1.msra.mxu0 %v370
    %3527 = vmatprep.subr.mxu0 %v389
    %3528 = vmatpush1.msra.mxu0 %v388
    %3529 = vmatprep.subr.mxu0 %v407
    %3530 = vmatpush1.msra.mxu0 %v406
    %3531 = vmatprep.subr.mxu0 %v425
    %3532 = vmatpush1.msra.mxu0 %v424
    %3533 = vmatprep.subr.mxu0 %v443
    %3534 = vmatpush1.msra.mxu0 %v442
    %3535 = vmatprep.subr.mxu0 %v461
    %3536 = vmatpush1.msra.mxu0 %v460
    %3537 = vmatprep.subr.mxu0 %v479
    %3538 = vmatpush1.msra.mxu0 %v478
    %3539 = vmatprep.subr.mxu0 %v497
    %3540 = vmatpush1.msra.mxu0 %v496
    %3541 = vmatprep.subr.mxu0 %v515
    %3542 = vmatpush1.msra.mxu0 %v514
    %3543 = vmatprep.subr.mxu0 %v533
    %3544 = vmatpush1.msra.mxu0 %v532
    %3545 = vmatprep.subr.mxu0 %v551
    %3546 = vmatpush1.msra.mxu0 %v550
    %3547 = vmatprep.subr.mxu0 %v569
    %3548 = vmatpush1.msra.mxu0 %v568
    %3549 = vmatprep.subr.mxu0 %v587
    %3550 = vmatpush1.msra.mxu0 %v586
    %3551 = vmatprep.subr.mxu0 %v605
    %3552 = vmatpush1.msra.mxu0 %v604
    %3553 = vmatprep.subr.mxu0 %v623
    %3554 = vmatpush1.msra.mxu0 %v622
    %3555 = vmatprep.subr.mxu0 %v641
    %3556 = vmatpush1.msra.mxu0 %v640
    %3557 = vmatprep.mubr.f32.mxu0 %v3331
    %3558 = vmatmul.mubr.f32.gmra.mrb[0].mxu0 %v3329
    %v3559 = vpop.f32.mrb[0].mxu0
    %v3560 = vadd.f32 0.0, %v3559
    %v3561 = vpop.f32.mrb[0].mxu0
    %v3562 = vadd.f32 0.0, %v3561
    %3563 = vmatprep.mubr.f32.mxu0 %v3337
    %3564 = vmatmul.mubr.f32.gmra.mrb[0].mxu0 %v3335
    %v3565 = vpop.f32.mrb[0].mxu0
    %v3566 = vadd.f32 0.0, %v3565
    %v3567 = vpop.f32.mrb[0].mxu0
    %v3568 = vadd.f32 0.0, %v3567
    %3569 = vdwg.mxu0
    %3570 = vmatprep.subr.mxu0 %v85
    %3571 = vmatpush1.msra.mxu0 %v84
    %3572 = vmatprep.subr.mxu0 %v103
    %3573 = vmatpush1.msra.mxu0 %v102
    %3574 = vmatprep.subr.mxu0 %v121
    %3575 = vmatpush1.msra.mxu0 %v120
    %3576 = vmatprep.subr.mxu0 %v139
    %3577 = vmatpush1.msra.mxu0 %v138
    %3578 = vmatprep.subr.mxu0 %v157
    %3579 = vmatpush1.msra.mxu0 %v156
    %3580 = vmatprep.subr.mxu0 %v175
    %3581 = vmatpush1.msra.mxu0 %v174
    %3582 = vmatprep.subr.mxu0 %v193
    %3583 = vmatpush1.msra.mxu0 %v192
    %3584 = vmatprep.subr.mxu0 %v211
    %3585 = vmatpush1.msra.mxu0 %v210
    %3586 = vmatprep.subr.mxu0 %v229
    %3587 = vmatpush1.msra.mxu0 %v228
    %3588 = vmatprep.subr.mxu0 %v247
    %3589 = vmatpush1.msra.mxu0 %v246
    %3590 = vmatprep.subr.mxu0 %v265
    %3591 = vmatpush1.msra.mxu0 %v264
    %3592 = vmatprep.subr.mxu0 %v283
    %3593 = vmatpush1.msra.mxu0 %v282
    %3594 = vmatprep.subr.mxu0 %v301
    %3595 = vmatpush1.msra.mxu0 %v300
    %3596 = vmatprep.subr.mxu0 %v319
    %3597 = vmatpush1.msra.mxu0 %v318
    %3598 = vmatprep.subr.mxu0 %v337
    %3599 = vmatpush1.msra.mxu0 %v336
    %3600 = vmatprep.subr.mxu0 %v355
    %3601 = vmatpush1.msra.mxu0 %v354
    %3602 = vmatprep.subr.mxu0 %v373
    %3603 = vmatpush1.msra.mxu0 %v372
    %3604 = vmatprep.subr.mxu0 %v391
    %3605 = vmatpush1.msra.mxu0 %v390
    %3606 = vmatprep.subr.mxu0 %v409
    %3607 = vmatpush1.msra.mxu0 %v408
    %3608 = vmatprep.subr.mxu0 %v427
    %3609 = vmatpush1.msra.mxu0 %v426
    %3610 = vmatprep.subr.mxu0 %v445
    %3611 = vmatpush1.msra.mxu0 %v444
    %3612 = vmatprep.subr.mxu0 %v463
    %3613 = vmatpush1.msra.mxu0 %v462
    %3614 = vmatprep.subr.mxu0 %v481
    %3615 = vmatpush1.msra.mxu0 %v480
    %3616 = vmatprep.subr.mxu0 %v499
    %3617 = vmatpush1.msra.mxu0 %v498
    %3618 = vmatprep.subr.mxu0 %v517
    %3619 = vmatpush1.msra.mxu0 %v516
    %3620 = vmatprep.subr.mxu0 %v535
    %3621 = vmatpush1.msra.mxu0 %v534
    %3622 = vmatprep.subr.mxu0 %v553
    %3623 = vmatpush1.msra.mxu0 %v552
    %3624 = vmatprep.subr.mxu0 %v571
    %3625 = vmatpush1.msra.mxu0 %v570
    %3626 = vmatprep.subr.mxu0 %v589
    %3627 = vmatpush1.msra.mxu0 %v588
    %3628 = vmatprep.subr.mxu0 %v607
    %3629 = vmatpush1.msra.mxu0 %v606
    %3630 = vmatprep.subr.mxu0 %v625
    %3631 = vmatpush1.msra.mxu0 %v624
    %3632 = vmatprep.subr.mxu0 %v643
    %3633 = vmatpush1.msra.mxu0 %v642
    %3634 = vmatprep.mubr.f32.mxu0 %v3331
    %3635 = vmatmul.mubr.f32.gmra.mrb[0].mxu0 %v3329
    %v3636 = vpop.f32.mrb[0].mxu0
    %v3637 = vadd.f32 0.0, %v3636
    %v3638 = vpop.f32.mrb[0].mxu0
    %v3639 = vadd.f32 0.0, %v3638
    %3640 = vmatprep.mubr.f32.mxu0 %v3337
    %3641 = vmatmul.mubr.f32.gmra.mrb[0].mxu0 %v3335
    %v3642 = vpop.f32.mrb[0].mxu0
    %v3643 = vadd.f32 0.0, %v3642
    %v3644 = vpop.f32.mrb[0].mxu0
    %v3645 = vadd.f32 0.0, %v3644
    %3646 = vdwg.mxu0
    %3647 = vmatprep.subr.mxu0 %v87
    %3648 = vmatpush1.msra.mxu0 %v86
    %3649 = vmatprep.subr.mxu0 %v105
    %3650 = vmatpush1.msra.mxu0 %v104
    %3651 = vmatprep.subr.mxu0 %v123
    %3652 = vmatpush1.msra.mxu0 %v122
    %3653 = vmatprep.subr.mxu0 %v141
    %3654 = vmatpush1.msra.mxu0 %v140
    %3655 = vmatprep.subr.mxu0 %v159
    %3656 = vmatpush1.msra.mxu0 %v158
    %3657 = vmatprep.subr.mxu0 %v177
    %3658 = vmatpush1.msra.mxu0 %v176
    %3659 = vmatprep.subr.mxu0 %v195
    %3660 = vmatpush1.msra.mxu0 %v194
    %3661 = vmatprep.subr.mxu0 %v213
    %3662 = vmatpush1.msra.mxu0 %v212
    %3663 = vmatprep.subr.mxu0 %v231
    %3664 = vmatpush1.msra.mxu0 %v230
    %3665 = vmatprep.subr.mxu0 %v249
    %3666 = vmatpush1.msra.mxu0 %v248
    %3667 = vmatprep.subr.mxu0 %v267
    %3668 = vmatpush1.msra.mxu0 %v266
    %3669 = vmatprep.subr.mxu0 %v285
    %3670 = vmatpush1.msra.mxu0 %v284
    %3671 = vmatprep.subr.mxu0 %v303
    %3672 = vmatpush1.msra.mxu0 %v302
    %3673 = vmatprep.subr.mxu0 %v321
    %3674 = vmatpush1.msra.mxu0 %v320
    %3675 = vmatprep.subr.mxu0 %v339
    %3676 = vmatpush1.msra.mxu0 %v338
    %3677 = vmatprep.subr.mxu0 %v357
    %3678 = vmatpush1.msra.mxu0 %v356
    %3679 = vmatprep.subr.mxu0 %v375
    %3680 = vmatpush1.msra.mxu0 %v374
    %3681 = vmatprep.subr.mxu0 %v393
    %3682 = vmatpush1.msra.mxu0 %v392
    %3683 = vmatprep.subr.mxu0 %v411
    %3684 = vmatpush1.msra.mxu0 %v410
    %3685 = vmatprep.subr.mxu0 %v429
    %3686 = vmatpush1.msra.mxu0 %v428
    %3687 = vmatprep.subr.mxu0 %v447
    %3688 = vmatpush1.msra.mxu0 %v446
    %3689 = vmatprep.subr.mxu0 %v465
    %3690 = vmatpush1.msra.mxu0 %v464
    %3691 = vmatprep.subr.mxu0 %v483
    %3692 = vmatpush1.msra.mxu0 %v482
    %3693 = vmatprep.subr.mxu0 %v501
    %3694 = vmatpush1.msra.mxu0 %v500
    %3695 = vmatprep.subr.mxu0 %v519
    %3696 = vmatpush1.msra.mxu0 %v518
    %3697 = vmatprep.subr.mxu0 %v537
    %3698 = vmatpush1.msra.mxu0 %v536
    %3699 = vmatprep.subr.mxu0 %v555
    %3700 = vmatpush1.msra.mxu0 %v554
    %3701 = vmatprep.subr.mxu0 %v573
    %3702 = vmatpush1.msra.mxu0 %v572
    %3703 = vmatprep.subr.mxu0 %v591
    %3704 = vmatpush1.msra.mxu0 %v590
    %3705 = vmatprep.subr.mxu0 %v609
    %3706 = vmatpush1.msra.mxu0 %v608
    %3707 = vmatprep.subr.mxu0 %v627
    %3708 = vmatpush1.msra.mxu0 %v626
    %3709 = vmatprep.subr.mxu0 %v645
    %3710 = vmatpush1.msra.mxu0 %v644
    %3711 = vmatprep.mubr.f32.mxu0 %v3331
    %3712 = vmatmul.mubr.f32.gmra.mrb[0].mxu0 %v3329
    %v3713 = vpop.f32.mrb[0].mxu0
    %v3714 = vadd.f32 0.0, %v3713
    %v3715 = vpop.f32.mrb[0].mxu0
    %v3716 = vadd.f32 0.0, %v3715
    %3717 = vmatprep.mubr.f32.mxu0 %v3337
    %3718 = vmatmul.mubr.f32.gmra.mrb[0].mxu0 %v3335
    %v3719 = vpop.f32.mrb[0].mxu0
    %v3720 = vadd.f32 0.0, %v3719
    %v3721 = vpop.f32.mrb[0].mxu0
    %v3722 = vadd.f32 0.0, %v3721
    %3723 = vdwg.mxu0
    %3724 = vmatprep.subr.mxu0 %v89
    %3725 = vmatpush1.msra.mxu0 %v88
    %3726 = vmatprep.subr.mxu0 %v107
    %3727 = vmatpush1.msra.mxu0 %v106
    %3728 = vmatprep.subr.mxu0 %v125
    %3729 = vmatpush1.msra.mxu0 %v124
    %3730 = vmatprep.subr.mxu0 %v143
    %3731 = vmatpush1.msra.mxu0 %v142
    %3732 = vmatprep.subr.mxu0 %v161
    %3733 = vmatpush1.msra.mxu0 %v160
    %3734 = vmatprep.subr.mxu0 %v179
    %3735 = vmatpush1.msra.mxu0 %v178
    %3736 = vmatprep.subr.mxu0 %v197
    %3737 = vmatpush1.msra.mxu0 %v196
    %3738 = vmatprep.subr.mxu0 %v215
    %3739 = vmatpush1.msra.mxu0 %v214
    %3740 = vmatprep.subr.mxu0 %v233
    %3741 = vmatpush1.msra.mxu0 %v232
    %3742 = vmatprep.subr.mxu0 %v251
    %3743 = vmatpush1.msra.mxu0 %v250
    %3744 = vmatprep.subr.mxu0 %v269
    %3745 = vmatpush1.msra.mxu0 %v268
    %3746 = vmatprep.subr.mxu0 %v287
    %3747 = vmatpush1.msra.mxu0 %v286
    %3748 = vmatprep.subr.mxu0 %v305
    %3749 = vmatpush1.msra.mxu0 %v304
    %3750 = vmatprep.subr.mxu0 %v323
    %3751 = vmatpush1.msra.mxu0 %v322
    %3752 = vmatprep.subr.mxu0 %v341
    %3753 = vmatpush1.msra.mxu0 %v340
    %3754 = vmatprep.subr.mxu0 %v359
    %3755 = vmatpush1.msra.mxu0 %v358
    %3756 = vmatprep.subr.mxu0 %v377
    %3757 = vmatpush1.msra.mxu0 %v376
    %3758 = vmatprep.subr.mxu0 %v395
    %3759 = vmatpush1.msra.mxu0 %v394
    %3760 = vmatprep.subr.mxu0 %v413
    %3761 = vmatpush1.msra.mxu0 %v412
    %3762 = vmatprep.subr.mxu0 %v431
    %3763 = vmatpush1.msra.mxu0 %v430
    %3764 = vmatprep.subr.mxu0 %v449
    %3765 = vmatpush1.msra.mxu0 %v448
    %3766 = vmatprep.subr.mxu0 %v467
    %3767 = vmatpush1.msra.mxu0 %v466
    %3768 = vmatprep.subr.mxu0 %v485
    %3769 = vmatpush1.msra.mxu0 %v484
    %3770 = vmatprep.subr.mxu0 %v503
    %3771 = vmatpush1.msra.mxu0 %v502
    %3772 = vmatprep.subr.mxu0 %v521
    %3773 = vmatpush1.msra.mxu0 %v520
    %3774 = vmatprep.subr.mxu0 %v539
    %3775 = vmatpush1.msra.mxu0 %v538
    %3776 = vmatprep.subr.mxu0 %v557
    %3777 = vmatpush1.msra.mxu0 %v556
    %3778 = vmatprep.subr.mxu0 %v575
    %3779 = vmatpush1.msra.mxu0 %v574
    %3780 = vmatprep.subr.mxu0 %v593
    %3781 = vmatpush1.msra.mxu0 %v592
    %3782 = vmatprep.subr.mxu0 %v611
    %3783 = vmatpush1.msra.mxu0 %v610
    %3784 = vmatprep.subr.mxu0 %v629
    %3785 = vmatpush1.msra.mxu0 %v628
    %3786 = vmatprep.subr.mxu0 %v647
    %3787 = vmatpush1.msra.mxu0 %v646
    %3788 = vmatprep.mubr.f32.mxu0 %v3331
    %3789 = vmatmul.mubr.f32.gmra.mrb[0].mxu0 %v3329
    %v3790 = vpop.f32.mrb[0].mxu0
    %v3791 = vadd.f32 0.0, %v3790
    %v3792 = vpop.f32.mrb[0].mxu0
    %v3793 = vadd.f32 0.0, %v3792
    %3794 = vmatprep.mubr.f32.mxu0 %v3337
    %3795 = vmatmul.mubr.f32.gmra.mrb[0].mxu0 %v3335
    %v3796 = vpop.f32.mrb[0].mxu0
    %v3797 = vadd.f32 0.0, %v3796
    %v3798 = vpop.f32.mrb[0].mxu0
    %v3799 = vadd.f32 0.0, %v3798
    %3800 = vdwg.mxu0
    %3801 = vmatprep.subr.mxu0 %v91
    %3802 = vmatpush1.msra.mxu0 %v90
    %3803 = vmatprep.subr.mxu0 %v109
    %3804 = vmatpush1.msra.mxu0 %v108
    %3805 = vmatprep.subr.mxu0 %v127
    %3806 = vmatpush1.msra.mxu0 %v126
    %3807 = vmatprep.subr.mxu0 %v145
    %3808 = vmatpush1.msra.mxu0 %v144
    %3809 = vmatprep.subr.mxu0 %v163
    %3810 = vmatpush1.msra.mxu0 %v162
    %3811 = vmatprep.subr.mxu0 %v181
    %3812 = vmatpush1.msra.mxu0 %v180
    %3813 = vmatprep.subr.mxu0 %v199
    %3814 = vmatpush1.msra.mxu0 %v198
    %3815 = vmatprep.subr.mxu0 %v217
    %3816 = vmatpush1.msra.mxu0 %v216
    %3817 = vmatprep.subr.mxu0 %v235
    %3818 = vmatpush1.msra.mxu0 %v234
    %3819 = vmatprep.subr.mxu0 %v253
    %3820 = vmatpush1.msra.mxu0 %v252
    %3821 = vmatprep.subr.mxu0 %v271
    %3822 = vmatpush1.msra.mxu0 %v270
    %3823 = vmatprep.subr.mxu0 %v289
    %3824 = vmatpush1.msra.mxu0 %v288
    %3825 = vmatprep.subr.mxu0 %v307
    %3826 = vmatpush1.msra.mxu0 %v306
    %3827 = vmatprep.subr.mxu0 %v325
    %3828 = vmatpush1.msra.mxu0 %v324
    %3829 = vmatprep.subr.mxu0 %v343
    %3830 = vmatpush1.msra.mxu0 %v342
    %3831 = vmatprep.subr.mxu0 %v361
    %3832 = vmatpush1.msra.mxu0 %v360
    %3833 = vmatprep.subr.mxu0 %v379
    %3834 = vmatpush1.msra.mxu0 %v378
    %3835 = vmatprep.subr.mxu0 %v397
    %3836 = vmatpush1.msra.mxu0 %v396
    %3837 = vmatprep.subr.mxu0 %v415
    %3838 = vmatpush1.msra.mxu0 %v414
    %3839 = vmatprep.subr.mxu0 %v433
    %3840 = vmatpush1.msra.mxu0 %v432
    %3841 = vmatprep.subr.mxu0 %v451
    %3842 = vmatpush1.msra.mxu0 %v450
    %3843 = vmatprep.subr.mxu0 %v469
    %3844 = vmatpush1.msra.mxu0 %v468
    %3845 = vmatprep.subr.mxu0 %v487
    %3846 = vmatpush1.msra.mxu0 %v486
    %3847 = vmatprep.subr.mxu0 %v505
    %3848 = vmatpush1.msra.mxu0 %v504
    %3849 = vmatprep.subr.mxu0 %v523
    %3850 = vmatpush1.msra.mxu0 %v522
    %3851 = vmatprep.subr.mxu0 %v541
    %3852 = vmatpush1.msra.mxu0 %v540
    %3853 = vmatprep.subr.mxu0 %v559
    %3854 = vmatpush1.msra.mxu0 %v558
    %3855 = vmatprep.subr.mxu0 %v577
    %3856 = vmatpush1.msra.mxu0 %v576
    %3857 = vmatprep.subr.mxu0 %v595
    %3858 = vmatpush1.msra.mxu0 %v594
    %3859 = vmatprep.subr.mxu0 %v613
    %3860 = vmatpush1.msra.mxu0 %v612
    %3861 = vmatprep.subr.mxu0 %v631
    %3862 = vmatpush1.msra.mxu0 %v630
    %3863 = vmatprep.subr.mxu0 %v649
    %3864 = vmatpush1.msra.mxu0 %v648
    %3865 = vmatprep.mubr.f32.mxu0 %v3331
    %3866 = vmatmul.mubr.f32.gmra.mrb[0].mxu0 %v3329
    %v3867 = vpop.f32.mrb[0].mxu0
    %v3868 = vadd.f32 0.0, %v3867
    %v3869 = vpop.f32.mrb[0].mxu0
    %v3870 = vadd.f32 0.0, %v3869
    %3871 = vmatprep.mubr.f32.mxu0 %v3337
    %3872 = vmatmul.mubr.f32.gmra.mrb[0].mxu0 %v3335
    %v3873 = vpop.f32.mrb[0].mxu0
    %v3874 = vadd.f32 0.0, %v3873
    %v3875 = vpop.f32.mrb[0].mxu0
    %v3876 = vadd.f32 0.0, %v3875
    %3877 = vdwg.mxu0
    %3878 = vmatprep.subr.mxu0 %v93
    %3879 = vmatpush1.msra.mxu0 %v92
    %3880 = vmatprep.subr.mxu0 %v111
    %3881 = vmatpush1.msra.mxu0 %v110
    %3882 = vmatprep.subr.mxu0 %v129
    %3883 = vmatpush1.msra.mxu0 %v128
    %3884 = vmatprep.subr.mxu0 %v147
    %3885 = vmatpush1.msra.mxu0 %v146
    %3886 = vmatprep.subr.mxu0 %v165
    %3887 = vmatpush1.msra.mxu0 %v164
    %3888 = vmatprep.subr.mxu0 %v183
    %3889 = vmatpush1.msra.mxu0 %v182
    %3890 = vmatprep.subr.mxu0 %v201
    %3891 = vmatpush1.msra.mxu0 %v200
    %3892 = vmatprep.subr.mxu0 %v219
    %3893 = vmatpush1.msra.mxu0 %v218
    %3894 = vmatprep.subr.mxu0 %v237
    %3895 = vmatpush1.msra.mxu0 %v236
    %3896 = vmatprep.subr.mxu0 %v255
    %3897 = vmatpush1.msra.mxu0 %v254
    %3898 = vmatprep.subr.mxu0 %v273
    %3899 = vmatpush1.msra.mxu0 %v272
    %3900 = vmatprep.subr.mxu0 %v291
    %3901 = vmatpush1.msra.mxu0 %v290
    %3902 = vmatprep.subr.mxu0 %v309
    %3903 = vmatpush1.msra.mxu0 %v308
    %3904 = vmatprep.subr.mxu0 %v327
    %3905 = vmatpush1.msra.mxu0 %v326
    %3906 = vmatprep.subr.mxu0 %v345
    %3907 = vmatpush1.msra.mxu0 %v344
    %3908 = vmatprep.subr.mxu0 %v363
    %3909 = vmatpush1.msra.mxu0 %v362
    %3910 = vmatprep.subr.mxu0 %v381
    %3911 = vmatpush1.msra.mxu0 %v380
    %3912 = vmatprep.subr.mxu0 %v399
    %3913 = vmatpush1.msra.mxu0 %v398
    %3914 = vmatprep.subr.mxu0 %v417
    %3915 = vmatpush1.msra.mxu0 %v416
    %3916 = vmatprep.subr.mxu0 %v435
    %3917 = vmatpush1.msra.mxu0 %v434
    %3918 = vmatprep.subr.mxu0 %v453
    %3919 = vmatpush1.msra.mxu0 %v452
    %3920 = vmatprep.subr.mxu0 %v471
    %3921 = vmatpush1.msra.mxu0 %v470
    %3922 = vmatprep.subr.mxu0 %v489
    %3923 = vmatpush1.msra.mxu0 %v488
    %3924 = vmatprep.subr.mxu0 %v507
    %3925 = vmatpush1.msra.mxu0 %v506
    %3926 = vmatprep.subr.mxu0 %v525
    %3927 = vmatpush1.msra.mxu0 %v524
    %3928 = vmatprep.subr.mxu0 %v543
    %3929 = vmatpush1.msra.mxu0 %v542
    %3930 = vmatprep.subr.mxu0 %v561
    %3931 = vmatpush1.msra.mxu0 %v560
    %3932 = vmatprep.subr.mxu0 %v579
    %3933 = vmatpush1.msra.mxu0 %v578
    %3934 = vmatprep.subr.mxu0 %v597
    %3935 = vmatpush1.msra.mxu0 %v596
    %3936 = vmatprep.subr.mxu0 %v615
    %3937 = vmatpush1.msra.mxu0 %v614
    %3938 = vmatprep.subr.mxu0 %v633
    %3939 = vmatpush1.msra.mxu0 %v632
    %3940 = vmatprep.subr.mxu0 %v651
    %3941 = vmatpush1.msra.mxu0 %v650
    %3942 = vmatprep.mubr.f32.mxu0 %v3331
    %3943 = vmatmul.mubr.f32.gmra.mrb[0].mxu0 %v3329
    %v3944 = vpop.f32.mrb[0].mxu0
    %v3945 = vadd.f32 0.0, %v3944
    %v3946 = vpop.f32.mrb[0].mxu0
    %v3947 = vadd.f32 0.0, %v3946
    %3948 = vmatprep.mubr.f32.mxu0 %v3337
    %3949 = vmatmul.mubr.f32.gmra.mrb[0].mxu0 %v3335
    %v3950 = vpop.f32.mrb[0].mxu0
    %v3951 = vadd.f32 0.0, %v3950
    %v3952 = vpop.f32.mrb[0].mxu0
    %v3953 = vadd.f32 0.0, %v3952
    %3954 = vdwg.mxu0
    %3955 = vmatprep.subr.mxu0 %v95
    %3956 = vmatpush1.msra.mxu0 %v94
    %3957 = vmatprep.subr.mxu0 %v113
    %3958 = vmatpush1.msra.mxu0 %v112
    %3959 = vmatprep.subr.mxu0 %v131
    %3960 = vmatpush1.msra.mxu0 %v130
    %3961 = vmatprep.subr.mxu0 %v149
    %3962 = vmatpush1.msra.mxu0 %v148
    %3963 = vmatprep.subr.mxu0 %v167
    %3964 = vmatpush1.msra.mxu0 %v166
    %3965 = vmatprep.subr.mxu0 %v185
    %3966 = vmatpush1.msra.mxu0 %v184
    %3967 = vmatprep.subr.mxu0 %v203
    %3968 = vmatpush1.msra.mxu0 %v202
    %3969 = vmatprep.subr.mxu0 %v221
    %3970 = vmatpush1.msra.mxu0 %v220
    %3971 = vmatprep.subr.mxu0 %v239
    %3972 = vmatpush1.msra.mxu0 %v238
    %3973 = vmatprep.subr.mxu0 %v257
    %3974 = vmatpush1.msra.mxu0 %v256
    %3975 = vmatprep.subr.mxu0 %v275
    %3976 = vmatpush1.msra.mxu0 %v274
    %3977 = vmatprep.subr.mxu0 %v293
    %3978 = vmatpush1.msra.mxu0 %v292
    %3979 = vmatprep.subr.mxu0 %v311
    %3980 = vmatpush1.msra.mxu0 %v310
    %3981 = vmatprep.subr.mxu0 %v329
    %3982 = vmatpush1.msra.mxu0 %v328
    %3983 = vmatprep.subr.mxu0 %v347
    %3984 = vmatpush1.msra.mxu0 %v346
    %3985 = vmatprep.subr.mxu0 %v365
    %3986 = vmatpush1.msra.mxu0 %v364
    %3987 = vmatprep.subr.mxu0 %v383
    %3988 = vmatpush1.msra.mxu0 %v382
    %3989 = vmatprep.subr.mxu0 %v401
    %3990 = vmatpush1.msra.mxu0 %v400
    %3991 = vmatprep.subr.mxu0 %v419
    %3992 = vmatpush1.msra.mxu0 %v418
    %3993 = vmatprep.subr.mxu0 %v437
    %3994 = vmatpush1.msra.mxu0 %v436
    %3995 = vmatprep.subr.mxu0 %v455
    %3996 = vmatpush1.msra.mxu0 %v454
    %3997 = vmatprep.subr.mxu0 %v473
    %3998 = vmatpush1.msra.mxu0 %v472
    %3999 = vmatprep.subr.mxu0 %v491
    %4000 = vmatpush1.msra.mxu0 %v490
    %4001 = vmatprep.subr.mxu0 %v509
    %4002 = vmatpush1.msra.mxu0 %v508
    %4003 = vmatprep.subr.mxu0 %v527
    %4004 = vmatpush1.msra.mxu0 %v526
    %4005 = vmatprep.subr.mxu0 %v545
    %4006 = vmatpush1.msra.mxu0 %v544
    %4007 = vmatprep.subr.mxu0 %v563
    %4008 = vmatpush1.msra.mxu0 %v562
    %4009 = vmatprep.subr.mxu0 %v581
    %4010 = vmatpush1.msra.mxu0 %v580
    %4011 = vmatprep.subr.mxu0 %v599
    %4012 = vmatpush1.msra.mxu0 %v598
    %4013 = vmatprep.subr.mxu0 %v617
    %4014 = vmatpush1.msra.mxu0 %v616
    %4015 = vmatprep.subr.mxu0 %v635
    %4016 = vmatpush1.msra.mxu0 %v634
    %4017 = vmatprep.subr.mxu0 %v653
    %4018 = vmatpush1.msra.mxu0 %v652
    %4019 = vmatprep.mubr.f32.mxu0 %v3331
    %4020 = vmatmul.mubr.f32.gmra.mrb[0].mxu0 %v3329
    %v4021 = vpop.f32.mrb[0].mxu0
    %v4022 = vadd.f32 0.0, %v4021
    %v4023 = vpop.f32.mrb[0].mxu0
    %v4024 = vadd.f32 0.0, %v4023
    %4025 = vmatprep.mubr.f32.mxu0 %v3337
    %4026 = vmatmul.mubr.f32.gmra.mrb[0].mxu0 %v3335
    %v4027 = vpop.f32.mrb[0].mxu0
    %v4028 = vadd.f32 0.0, %v4027
    %v4029 = vpop.f32.mrb[0].mxu0
    %v4030 = vadd.f32 0.0, %v4029
    %4031 = vdwg.mxu0
    %v4032 = vld [vmem:[%s7] sm:$0xff]
    %v4033 = vld [vmem:[%s7 + $0x8] sm:$0xff]
    %4035 = vset.pattern.permute.xlu0 0
    %4036 = vperm.xlu0 %4035, %v4032
    %v4037 = vpop.permute.xlu0 %4036
    %4040 = vset.pattern.permute.xlu0 0
    %4041 = vperm.xlu0 %4040, %v4033
    %v4042 = vpop.permute.xlu0 %4041
    %v4044 = vld [vmem:[%s6] sm:$0xff]
    %v4045 = vld [vmem:[%s6 + $0x8] sm:$0xff]
    %vm4046 = vcmask 130048
    %v4048 = vsel %vm4046, %v4044, 0
    %v4051 = vsel %vm4046, %v4045, 0
    %4053 = vmatprep.subr.mxu0 %v3408
    %4054 = vmatpush1.msra.mxu0 %v3406
    %4055 = vmatprep.subr.mxu0 %v3414
    %4056 = vmatpush1.msra.mxu0 %v3412
    %4057 = vmatprep.subr.mxu0 0.0
    %4058 = vmatpush1.msra.mxu0 0.0
    %4059 = vmatprep.subr.mxu0 0.0
    %4060 = vmatpush1.msra.mxu0 0.0
    %4061 = vmatprep.subr.mxu0 0.0
    %4062 = vmatpush1.msra.mxu0 0.0
    %4063 = vmatprep.subr.mxu0 0.0
    %4064 = vmatpush1.msra.mxu0 0.0
    %4065 = vmatprep.subr.mxu0 0.0
    %4066 = vmatpush1.msra.mxu0 0.0
    %4067 = vmatprep.subr.mxu0 0.0
    %4068 = vmatpush1.msra.mxu0 0.0
    %4069 = vmatprep.subr.mxu0 0.0
    %4070 = vmatpush1.msra.mxu0 0.0
    %4071 = vmatprep.subr.mxu0 0.0
    %4072 = vmatpush1.msra.mxu0 0.0
    %4073 = vmatprep.subr.mxu0 0.0
    %4074 = vmatpush1.msra.mxu0 0.0
    %4075 = vmatprep.subr.mxu0 0.0
    %4076 = vmatpush1.msra.mxu0 0.0
    %4077 = vmatprep.subr.mxu0 0.0
    %4078 = vmatpush1.msra.mxu0 0.0
    %4079 = vmatprep.subr.mxu0 0.0
    %4080 = vmatpush1.msra.mxu0 0.0
    %4081 = vmatprep.subr.mxu0 0.0
    %4082 = vmatpush1.msra.mxu0 0.0
    %4083 = vmatprep.subr.mxu0 0.0
    %4084 = vmatpush1.msra.mxu0 0.0
    %4085 = vmatprep.subr.mxu0 0.0
    %4086 = vmatpush1.msra.mxu0 0.0
    %4087 = vmatprep.subr.mxu0 0.0
    %4088 = vmatpush1.msra.mxu0 0.0
    %4089 = vmatprep.subr.mxu0 0.0
    %4090 = vmatpush1.msra.mxu0 0.0
    %4091 = vmatprep.subr.mxu0 0.0
    %4092 = vmatpush1.msra.mxu0 0.0
    %4093 = vmatprep.subr.mxu0 0.0
    %4094 = vmatpush1.msra.mxu0 0.0
    %4095 = vmatprep.subr.mxu0 0.0
    %4096 = vmatpush1.msra.mxu0 0.0
    %4097 = vmatprep.subr.mxu0 0.0
    %4098 = vmatpush1.msra.mxu0 0.0
    %4099 = vmatprep.subr.mxu0 0.0
    %4100 = vmatpush1.msra.mxu0 0.0
    %4101 = vmatprep.subr.mxu0 0.0
    %4102 = vmatpush1.msra.mxu0 0.0
    %4103 = vmatprep.subr.mxu0 0.0
    %4104 = vmatpush1.msra.mxu0 0.0
    %4105 = vmatprep.subr.mxu0 0.0
    %4106 = vmatpush1.msra.mxu0 0.0
    %4107 = vmatprep.subr.mxu0 0.0
    %4108 = vmatpush1.msra.mxu0 0.0
    %4109 = vmatprep.subr.mxu0 0.0
    %4110 = vmatpush1.msra.mxu0 0.0
    %4111 = vmatprep.subr.mxu0 0.0
    %4112 = vmatpush1.msra.mxu0 0.0
    %4113 = vmatprep.subr.mxu0 0.0
    %4114 = vmatpush1.msra.mxu0 0.0
    %4115 = vmatprep.subr.mxu0 0.0
    %4116 = vmatpush1.msra.mxu0 0.0
    %4117 = vmatprep.mubr.f32.mxu0 0.0
    %4118 = vmatmul.mubr.f32.gmra.mrb[0].mxu0 %v4048
    %v4119 = vpop.f32.mrb[0].mxu0
    %v4120 = vadd.f32 0.0, %v4119
    %v4121 = vpop.f32.mrb[0].mxu0
    %v4122 = vadd.f32 0.0, %v4121
    %4123 = vmatprep.mubr.f32.mxu0 0.0
    %4124 = vmatmul.mubr.f32.gmra.mrb[0].mxu0 %v4051
    %v4125 = vpop.f32.mrb[0].mxu0
    %v4126 = vadd.f32 0.0, %v4125
    %v4127 = vpop.f32.mrb[0].mxu0
    %v4128 = vadd.f32 0.0, %v4127
    %4129 = vdwg.mxu0
    %v4130 = vadd.f32 %v4037, %v4120
    %v4131 = vadd.f32 %v4037, %v4122
    %v4132 = vadd.f32 %v4042, %v4126
    %v4133 = vadd.f32 %v4042, %v4128
    %s4134 = scalar_lea.vmem %s6, 16
    %v4135 = vld [vmem:[%s4134] sm:$0xff]
    %v4136 = vld [vmem:[%s4134 + $0x8] sm:$0xff]
    %v4138 = vsel %vm4046, %v4135, 0
    %v4141 = vsel %vm4046, %v4136, 0
    %4143 = vmatprep.subr.mxu0 %v3485
    %4144 = vmatpush1.msra.mxu0 %v3483
    %4145 = vmatprep.subr.mxu0 %v3491
    %4146 = vmatpush1.msra.mxu0 %v3489
    %4147 = vmatprep.subr.mxu0 0.0
    %4148 = vmatpush1.msra.mxu0 0.0
    %4149 = vmatprep.subr.mxu0 0.0
    %4150 = vmatpush1.msra.mxu0 0.0
    %4151 = vmatprep.subr.mxu0 0.0
    %4152 = vmatpush1.msra.mxu0 0.0
    %4153 = vmatprep.subr.mxu0 0.0
    %4154 = vmatpush1.msra.mxu0 0.0
    %4155 = vmatprep.subr.mxu0 0.0
    %4156 = vmatpush1.msra.mxu0 0.0
    %4157 = vmatprep.subr.mxu0 0.0
    %4158 = vmatpush1.msra.mxu0 0.0
    %4159 = vmatprep.subr.mxu0 0.0
    %4160 = vmatpush1.msra.mxu0 0.0
    %4161 = vmatprep.subr.mxu0 0.0
    %4162 = vmatpush1.msra.mxu0 0.0
    %4163 = vmatprep.subr.mxu0 0.0
    %4164 = vmatpush1.msra.mxu0 0.0
    %4165 = vmatprep.subr.mxu0 0.0
    %4166 = vmatpush1.msra.mxu0 0.0
    %4167 = vmatprep.subr.mxu0 0.0
    %4168 = vmatpush1.msra.mxu0 0.0
    %4169 = vmatprep.subr.mxu0 0.0
    %4170 = vmatpush1.msra.mxu0 0.0
    %4171 = vmatprep.subr.mxu0 0.0
    %4172 = vmatpush1.msra.mxu0 0.0
    %4173 = vmatprep.subr.mxu0 0.0
    %4174 = vmatpush1.msra.mxu0 0.0
    %4175 = vmatprep.subr.mxu0 0.0
    %4176 = vmatpush1.msra.mxu0 0.0
    %4177 = vmatprep.subr.mxu0 0.0
    %4178 = vmatpush1.msra.mxu0 0.0
    %4179 = vmatprep.subr.mxu0 0.0
    %4180 = vmatpush1.msra.mxu0 0.0
    %4181 = vmatprep.subr.mxu0 0.0
    %4182 = vmatpush1.msra.mxu0 0.0
    %4183 = vmatprep.subr.mxu0 0.0
    %4184 = vmatpush1.msra.mxu0 0.0
    %4185 = vmatprep.subr.mxu0 0.0
    %4186 = vmatpush1.msra.mxu0 0.0
    %4187 = vmatprep.subr.mxu0 0.0
    %4188 = vmatpush1.msra.mxu0 0.0
    %4189 = vmatprep.subr.mxu0 0.0
    %4190 = vmatpush1.msra.mxu0 0.0
    %4191 = vmatprep.subr.mxu0 0.0
    %4192 = vmatpush1.msra.mxu0 0.0
    %4193 = vmatprep.subr.mxu0 0.0
    %4194 = vmatpush1.msra.mxu0 0.0
    %4195 = vmatprep.subr.mxu0 0.0
    %4196 = vmatpush1.msra.mxu0 0.0
    %4197 = vmatprep.subr.mxu0 0.0
    %4198 = vmatpush1.msra.mxu0 0.0
    %4199 = vmatprep.subr.mxu0 0.0
    %4200 = vmatpush1.msra.mxu0 0.0
    %4201 = vmatprep.subr.mxu0 0.0
    %4202 = vmatpush1.msra.mxu0 0.0
    %4203 = vmatprep.subr.mxu0 0.0
    %4204 = vmatpush1.msra.mxu0 0.0
    %4205 = vmatprep.subr.mxu0 0.0
    %4206 = vmatpush1.msra.mxu0 0.0
    %4207 = vmatprep.mubr.f32.mxu0 0.0
    %4208 = vmatmul.mubr.f32.gmra.mrb[0].mxu0 %v4138
    %v4209 = vpop.f32.mrb[0].mxu0
    %v4210 = vadd.f32 0.0, %v4209
    %v4211 = vpop.f32.mrb[0].mxu0
    %v4212 = vadd.f32 0.0, %v4211
    %4213 = vmatprep.mubr.f32.mxu0 0.0
    %4214 = vmatmul.mubr.f32.gmra.mrb[0].mxu0 %v4141
    %v4215 = vpop.f32.mrb[0].mxu0
    %v4216 = vadd.f32 0.0, %v4215
    %v4217 = vpop.f32.mrb[0].mxu0
    %v4218 = vadd.f32 0.0, %v4217
    %4219 = vdwg.mxu0
    %v4220 = vadd.f32 %v4130, %v4210
    %v4221 = vadd.f32 %v4131, %v4212
    %v4222 = vadd.f32 %v4132, %v4216
    %v4223 = vadd.f32 %v4133, %v4218
    %s4224 = scalar_lea.vmem %s6, 32
    %v4225 = vld [vmem:[%s4224] sm:$0xff]
    %v4226 = vld [vmem:[%s4224 + $0x8] sm:$0xff]
    %v4228 = vsel %vm4046, %v4225, 0
    %v4231 = vsel %vm4046, %v4226, 0
    %4233 = vmatprep.subr.mxu0 %v3562
    %4234 = vmatpush1.msra.mxu0 %v3560
    %4235 = vmatprep.subr.mxu0 %v3568
    %4236 = vmatpush1.msra.mxu0 %v3566
    %4237 = vmatprep.subr.mxu0 0.0
    %4238 = vmatpush1.msra.mxu0 0.0
    %4239 = vmatprep.subr.mxu0 0.0
    %4240 = vmatpush1.msra.mxu0 0.0
    %4241 = vmatprep.subr.mxu0 0.0
    %4242 = vmatpush1.msra.mxu0 0.0
    %4243 = vmatprep.subr.mxu0 0.0
    %4244 = vmatpush1.msra.mxu0 0.0
    %4245 = vmatprep.subr.mxu0 0.0
    %4246 = vmatpush1.msra.mxu0 0.0
    %4247 = vmatprep.subr.mxu0 0.0
    %4248 = vmatpush1.msra.mxu0 0.0
    %4249 = vmatprep.subr.mxu0 0.0
    %4250 = vmatpush1.msra.mxu0 0.0
    %4251 = vmatprep.subr.mxu0 0.0
    %4252 = vmatpush1.msra.mxu0 0.0
    %4253 = vmatprep.subr.mxu0 0.0
    %4254 = vmatpush1.msra.mxu0 0.0
    %4255 = vmatprep.subr.mxu0 0.0
    %4256 = vmatpush1.msra.mxu0 0.0
    %4257 = vmatprep.subr.mxu0 0.0
    %4258 = vmatpush1.msra.mxu0 0.0
    %4259 = vmatprep.subr.mxu0 0.0
    %4260 = vmatpush1.msra.mxu0 0.0
    %4261 = vmatprep.subr.mxu0 0.0
    %4262 = vmatpush1.msra.mxu0 0.0
    %4263 = vmatprep.subr.mxu0 0.0
    %4264 = vmatpush1.msra.mxu0 0.0
    %4265 = vmatprep.subr.mxu0 0.0
    %4266 = vmatpush1.msra.mxu0 0.0
    %4267 = vmatprep.subr.mxu0 0.0
    %4268 = vmatpush1.msra.mxu0 0.0
    %4269 = vmatprep.subr.mxu0 0.0
    %4270 = vmatpush1.msra.mxu0 0.0
    %4271 = vmatprep.subr.mxu0 0.0
    %4272 = vmatpush1.msra.mxu0 0.0
    %4273 = vmatprep.subr.mxu0 0.0
    %4274 = vmatpush1.msra.mxu0 0.0
    %4275 = vmatprep.subr.mxu0 0.0
    %4276 = vmatpush1.msra.mxu0 0.0
    %4277 = vmatprep.subr.mxu0 0.0
    %4278 = vmatpush1.msra.mxu0 0.0
    %4279 = vmatprep.subr.mxu0 0.0
    %4280 = vmatpush1.msra.mxu0 0.0
    %4281 = vmatprep.subr.mxu0 0.0
    %4282 = vmatpush1.msra.mxu0 0.0
    %4283 = vmatprep.subr.mxu0 0.0
    %4284 = vmatpush1.msra.mxu0 0.0
    %4285 = vmatprep.subr.mxu0 0.0
    %4286 = vmatpush1.msra.mxu0 0.0
    %4287 = vmatprep.subr.mxu0 0.0
    %4288 = vmatpush1.msra.mxu0 0.0
    %4289 = vmatprep.subr.mxu0 0.0
    %4290 = vmatpush1.msra.mxu0 0.0
    %4291 = vmatprep.subr.mxu0 0.0
    %4292 = vmatpush1.msra.mxu0 0.0
    %4293 = vmatprep.subr.mxu0 0.0
    %4294 = vmatpush1.msra.mxu0 0.0
    %4295 = vmatprep.subr.mxu0 0.0
    %4296 = vmatpush1.msra.mxu0 0.0
    %4297 = vmatprep.mubr.f32.mxu0 0.0
    %4298 = vmatmul.mubr.f32.gmra.mrb[0].mxu0 %v4228
    %v4299 = vpop.f32.mrb[0].mxu0
    %v4300 = vadd.f32 0.0, %v4299
    %v4301 = vpop.f32.mrb[0].mxu0
    %v4302 = vadd.f32 0.0, %v4301
    %4303 = vmatprep.mubr.f32.mxu0 0.0
    %4304 = vmatmul.mubr.f32.gmra.mrb[0].mxu0 %v4231
    %v4305 = vpop.f32.mrb[0].mxu0
    %v4306 = vadd.f32 0.0, %v4305
    %v4307 = vpop.f32.mrb[0].mxu0
    %v4308 = vadd.f32 0.0, %v4307
    %4309 = vdwg.mxu0
    %v4310 = vadd.f32 %v4220, %v4300
    %v4311 = vadd.f32 %v4221, %v4302
    %v4312 = vadd.f32 %v4222, %v4306
    %v4313 = vadd.f32 %v4223, %v4308
    %s4314 = scalar_lea.vmem %s6, 48
    %v4315 = vld [vmem:[%s4314] sm:$0xff]
    %v4316 = vld [vmem:[%s4314 + $0x8] sm:$0xff]
    %v4318 = vsel %vm4046, %v4315, 0
    %v4321 = vsel %vm4046, %v4316, 0
    %4323 = vmatprep.subr.mxu0 %v3639
    %4324 = vmatpush1.msra.mxu0 %v3637
    %4325 = vmatprep.subr.mxu0 %v3645
    %4326 = vmatpush1.msra.mxu0 %v3643
    %4327 = vmatprep.subr.mxu0 0.0
    %4328 = vmatpush1.msra.mxu0 0.0
    %4329 = vmatprep.subr.mxu0 0.0
    %4330 = vmatpush1.msra.mxu0 0.0
    %4331 = vmatprep.subr.mxu0 0.0
    %4332 = vmatpush1.msra.mxu0 0.0
    %4333 = vmatprep.subr.mxu0 0.0
    %4334 = vmatpush1.msra.mxu0 0.0
    %4335 = vmatprep.subr.mxu0 0.0
    %4336 = vmatpush1.msra.mxu0 0.0
    %4337 = vmatprep.subr.mxu0 0.0
    %4338 = vmatpush1.msra.mxu0 0.0
    %4339 = vmatprep.subr.mxu0 0.0
    %4340 = vmatpush1.msra.mxu0 0.0
    %4341 = vmatprep.subr.mxu0 0.0
    %4342 = vmatpush1.msra.mxu0 0.0
    %4343 = vmatprep.subr.mxu0 0.0
    %4344 = vmatpush1.msra.mxu0 0.0
    %4345 = vmatprep.subr.mxu0 0.0
    %4346 = vmatpush1.msra.mxu0 0.0
    %4347 = vmatprep.subr.mxu0 0.0
    %4348 = vmatpush1.msra.mxu0 0.0
    %4349 = vmatprep.subr.mxu0 0.0
    %4350 = vmatpush1.msra.mxu0 0.0
    %4351 = vmatprep.subr.mxu0 0.0
    %4352 = vmatpush1.msra.mxu0 0.0
    %4353 = vmatprep.subr.mxu0 0.0
    %4354 = vmatpush1.msra.mxu0 0.0
    %4355 = vmatprep.subr.mxu0 0.0
    %4356 = vmatpush1.msra.mxu0 0.0
    %4357 = vmatprep.subr.mxu0 0.0
    %4358 = vmatpush1.msra.mxu0 0.0
    %4359 = vmatprep.subr.mxu0 0.0
    %4360 = vmatpush1.msra.mxu0 0.0
    %4361 = vmatprep.subr.mxu0 0.0
    %4362 = vmatpush1.msra.mxu0 0.0
    %4363 = vmatprep.subr.mxu0 0.0
    %4364 = vmatpush1.msra.mxu0 0.0
    %4365 = vmatprep.subr.mxu0 0.0
    %4366 = vmatpush1.msra.mxu0 0.0
    %4367 = vmatprep.subr.mxu0 0.0
    %4368 = vmatpush1.msra.mxu0 0.0
    %4369 = vmatprep.subr.mxu0 0.0
    %4370 = vmatpush1.msra.mxu0 0.0
    %4371 = vmatprep.subr.mxu0 0.0
    %4372 = vmatpush1.msra.mxu0 0.0
    %4373 = vmatprep.subr.mxu0 0.0
    %4374 = vmatpush1.msra.mxu0 0.0
    %4375 = vmatprep.subr.mxu0 0.0
    %4376 = vmatpush1.msra.mxu0 0.0
    %4377 = vmatprep.subr.mxu0 0.0
    %4378 = vmatpush1.msra.mxu0 0.0
    %4379 = vmatprep.subr.mxu0 0.0
    %4380 = vmatpush1.msra.mxu0 0.0
    %4381 = vmatprep.subr.mxu0 0.0
    %4382 = vmatpush1.msra.mxu0 0.0
    %4383 = vmatprep.subr.mxu0 0.0
    %4384 = vmatpush1.msra.mxu0 0.0
    %4385 = vmatprep.subr.mxu0 0.0
    %4386 = vmatpush1.msra.mxu0 0.0
    %4387 = vmatprep.mubr.f32.mxu0 0.0
    %4388 = vmatmul.mubr.f32.gmra.mrb[0].mxu0 %v4318
    %v4389 = vpop.f32.mrb[0].mxu0
    %v4390 = vadd.f32 0.0, %v4389
    %v4391 = vpop.f32.mrb[0].mxu0
    %v4392 = vadd.f32 0.0, %v4391
    %4393 = vmatprep.mubr.f32.mxu0 0.0
    %4394 = vmatmul.mubr.f32.gmra.mrb[0].mxu0 %v4321
    %v4395 = vpop.f32.mrb[0].mxu0
    %v4396 = vadd.f32 0.0, %v4395
    %v4397 = vpop.f32.mrb[0].mxu0
    %v4398 = vadd.f32 0.0, %v4397
    %4399 = vdwg.mxu0
    %v4400 = vadd.f32 %v4310, %v4390
    %v4401 = vadd.f32 %v4311, %v4392
    %v4402 = vadd.f32 %v4312, %v4396
    %v4403 = vadd.f32 %v4313, %v4398
    %s4404 = scalar_lea.vmem %s6, 64
    %v4405 = vld [vmem:[%s4404] sm:$0xff]
    %v4406 = vld [vmem:[%s4404 + $0x8] sm:$0xff]
    %v4408 = vsel %vm4046, %v4405, 0
    %v4411 = vsel %vm4046, %v4406, 0
    %4413 = vmatprep.subr.mxu0 %v3716
    %4414 = vmatpush1.msra.mxu0 %v3714
    %4415 = vmatprep.subr.mxu0 %v3722
    %4416 = vmatpush1.msra.mxu0 %v3720
    %4417 = vmatprep.subr.mxu0 0.0
    %4418 = vmatpush1.msra.mxu0 0.0
    %4419 = vmatprep.subr.mxu0 0.0
    %4420 = vmatpush1.msra.mxu0 0.0
    %4421 = vmatprep.subr.mxu0 0.0
    %4422 = vmatpush1.msra.mxu0 0.0
    %4423 = vmatprep.subr.mxu0 0.0
    %4424 = vmatpush1.msra.mxu0 0.0
    %4425 = vmatprep.subr.mxu0 0.0
    %4426 = vmatpush1.msra.mxu0 0.0
    %4427 = vmatprep.subr.mxu0 0.0
    %4428 = vmatpush1.msra.mxu0 0.0
    %4429 = vmatprep.subr.mxu0 0.0
    %4430 = vmatpush1.msra.mxu0 0.0
    %4431 = vmatprep.subr.mxu0 0.0
    %4432 = vmatpush1.msra.mxu0 0.0
    %4433 = vmatprep.subr.mxu0 0.0
    %4434 = vmatpush1.msra.mxu0 0.0
    %4435 = vmatprep.subr.mxu0 0.0
    %4436 = vmatpush1.msra.mxu0 0.0
    %4437 = vmatprep.subr.mxu0 0.0
    %4438 = vmatpush1.msra.mxu0 0.0
    %4439 = vmatprep.subr.mxu0 0.0
    %4440 = vmatpush1.msra.mxu0 0.0
    %4441 = vmatprep.subr.mxu0 0.0
    %4442 = vmatpush1.msra.mxu0 0.0
    %4443 = vmatprep.subr.mxu0 0.0
    %4444 = vmatpush1.msra.mxu0 0.0
    %4445 = vmatprep.subr.mxu0 0.0
    %4446 = vmatpush1.msra.mxu0 0.0
    %4447 = vmatprep.subr.mxu0 0.0
    %4448 = vmatpush1.msra.mxu0 0.0
    %4449 = vmatprep.subr.mxu0 0.0
    %4450 = vmatpush1.msra.mxu0 0.0
    %4451 = vmatprep.subr.mxu0 0.0
    %4452 = vmatpush1.msra.mxu0 0.0
    %4453 = vmatprep.subr.mxu0 0.0
    %4454 = vmatpush1.msra.mxu0 0.0
    %4455 = vmatprep.subr.mxu0 0.0
    %4456 = vmatpush1.msra.mxu0 0.0
    %4457 = vmatprep.subr.mxu0 0.0
    %4458 = vmatpush1.msra.mxu0 0.0
    %4459 = vmatprep.subr.mxu0 0.0
    %4460 = vmatpush1.msra.mxu0 0.0
    %4461 = vmatprep.subr.mxu0 0.0
    %4462 = vmatpush1.msra.mxu0 0.0
    %4463 = vmatprep.subr.mxu0 0.0
    %4464 = vmatpush1.msra.mxu0 0.0
    %4465 = vmatprep.subr.mxu0 0.0
    %4466 = vmatpush1.msra.mxu0 0.0
    %4467 = vmatprep.subr.mxu0 0.0
    %4468 = vmatpush1.msra.mxu0 0.0
    %4469 = vmatprep.subr.mxu0 0.0
    %4470 = vmatpush1.msra.mxu0 0.0
    %4471 = vmatprep.subr.mxu0 0.0
    %4472 = vmatpush1.msra.mxu0 0.0
    %4473 = vmatprep.subr.mxu0 0.0
    %4474 = vmatpush1.msra.mxu0 0.0
    %4475 = vmatprep.subr.mxu0 0.0
    %4476 = vmatpush1.msra.mxu0 0.0
    %4477 = vmatprep.mubr.f32.mxu0 0.0
    %4478 = vmatmul.mubr.f32.gmra.mrb[0].mxu0 %v4408
    %v4479 = vpop.f32.mrb[0].mxu0
    %v4480 = vadd.f32 0.0, %v4479
    %v4481 = vpop.f32.mrb[0].mxu0
    %v4482 = vadd.f32 0.0, %v4481
    %4483 = vmatprep.mubr.f32.mxu0 0.0
    %4484 = vmatmul.mubr.f32.gmra.mrb[0].mxu0 %v4411
    %v4485 = vpop.f32.mrb[0].mxu0
    %v4486 = vadd.f32 0.0, %v4485
    %v4487 = vpop.f32.mrb[0].mxu0
    %v4488 = vadd.f32 0.0, %v4487
    %4489 = vdwg.mxu0
    %v4490 = vadd.f32 %v4400, %v4480
    %v4491 = vadd.f32 %v4401, %v4482
    %v4492 = vadd.f32 %v4402, %v4486
    %v4493 = vadd.f32 %v4403, %v4488
    %s4494 = scalar_lea.vmem %s6, 80
    %v4495 = vld [vmem:[%s4494] sm:$0xff]
    %v4496 = vld [vmem:[%s4494 + $0x8] sm:$0xff]
    %v4498 = vsel %vm4046, %v4495, 0
    %v4501 = vsel %vm4046, %v4496, 0
    %4503 = vmatprep.subr.mxu0 %v3793
    %4504 = vmatpush1.msra.mxu0 %v3791
    %4505 = vmatprep.subr.mxu0 %v3799
    %4506 = vmatpush1.msra.mxu0 %v3797
    %4507 = vmatprep.subr.mxu0 0.0
    %4508 = vmatpush1.msra.mxu0 0.0
    %4509 = vmatprep.subr.mxu0 0.0
    %4510 = vmatpush1.msra.mxu0 0.0
    %4511 = vmatprep.subr.mxu0 0.0
    %4512 = vmatpush1.msra.mxu0 0.0
    %4513 = vmatprep.subr.mxu0 0.0
    %4514 = vmatpush1.msra.mxu0 0.0
    %4515 = vmatprep.subr.mxu0 0.0
    %4516 = vmatpush1.msra.mxu0 0.0
    %4517 = vmatprep.subr.mxu0 0.0
    %4518 = vmatpush1.msra.mxu0 0.0
    %4519 = vmatprep.subr.mxu0 0.0
    %4520 = vmatpush1.msra.mxu0 0.0
    %4521 = vmatprep.subr.mxu0 0.0
    %4522 = vmatpush1.msra.mxu0 0.0
    %4523 = vmatprep.subr.mxu0 0.0
    %4524 = vmatpush1.msra.mxu0 0.0
    %4525 = vmatprep.subr.mxu0 0.0
    %4526 = vmatpush1.msra.mxu0 0.0
    %4527 = vmatprep.subr.mxu0 0.0
    %4528 = vmatpush1.msra.mxu0 0.0
    %4529 = vmatprep.subr.mxu0 0.0
    %4530 = vmatpush1.msra.mxu0 0.0
    %4531 = vmatprep.subr.mxu0 0.0
    %4532 = vmatpush1.msra.mxu0 0.0
    %4533 = vmatprep.subr.mxu0 0.0
    %4534 = vmatpush1.msra.mxu0 0.0
    %4535 = vmatprep.subr.mxu0 0.0
    %4536 = vmatpush1.msra.mxu0 0.0
    %4537 = vmatprep.subr.mxu0 0.0
    %4538 = vmatpush1.msra.mxu0 0.0
    %4539 = vmatprep.subr.mxu0 0.0
    %4540 = vmatpush1.msra.mxu0 0.0
    %4541 = vmatprep.subr.mxu0 0.0
    %4542 = vmatpush1.msra.mxu0 0.0
    %4543 = vmatprep.subr.mxu0 0.0
    %4544 = vmatpush1.msra.mxu0 0.0
    %4545 = vmatprep.subr.mxu0 0.0
    %4546 = vmatpush1.msra.mxu0 0.0
    %4547 = vmatprep.subr.mxu0 0.0
    %4548 = vmatpush1.msra.mxu0 0.0
    %4549 = vmatprep.subr.mxu0 0.0
    %4550 = vmatpush1.msra.mxu0 0.0
    %4551 = vmatprep.subr.mxu0 0.0
    %4552 = vmatpush1.msra.mxu0 0.0
    %4553 = vmatprep.subr.mxu0 0.0
    %4554 = vmatpush1.msra.mxu0 0.0
    %4555 = vmatprep.subr.mxu0 0.0
    %4556 = vmatpush1.msra.mxu0 0.0
    %4557 = vmatprep.subr.mxu0 0.0
    %4558 = vmatpush1.msra.mxu0 0.0
    %4559 = vmatprep.subr.mxu0 0.0
    %4560 = vmatpush1.msra.mxu0 0.0
    %4561 = vmatprep.subr.mxu0 0.0
    %4562 = vmatpush1.msra.mxu0 0.0
    %4563 = vmatprep.subr.mxu0 0.0
    %4564 = vmatpush1.msra.mxu0 0.0
    %4565 = vmatprep.subr.mxu0 0.0
    %4566 = vmatpush1.msra.mxu0 0.0
    %4567 = vmatprep.mubr.f32.mxu0 0.0
    %4568 = vmatmul.mubr.f32.gmra.mrb[0].mxu0 %v4498
    %v4569 = vpop.f32.mrb[0].mxu0
    %v4570 = vadd.f32 0.0, %v4569
    %v4571 = vpop.f32.mrb[0].mxu0
    %v4572 = vadd.f32 0.0, %v4571
    %4573 = vmatprep.mubr.f32.mxu0 0.0
    %4574 = vmatmul.mubr.f32.gmra.mrb[0].mxu0 %v4501
    %v4575 = vpop.f32.mrb[0].mxu0
    %v4576 = vadd.f32 0.0, %v4575
    %v4577 = vpop.f32.mrb[0].mxu0
    %v4578 = vadd.f32 0.0, %v4577
    %4579 = vdwg.mxu0
    %v4580 = vadd.f32 %v4490, %v4570
    %v4581 = vadd.f32 %v4491, %v4572
    %v4582 = vadd.f32 %v4492, %v4576
    %v4583 = vadd.f32 %v4493, %v4578
    %s4584 = scalar_lea.vmem %s6, 96
    %v4585 = vld [vmem:[%s4584] sm:$0xff]
    %v4586 = vld [vmem:[%s4584 + $0x8] sm:$0xff]
    %v4588 = vsel %vm4046, %v4585, 0
    %v4591 = vsel %vm4046, %v4586, 0
    %4593 = vmatprep.subr.mxu0 %v3870
    %4594 = vmatpush1.msra.mxu0 %v3868
    %4595 = vmatprep.subr.mxu0 %v3876
    %4596 = vmatpush1.msra.mxu0 %v3874
    %4597 = vmatprep.subr.mxu0 0.0
    %4598 = vmatpush1.msra.mxu0 0.0
    %4599 = vmatprep.subr.mxu0 0.0
    %4600 = vmatpush1.msra.mxu0 0.0
    %4601 = vmatprep.subr.mxu0 0.0
    %4602 = vmatpush1.msra.mxu0 0.0
    %4603 = vmatprep.subr.mxu0 0.0
    %4604 = vmatpush1.msra.mxu0 0.0
    %4605 = vmatprep.subr.mxu0 0.0
    %4606 = vmatpush1.msra.mxu0 0.0
    %4607 = vmatprep.subr.mxu0 0.0
    %4608 = vmatpush1.msra.mxu0 0.0
    %4609 = vmatprep.subr.mxu0 0.0
    %4610 = vmatpush1.msra.mxu0 0.0
    %4611 = vmatprep.subr.mxu0 0.0
    %4612 = vmatpush1.msra.mxu0 0.0
    %4613 = vmatprep.subr.mxu0 0.0
    %4614 = vmatpush1.msra.mxu0 0.0
    %4615 = vmatprep.subr.mxu0 0.0
    %4616 = vmatpush1.msra.mxu0 0.0
    %4617 = vmatprep.subr.mxu0 0.0
    %4618 = vmatpush1.msra.mxu0 0.0
    %4619 = vmatprep.subr.mxu0 0.0
    %4620 = vmatpush1.msra.mxu0 0.0
    %4621 = vmatprep.subr.mxu0 0.0
    %4622 = vmatpush1.msra.mxu0 0.0
    %4623 = vmatprep.subr.mxu0 0.0
    %4624 = vmatpush1.msra.mxu0 0.0
    %4625 = vmatprep.subr.mxu0 0.0
    %4626 = vmatpush1.msra.mxu0 0.0
    %4627 = vmatprep.subr.mxu0 0.0
    %4628 = vmatpush1.msra.mxu0 0.0
    %4629 = vmatprep.subr.mxu0 0.0
    %4630 = vmatpush1.msra.mxu0 0.0
    %4631 = vmatprep.subr.mxu0 0.0
    %4632 = vmatpush1.msra.mxu0 0.0
    %4633 = vmatprep.subr.mxu0 0.0
    %4634 = vmatpush1.msra.mxu0 0.0
    %4635 = vmatprep.subr.mxu0 0.0
    %4636 = vmatpush1.msra.mxu0 0.0
    %4637 = vmatprep.subr.mxu0 0.0
    %4638 = vmatpush1.msra.mxu0 0.0
    %4639 = vmatprep.subr.mxu0 0.0
    %4640 = vmatpush1.msra.mxu0 0.0
    %4641 = vmatprep.subr.mxu0 0.0
    %4642 = vmatpush1.msra.mxu0 0.0
    %4643 = vmatprep.subr.mxu0 0.0
    %4644 = vmatpush1.msra.mxu0 0.0
    %4645 = vmatprep.subr.mxu0 0.0
    %4646 = vmatpush1.msra.mxu0 0.0
    %4647 = vmatprep.subr.mxu0 0.0
    %4648 = vmatpush1.msra.mxu0 0.0
    %4649 = vmatprep.subr.mxu0 0.0
    %4650 = vmatpush1.msra.mxu0 0.0
    %4651 = vmatprep.subr.mxu0 0.0
    %4652 = vmatpush1.msra.mxu0 0.0
    %4653 = vmatprep.subr.mxu0 0.0
    %4654 = vmatpush1.msra.mxu0 0.0
    %4655 = vmatprep.subr.mxu0 0.0
    %4656 = vmatpush1.msra.mxu0 0.0
    %4657 = vmatprep.mubr.f32.mxu0 0.0
    %4658 = vmatmul.mubr.f32.gmra.mrb[0].mxu0 %v4588
    %v4659 = vpop.f32.mrb[0].mxu0
    %v4660 = vadd.f32 0.0, %v4659
    %v4661 = vpop.f32.mrb[0].mxu0
    %v4662 = vadd.f32 0.0, %v4661
    %4663 = vmatprep.mubr.f32.mxu0 0.0
    %4664 = vmatmul.mubr.f32.gmra.mrb[0].mxu0 %v4591
    %v4665 = vpop.f32.mrb[0].mxu0
    %v4666 = vadd.f32 0.0, %v4665
    %v4667 = vpop.f32.mrb[0].mxu0
    %v4668 = vadd.f32 0.0, %v4667
    %4669 = vdwg.mxu0
    %v4670 = vadd.f32 %v4580, %v4660
    %v4671 = vadd.f32 %v4581, %v4662
    %v4672 = vadd.f32 %v4582, %v4666
    %v4673 = vadd.f32 %v4583, %v4668
    %s4674 = scalar_lea.vmem %s6, 112
    %v4675 = vld [vmem:[%s4674] sm:$0xff]
    %v4676 = vld [vmem:[%s4674 + $0x8] sm:$0xff]
    %v4678 = vsel %vm4046, %v4675, 0
    %v4681 = vsel %vm4046, %v4676, 0
    %4683 = vmatprep.subr.mxu0 %v3947
    %4684 = vmatpush1.msra.mxu0 %v3945
    %4685 = vmatprep.subr.mxu0 %v3953
    %4686 = vmatpush1.msra.mxu0 %v3951
    %4687 = vmatprep.subr.mxu0 0.0
    %4688 = vmatpush1.msra.mxu0 0.0
    %4689 = vmatprep.subr.mxu0 0.0
    %4690 = vmatpush1.msra.mxu0 0.0
    %4691 = vmatprep.subr.mxu0 0.0
    %4692 = vmatpush1.msra.mxu0 0.0
    %4693 = vmatprep.subr.mxu0 0.0
    %4694 = vmatpush1.msra.mxu0 0.0
    %4695 = vmatprep.subr.mxu0 0.0
    %4696 = vmatpush1.msra.mxu0 0.0
    %4697 = vmatprep.subr.mxu0 0.0
    %4698 = vmatpush1.msra.mxu0 0.0
    %4699 = vmatprep.subr.mxu0 0.0
    %4700 = vmatpush1.msra.mxu0 0.0
    %4701 = vmatprep.subr.mxu0 0.0
    %4702 = vmatpush1.msra.mxu0 0.0
    %4703 = vmatprep.subr.mxu0 0.0
    %4704 = vmatpush1.msra.mxu0 0.0
    %4705 = vmatprep.subr.mxu0 0.0
    %4706 = vmatpush1.msra.mxu0 0.0
    %4707 = vmatprep.subr.mxu0 0.0
    %4708 = vmatpush1.msra.mxu0 0.0
    %4709 = vmatprep.subr.mxu0 0.0
    %4710 = vmatpush1.msra.mxu0 0.0
    %4711 = vmatprep.subr.mxu0 0.0
    %4712 = vmatpush1.msra.mxu0 0.0
    %4713 = vmatprep.subr.mxu0 0.0
    %4714 = vmatpush1.msra.mxu0 0.0
    %4715 = vmatprep.subr.mxu0 0.0
    %4716 = vmatpush1.msra.mxu0 0.0
    %4717 = vmatprep.subr.mxu0 0.0
    %4718 = vmatpush1.msra.mxu0 0.0
    %4719 = vmatprep.subr.mxu0 0.0
    %4720 = vmatpush1.msra.mxu0 0.0
    %4721 = vmatprep.subr.mxu0 0.0
    %4722 = vmatpush1.msra.mxu0 0.0
    %4723 = vmatprep.subr.mxu0 0.0
    %4724 = vmatpush1.msra.mxu0 0.0
    %4725 = vmatprep.subr.mxu0 0.0
    %4726 = vmatpush1.msra.mxu0 0.0
    %4727 = vmatprep.subr.mxu0 0.0
    %4728 = vmatpush1.msra.mxu0 0.0
    %4729 = vmatprep.subr.mxu0 0.0
    %4730 = vmatpush1.msra.mxu0 0.0
    %4731 = vmatprep.subr.mxu0 0.0
    %4732 = vmatpush1.msra.mxu0 0.0
    %4733 = vmatprep.subr.mxu0 0.0
    %4734 = vmatpush1.msra.mxu0 0.0
    %4735 = vmatprep.subr.mxu0 0.0
    %4736 = vmatpush1.msra.mxu0 0.0
    %4737 = vmatprep.subr.mxu0 0.0
    %4738 = vmatpush1.msra.mxu0 0.0
    %4739 = vmatprep.subr.mxu0 0.0
    %4740 = vmatpush1.msra.mxu0 0.0
    %4741 = vmatprep.subr.mxu0 0.0
    %4742 = vmatpush1.msra.mxu0 0.0
    %4743 = vmatprep.subr.mxu0 0.0
    %4744 = vmatpush1.msra.mxu0 0.0
    %4745 = vmatprep.subr.mxu0 0.0
    %4746 = vmatpush1.msra.mxu0 0.0
    %4747 = vmatprep.mubr.f32.mxu0 0.0
    %4748 = vmatmul.mubr.f32.gmra.mrb[0].mxu0 %v4678
    %v4749 = vpop.f32.mrb[0].mxu0
    %v4750 = vadd.f32 0.0, %v4749
    %v4751 = vpop.f32.mrb[0].mxu0
    %v4752 = vadd.f32 0.0, %v4751
    %4753 = vmatprep.mubr.f32.mxu0 0.0
    %4754 = vmatmul.mubr.f32.gmra.mrb[0].mxu0 %v4681
    %v4755 = vpop.f32.mrb[0].mxu0
    %v4756 = vadd.f32 0.0, %v4755
    %v4757 = vpop.f32.mrb[0].mxu0
    %v4758 = vadd.f32 0.0, %v4757
    %4759 = vdwg.mxu0
    %v4760 = vadd.f32 %v4670, %v4750
    %v4761 = vadd.f32 %v4671, %v4752
    %v4762 = vadd.f32 %v4672, %v4756
    %v4763 = vadd.f32 %v4673, %v4758
    %s4764 = scalar_lea.vmem %s6, 128
    %v4765 = vld [vmem:[%s4764] sm:$0xff]
    %v4766 = vld [vmem:[%s4764 + $0x8] sm:$0xff]
    %v4768 = vsel %vm4046, %v4765, 0
    %v4771 = vsel %vm4046, %v4766, 0
    %4773 = vmatprep.subr.mxu0 %v4024
    %4774 = vmatpush1.msra.mxu0 %v4022
    %4775 = vmatprep.subr.mxu0 %v4030
    %4776 = vmatpush1.msra.mxu0 %v4028
    %4777 = vmatprep.subr.mxu0 0.0
    %4778 = vmatpush1.msra.mxu0 0.0
    %4779 = vmatprep.subr.mxu0 0.0
    %4780 = vmatpush1.msra.mxu0 0.0
    %4781 = vmatprep.subr.mxu0 0.0
    %4782 = vmatpush1.msra.mxu0 0.0
    %4783 = vmatprep.subr.mxu0 0.0
    %4784 = vmatpush1.msra.mxu0 0.0
    %4785 = vmatprep.subr.mxu0 0.0
    %4786 = vmatpush1.msra.mxu0 0.0
    %4787 = vmatprep.subr.mxu0 0.0
    %4788 = vmatpush1.msra.mxu0 0.0
    %4789 = vmatprep.subr.mxu0 0.0
    %4790 = vmatpush1.msra.mxu0 0.0
    %4791 = vmatprep.subr.mxu0 0.0
    %4792 = vmatpush1.msra.mxu0 0.0
    %4793 = vmatprep.subr.mxu0 0.0
    %4794 = vmatpush1.msra.mxu0 0.0
    %4795 = vmatprep.subr.mxu0 0.0
    %4796 = vmatpush1.msra.mxu0 0.0
    %4797 = vmatprep.subr.mxu0 0.0
    %4798 = vmatpush1.msra.mxu0 0.0
    %4799 = vmatprep.subr.mxu0 0.0
    %4800 = vmatpush1.msra.mxu0 0.0
    %4801 = vmatprep.subr.mxu0 0.0
    %4802 = vmatpush1.msra.mxu0 0.0
    %4803 = vmatprep.subr.mxu0 0.0
    %4804 = vmatpush1.msra.mxu0 0.0
    %4805 = vmatprep.subr.mxu0 0.0
    %4806 = vmatpush1.msra.mxu0 0.0
    %4807 = vmatprep.subr.mxu0 0.0
    %4808 = vmatpush1.msra.mxu0 0.0
    %4809 = vmatprep.subr.mxu0 0.0
    %4810 = vmatpush1.msra.mxu0 0.0
    %4811 = vmatprep.subr.mxu0 0.0
    %4812 = vmatpush1.msra.mxu0 0.0
    %4813 = vmatprep.subr.mxu0 0.0
    %4814 = vmatpush1.msra.mxu0 0.0
    %4815 = vmatprep.subr.mxu0 0.0
    %4816 = vmatpush1.msra.mxu0 0.0
    %4817 = vmatprep.subr.mxu0 0.0
    %4818 = vmatpush1.msra.mxu0 0.0
    %4819 = vmatprep.subr.mxu0 0.0
    %4820 = vmatpush1.msra.mxu0 0.0
    %4821 = vmatprep.subr.mxu0 0.0
    %4822 = vmatpush1.msra.mxu0 0.0
    %4823 = vmatprep.subr.mxu0 0.0
    %4824 = vmatpush1.msra.mxu0 0.0
    %4825 = vmatprep.subr.mxu0 0.0
    %4826 = vmatpush1.msra.mxu0 0.0
    %4827 = vmatprep.subr.mxu0 0.0
    %4828 = vmatpush1.msra.mxu0 0.0
    %4829 = vmatprep.subr.mxu0 0.0
    %4830 = vmatpush1.msra.mxu0 0.0
    %4831 = vmatprep.subr.mxu0 0.0
    %4832 = vmatpush1.msra.mxu0 0.0
    %4833 = vmatprep.subr.mxu0 0.0
    %4834 = vmatpush1.msra.mxu0 0.0
    %4835 = vmatprep.subr.mxu0 0.0
    %4836 = vmatpush1.msra.mxu0 0.0
    %4837 = vmatprep.mubr.f32.mxu0 0.0
    %4838 = vmatmul.mubr.f32.gmra.mrb[0].mxu0 %v4768
    %v4839 = vpop.f32.mrb[0].mxu0
    %v4840 = vadd.f32 0.0, %v4839
    %v4841 = vpop.f32.mrb[0].mxu0
    %v4842 = vadd.f32 0.0, %v4841
    %4843 = vmatprep.mubr.f32.mxu0 0.0
    %4844 = vmatmul.mubr.f32.gmra.mrb[0].mxu0 %v4771
    %v4845 = vpop.f32.mrb[0].mxu0
    %v4846 = vadd.f32 0.0, %v4845
    %v4847 = vpop.f32.mrb[0].mxu0
    %v4848 = vadd.f32 0.0, %v4847
    %4849 = vdwg.mxu0
    %v4850 = vadd.f32 %v4760, %v4840
    %v4851 = vadd.f32 %v4761, %v4842
    %v4852 = vadd.f32 %v4762, %v4846
    %v4853 = vadd.f32 %v4763, %v4848
    %4854 = vmatprep.subr.mxu0 %v2116
    %4855 = vmatpush1.msra.mxu0 %v2115
    %4856 = vmatprep.subr.mxu0 %v2124
    %4857 = vmatpush1.msra.mxu0 %v2123
    %4858 = vmatprep.subr.mxu0 %v2132
    %4859 = vmatpush1.msra.mxu0 %v2131
    %4860 = vmatprep.subr.mxu0 %v2140
    %4861 = vmatpush1.msra.mxu0 %v2139
    %4862 = vmatprep.subr.mxu0 %v2148
    %4863 = vmatpush1.msra.mxu0 %v2147
    %4864 = vmatprep.subr.mxu0 %v2156
    %4865 = vmatpush1.msra.mxu0 %v2155
    %4866 = vmatprep.subr.mxu0 %v2164
    %4867 = vmatpush1.msra.mxu0 %v2163
    %4868 = vmatprep.subr.mxu0 %v2172
    %4869 = vmatpush1.msra.mxu0 %v2171
    %4870 = vmatprep.subr.mxu0 %v2180
    %4871 = vmatpush1.msra.mxu0 %v2179
    %4872 = vmatprep.subr.mxu0 %v2188
    %4873 = vmatpush1.msra.mxu0 %v2187
    %4874 = vmatprep.subr.mxu0 %v2196
    %4875 = vmatpush1.msra.mxu0 %v2195
    %4876 = vmatprep.subr.mxu0 %v2204
    %4877 = vmatpush1.msra.mxu0 %v2203
    %4878 = vmatprep.subr.mxu0 %v2212
    %4879 = vmatpush1.msra.mxu0 %v2211
    %4880 = vmatprep.subr.mxu0 %v2220
    %4881 = vmatpush1.msra.mxu0 %v2219
    %4882 = vmatprep.subr.mxu0 %v2228
    %4883 = vmatpush1.msra.mxu0 %v2227
    %4884 = vmatprep.subr.mxu0 %v2236
    %4885 = vmatpush1.msra.mxu0 %v2235
    %4886 = vmatprep.subr.mxu0 %v2244
    %4887 = vmatpush1.msra.mxu0 %v2243
    %4888 = vmatprep.subr.mxu0 %v2252
    %4889 = vmatpush1.msra.mxu0 %v2251
    %4890 = vmatprep.subr.mxu0 %v2260
    %4891 = vmatpush1.msra.mxu0 %v2259
    %4892 = vmatprep.subr.mxu0 %v2268
    %4893 = vmatpush1.msra.mxu0 %v2267
    %4894 = vmatprep.subr.mxu0 %v2276
    %4895 = vmatpush1.msra.mxu0 %v2275
    %4896 = vmatprep.subr.mxu0 %v2284
    %4897 = vmatpush1.msra.mxu0 %v2283
    %4898 = vmatprep.subr.mxu0 %v2292
    %4899 = vmatpush1.msra.mxu0 %v2291
    %4900 = vmatprep.subr.mxu0 %v2300
    %4901 = vmatpush1.msra.mxu0 %v2299
    %4902 = vmatprep.subr.mxu0 %v2308
    %4903 = vmatpush1.msra.mxu0 %v2307
    %4904 = vmatprep.subr.mxu0 %v2316
    %4905 = vmatpush1.msra.mxu0 %v2315
    %4906 = vmatprep.subr.mxu0 %v2324
    %4907 = vmatpush1.msra.mxu0 %v2323
    %4908 = vmatprep.subr.mxu0 %v2332
    %4909 = vmatpush1.msra.mxu0 %v2331
    %4910 = vmatprep.subr.mxu0 %v2340
    %4911 = vmatpush1.msra.mxu0 %v2339
    %4912 = vmatprep.subr.mxu0 %v2348
    %4913 = vmatpush1.msra.mxu0 %v2347
    %4914 = vmatprep.subr.mxu0 %v2356
    %4915 = vmatpush1.msra.mxu0 %v2355
    %4916 = vmatprep.subr.mxu0 %v2364
    %4917 = vmatpush1.msra.mxu0 %v2363
    %4918 = vmatprep.mubr.f32.mxu0 %v4851
    %4919 = vmatmul.mubr.f32.gmra.mrb[0].mxu0 %v4850
    %v4920 = vpop.f32.mrb[0].mxu0
    %v4921 = vadd.f32 0.0, %v4920
    %v4922 = vpop.f32.mrb[0].mxu0
    %v4923 = vadd.f32 0.0, %v4922
    %4924 = vmatprep.mubr.f32.mxu0 %v4853
    %4925 = vmatmul.mubr.f32.gmra.mrb[0].mxu0 %v4852
    %v4926 = vpop.f32.mrb[0].mxu0
    %v4927 = vadd.f32 0.0, %v4926
    %v4928 = vpop.f32.mrb[0].mxu0
    %v4929 = vadd.f32 0.0, %v4928
    %4930 = vdwg.mxu0
    %4931 = vmatprep.subr.mxu0 %v2118
    %4932 = vmatpush1.msra.mxu0 %v2117
    %4933 = vmatprep.subr.mxu0 %v2126
    %4934 = vmatpush1.msra.mxu0 %v2125
    %4935 = vmatprep.subr.mxu0 %v2134
    %4936 = vmatpush1.msra.mxu0 %v2133
    %4937 = vmatprep.subr.mxu0 %v2142
    %4938 = vmatpush1.msra.mxu0 %v2141
    %4939 = vmatprep.subr.mxu0 %v2150
    %4940 = vmatpush1.msra.mxu0 %v2149
    %4941 = vmatprep.subr.mxu0 %v2158
    %4942 = vmatpush1.msra.mxu0 %v2157
    %4943 = vmatprep.subr.mxu0 %v2166
    %4944 = vmatpush1.msra.mxu0 %v2165
    %4945 = vmatprep.subr.mxu0 %v2174
    %4946 = vmatpush1.msra.mxu0 %v2173
    %4947 = vmatprep.subr.mxu0 %v2182
    %4948 = vmatpush1.msra.mxu0 %v2181
    %4949 = vmatprep.subr.mxu0 %v2190
    %4950 = vmatpush1.msra.mxu0 %v2189
    %4951 = vmatprep.subr.mxu0 %v2198
    %4952 = vmatpush1.msra.mxu0 %v2197
    %4953 = vmatprep.subr.mxu0 %v2206
    %4954 = vmatpush1.msra.mxu0 %v2205
    %4955 = vmatprep.subr.mxu0 %v2214
    %4956 = vmatpush1.msra.mxu0 %v2213
    %4957 = vmatprep.subr.mxu0 %v2222
    %4958 = vmatpush1.msra.mxu0 %v2221
    %4959 = vmatprep.subr.mxu0 %v2230
    %4960 = vmatpush1.msra.mxu0 %v2229
    %4961 = vmatprep.subr.mxu0 %v2238
    %4962 = vmatpush1.msra.mxu0 %v2237
    %4963 = vmatprep.subr.mxu0 %v2246
    %4964 = vmatpush1.msra.mxu0 %v2245
    %4965 = vmatprep.subr.mxu0 %v2254
    %4966 = vmatpush1.msra.mxu0 %v2253
    %4967 = vmatprep.subr.mxu0 %v2262
    %4968 = vmatpush1.msra.mxu0 %v2261
    %4969 = vmatprep.subr.mxu0 %v2270
    %4970 = vmatpush1.msra.mxu0 %v2269
    %4971 = vmatprep.subr.mxu0 %v2278
    %4972 = vmatpush1.msra.mxu0 %v2277
    %4973 = vmatprep.subr.mxu0 %v2286
    %4974 = vmatpush1.msra.mxu0 %v2285
    %4975 = vmatprep.subr.mxu0 %v2294
    %4976 = vmatpush1.msra.mxu0 %v2293
    %4977 = vmatprep.subr.mxu0 %v2302
    %4978 = vmatpush1.msra.mxu0 %v2301
    %4979 = vmatprep.subr.mxu0 %v2310
    %4980 = vmatpush1.msra.mxu0 %v2309
    %4981 = vmatprep.subr.mxu0 %v2318
    %4982 = vmatpush1.msra.mxu0 %v2317
    %4983 = vmatprep.subr.mxu0 %v2326
    %4984 = vmatpush1.msra.mxu0 %v2325
    %4985 = vmatprep.subr.mxu0 %v2334
    %4986 = vmatpush1.msra.mxu0 %v2333
    %4987 = vmatprep.subr.mxu0 %v2342
    %4988 = vmatpush1.msra.mxu0 %v2341
    %4989 = vmatprep.subr.mxu0 %v2350
    %4990 = vmatpush1.msra.mxu0 %v2349
    %4991 = vmatprep.subr.mxu0 %v2358
    %4992 = vmatpush1.msra.mxu0 %v2357
    %4993 = vmatprep.subr.mxu0 %v2366
    %4994 = vmatpush1.msra.mxu0 %v2365
    %4995 = vmatprep.mubr.f32.mxu0 %v4851
    %4996 = vmatmul.mubr.f32.gmra.mrb[0].mxu0 %v4850
    %v4997 = vpop.f32.mrb[0].mxu0
    %v4998 = vadd.f32 0.0, %v4997
    %v4999 = vpop.f32.mrb[0].mxu0
    %v5000 = vadd.f32 0.0, %v4999
    %5001 = vmatprep.mubr.f32.mxu0 %v4853
    %5002 = vmatmul.mubr.f32.gmra.mrb[0].mxu0 %v4852
    %v5003 = vpop.f32.mrb[0].mxu0
    %v5004 = vadd.f32 0.0, %v5003
    %v5005 = vpop.f32.mrb[0].mxu0
    %v5006 = vadd.f32 0.0, %v5005
    %5007 = vdwg.mxu0
    %5008 = vmatprep.subr.mxu0 %v2120
    %5009 = vmatpush1.msra.mxu0 %v2119
    %5010 = vmatprep.subr.mxu0 %v2128
    %5011 = vmatpush1.msra.mxu0 %v2127
    %5012 = vmatprep.subr.mxu0 %v2136
    %5013 = vmatpush1.msra.mxu0 %v2135
    %5014 = vmatprep.subr.mxu0 %v2144
    %5015 = vmatpush1.msra.mxu0 %v2143
    %5016 = vmatprep.subr.mxu0 %v2152
    %5017 = vmatpush1.msra.mxu0 %v2151
    %5018 = vmatprep.subr.mxu0 %v2160
    %5019 = vmatpush1.msra.mxu0 %v2159
    %5020 = vmatprep.subr.mxu0 %v2168
    %5021 = vmatpush1.msra.mxu0 %v2167
    %5022 = vmatprep.subr.mxu0 %v2176
    %5023 = vmatpush1.msra.mxu0 %v2175
    %5024 = vmatprep.subr.mxu0 %v2184
    %5025 = vmatpush1.msra.mxu0 %v2183
    %5026 = vmatprep.subr.mxu0 %v2192
    %5027 = vmatpush1.msra.mxu0 %v2191
    %5028 = vmatprep.subr.mxu0 %v2200
    %5029 = vmatpush1.msra.mxu0 %v2199
    %5030 = vmatprep.subr.mxu0 %v2208
    %5031 = vmatpush1.msra.mxu0 %v2207
    %5032 = vmatprep.subr.mxu0 %v2216
    %5033 = vmatpush1.msra.mxu0 %v2215
    %5034 = vmatprep.subr.mxu0 %v2224
    %5035 = vmatpush1.msra.mxu0 %v2223
    %5036 = vmatprep.subr.mxu0 %v2232
    %5037 = vmatpush1.msra.mxu0 %v2231
    %5038 = vmatprep.subr.mxu0 %v2240
    %5039 = vmatpush1.msra.mxu0 %v2239
    %5040 = vmatprep.subr.mxu0 %v2248
    %5041 = vmatpush1.msra.mxu0 %v2247
    %5042 = vmatprep.subr.mxu0 %v2256
    %5043 = vmatpush1.msra.mxu0 %v2255
    %5044 = vmatprep.subr.mxu0 %v2264
    %5045 = vmatpush1.msra.mxu0 %v2263
    %5046 = vmatprep.subr.mxu0 %v2272
    %5047 = vmatpush1.msra.mxu0 %v2271
    %5048 = vmatprep.subr.mxu0 %v2280
    %5049 = vmatpush1.msra.mxu0 %v2279
    %5050 = vmatprep.subr.mxu0 %v2288
    %5051 = vmatpush1.msra.mxu0 %v2287
    %5052 = vmatprep.subr.mxu0 %v2296
    %5053 = vmatpush1.msra.mxu0 %v2295
    %5054 = vmatprep.subr.mxu0 %v2304
    %5055 = vmatpush1.msra.mxu0 %v2303
    %5056 = vmatprep.subr.mxu0 %v2312
    %5057 = vmatpush1.msra.mxu0 %v2311
    %5058 = vmatprep.subr.mxu0 %v2320
    %5059 = vmatpush1.msra.mxu0 %v2319
    %5060 = vmatprep.subr.mxu0 %v2328
    %5061 = vmatpush1.msra.mxu0 %v2327
    %5062 = vmatprep.subr.mxu0 %v2336
    %5063 = vmatpush1.msra.mxu0 %v2335
    %5064 = vmatprep.subr.mxu0 %v2344
    %5065 = vmatpush1.msra.mxu0 %v2343
    %5066 = vmatprep.subr.mxu0 %v2352
    %5067 = vmatpush1.msra.mxu0 %v2351
    %5068 = vmatprep.subr.mxu0 %v2360
    %5069 = vmatpush1.msra.mxu0 %v2359
    %5070 = vmatprep.subr.mxu0 %v2368
    %5071 = vmatpush1.msra.mxu0 %v2367
    %5072 = vmatprep.mubr.f32.mxu0 %v4851
    %5073 = vmatmul.mubr.f32.gmra.mrb[0].mxu0 %v4850
    %v5074 = vpop.f32.mrb[0].mxu0
    %v5075 = vadd.f32 0.0, %v5074
    %v5076 = vpop.f32.mrb[0].mxu0
    %v5077 = vadd.f32 0.0, %v5076
    %5078 = vmatprep.mubr.f32.mxu0 %v4853
    %5079 = vmatmul.mubr.f32.gmra.mrb[0].mxu0 %v4852
    %v5080 = vpop.f32.mrb[0].mxu0
    %v5081 = vadd.f32 0.0, %v5080
    %v5082 = vpop.f32.mrb[0].mxu0
    %v5083 = vadd.f32 0.0, %v5082
    %5084 = vdwg.mxu0
    %5085 = vmatprep.subr.mxu0 %v2122
    %5086 = vmatpush1.msra.mxu0 %v2121
    %5087 = vmatprep.subr.mxu0 %v2130
    %5088 = vmatpush1.msra.mxu0 %v2129
    %5089 = vmatprep.subr.mxu0 %v2138
    %5090 = vmatpush1.msra.mxu0 %v2137
    %5091 = vmatprep.subr.mxu0 %v2146
    %5092 = vmatpush1.msra.mxu0 %v2145
    %5093 = vmatprep.subr.mxu0 %v2154
    %5094 = vmatpush1.msra.mxu0 %v2153
    %5095 = vmatprep.subr.mxu0 %v2162
    %5096 = vmatpush1.msra.mxu0 %v2161
    %5097 = vmatprep.subr.mxu0 %v2170
    %5098 = vmatpush1.msra.mxu0 %v2169
    %5099 = vmatprep.subr.mxu0 %v2178
    %5100 = vmatpush1.msra.mxu0 %v2177
    %5101 = vmatprep.subr.mxu0 %v2186
    %5102 = vmatpush1.msra.mxu0 %v2185
    %5103 = vmatprep.subr.mxu0 %v2194
    %5104 = vmatpush1.msra.mxu0 %v2193
    %5105 = vmatprep.subr.mxu0 %v2202
    %5106 = vmatpush1.msra.mxu0 %v2201
    %5107 = vmatprep.subr.mxu0 %v2210
    %5108 = vmatpush1.msra.mxu0 %v2209
    %5109 = vmatprep.subr.mxu0 %v2218
    %5110 = vmatpush1.msra.mxu0 %v2217
    %5111 = vmatprep.subr.mxu0 %v2226
    %5112 = vmatpush1.msra.mxu0 %v2225
    %5113 = vmatprep.subr.mxu0 %v2234
    %5114 = vmatpush1.msra.mxu0 %v2233
    %5115 = vmatprep.subr.mxu0 %v2242
    %5116 = vmatpush1.msra.mxu0 %v2241
    %5117 = vmatprep.subr.mxu0 %v2250
    %5118 = vmatpush1.msra.mxu0 %v2249
    %5119 = vmatprep.subr.mxu0 %v2258
    %5120 = vmatpush1.msra.mxu0 %v2257
    %5121 = vmatprep.subr.mxu0 %v2266
    %5122 = vmatpush1.msra.mxu0 %v2265
    %5123 = vmatprep.subr.mxu0 %v2274
    %5124 = vmatpush1.msra.mxu0 %v2273
    %5125 = vmatprep.subr.mxu0 %v2282
    %5126 = vmatpush1.msra.mxu0 %v2281
    %5127 = vmatprep.subr.mxu0 %v2290
    %5128 = vmatpush1.msra.mxu0 %v2289
    %5129 = vmatprep.subr.mxu0 %v2298
    %5130 = vmatpush1.msra.mxu0 %v2297
    %5131 = vmatprep.subr.mxu0 %v2306
    %5132 = vmatpush1.msra.mxu0 %v2305
    %5133 = vmatprep.subr.mxu0 %v2314
    %5134 = vmatpush1.msra.mxu0 %v2313
    %5135 = vmatprep.subr.mxu0 %v2322
    %5136 = vmatpush1.msra.mxu0 %v2321
    %5137 = vmatprep.subr.mxu0 %v2330
    %5138 = vmatpush1.msra.mxu0 %v2329
    %5139 = vmatprep.subr.mxu0 %v2338
    %5140 = vmatpush1.msra.mxu0 %v2337
    %5141 = vmatprep.subr.mxu0 %v2346
    %5142 = vmatpush1.msra.mxu0 %v2345
    %5143 = vmatprep.subr.mxu0 %v2354
    %5144 = vmatpush1.msra.mxu0 %v2353
    %5145 = vmatprep.subr.mxu0 %v2362
    %5146 = vmatpush1.msra.mxu0 %v2361
    %5147 = vmatprep.subr.mxu0 %v2370
    %5148 = vmatpush1.msra.mxu0 %v2369
    %5149 = vmatprep.mubr.f32.mxu0 %v4851
    %5150 = vmatmul.mubr.f32.gmra.mrb[0].mxu0 %v4850
    %v5151 = vpop.f32.mrb[0].mxu0
    %v5152 = vadd.f32 0.0, %v5151
    %v5153 = vpop.f32.mrb[0].mxu0
    %v5154 = vadd.f32 0.0, %v5153
    %5155 = vmatprep.mubr.f32.mxu0 %v4853
    %5156 = vmatmul.mubr.f32.gmra.mrb[0].mxu0 %v4852
    %v5157 = vpop.f32.mrb[0].mxu0
    %v5158 = vadd.f32 0.0, %v5157
    %v5159 = vpop.f32.mrb[0].mxu0
    %v5160 = vadd.f32 0.0, %v5159
    %5161 = vdwg.mxu0
    %vm5162 = vcmp.gt.f32.partialorder %v4921, 0.0
    %vm5163 = vcmp.gt.f32.partialorder %v4923, 0.0
    %vm5164 = vcmp.gt.f32.partialorder %v4998, 0.0
    %vm5165 = vcmp.gt.f32.partialorder %v5000, 0.0
    %vm5166 = vcmp.gt.f32.partialorder %v5075, 0.0
    %vm5167 = vcmp.gt.f32.partialorder %v5077, 0.0
    %vm5168 = vcmp.gt.f32.partialorder %v5152, 0.0
    %vm5169 = vcmp.gt.f32.partialorder %v5154, 0.0
    %vm5170 = vcmp.gt.f32.partialorder %v4927, 0.0
    %vm5171 = vcmp.gt.f32.partialorder %v4929, 0.0
    %vm5172 = vcmp.gt.f32.partialorder %v5004, 0.0
    %vm5173 = vcmp.gt.f32.partialorder %v5006, 0.0
    %vm5174 = vcmp.gt.f32.partialorder %v5081, 0.0
    %vm5175 = vcmp.gt.f32.partialorder %v5083, 0.0
    %vm5176 = vcmp.gt.f32.partialorder %v5158, 0.0
    %vm5177 = vcmp.gt.f32.partialorder %v5160, 0.0
    %v5178 = vmin.f32 %v4921, 0.0
    %v5179 = vmin.f32 %v4923, 0.0
    %v5180 = vmin.f32 %v4998, 0.0
    %v5181 = vmin.f32 %v5000, 0.0
    %v5182 = vmin.f32 %v5075, 0.0
    %v5183 = vmin.f32 %v5077, 0.0
    %v5184 = vmin.f32 %v5152, 0.0
    %v5185 = vmin.f32 %v5154, 0.0
    %v5186 = vmin.f32 %v4927, 0.0
    %v5187 = vmin.f32 %v4929, 0.0
    %v5188 = vmin.f32 %v5004, 0.0
    %v5189 = vmin.f32 %v5006, 0.0
    %v5190 = vmin.f32 %v5081, 0.0
    %v5191 = vmin.f32 %v5083, 0.0
    %v5192 = vmin.f32 %v5158, 0.0
    %v5193 = vmin.f32 %v5160, 0.0
    %v5194 = vmul.f32 %v5178, 1.442695
    %v5195 = vpow.pop %v5194
    %v5196 = vmul.f32 %v5179, 1.442695
    %v5197 = vpow.pop %v5196
    %v5198 = vmul.f32 %v5180, 1.442695
    %v5199 = vpow.pop %v5198
    %v5200 = vmul.f32 %v5181, 1.442695
    %v5201 = vpow.pop %v5200
    %v5202 = vmul.f32 %v5182, 1.442695
    %v5203 = vpow.pop %v5202
    %v5204 = vmul.f32 %v5183, 1.442695
    %v5205 = vpow.pop %v5204
    %v5206 = vmul.f32 %v5184, 1.442695
    %v5207 = vpow.pop %v5206
    %v5208 = vmul.f32 %v5185, 1.442695
    %v5209 = vpow.pop %v5208
    %v5210 = vmul.f32 %v5186, 1.442695
    %v5211 = vpow.pop %v5210
    %v5212 = vmul.f32 %v5187, 1.442695
    %v5213 = vpow.pop %v5212
    %v5214 = vmul.f32 %v5188, 1.442695
    %v5215 = vpow.pop %v5214
    %v5216 = vmul.f32 %v5189, 1.442695
    %v5217 = vpow.pop %v5216
    %v5218 = vmul.f32 %v5190, 1.442695
    %v5219 = vpow.pop %v5218
    %v5220 = vmul.f32 %v5191, 1.442695
    %v5221 = vpow.pop %v5220
    %v5222 = vmul.f32 %v5192, 1.442695
    %v5223 = vpow.pop %v5222
    %v5224 = vmul.f32 %v5193, 1.442695
    %v5225 = vpow.pop %v5224
    %v5226 = vsub.f32 %v5195, 1.0
    %v5227 = vsub.f32 %v5197, 1.0
    %v5228 = vsub.f32 %v5199, 1.0
    %v5229 = vsub.f32 %v5201, 1.0
    %v5230 = vsub.f32 %v5203, 1.0
    %v5231 = vsub.f32 %v5205, 1.0
    %v5232 = vsub.f32 %v5207, 1.0
    %v5233 = vsub.f32 %v5209, 1.0
    %v5234 = vsub.f32 %v5211, 1.0
    %v5235 = vsub.f32 %v5213, 1.0
    %v5236 = vsub.f32 %v5215, 1.0
    %v5237 = vsub.f32 %v5217, 1.0
    %v5238 = vsub.f32 %v5219, 1.0
    %v5239 = vsub.f32 %v5221, 1.0
    %v5240 = vsub.f32 %v5223, 1.0
    %v5241 = vsub.f32 %v5225, 1.0
    %v5242 = vsel %vm5162, %v4921, %v5226
    %v5243 = vsel %vm5163, %v4923, %v5227
    %v5244 = vsel %vm5164, %v4998, %v5228
    %v5245 = vsel %vm5165, %v5000, %v5229
    %v5246 = vsel %vm5166, %v5075, %v5230
    %v5247 = vsel %vm5167, %v5077, %v5231
    %v5248 = vsel %vm5168, %v5152, %v5232
    %v5249 = vsel %vm5169, %v5154, %v5233
    %v5250 = vsel %vm5170, %v4927, %v5234
    %v5251 = vsel %vm5171, %v4929, %v5235
    %v5252 = vsel %vm5172, %v5004, %v5236
    %v5253 = vsel %vm5173, %v5006, %v5237
    %v5254 = vsel %vm5174, %v5081, %v5238
    %v5255 = vsel %vm5175, %v5083, %v5239
    %v5256 = vsel %vm5176, %v5158, %v5240
    %v5257 = vsel %vm5177, %v5160, %v5241
    %5258 = vmatprep.subr.mxu0 %v2776
    %5259 = vmatpush1.msra.mxu0 %v2775
    %5260 = vmatprep.subr.mxu0 %v2778
    %5261 = vmatpush1.msra.mxu0 %v2777
    %5262 = vmatprep.subr.mxu0 %v2780
    %5263 = vmatpush1.msra.mxu0 %v2779
    %5264 = vmatprep.subr.mxu0 %v2782
    %5265 = vmatpush1.msra.mxu0 %v2781
    %5266 = vmatprep.subr.mxu0 %v2784
    %5267 = vmatpush1.msra.mxu0 %v2783
    %5268 = vmatprep.subr.mxu0 %v2786
    %5269 = vmatpush1.msra.mxu0 %v2785
    %5270 = vmatprep.subr.mxu0 %v2788
    %5271 = vmatpush1.msra.mxu0 %v2787
    %5272 = vmatprep.subr.mxu0 %v2790
    %5273 = vmatpush1.msra.mxu0 %v2789
    %5274 = vmatprep.subr.mxu0 %v2792
    %5275 = vmatpush1.msra.mxu0 %v2791
    %5276 = vmatprep.subr.mxu0 %v2794
    %5277 = vmatpush1.msra.mxu0 %v2793
    %5278 = vmatprep.subr.mxu0 %v2796
    %5279 = vmatpush1.msra.mxu0 %v2795
    %5280 = vmatprep.subr.mxu0 %v2798
    %5281 = vmatpush1.msra.mxu0 %v2797
    %5282 = vmatprep.subr.mxu0 %v2800
    %5283 = vmatpush1.msra.mxu0 %v2799
    %5284 = vmatprep.subr.mxu0 %v2802
    %5285 = vmatpush1.msra.mxu0 %v2801
    %5286 = vmatprep.subr.mxu0 %v2804
    %5287 = vmatpush1.msra.mxu0 %v2803
    %5288 = vmatprep.subr.mxu0 %v2806
    %5289 = vmatpush1.msra.mxu0 %v2805
    %5290 = vmatprep.subr.mxu0 %v2808
    %5291 = vmatpush1.msra.mxu0 %v2807
    %5292 = vmatprep.subr.mxu0 %v2810
    %5293 = vmatpush1.msra.mxu0 %v2809
    %5294 = vmatprep.subr.mxu0 %v2812
    %5295 = vmatpush1.msra.mxu0 %v2811
    %5296 = vmatprep.subr.mxu0 %v2814
    %5297 = vmatpush1.msra.mxu0 %v2813
    %5298 = vmatprep.subr.mxu0 %v2816
    %5299 = vmatpush1.msra.mxu0 %v2815
    %5300 = vmatprep.subr.mxu0 %v2818
    %5301 = vmatpush1.msra.mxu0 %v2817
    %5302 = vmatprep.subr.mxu0 %v2820
    %5303 = vmatpush1.msra.mxu0 %v2819
    %5304 = vmatprep.subr.mxu0 %v2822
    %5305 = vmatpush1.msra.mxu0 %v2821
    %5306 = vmatprep.subr.mxu0 %v2824
    %5307 = vmatpush1.msra.mxu0 %v2823
    %5308 = vmatprep.subr.mxu0 %v2826
    %5309 = vmatpush1.msra.mxu0 %v2825
    %5310 = vmatprep.subr.mxu0 %v2828
    %5311 = vmatpush1.msra.mxu0 %v2827
    %5312 = vmatprep.subr.mxu0 %v2830
    %5313 = vmatpush1.msra.mxu0 %v2829
    %5314 = vmatprep.subr.mxu0 %v2832
    %5315 = vmatpush1.msra.mxu0 %v2831
    %5316 = vmatprep.subr.mxu0 %v2834
    %5317 = vmatpush1.msra.mxu0 %v2833
    %5318 = vmatprep.subr.mxu0 %v2836
    %5319 = vmatpush1.msra.mxu0 %v2835
    %5320 = vmatprep.subr.mxu0 %v2838
    %5321 = vmatpush1.msra.mxu0 %v2837
    %5322 = vmatprep.mubr.f32.mxu0 %v5243
    %5323 = vmatmul.mubr.f32.gmra.mrb[0].mxu0 %v5242
    %v5324 = vpop.f32.mrb[0].mxu0
    %v5325 = vadd.f32 0.0, %v5324
    %v5326 = vpop.f32.mrb[0].mxu0
    %v5327 = vadd.f32 0.0, %v5326
    %5328 = vmatprep.mubr.f32.mxu0 %v5251
    %5329 = vmatmul.mubr.f32.gmra.mrb[0].mxu0 %v5250
    %v5330 = vpop.f32.mrb[0].mxu0
    %v5331 = vadd.f32 0.0, %v5330
    %v5332 = vpop.f32.mrb[0].mxu0
    %v5333 = vadd.f32 0.0, %v5332
    %5334 = vdwg.mxu0
    %5335 = vmatprep.subr.mxu0 %v2840
    %5336 = vmatpush1.msra.mxu0 %v2839
    %5337 = vmatprep.subr.mxu0 %v2842
    %5338 = vmatpush1.msra.mxu0 %v2841
    %5339 = vmatprep.subr.mxu0 %v2844
    %5340 = vmatpush1.msra.mxu0 %v2843
    %5341 = vmatprep.subr.mxu0 %v2846
    %5342 = vmatpush1.msra.mxu0 %v2845
    %5343 = vmatprep.subr.mxu0 %v2848
    %5344 = vmatpush1.msra.mxu0 %v2847
    %5345 = vmatprep.subr.mxu0 %v2850
    %5346 = vmatpush1.msra.mxu0 %v2849
    %5347 = vmatprep.subr.mxu0 %v2852
    %5348 = vmatpush1.msra.mxu0 %v2851
    %5349 = vmatprep.subr.mxu0 %v2854
    %5350 = vmatpush1.msra.mxu0 %v2853
    %5351 = vmatprep.subr.mxu0 %v2856
    %5352 = vmatpush1.msra.mxu0 %v2855
    %5353 = vmatprep.subr.mxu0 %v2858
    %5354 = vmatpush1.msra.mxu0 %v2857
    %5355 = vmatprep.subr.mxu0 %v2860
    %5356 = vmatpush1.msra.mxu0 %v2859
    %5357 = vmatprep.subr.mxu0 %v2862
    %5358 = vmatpush1.msra.mxu0 %v2861
    %5359 = vmatprep.subr.mxu0 %v2864
    %5360 = vmatpush1.msra.mxu0 %v2863
    %5361 = vmatprep.subr.mxu0 %v2866
    %5362 = vmatpush1.msra.mxu0 %v2865
    %5363 = vmatprep.subr.mxu0 %v2868
    %5364 = vmatpush1.msra.mxu0 %v2867
    %5365 = vmatprep.subr.mxu0 %v2870
    %5366 = vmatpush1.msra.mxu0 %v2869
    %5367 = vmatprep.subr.mxu0 %v2872
    %5368 = vmatpush1.msra.mxu0 %v2871
    %5369 = vmatprep.subr.mxu0 %v2874
    %5370 = vmatpush1.msra.mxu0 %v2873
    %5371 = vmatprep.subr.mxu0 %v2876
    %5372 = vmatpush1.msra.mxu0 %v2875
    %5373 = vmatprep.subr.mxu0 %v2878
    %5374 = vmatpush1.msra.mxu0 %v2877
    %5375 = vmatprep.subr.mxu0 %v2880
    %5376 = vmatpush1.msra.mxu0 %v2879
    %5377 = vmatprep.subr.mxu0 %v2882
    %5378 = vmatpush1.msra.mxu0 %v2881
    %5379 = vmatprep.subr.mxu0 %v2884
    %5380 = vmatpush1.msra.mxu0 %v2883
    %5381 = vmatprep.subr.mxu0 %v2886
    %5382 = vmatpush1.msra.mxu0 %v2885
    %5383 = vmatprep.subr.mxu0 %v2888
    %5384 = vmatpush1.msra.mxu0 %v2887
    %5385 = vmatprep.subr.mxu0 %v2890
    %5386 = vmatpush1.msra.mxu0 %v2889
    %5387 = vmatprep.subr.mxu0 %v2892
    %5388 = vmatpush1.msra.mxu0 %v2891
    %5389 = vmatprep.subr.mxu0 %v2894
    %5390 = vmatpush1.msra.mxu0 %v2893
    %5391 = vmatprep.subr.mxu0 %v2896
    %5392 = vmatpush1.msra.mxu0 %v2895
    %5393 = vmatprep.subr.mxu0 %v2898
    %5394 = vmatpush1.msra.mxu0 %v2897
    %5395 = vmatprep.subr.mxu0 %v2900
    %5396 = vmatpush1.msra.mxu0 %v2899
    %5397 = vmatprep.subr.mxu0 %v2902
    %5398 = vmatpush1.msra.mxu0 %v2901
    %5399 = vmatprep.mubr.f32.mxu0 %v5245
    %5400 = vmatmul.mubr.f32.gmra.mrb[0].mxu0 %v5244
    %v5401 = vpop.f32.mrb[0].mxu0
    %v5402 = vadd.f32 %v5325, %v5401
    %v5403 = vpop.f32.mrb[0].mxu0
    %v5404 = vadd.f32 %v5327, %v5403
    %5405 = vmatprep.mubr.f32.mxu0 %v5253
    %5406 = vmatmul.mubr.f32.gmra.mrb[0].mxu0 %v5252
    %v5407 = vpop.f32.mrb[0].mxu0
    %v5408 = vadd.f32 %v5331, %v5407
    %v5409 = vpop.f32.mrb[0].mxu0
    %v5410 = vadd.f32 %v5333, %v5409
    %5411 = vdwg.mxu0
    %5412 = vmatprep.subr.mxu0 %v2904
    %5413 = vmatpush1.msra.mxu0 %v2903
    %5414 = vmatprep.subr.mxu0 %v2906
    %5415 = vmatpush1.msra.mxu0 %v2905
    %5416 = vmatprep.subr.mxu0 %v2908
    %5417 = vmatpush1.msra.mxu0 %v2907
    %5418 = vmatprep.subr.mxu0 %v2910
    %5419 = vmatpush1.msra.mxu0 %v2909
    %5420 = vmatprep.subr.mxu0 %v2912
    %5421 = vmatpush1.msra.mxu0 %v2911
    %5422 = vmatprep.subr.mxu0 %v2914
    %5423 = vmatpush1.msra.mxu0 %v2913
    %5424 = vmatprep.subr.mxu0 %v2916
    %5425 = vmatpush1.msra.mxu0 %v2915
    %5426 = vmatprep.subr.mxu0 %v2918
    %5427 = vmatpush1.msra.mxu0 %v2917
    %5428 = vmatprep.subr.mxu0 %v2920
    %5429 = vmatpush1.msra.mxu0 %v2919
    %5430 = vmatprep.subr.mxu0 %v2922
    %5431 = vmatpush1.msra.mxu0 %v2921
    %5432 = vmatprep.subr.mxu0 %v2924
    %5433 = vmatpush1.msra.mxu0 %v2923
    %5434 = vmatprep.subr.mxu0 %v2926
    %5435 = vmatpush1.msra.mxu0 %v2925
    %5436 = vmatprep.subr.mxu0 %v2928
    %5437 = vmatpush1.msra.mxu0 %v2927
    %5438 = vmatprep.subr.mxu0 %v2930
    %5439 = vmatpush1.msra.mxu0 %v2929
    %5440 = vmatprep.subr.mxu0 %v2932
    %5441 = vmatpush1.msra.mxu0 %v2931
    %5442 = vmatprep.subr.mxu0 %v2934
    %5443 = vmatpush1.msra.mxu0 %v2933
    %5444 = vmatprep.subr.mxu0 %v2936
    %5445 = vmatpush1.msra.mxu0 %v2935
    %5446 = vmatprep.subr.mxu0 %v2938
    %5447 = vmatpush1.msra.mxu0 %v2937
    %5448 = vmatprep.subr.mxu0 %v2940
    %5449 = vmatpush1.msra.mxu0 %v2939
    %5450 = vmatprep.subr.mxu0 %v2942
    %5451 = vmatpush1.msra.mxu0 %v2941
    %5452 = vmatprep.subr.mxu0 %v2944
    %5453 = vmatpush1.msra.mxu0 %v2943
    %5454 = vmatprep.subr.mxu0 %v2946
    %5455 = vmatpush1.msra.mxu0 %v2945
    %5456 = vmatprep.subr.mxu0 %v2948
    %5457 = vmatpush1.msra.mxu0 %v2947
    %5458 = vmatprep.subr.mxu0 %v2950
    %5459 = vmatpush1.msra.mxu0 %v2949
    %5460 = vmatprep.subr.mxu0 %v2952
    %5461 = vmatpush1.msra.mxu0 %v2951
    %5462 = vmatprep.subr.mxu0 %v2954
    %5463 = vmatpush1.msra.mxu0 %v2953
    %5464 = vmatprep.subr.mxu0 %v2956
    %5465 = vmatpush1.msra.mxu0 %v2955
    %5466 = vmatprep.subr.mxu0 %v2958
    %5467 = vmatpush1.msra.mxu0 %v2957
    %5468 = vmatprep.subr.mxu0 %v2960
    %5469 = vmatpush1.msra.mxu0 %v2959
    %5470 = vmatprep.subr.mxu0 %v2962
    %5471 = vmatpush1.msra.mxu0 %v2961
    %5472 = vmatprep.subr.mxu0 %v2964
    %5473 = vmatpush1.msra.mxu0 %v2963
    %5474 = vmatprep.subr.mxu0 %v2966
    %5475 = vmatpush1.msra.mxu0 %v2965
    %5476 = vmatprep.mubr.f32.mxu0 %v5247
    %5477 = vmatmul.mubr.f32.gmra.mrb[0].mxu0 %v5246
    %v5478 = vpop.f32.mrb[0].mxu0
    %v5479 = vadd.f32 %v5402, %v5478
    %v5480 = vpop.f32.mrb[0].mxu0
    %v5481 = vadd.f32 %v5404, %v5480
    %5482 = vmatprep.mubr.f32.mxu0 %v5255
    %5483 = vmatmul.mubr.f32.gmra.mrb[0].mxu0 %v5254
    %v5484 = vpop.f32.mrb[0].mxu0
    %v5485 = vadd.f32 %v5408, %v5484
    %v5486 = vpop.f32.mrb[0].mxu0
    %v5487 = vadd.f32 %v5410, %v5486
    %5488 = vdwg.mxu0
    %5489 = vmatprep.subr.mxu0 %v2968
    %5490 = vmatpush1.msra.mxu0 %v2967
    %5491 = vmatprep.subr.mxu0 %v2970
    %5492 = vmatpush1.msra.mxu0 %v2969
    %5493 = vmatprep.subr.mxu0 %v2972
    %5494 = vmatpush1.msra.mxu0 %v2971
    %5495 = vmatprep.subr.mxu0 %v2974
    %5496 = vmatpush1.msra.mxu0 %v2973
    %5497 = vmatprep.subr.mxu0 %v2976
    %5498 = vmatpush1.msra.mxu0 %v2975
    %5499 = vmatprep.subr.mxu0 %v2978
    %5500 = vmatpush1.msra.mxu0 %v2977
    %5501 = vmatprep.subr.mxu0 %v2980
    %5502 = vmatpush1.msra.mxu0 %v2979
    %5503 = vmatprep.subr.mxu0 %v2982
    %5504 = vmatpush1.msra.mxu0 %v2981
    %5505 = vmatprep.subr.mxu0 %v2984
    %5506 = vmatpush1.msra.mxu0 %v2983
    %5507 = vmatprep.subr.mxu0 %v2986
    %5508 = vmatpush1.msra.mxu0 %v2985
    %5509 = vmatprep.subr.mxu0 %v2988
    %5510 = vmatpush1.msra.mxu0 %v2987
    %5511 = vmatprep.subr.mxu0 %v2990
    %5512 = vmatpush1.msra.mxu0 %v2989
    %5513 = vmatprep.subr.mxu0 %v2992
    %5514 = vmatpush1.msra.mxu0 %v2991
    %5515 = vmatprep.subr.mxu0 %v2994
    %5516 = vmatpush1.msra.mxu0 %v2993
    %5517 = vmatprep.subr.mxu0 %v2996
    %5518 = vmatpush1.msra.mxu0 %v2995
    %5519 = vmatprep.subr.mxu0 %v2998
    %5520 = vmatpush1.msra.mxu0 %v2997
    %5521 = vmatprep.subr.mxu0 %v3000
    %5522 = vmatpush1.msra.mxu0 %v2999
    %5523 = vmatprep.subr.mxu0 %v3002
    %5524 = vmatpush1.msra.mxu0 %v3001
    %5525 = vmatprep.subr.mxu0 %v3004
    %5526 = vmatpush1.msra.mxu0 %v3003
    %5527 = vmatprep.subr.mxu0 %v3006
    %5528 = vmatpush1.msra.mxu0 %v3005
    %5529 = vmatprep.subr.mxu0 %v3008
    %5530 = vmatpush1.msra.mxu0 %v3007
    %5531 = vmatprep.subr.mxu0 %v3010
    %5532 = vmatpush1.msra.mxu0 %v3009
    %5533 = vmatprep.subr.mxu0 %v3012
    %5534 = vmatpush1.msra.mxu0 %v3011
    %5535 = vmatprep.subr.mxu0 %v3014
    %5536 = vmatpush1.msra.mxu0 %v3013
    %5537 = vmatprep.subr.mxu0 %v3016
    %5538 = vmatpush1.msra.mxu0 %v3015
    %5539 = vmatprep.subr.mxu0 %v3018
    %5540 = vmatpush1.msra.mxu0 %v3017
    %5541 = vmatprep.subr.mxu0 %v3020
    %5542 = vmatpush1.msra.mxu0 %v3019
    %5543 = vmatprep.subr.mxu0 %v3022
    %5544 = vmatpush1.msra.mxu0 %v3021
    %5545 = vmatprep.subr.mxu0 %v3024
    %5546 = vmatpush1.msra.mxu0 %v3023
    %5547 = vmatprep.subr.mxu0 %v3026
    %5548 = vmatpush1.msra.mxu0 %v3025
    %5549 = vmatprep.subr.mxu0 %v3028
    %5550 = vmatpush1.msra.mxu0 %v3027
    %5551 = vmatprep.subr.mxu0 %v3030
    %5552 = vmatpush1.msra.mxu0 %v3029
    %5553 = vmatprep.mubr.f32.mxu0 %v5249
    %5554 = vmatmul.mubr.f32.gmra.mrb[0].mxu0 %v5248
    %v5555 = vpop.f32.mrb[0].mxu0
    %v5556 = vadd.f32 %v5479, %v5555
    %v5557 = vpop.f32.mrb[0].mxu0
    %v5558 = vadd.f32 %v5481, %v5557
    %5559 = vmatprep.mubr.f32.mxu0 %v5257
    %5560 = vmatmul.mubr.f32.gmra.mrb[0].mxu0 %v5256
    %v5561 = vpop.f32.mrb[0].mxu0
    %v5562 = vadd.f32 %v5485, %v5561
    %v5563 = vpop.f32.mrb[0].mxu0
    %v5564 = vadd.f32 %v5487, %v5563
    %5565 = vdwg.mxu0
    %5566 = vmatprep.subr.mxu0 %v79
    %5567 = vmatpush1.msra.mxu0 %v78
    %5568 = vmatprep.subr.mxu0 %v97
    %5569 = vmatpush1.msra.mxu0 %v96
    %5570 = vmatprep.subr.mxu0 %v115
    %5571 = vmatpush1.msra.mxu0 %v114
    %5572 = vmatprep.subr.mxu0 %v133
    %5573 = vmatpush1.msra.mxu0 %v132
    %5574 = vmatprep.subr.mxu0 %v151
    %5575 = vmatpush1.msra.mxu0 %v150
    %5576 = vmatprep.subr.mxu0 %v169
    %5577 = vmatpush1.msra.mxu0 %v168
    %5578 = vmatprep.subr.mxu0 %v187
    %5579 = vmatpush1.msra.mxu0 %v186
    %5580 = vmatprep.subr.mxu0 %v205
    %5581 = vmatpush1.msra.mxu0 %v204
    %5582 = vmatprep.subr.mxu0 %v223
    %5583 = vmatpush1.msra.mxu0 %v222
    %5584 = vmatprep.subr.mxu0 %v241
    %5585 = vmatpush1.msra.mxu0 %v240
    %5586 = vmatprep.subr.mxu0 %v259
    %5587 = vmatpush1.msra.mxu0 %v258
    %5588 = vmatprep.subr.mxu0 %v277
    %5589 = vmatpush1.msra.mxu0 %v276
    %5590 = vmatprep.subr.mxu0 %v295
    %5591 = vmatpush1.msra.mxu0 %v294
    %5592 = vmatprep.subr.mxu0 %v313
    %5593 = vmatpush1.msra.mxu0 %v312
    %5594 = vmatprep.subr.mxu0 %v331
    %5595 = vmatpush1.msra.mxu0 %v330
    %5596 = vmatprep.subr.mxu0 %v349
    %5597 = vmatpush1.msra.mxu0 %v348
    %5598 = vmatprep.subr.mxu0 %v367
    %5599 = vmatpush1.msra.mxu0 %v366
    %5600 = vmatprep.subr.mxu0 %v385
    %5601 = vmatpush1.msra.mxu0 %v384
    %5602 = vmatprep.subr.mxu0 %v403
    %5603 = vmatpush1.msra.mxu0 %v402
    %5604 = vmatprep.subr.mxu0 %v421
    %5605 = vmatpush1.msra.mxu0 %v420
    %5606 = vmatprep.subr.mxu0 %v439
    %5607 = vmatpush1.msra.mxu0 %v438
    %5608 = vmatprep.subr.mxu0 %v457
    %5609 = vmatpush1.msra.mxu0 %v456
    %5610 = vmatprep.subr.mxu0 %v475
    %5611 = vmatpush1.msra.mxu0 %v474
    %5612 = vmatprep.subr.mxu0 %v493
    %5613 = vmatpush1.msra.mxu0 %v492
    %5614 = vmatprep.subr.mxu0 %v511
    %5615 = vmatpush1.msra.mxu0 %v510
    %5616 = vmatprep.subr.mxu0 %v529
    %5617 = vmatpush1.msra.mxu0 %v528
    %5618 = vmatprep.subr.mxu0 %v547
    %5619 = vmatpush1.msra.mxu0 %v546
    %5620 = vmatprep.subr.mxu0 %v565
    %5621 = vmatpush1.msra.mxu0 %v564
    %5622 = vmatprep.subr.mxu0 %v583
    %5623 = vmatpush1.msra.mxu0 %v582
    %5624 = vmatprep.subr.mxu0 %v601
    %5625 = vmatpush1.msra.mxu0 %v600
    %5626 = vmatprep.subr.mxu0 %v619
    %5627 = vmatpush1.msra.mxu0 %v618
    %5628 = vmatprep.subr.mxu0 %v637
    %5629 = vmatpush1.msra.mxu0 %v636
    %5630 = vmatprep.mubr.f32.mxu0 %v5558
    %5631 = vmatmul.mubr.f32.gmra.mrb[0].mxu0 %v5556
    %v5632 = vpop.f32.mrb[0].mxu0
    %v5633 = vadd.f32 0.0, %v5632
    %v5634 = vpop.f32.mrb[0].mxu0
    %v5635 = vadd.f32 0.0, %v5634
    %5636 = vmatprep.mubr.f32.mxu0 %v5564
    %5637 = vmatmul.mubr.f32.gmra.mrb[0].mxu0 %v5562
    %v5638 = vpop.f32.mrb[0].mxu0
    %v5639 = vadd.f32 0.0, %v5638
    %v5640 = vpop.f32.mrb[0].mxu0
    %v5641 = vadd.f32 0.0, %v5640
    %5642 = vdwg.mxu0
    %5643 = vmatprep.subr.mxu0 %v81
    %5644 = vmatpush1.msra.mxu0 %v80
    %5645 = vmatprep.subr.mxu0 %v99
    %5646 = vmatpush1.msra.mxu0 %v98
    %5647 = vmatprep.subr.mxu0 %v117
    %5648 = vmatpush1.msra.mxu0 %v116
    %5649 = vmatprep.subr.mxu0 %v135
    %5650 = vmatpush1.msra.mxu0 %v134
    %5651 = vmatprep.subr.mxu0 %v153
    %5652 = vmatpush1.msra.mxu0 %v152
    %5653 = vmatprep.subr.mxu0 %v171
    %5654 = vmatpush1.msra.mxu0 %v170
    %5655 = vmatprep.subr.mxu0 %v189
    %5656 = vmatpush1.msra.mxu0 %v188
    %5657 = vmatprep.subr.mxu0 %v207
    %5658 = vmatpush1.msra.mxu0 %v206
    %5659 = vmatprep.subr.mxu0 %v225
    %5660 = vmatpush1.msra.mxu0 %v224
    %5661 = vmatprep.subr.mxu0 %v243
    %5662 = vmatpush1.msra.mxu0 %v242
    %5663 = vmatprep.subr.mxu0 %v261
    %5664 = vmatpush1.msra.mxu0 %v260
    %5665 = vmatprep.subr.mxu0 %v279
    %5666 = vmatpush1.msra.mxu0 %v278
    %5667 = vmatprep.subr.mxu0 %v297
    %5668 = vmatpush1.msra.mxu0 %v296
    %5669 = vmatprep.subr.mxu0 %v315
    %5670 = vmatpush1.msra.mxu0 %v314
    %5671 = vmatprep.subr.mxu0 %v333
    %5672 = vmatpush1.msra.mxu0 %v332
    %5673 = vmatprep.subr.mxu0 %v351
    %5674 = vmatpush1.msra.mxu0 %v350
    %5675 = vmatprep.subr.mxu0 %v369
    %5676 = vmatpush1.msra.mxu0 %v368
    %5677 = vmatprep.subr.mxu0 %v387
    %5678 = vmatpush1.msra.mxu0 %v386
    %5679 = vmatprep.subr.mxu0 %v405
    %5680 = vmatpush1.msra.mxu0 %v404
    %5681 = vmatprep.subr.mxu0 %v423
    %5682 = vmatpush1.msra.mxu0 %v422
    %5683 = vmatprep.subr.mxu0 %v441
    %5684 = vmatpush1.msra.mxu0 %v440
    %5685 = vmatprep.subr.mxu0 %v459
    %5686 = vmatpush1.msra.mxu0 %v458
    %5687 = vmatprep.subr.mxu0 %v477
    %5688 = vmatpush1.msra.mxu0 %v476
    %5689 = vmatprep.subr.mxu0 %v495
    %5690 = vmatpush1.msra.mxu0 %v494
    %5691 = vmatprep.subr.mxu0 %v513
    %5692 = vmatpush1.msra.mxu0 %v512
    %5693 = vmatprep.subr.mxu0 %v531
    %5694 = vmatpush1.msra.mxu0 %v530
    %5695 = vmatprep.subr.mxu0 %v549
    %5696 = vmatpush1.msra.mxu0 %v548
    %5697 = vmatprep.subr.mxu0 %v567
    %5698 = vmatpush1.msra.mxu0 %v566
    %5699 = vmatprep.subr.mxu0 %v585
    %5700 = vmatpush1.msra.mxu0 %v584
    %5701 = vmatprep.subr.mxu0 %v603
    %5702 = vmatpush1.msra.mxu0 %v602
    %5703 = vmatprep.subr.mxu0 %v621
    %5704 = vmatpush1.msra.mxu0 %v620
    %5705 = vmatprep.subr.mxu0 %v639
    %5706 = vmatpush1.msra.mxu0 %v638
    %5707 = vmatprep.mubr.f32.mxu0 %v5558
    %5708 = vmatmul.mubr.f32.gmra.mrb[0].mxu0 %v5556
    %v5709 = vpop.f32.mrb[0].mxu0
    %v5710 = vadd.f32 0.0, %v5709
    %v5711 = vpop.f32.mrb[0].mxu0
    %v5712 = vadd.f32 0.0, %v5711
    %5713 = vmatprep.mubr.f32.mxu0 %v5564
    %5714 = vmatmul.mubr.f32.gmra.mrb[0].mxu0 %v5562
    %v5715 = vpop.f32.mrb[0].mxu0
    %v5716 = vadd.f32 0.0, %v5715
    %v5717 = vpop.f32.mrb[0].mxu0
    %v5718 = vadd.f32 0.0, %v5717
    %5719 = vdwg.mxu0
    %5720 = vmatprep.subr.mxu0 %v83
    %5721 = vmatpush1.msra.mxu0 %v82
    %5722 = vmatprep.subr.mxu0 %v101
    %5723 = vmatpush1.msra.mxu0 %v100
    %5724 = vmatprep.subr.mxu0 %v119
    %5725 = vmatpush1.msra.mxu0 %v118
    %5726 = vmatprep.subr.mxu0 %v137
    %5727 = vmatpush1.msra.mxu0 %v136
    %5728 = vmatprep.subr.mxu0 %v155
    %5729 = vmatpush1.msra.mxu0 %v154
    %5730 = vmatprep.subr.mxu0 %v173
    %5731 = vmatpush1.msra.mxu0 %v172
    %5732 = vmatprep.subr.mxu0 %v191
    %5733 = vmatpush1.msra.mxu0 %v190
    %5734 = vmatprep.subr.mxu0 %v209
    %5735 = vmatpush1.msra.mxu0 %v208
    %5736 = vmatprep.subr.mxu0 %v227
    %5737 = vmatpush1.msra.mxu0 %v226
    %5738 = vmatprep.subr.mxu0 %v245
    %5739 = vmatpush1.msra.mxu0 %v244
    %5740 = vmatprep.subr.mxu0 %v263
    %5741 = vmatpush1.msra.mxu0 %v262
    %5742 = vmatprep.subr.mxu0 %v281
    %5743 = vmatpush1.msra.mxu0 %v280
    %5744 = vmatprep.subr.mxu0 %v299
    %5745 = vmatpush1.msra.mxu0 %v298
    %5746 = vmatprep.subr.mxu0 %v317
    %5747 = vmatpush1.msra.mxu0 %v316
    %5748 = vmatprep.subr.mxu0 %v335
    %5749 = vmatpush1.msra.mxu0 %v334
    %5750 = vmatprep.subr.mxu0 %v353
    %5751 = vmatpush1.msra.mxu0 %v352
    %5752 = vmatprep.subr.mxu0 %v371
    %5753 = vmatpush1.msra.mxu0 %v370
    %5754 = vmatprep.subr.mxu0 %v389
    %5755 = vmatpush1.msra.mxu0 %v388
    %5756 = vmatprep.subr.mxu0 %v407
    %5757 = vmatpush1.msra.mxu0 %v406
    %5758 = vmatprep.subr.mxu0 %v425
    %5759 = vmatpush1.msra.mxu0 %v424
    %5760 = vmatprep.subr.mxu0 %v443
    %5761 = vmatpush1.msra.mxu0 %v442
    %5762 = vmatprep.subr.mxu0 %v461
    %5763 = vmatpush1.msra.mxu0 %v460
    %5764 = vmatprep.subr.mxu0 %v479
    %5765 = vmatpush1.msra.mxu0 %v478
    %5766 = vmatprep.subr.mxu0 %v497
    %5767 = vmatpush1.msra.mxu0 %v496
    %5768 = vmatprep.subr.mxu0 %v515
    %5769 = vmatpush1.msra.mxu0 %v514
    %5770 = vmatprep.subr.mxu0 %v533
    %5771 = vmatpush1.msra.mxu0 %v532
    %5772 = vmatprep.subr.mxu0 %v551
    %5773 = vmatpush1.msra.mxu0 %v550
    %5774 = vmatprep.subr.mxu0 %v569
    %5775 = vmatpush1.msra.mxu0 %v568
    %5776 = vmatprep.subr.mxu0 %v587
    %5777 = vmatpush1.msra.mxu0 %v586
    %5778 = vmatprep.subr.mxu0 %v605
    %5779 = vmatpush1.msra.mxu0 %v604
    %5780 = vmatprep.subr.mxu0 %v623
    %5781 = vmatpush1.msra.mxu0 %v622
    %5782 = vmatprep.subr.mxu0 %v641
    %5783 = vmatpush1.msra.mxu0 %v640
    %5784 = vmatprep.mubr.f32.mxu0 %v5558
    %5785 = vmatmul.mubr.f32.gmra.mrb[0].mxu0 %v5556
    %v5786 = vpop.f32.mrb[0].mxu0
    %v5787 = vadd.f32 0.0, %v5786
    %v5788 = vpop.f32.mrb[0].mxu0
    %v5789 = vadd.f32 0.0, %v5788
    %5790 = vmatprep.mubr.f32.mxu0 %v5564
    %5791 = vmatmul.mubr.f32.gmra.mrb[0].mxu0 %v5562
    %v5792 = vpop.f32.mrb[0].mxu0
    %v5793 = vadd.f32 0.0, %v5792
    %v5794 = vpop.f32.mrb[0].mxu0
    %v5795 = vadd.f32 0.0, %v5794
    %5796 = vdwg.mxu0
    %5797 = vmatprep.subr.mxu0 %v85
    %5798 = vmatpush1.msra.mxu0 %v84
    %5799 = vmatprep.subr.mxu0 %v103
    %5800 = vmatpush1.msra.mxu0 %v102
    %5801 = vmatprep.subr.mxu0 %v121
    %5802 = vmatpush1.msra.mxu0 %v120
    %5803 = vmatprep.subr.mxu0 %v139
    %5804 = vmatpush1.msra.mxu0 %v138
    %5805 = vmatprep.subr.mxu0 %v157
    %5806 = vmatpush1.msra.mxu0 %v156
    %5807 = vmatprep.subr.mxu0 %v175
    %5808 = vmatpush1.msra.mxu0 %v174
    %5809 = vmatprep.subr.mxu0 %v193
    %5810 = vmatpush1.msra.mxu0 %v192
    %5811 = vmatprep.subr.mxu0 %v211
    %5812 = vmatpush1.msra.mxu0 %v210
    %5813 = vmatprep.subr.mxu0 %v229
    %5814 = vmatpush1.msra.mxu0 %v228
    %5815 = vmatprep.subr.mxu0 %v247
    %5816 = vmatpush1.msra.mxu0 %v246
    %5817 = vmatprep.subr.mxu0 %v265
    %5818 = vmatpush1.msra.mxu0 %v264
    %5819 = vmatprep.subr.mxu0 %v283
    %5820 = vmatpush1.msra.mxu0 %v282
    %5821 = vmatprep.subr.mxu0 %v301
    %5822 = vmatpush1.msra.mxu0 %v300
    %5823 = vmatprep.subr.mxu0 %v319
    %5824 = vmatpush1.msra.mxu0 %v318
    %5825 = vmatprep.subr.mxu0 %v337
    %5826 = vmatpush1.msra.mxu0 %v336
    %5827 = vmatprep.subr.mxu0 %v355
    %5828 = vmatpush1.msra.mxu0 %v354
    %5829 = vmatprep.subr.mxu0 %v373
    %5830 = vmatpush1.msra.mxu0 %v372
    %5831 = vmatprep.subr.mxu0 %v391
    %5832 = vmatpush1.msra.mxu0 %v390
    %5833 = vmatprep.subr.mxu0 %v409
    %5834 = vmatpush1.msra.mxu0 %v408
    %5835 = vmatprep.subr.mxu0 %v427
    %5836 = vmatpush1.msra.mxu0 %v426
    %5837 = vmatprep.subr.mxu0 %v445
    %5838 = vmatpush1.msra.mxu0 %v444
    %5839 = vmatprep.subr.mxu0 %v463
    %5840 = vmatpush1.msra.mxu0 %v462
    %5841 = vmatprep.subr.mxu0 %v481
    %5842 = vmatpush1.msra.mxu0 %v480
    %5843 = vmatprep.subr.mxu0 %v499
    %5844 = vmatpush1.msra.mxu0 %v498
    %5845 = vmatprep.subr.mxu0 %v517
    %5846 = vmatpush1.msra.mxu0 %v516
    %5847 = vmatprep.subr.mxu0 %v535
    %5848 = vmatpush1.msra.mxu0 %v534
    %5849 = vmatprep.subr.mxu0 %v553
    %5850 = vmatpush1.msra.mxu0 %v552
    %5851 = vmatprep.subr.mxu0 %v571
    %5852 = vmatpush1.msra.mxu0 %v570
    %5853 = vmatprep.subr.mxu0 %v589
    %5854 = vmatpush1.msra.mxu0 %v588
    %5855 = vmatprep.subr.mxu0 %v607
    %5856 = vmatpush1.msra.mxu0 %v606
    %5857 = vmatprep.subr.mxu0 %v625
    %5858 = vmatpush1.msra.mxu0 %v624
    %5859 = vmatprep.subr.mxu0 %v643
    %5860 = vmatpush1.msra.mxu0 %v642
    %5861 = vmatprep.mubr.f32.mxu0 %v5558
    %5862 = vmatmul.mubr.f32.gmra.mrb[0].mxu0 %v5556
    %v5863 = vpop.f32.mrb[0].mxu0
    %v5864 = vadd.f32 0.0, %v5863
    %v5865 = vpop.f32.mrb[0].mxu0
    %v5866 = vadd.f32 0.0, %v5865
    %5867 = vmatprep.mubr.f32.mxu0 %v5564
    %5868 = vmatmul.mubr.f32.gmra.mrb[0].mxu0 %v5562
    %v5869 = vpop.f32.mrb[0].mxu0
    %v5870 = vadd.f32 0.0, %v5869
    %v5871 = vpop.f32.mrb[0].mxu0
    %v5872 = vadd.f32 0.0, %v5871
    %5873 = vdwg.mxu0
    %5874 = vmatprep.subr.mxu0 %v87
    %5875 = vmatpush1.msra.mxu0 %v86
    %5876 = vmatprep.subr.mxu0 %v105
    %5877 = vmatpush1.msra.mxu0 %v104
    %5878 = vmatprep.subr.mxu0 %v123
    %5879 = vmatpush1.msra.mxu0 %v122
    %5880 = vmatprep.subr.mxu0 %v141
    %5881 = vmatpush1.msra.mxu0 %v140
    %5882 = vmatprep.subr.mxu0 %v159
    %5883 = vmatpush1.msra.mxu0 %v158
    %5884 = vmatprep.subr.mxu0 %v177
    %5885 = vmatpush1.msra.mxu0 %v176
    %5886 = vmatprep.subr.mxu0 %v195
    %5887 = vmatpush1.msra.mxu0 %v194
    %5888 = vmatprep.subr.mxu0 %v213
    %5889 = vmatpush1.msra.mxu0 %v212
    %5890 = vmatprep.subr.mxu0 %v231
    %5891 = vmatpush1.msra.mxu0 %v230
    %5892 = vmatprep.subr.mxu0 %v249
    %5893 = vmatpush1.msra.mxu0 %v248
    %5894 = vmatprep.subr.mxu0 %v267
    %5895 = vmatpush1.msra.mxu0 %v266
    %5896 = vmatprep.subr.mxu0 %v285
    %5897 = vmatpush1.msra.mxu0 %v284
    %5898 = vmatprep.subr.mxu0 %v303
    %5899 = vmatpush1.msra.mxu0 %v302
    %5900 = vmatprep.subr.mxu0 %v321
    %5901 = vmatpush1.msra.mxu0 %v320
    %5902 = vmatprep.subr.mxu0 %v339
    %5903 = vmatpush1.msra.mxu0 %v338
    %5904 = vmatprep.subr.mxu0 %v357
    %5905 = vmatpush1.msra.mxu0 %v356
    %5906 = vmatprep.subr.mxu0 %v375
    %5907 = vmatpush1.msra.mxu0 %v374
    %5908 = vmatprep.subr.mxu0 %v393
    %5909 = vmatpush1.msra.mxu0 %v392
    %5910 = vmatprep.subr.mxu0 %v411
    %5911 = vmatpush1.msra.mxu0 %v410
    %5912 = vmatprep.subr.mxu0 %v429
    %5913 = vmatpush1.msra.mxu0 %v428
    %5914 = vmatprep.subr.mxu0 %v447
    %5915 = vmatpush1.msra.mxu0 %v446
    %5916 = vmatprep.subr.mxu0 %v465
    %5917 = vmatpush1.msra.mxu0 %v464
    %5918 = vmatprep.subr.mxu0 %v483
    %5919 = vmatpush1.msra.mxu0 %v482
    %5920 = vmatprep.subr.mxu0 %v501
    %5921 = vmatpush1.msra.mxu0 %v500
    %5922 = vmatprep.subr.mxu0 %v519
    %5923 = vmatpush1.msra.mxu0 %v518
    %5924 = vmatprep.subr.mxu0 %v537
    %5925 = vmatpush1.msra.mxu0 %v536
    %5926 = vmatprep.subr.mxu0 %v555
    %5927 = vmatpush1.msra.mxu0 %v554
    %5928 = vmatprep.subr.mxu0 %v573
    %5929 = vmatpush1.msra.mxu0 %v572
    %5930 = vmatprep.subr.mxu0 %v591
    %5931 = vmatpush1.msra.mxu0 %v590
    %5932 = vmatprep.subr.mxu0 %v609
    %5933 = vmatpush1.msra.mxu0 %v608
    %5934 = vmatprep.subr.mxu0 %v627
    %5935 = vmatpush1.msra.mxu0 %v626
    %5936 = vmatprep.subr.mxu0 %v645
    %5937 = vmatpush1.msra.mxu0 %v644
    %5938 = vmatprep.mubr.f32.mxu0 %v5558
    %5939 = vmatmul.mubr.f32.gmra.mrb[0].mxu0 %v5556
    %v5940 = vpop.f32.mrb[0].mxu0
    %v5941 = vadd.f32 0.0, %v5940
    %v5942 = vpop.f32.mrb[0].mxu0
    %v5943 = vadd.f32 0.0, %v5942
    %5944 = vmatprep.mubr.f32.mxu0 %v5564
    %5945 = vmatmul.mubr.f32.gmra.mrb[0].mxu0 %v5562
    %v5946 = vpop.f32.mrb[0].mxu0
    %v5947 = vadd.f32 0.0, %v5946
    %v5948 = vpop.f32.mrb[0].mxu0
    %v5949 = vadd.f32 0.0, %v5948
    %5950 = vdwg.mxu0
    %5951 = vmatprep.subr.mxu0 %v89
    %5952 = vmatpush1.msra.mxu0 %v88
    %5953 = vmatprep.subr.mxu0 %v107
    %5954 = vmatpush1.msra.mxu0 %v106
    %5955 = vmatprep.subr.mxu0 %v125
    %5956 = vmatpush1.msra.mxu0 %v124
    %5957 = vmatprep.subr.mxu0 %v143
    %5958 = vmatpush1.msra.mxu0 %v142
    %5959 = vmatprep.subr.mxu0 %v161
    %5960 = vmatpush1.msra.mxu0 %v160
    %5961 = vmatprep.subr.mxu0 %v179
    %5962 = vmatpush1.msra.mxu0 %v178
    %5963 = vmatprep.subr.mxu0 %v197
    %5964 = vmatpush1.msra.mxu0 %v196
    %5965 = vmatprep.subr.mxu0 %v215
    %5966 = vmatpush1.msra.mxu0 %v214
    %5967 = vmatprep.subr.mxu0 %v233
    %5968 = vmatpush1.msra.mxu0 %v232
    %5969 = vmatprep.subr.mxu0 %v251
    %5970 = vmatpush1.msra.mxu0 %v250
    %5971 = vmatprep.subr.mxu0 %v269
    %5972 = vmatpush1.msra.mxu0 %v268
    %5973 = vmatprep.subr.mxu0 %v287
    %5974 = vmatpush1.msra.mxu0 %v286
    %5975 = vmatprep.subr.mxu0 %v305
    %5976 = vmatpush1.msra.mxu0 %v304
    %5977 = vmatprep.subr.mxu0 %v323
    %5978 = vmatpush1.msra.mxu0 %v322
    %5979 = vmatprep.subr.mxu0 %v341
    %5980 = vmatpush1.msra.mxu0 %v340
    %5981 = vmatprep.subr.mxu0 %v359
    %5982 = vmatpush1.msra.mxu0 %v358
    %5983 = vmatprep.subr.mxu0 %v377
    %5984 = vmatpush1.msra.mxu0 %v376
    %5985 = vmatprep.subr.mxu0 %v395
    %5986 = vmatpush1.msra.mxu0 %v394
    %5987 = vmatprep.subr.mxu0 %v413
    %5988 = vmatpush1.msra.mxu0 %v412
    %5989 = vmatprep.subr.mxu0 %v431
    %5990 = vmatpush1.msra.mxu0 %v430
    %5991 = vmatprep.subr.mxu0 %v449
    %5992 = vmatpush1.msra.mxu0 %v448
    %5993 = vmatprep.subr.mxu0 %v467
    %5994 = vmatpush1.msra.mxu0 %v466
    %5995 = vmatprep.subr.mxu0 %v485
    %5996 = vmatpush1.msra.mxu0 %v484
    %5997 = vmatprep.subr.mxu0 %v503
    %5998 = vmatpush1.msra.mxu0 %v502
    %5999 = vmatprep.subr.mxu0 %v521
    %6000 = vmatpush1.msra.mxu0 %v520
    %6001 = vmatprep.subr.mxu0 %v539
    %6002 = vmatpush1.msra.mxu0 %v538
    %6003 = vmatprep.subr.mxu0 %v557
    %6004 = vmatpush1.msra.mxu0 %v556
    %6005 = vmatprep.subr.mxu0 %v575
    %6006 = vmatpush1.msra.mxu0 %v574
    %6007 = vmatprep.subr.mxu0 %v593
    %6008 = vmatpush1.msra.mxu0 %v592
    %6009 = vmatprep.subr.mxu0 %v611
    %6010 = vmatpush1.msra.mxu0 %v610
    %6011 = vmatprep.subr.mxu0 %v629
    %6012 = vmatpush1.msra.mxu0 %v628
    %6013 = vmatprep.subr.mxu0 %v647
    %6014 = vmatpush1.msra.mxu0 %v646
    %6015 = vmatprep.mubr.f32.mxu0 %v5558
    %6016 = vmatmul.mubr.f32.gmra.mrb[0].mxu0 %v5556
    %v6017 = vpop.f32.mrb[0].mxu0
    %v6018 = vadd.f32 0.0, %v6017
    %v6019 = vpop.f32.mrb[0].mxu0
    %v6020 = vadd.f32 0.0, %v6019
    %6021 = vmatprep.mubr.f32.mxu0 %v5564
    %6022 = vmatmul.mubr.f32.gmra.mrb[0].mxu0 %v5562
    %v6023 = vpop.f32.mrb[0].mxu0
    %v6024 = vadd.f32 0.0, %v6023
    %v6025 = vpop.f32.mrb[0].mxu0
    %v6026 = vadd.f32 0.0, %v6025
    %6027 = vdwg.mxu0
    %6028 = vmatprep.subr.mxu0 %v91
    %6029 = vmatpush1.msra.mxu0 %v90
    %6030 = vmatprep.subr.mxu0 %v109
    %6031 = vmatpush1.msra.mxu0 %v108
    %6032 = vmatprep.subr.mxu0 %v127
    %6033 = vmatpush1.msra.mxu0 %v126
    %6034 = vmatprep.subr.mxu0 %v145
    %6035 = vmatpush1.msra.mxu0 %v144
    %6036 = vmatprep.subr.mxu0 %v163
    %6037 = vmatpush1.msra.mxu0 %v162
    %6038 = vmatprep.subr.mxu0 %v181
    %6039 = vmatpush1.msra.mxu0 %v180
    %6040 = vmatprep.subr.mxu0 %v199
    %6041 = vmatpush1.msra.mxu0 %v198
    %6042 = vmatprep.subr.mxu0 %v217
    %6043 = vmatpush1.msra.mxu0 %v216
    %6044 = vmatprep.subr.mxu0 %v235
    %6045 = vmatpush1.msra.mxu0 %v234
    %6046 = vmatprep.subr.mxu0 %v253
    %6047 = vmatpush1.msra.mxu0 %v252
    %6048 = vmatprep.subr.mxu0 %v271
    %6049 = vmatpush1.msra.mxu0 %v270
    %6050 = vmatprep.subr.mxu0 %v289
    %6051 = vmatpush1.msra.mxu0 %v288
    %6052 = vmatprep.subr.mxu0 %v307
    %6053 = vmatpush1.msra.mxu0 %v306
    %6054 = vmatprep.subr.mxu0 %v325
    %6055 = vmatpush1.msra.mxu0 %v324
    %6056 = vmatprep.subr.mxu0 %v343
    %6057 = vmatpush1.msra.mxu0 %v342
    %6058 = vmatprep.subr.mxu0 %v361
    %6059 = vmatpush1.msra.mxu0 %v360
    %6060 = vmatprep.subr.mxu0 %v379
    %6061 = vmatpush1.msra.mxu0 %v378
    %6062 = vmatprep.subr.mxu0 %v397
    %6063 = vmatpush1.msra.mxu0 %v396
    %6064 = vmatprep.subr.mxu0 %v415
    %6065 = vmatpush1.msra.mxu0 %v414
    %6066 = vmatprep.subr.mxu0 %v433
    %6067 = vmatpush1.msra.mxu0 %v432
    %6068 = vmatprep.subr.mxu0 %v451
    %6069 = vmatpush1.msra.mxu0 %v450
    %6070 = vmatprep.subr.mxu0 %v469
    %6071 = vmatpush1.msra.mxu0 %v468
    %6072 = vmatprep.subr.mxu0 %v487
    %6073 = vmatpush1.msra.mxu0 %v486
    %6074 = vmatprep.subr.mxu0 %v505
    %6075 = vmatpush1.msra.mxu0 %v504
    %6076 = vmatprep.subr.mxu0 %v523
    %6077 = vmatpush1.msra.mxu0 %v522
    %6078 = vmatprep.subr.mxu0 %v541
    %6079 = vmatpush1.msra.mxu0 %v540
    %6080 = vmatprep.subr.mxu0 %v559
    %6081 = vmatpush1.msra.mxu0 %v558
    %6082 = vmatprep.subr.mxu0 %v577
    %6083 = vmatpush1.msra.mxu0 %v576
    %6084 = vmatprep.subr.mxu0 %v595
    %6085 = vmatpush1.msra.mxu0 %v594
    %6086 = vmatprep.subr.mxu0 %v613
    %6087 = vmatpush1.msra.mxu0 %v612
    %6088 = vmatprep.subr.mxu0 %v631
    %6089 = vmatpush1.msra.mxu0 %v630
    %6090 = vmatprep.subr.mxu0 %v649
    %6091 = vmatpush1.msra.mxu0 %v648
    %6092 = vmatprep.mubr.f32.mxu0 %v5558
    %6093 = vmatmul.mubr.f32.gmra.mrb[0].mxu0 %v5556
    %v6094 = vpop.f32.mrb[0].mxu0
    %v6095 = vadd.f32 0.0, %v6094
    %v6096 = vpop.f32.mrb[0].mxu0
    %v6097 = vadd.f32 0.0, %v6096
    %6098 = vmatprep.mubr.f32.mxu0 %v5564
    %6099 = vmatmul.mubr.f32.gmra.mrb[0].mxu0 %v5562
    %v6100 = vpop.f32.mrb[0].mxu0
    %v6101 = vadd.f32 0.0, %v6100
    %v6102 = vpop.f32.mrb[0].mxu0
    %v6103 = vadd.f32 0.0, %v6102
    %6104 = vdwg.mxu0
    %6105 = vmatprep.subr.mxu0 %v93
    %6106 = vmatpush1.msra.mxu0 %v92
    %6107 = vmatprep.subr.mxu0 %v111
    %6108 = vmatpush1.msra.mxu0 %v110
    %6109 = vmatprep.subr.mxu0 %v129
    %6110 = vmatpush1.msra.mxu0 %v128
    %6111 = vmatprep.subr.mxu0 %v147
    %6112 = vmatpush1.msra.mxu0 %v146
    %6113 = vmatprep.subr.mxu0 %v165
    %6114 = vmatpush1.msra.mxu0 %v164
    %6115 = vmatprep.subr.mxu0 %v183
    %6116 = vmatpush1.msra.mxu0 %v182
    %6117 = vmatprep.subr.mxu0 %v201
    %6118 = vmatpush1.msra.mxu0 %v200
    %6119 = vmatprep.subr.mxu0 %v219
    %6120 = vmatpush1.msra.mxu0 %v218
    %6121 = vmatprep.subr.mxu0 %v237
    %6122 = vmatpush1.msra.mxu0 %v236
    %6123 = vmatprep.subr.mxu0 %v255
    %6124 = vmatpush1.msra.mxu0 %v254
    %6125 = vmatprep.subr.mxu0 %v273
    %6126 = vmatpush1.msra.mxu0 %v272
    %6127 = vmatprep.subr.mxu0 %v291
    %6128 = vmatpush1.msra.mxu0 %v290
    %6129 = vmatprep.subr.mxu0 %v309
    %6130 = vmatpush1.msra.mxu0 %v308
    %6131 = vmatprep.subr.mxu0 %v327
    %6132 = vmatpush1.msra.mxu0 %v326
    %6133 = vmatprep.subr.mxu0 %v345
    %6134 = vmatpush1.msra.mxu0 %v344
    %6135 = vmatprep.subr.mxu0 %v363
    %6136 = vmatpush1.msra.mxu0 %v362
    %6137 = vmatprep.subr.mxu0 %v381
    %6138 = vmatpush1.msra.mxu0 %v380
    %6139 = vmatprep.subr.mxu0 %v399
    %6140 = vmatpush1.msra.mxu0 %v398
    %6141 = vmatprep.subr.mxu0 %v417
    %6142 = vmatpush1.msra.mxu0 %v416
    %6143 = vmatprep.subr.mxu0 %v435
    %6144 = vmatpush1.msra.mxu0 %v434
    %6145 = vmatprep.subr.mxu0 %v453
    %6146 = vmatpush1.msra.mxu0 %v452
    %6147 = vmatprep.subr.mxu0 %v471
    %6148 = vmatpush1.msra.mxu0 %v470
    %6149 = vmatprep.subr.mxu0 %v489
    %6150 = vmatpush1.msra.mxu0 %v488
    %6151 = vmatprep.subr.mxu0 %v507
    %6152 = vmatpush1.msra.mxu0 %v506
    %6153 = vmatprep.subr.mxu0 %v525
    %6154 = vmatpush1.msra.mxu0 %v524
    %6155 = vmatprep.subr.mxu0 %v543
    %6156 = vmatpush1.msra.mxu0 %v542
    %6157 = vmatprep.subr.mxu0 %v561
    %6158 = vmatpush1.msra.mxu0 %v560
    %6159 = vmatprep.subr.mxu0 %v579
    %6160 = vmatpush1.msra.mxu0 %v578
    %6161 = vmatprep.subr.mxu0 %v597
    %6162 = vmatpush1.msra.mxu0 %v596
    %6163 = vmatprep.subr.mxu0 %v615
    %6164 = vmatpush1.msra.mxu0 %v614
    %6165 = vmatprep.subr.mxu0 %v633
    %6166 = vmatpush1.msra.mxu0 %v632
    %6167 = vmatprep.subr.mxu0 %v651
    %6168 = vmatpush1.msra.mxu0 %v650
    %6169 = vmatprep.mubr.f32.mxu0 %v5558
    %6170 = vmatmul.mubr.f32.gmra.mrb[0].mxu0 %v5556
    %v6171 = vpop.f32.mrb[0].mxu0
    %v6172 = vadd.f32 0.0, %v6171
    %v6173 = vpop.f32.mrb[0].mxu0
    %v6174 = vadd.f32 0.0, %v6173
    %6175 = vmatprep.mubr.f32.mxu0 %v5564
    %6176 = vmatmul.mubr.f32.gmra.mrb[0].mxu0 %v5562
    %v6177 = vpop.f32.mrb[0].mxu0
    %v6178 = vadd.f32 0.0, %v6177
    %v6179 = vpop.f32.mrb[0].mxu0
    %v6180 = vadd.f32 0.0, %v6179
    %6181 = vdwg.mxu0
    %6182 = vmatprep.subr.mxu0 %v95
    %6183 = vmatpush1.msra.mxu0 %v94
    %6184 = vmatprep.subr.mxu0 %v113
    %6185 = vmatpush1.msra.mxu0 %v112
    %6186 = vmatprep.subr.mxu0 %v131
    %6187 = vmatpush1.msra.mxu0 %v130
    %6188 = vmatprep.subr.mxu0 %v149
    %6189 = vmatpush1.msra.mxu0 %v148
    %6190 = vmatprep.subr.mxu0 %v167
    %6191 = vmatpush1.msra.mxu0 %v166
    %6192 = vmatprep.subr.mxu0 %v185
    %6193 = vmatpush1.msra.mxu0 %v184
    %6194 = vmatprep.subr.mxu0 %v203
    %6195 = vmatpush1.msra.mxu0 %v202
    %6196 = vmatprep.subr.mxu0 %v221
    %6197 = vmatpush1.msra.mxu0 %v220
    %6198 = vmatprep.subr.mxu0 %v239
    %6199 = vmatpush1.msra.mxu0 %v238
    %6200 = vmatprep.subr.mxu0 %v257
    %6201 = vmatpush1.msra.mxu0 %v256
    %6202 = vmatprep.subr.mxu0 %v275
    %6203 = vmatpush1.msra.mxu0 %v274
    %6204 = vmatprep.subr.mxu0 %v293
    %6205 = vmatpush1.msra.mxu0 %v292
    %6206 = vmatprep.subr.mxu0 %v311
    %6207 = vmatpush1.msra.mxu0 %v310
    %6208 = vmatprep.subr.mxu0 %v329
    %6209 = vmatpush1.msra.mxu0 %v328
    %6210 = vmatprep.subr.mxu0 %v347
    %6211 = vmatpush1.msra.mxu0 %v346
    %6212 = vmatprep.subr.mxu0 %v365
    %6213 = vmatpush1.msra.mxu0 %v364
    %6214 = vmatprep.subr.mxu0 %v383
    %6215 = vmatpush1.msra.mxu0 %v382
    %6216 = vmatprep.subr.mxu0 %v401
    %6217 = vmatpush1.msra.mxu0 %v400
    %6218 = vmatprep.subr.mxu0 %v419
    %6219 = vmatpush1.msra.mxu0 %v418
    %6220 = vmatprep.subr.mxu0 %v437
    %6221 = vmatpush1.msra.mxu0 %v436
    %6222 = vmatprep.subr.mxu0 %v455
    %6223 = vmatpush1.msra.mxu0 %v454
    %6224 = vmatprep.subr.mxu0 %v473
    %6225 = vmatpush1.msra.mxu0 %v472
    %6226 = vmatprep.subr.mxu0 %v491
    %6227 = vmatpush1.msra.mxu0 %v490
    %6228 = vmatprep.subr.mxu0 %v509
    %6229 = vmatpush1.msra.mxu0 %v508
    %6230 = vmatprep.subr.mxu0 %v527
    %6231 = vmatpush1.msra.mxu0 %v526
    %6232 = vmatprep.subr.mxu0 %v545
    %6233 = vmatpush1.msra.mxu0 %v544
    %6234 = vmatprep.subr.mxu0 %v563
    %6235 = vmatpush1.msra.mxu0 %v562
    %6236 = vmatprep.subr.mxu0 %v581
    %6237 = vmatpush1.msra.mxu0 %v580
    %6238 = vmatprep.subr.mxu0 %v599
    %6239 = vmatpush1.msra.mxu0 %v598
    %6240 = vmatprep.subr.mxu0 %v617
    %6241 = vmatpush1.msra.mxu0 %v616
    %6242 = vmatprep.subr.mxu0 %v635
    %6243 = vmatpush1.msra.mxu0 %v634
    %6244 = vmatprep.subr.mxu0 %v653
    %6245 = vmatpush1.msra.mxu0 %v652
    %6246 = vmatprep.mubr.f32.mxu0 %v5558
    %6247 = vmatmul.mubr.f32.gmra.mrb[0].mxu0 %v5556
    %v6248 = vpop.f32.mrb[0].mxu0
    %v6249 = vadd.f32 0.0, %v6248
    %v6250 = vpop.f32.mrb[0].mxu0
    %v6251 = vadd.f32 0.0, %v6250
    %6252 = vmatprep.mubr.f32.mxu0 %v5564
    %6253 = vmatmul.mubr.f32.gmra.mrb[0].mxu0 %v5562
    %v6254 = vpop.f32.mrb[0].mxu0
    %v6255 = vadd.f32 0.0, %v6254
    %v6256 = vpop.f32.mrb[0].mxu0
    %v6257 = vadd.f32 0.0, %v6256
    %6258 = vdwg.mxu0
    %v6259 = vld [vmem:[%s9] sm:$0xff]
    %6261 = vset.pattern.permute.xlu0 0
    %6262 = vperm.xlu0 %6261, %v6259
    %v6263 = vpop.permute.xlu0 %6262
    %v6265 = vld [vmem:[%s8] sm:$0xff]
    %v6267 = vsel %vm4046, %v6265, 0
    %6269 = vmatprep.subr.mxu0 %v5635
    %6270 = vmatpush1.msra.mxu0 %v5633
    %6271 = vmatprep.subr.mxu0 %v5641
    %6272 = vmatpush1.msra.mxu0 %v5639
    %6273 = vmatprep.subr.mxu0 0.0
    %6274 = vmatpush1.msra.mxu0 0.0
    %6275 = vmatprep.subr.mxu0 0.0
    %6276 = vmatpush1.msra.mxu0 0.0
    %6277 = vmatprep.subr.mxu0 0.0
    %6278 = vmatpush1.msra.mxu0 0.0
    %6279 = vmatprep.subr.mxu0 0.0
    %6280 = vmatpush1.msra.mxu0 0.0
    %6281 = vmatprep.subr.mxu0 0.0
    %6282 = vmatpush1.msra.mxu0 0.0
    %6283 = vmatprep.subr.mxu0 0.0
    %6284 = vmatpush1.msra.mxu0 0.0
    %6285 = vmatprep.subr.mxu0 0.0
    %6286 = vmatpush1.msra.mxu0 0.0
    %6287 = vmatprep.subr.mxu0 0.0
    %6288 = vmatpush1.msra.mxu0 0.0
    %6289 = vmatprep.subr.mxu0 0.0
    %6290 = vmatpush1.msra.mxu0 0.0
    %6291 = vmatprep.subr.mxu0 0.0
    %6292 = vmatpush1.msra.mxu0 0.0
    %6293 = vmatprep.subr.mxu0 0.0
    %6294 = vmatpush1.msra.mxu0 0.0
    %6295 = vmatprep.subr.mxu0 0.0
    %6296 = vmatpush1.msra.mxu0 0.0
    %6297 = vmatprep.subr.mxu0 0.0
    %6298 = vmatpush1.msra.mxu0 0.0
    %6299 = vmatprep.subr.mxu0 0.0
    %6300 = vmatpush1.msra.mxu0 0.0
    %6301 = vmatprep.subr.mxu0 0.0
    %6302 = vmatpush1.msra.mxu0 0.0
    %6303 = vmatprep.subr.mxu0 0.0
    %6304 = vmatpush1.msra.mxu0 0.0
    %6305 = vmatprep.subr.mxu0 0.0
    %6306 = vmatpush1.msra.mxu0 0.0
    %6307 = vmatprep.subr.mxu0 0.0
    %6308 = vmatpush1.msra.mxu0 0.0
    %6309 = vmatprep.subr.mxu0 0.0
    %6310 = vmatpush1.msra.mxu0 0.0
    %6311 = vmatprep.subr.mxu0 0.0
    %6312 = vmatpush1.msra.mxu0 0.0
    %6313 = vmatprep.subr.mxu0 0.0
    %6314 = vmatpush1.msra.mxu0 0.0
    %6315 = vmatprep.subr.mxu0 0.0
    %6316 = vmatpush1.msra.mxu0 0.0
    %6317 = vmatprep.subr.mxu0 0.0
    %6318 = vmatpush1.msra.mxu0 0.0
    %6319 = vmatprep.subr.mxu0 0.0
    %6320 = vmatpush1.msra.mxu0 0.0
    %6321 = vmatprep.subr.mxu0 0.0
    %6322 = vmatpush1.msra.mxu0 0.0
    %6323 = vmatprep.subr.mxu0 0.0
    %6324 = vmatpush1.msra.mxu0 0.0
    %6325 = vmatprep.subr.mxu0 0.0
    %6326 = vmatpush1.msra.mxu0 0.0
    %6327 = vmatprep.subr.mxu0 0.0
    %6328 = vmatpush1.msra.mxu0 0.0
    %6329 = vmatprep.subr.mxu0 0.0
    %6330 = vmatpush1.msra.mxu0 0.0
    %6331 = vmatprep.subr.mxu0 0.0
    %6332 = vmatpush1.msra.mxu0 0.0
    %6333 = vmatprep.mubr.f32.mxu0 0.0
    %6334 = vmatmul.mubr.f32.gmra.mrb[0].mxu0 %v6267
    %v6335 = vpop.f32.mrb[0].mxu0
    %v6336 = vadd.f32 0.0, %v6335
    %v6337 = vpop.f32.mrb[0].mxu0
    %v6338 = vadd.f32 0.0, %v6337
    %6339 = vdwg.mxu0
    %v6340 = vadd.f32 %v6263, %v6336
    %v6341 = vadd.f32 %v6263, %v6338
    %s6342 = scalar_lea.vmem %s8, 8
    %v6343 = vld [vmem:[%s6342] sm:$0xff]
    %v6345 = vsel %vm4046, %v6343, 0
    %6347 = vmatprep.subr.mxu0 %v5712
    %6348 = vmatpush1.msra.mxu0 %v5710
    %6349 = vmatprep.subr.mxu0 %v5718
    %6350 = vmatpush1.msra.mxu0 %v5716
    %6351 = vmatprep.subr.mxu0 0.0
    %6352 = vmatpush1.msra.mxu0 0.0
    %6353 = vmatprep.subr.mxu0 0.0
    %6354 = vmatpush1.msra.mxu0 0.0
    %6355 = vmatprep.subr.mxu0 0.0
    %6356 = vmatpush1.msra.mxu0 0.0
    %6357 = vmatprep.subr.mxu0 0.0
    %6358 = vmatpush1.msra.mxu0 0.0
    %6359 = vmatprep.subr.mxu0 0.0
    %6360 = vmatpush1.msra.mxu0 0.0
    %6361 = vmatprep.subr.mxu0 0.0
    %6362 = vmatpush1.msra.mxu0 0.0
    %6363 = vmatprep.subr.mxu0 0.0
    %6364 = vmatpush1.msra.mxu0 0.0
    %6365 = vmatprep.subr.mxu0 0.0
    %6366 = vmatpush1.msra.mxu0 0.0
    %6367 = vmatprep.subr.mxu0 0.0
    %6368 = vmatpush1.msra.mxu0 0.0
    %6369 = vmatprep.subr.mxu0 0.0
    %6370 = vmatpush1.msra.mxu0 0.0
    %6371 = vmatprep.subr.mxu0 0.0
    %6372 = vmatpush1.msra.mxu0 0.0
    %6373 = vmatprep.subr.mxu0 0.0
    %6374 = vmatpush1.msra.mxu0 0.0
    %6375 = vmatprep.subr.mxu0 0.0
    %6376 = vmatpush1.msra.mxu0 0.0
    %6377 = vmatprep.subr.mxu0 0.0
    %6378 = vmatpush1.msra.mxu0 0.0
    %6379 = vmatprep.subr.mxu0 0.0
    %6380 = vmatpush1.msra.mxu0 0.0
    %6381 = vmatprep.subr.mxu0 0.0
    %6382 = vmatpush1.msra.mxu0 0.0
    %6383 = vmatprep.subr.mxu0 0.0
    %6384 = vmatpush1.msra.mxu0 0.0
    %6385 = vmatprep.subr.mxu0 0.0
    %6386 = vmatpush1.msra.mxu0 0.0
    %6387 = vmatprep.subr.mxu0 0.0
    %6388 = vmatpush1.msra.mxu0 0.0
    %6389 = vmatprep.subr.mxu0 0.0
    %6390 = vmatpush1.msra.mxu0 0.0
    %6391 = vmatprep.subr.mxu0 0.0
    %6392 = vmatpush1.msra.mxu0 0.0
    %6393 = vmatprep.subr.mxu0 0.0
    %6394 = vmatpush1.msra.mxu0 0.0
    %6395 = vmatprep.subr.mxu0 0.0
    %6396 = vmatpush1.msra.mxu0 0.0
    %6397 = vmatprep.subr.mxu0 0.0
    %6398 = vmatpush1.msra.mxu0 0.0
    %6399 = vmatprep.subr.mxu0 0.0
    %6400 = vmatpush1.msra.mxu0 0.0
    %6401 = vmatprep.subr.mxu0 0.0
    %6402 = vmatpush1.msra.mxu0 0.0
    %6403 = vmatprep.subr.mxu0 0.0
    %6404 = vmatpush1.msra.mxu0 0.0
    %6405 = vmatprep.subr.mxu0 0.0
    %6406 = vmatpush1.msra.mxu0 0.0
    %6407 = vmatprep.subr.mxu0 0.0
    %6408 = vmatpush1.msra.mxu0 0.0
    %6409 = vmatprep.subr.mxu0 0.0
    %6410 = vmatpush1.msra.mxu0 0.0
    %6411 = vmatprep.mubr.f32.mxu0 0.0
    %6412 = vmatmul.mubr.f32.gmra.mrb[0].mxu0 %v6345
    %v6413 = vpop.f32.mrb[0].mxu0
    %v6414 = vadd.f32 0.0, %v6413
    %v6415 = vpop.f32.mrb[0].mxu0
    %v6416 = vadd.f32 0.0, %v6415
    %6417 = vdwg.mxu0
    %v6418 = vadd.f32 %v6340, %v6414
    %v6419 = vadd.f32 %v6341, %v6416
    %s6420 = scalar_lea.vmem %s8, 16
    %v6421 = vld [vmem:[%s6420] sm:$0xff]
    %v6423 = vsel %vm4046, %v6421, 0
    %6425 = vmatprep.subr.mxu0 %v5789
    %6426 = vmatpush1.msra.mxu0 %v5787
    %6427 = vmatprep.subr.mxu0 %v5795
    %6428 = vmatpush1.msra.mxu0 %v5793
    %6429 = vmatprep.subr.mxu0 0.0
    %6430 = vmatpush1.msra.mxu0 0.0
    %6431 = vmatprep.subr.mxu0 0.0
    %6432 = vmatpush1.msra.mxu0 0.0
    %6433 = vmatprep.subr.mxu0 0.0
    %6434 = vmatpush1.msra.mxu0 0.0
    %6435 = vmatprep.subr.mxu0 0.0
    %6436 = vmatpush1.msra.mxu0 0.0
    %6437 = vmatprep.subr.mxu0 0.0
    %6438 = vmatpush1.msra.mxu0 0.0
    %6439 = vmatprep.subr.mxu0 0.0
    %6440 = vmatpush1.msra.mxu0 0.0
    %6441 = vmatprep.subr.mxu0 0.0
    %6442 = vmatpush1.msra.mxu0 0.0
    %6443 = vmatprep.subr.mxu0 0.0
    %6444 = vmatpush1.msra.mxu0 0.0
    %6445 = vmatprep.subr.mxu0 0.0
    %6446 = vmatpush1.msra.mxu0 0.0
    %6447 = vmatprep.subr.mxu0 0.0
    %6448 = vmatpush1.msra.mxu0 0.0
    %6449 = vmatprep.subr.mxu0 0.0
    %6450 = vmatpush1.msra.mxu0 0.0
    %6451 = vmatprep.subr.mxu0 0.0
    %6452 = vmatpush1.msra.mxu0 0.0
    %6453 = vmatprep.subr.mxu0 0.0
    %6454 = vmatpush1.msra.mxu0 0.0
    %6455 = vmatprep.subr.mxu0 0.0
    %6456 = vmatpush1.msra.mxu0 0.0
    %6457 = vmatprep.subr.mxu0 0.0
    %6458 = vmatpush1.msra.mxu0 0.0
    %6459 = vmatprep.subr.mxu0 0.0
    %6460 = vmatpush1.msra.mxu0 0.0
    %6461 = vmatprep.subr.mxu0 0.0
    %6462 = vmatpush1.msra.mxu0 0.0
    %6463 = vmatprep.subr.mxu0 0.0
    %6464 = vmatpush1.msra.mxu0 0.0
    %6465 = vmatprep.subr.mxu0 0.0
    %6466 = vmatpush1.msra.mxu0 0.0
    %6467 = vmatprep.subr.mxu0 0.0
    %6468 = vmatpush1.msra.mxu0 0.0
    %6469 = vmatprep.subr.mxu0 0.0
    %6470 = vmatpush1.msra.mxu0 0.0
    %6471 = vmatprep.subr.mxu0 0.0
    %6472 = vmatpush1.msra.mxu0 0.0
    %6473 = vmatprep.subr.mxu0 0.0
    %6474 = vmatpush1.msra.mxu0 0.0
    %6475 = vmatprep.subr.mxu0 0.0
    %6476 = vmatpush1.msra.mxu0 0.0
    %6477 = vmatprep.subr.mxu0 0.0
    %6478 = vmatpush1.msra.mxu0 0.0
    %6479 = vmatprep.subr.mxu0 0.0
    %6480 = vmatpush1.msra.mxu0 0.0
    %6481 = vmatprep.subr.mxu0 0.0
    %6482 = vmatpush1.msra.mxu0 0.0
    %6483 = vmatprep.subr.mxu0 0.0
    %6484 = vmatpush1.msra.mxu0 0.0
    %6485 = vmatprep.subr.mxu0 0.0
    %6486 = vmatpush1.msra.mxu0 0.0
    %6487 = vmatprep.subr.mxu0 0.0
    %6488 = vmatpush1.msra.mxu0 0.0
    %6489 = vmatprep.mubr.f32.mxu0 0.0
    %6490 = vmatmul.mubr.f32.gmra.mrb[0].mxu0 %v6423
    %v6491 = vpop.f32.mrb[0].mxu0
    %v6492 = vadd.f32 0.0, %v6491
    %v6493 = vpop.f32.mrb[0].mxu0
    %v6494 = vadd.f32 0.0, %v6493
    %6495 = vdwg.mxu0
    %v6496 = vadd.f32 %v6418, %v6492
    %v6497 = vadd.f32 %v6419, %v6494
    %s6498 = scalar_lea.vmem %s8, 24
    %v6499 = vld [vmem:[%s6498] sm:$0xff]
    %v6501 = vsel %vm4046, %v6499, 0
    %6503 = vmatprep.subr.mxu0 %v5866
    %6504 = vmatpush1.msra.mxu0 %v5864
    %6505 = vmatprep.subr.mxu0 %v5872
    %6506 = vmatpush1.msra.mxu0 %v5870
    %6507 = vmatprep.subr.mxu0 0.0
    %6508 = vmatpush1.msra.mxu0 0.0
    %6509 = vmatprep.subr.mxu0 0.0
    %6510 = vmatpush1.msra.mxu0 0.0
    %6511 = vmatprep.subr.mxu0 0.0
    %6512 = vmatpush1.msra.mxu0 0.0
    %6513 = vmatprep.subr.mxu0 0.0
    %6514 = vmatpush1.msra.mxu0 0.0
    %6515 = vmatprep.subr.mxu0 0.0
    %6516 = vmatpush1.msra.mxu0 0.0
    %6517 = vmatprep.subr.mxu0 0.0
    %6518 = vmatpush1.msra.mxu0 0.0
    %6519 = vmatprep.subr.mxu0 0.0
    %6520 = vmatpush1.msra.mxu0 0.0
    %6521 = vmatprep.subr.mxu0 0.0
    %6522 = vmatpush1.msra.mxu0 0.0
    %6523 = vmatprep.subr.mxu0 0.0
    %6524 = vmatpush1.msra.mxu0 0.0
    %6525 = vmatprep.subr.mxu0 0.0
    %6526 = vmatpush1.msra.mxu0 0.0
    %6527 = vmatprep.subr.mxu0 0.0
    %6528 = vmatpush1.msra.mxu0 0.0
    %6529 = vmatprep.subr.mxu0 0.0
    %6530 = vmatpush1.msra.mxu0 0.0
    %6531 = vmatprep.subr.mxu0 0.0
    %6532 = vmatpush1.msra.mxu0 0.0
    %6533 = vmatprep.subr.mxu0 0.0
    %6534 = vmatpush1.msra.mxu0 0.0
    %6535 = vmatprep.subr.mxu0 0.0
    %6536 = vmatpush1.msra.mxu0 0.0
    %6537 = vmatprep.subr.mxu0 0.0
    %6538 = vmatpush1.msra.mxu0 0.0
    %6539 = vmatprep.subr.mxu0 0.0
    %6540 = vmatpush1.msra.mxu0 0.0
    %6541 = vmatprep.subr.mxu0 0.0
    %6542 = vmatpush1.msra.mxu0 0.0
    %6543 = vmatprep.subr.mxu0 0.0
    %6544 = vmatpush1.msra.mxu0 0.0
    %6545 = vmatprep.subr.mxu0 0.0
    %6546 = vmatpush1.msra.mxu0 0.0
    %6547 = vmatprep.subr.mxu0 0.0
    %6548 = vmatpush1.msra.mxu0 0.0
    %6549 = vmatprep.subr.mxu0 0.0
    %6550 = vmatpush1.msra.mxu0 0.0
    %6551 = vmatprep.subr.mxu0 0.0
    %6552 = vmatpush1.msra.mxu0 0.0
    %6553 = vmatprep.subr.mxu0 0.0
    %6554 = vmatpush1.msra.mxu0 0.0
    %6555 = vmatprep.subr.mxu0 0.0
    %6556 = vmatpush1.msra.mxu0 0.0
    %6557 = vmatprep.subr.mxu0 0.0
    %6558 = vmatpush1.msra.mxu0 0.0
    %6559 = vmatprep.subr.mxu0 0.0
    %6560 = vmatpush1.msra.mxu0 0.0
    %6561 = vmatprep.subr.mxu0 0.0
    %6562 = vmatpush1.msra.mxu0 0.0
    %6563 = vmatprep.subr.mxu0 0.0
    %6564 = vmatpush1.msra.mxu0 0.0
    %6565 = vmatprep.subr.mxu0 0.0
    %6566 = vmatpush1.msra.mxu0 0.0
    %6567 = vmatprep.mubr.f32.mxu0 0.0
    %6568 = vmatmul.mubr.f32.gmra.mrb[0].mxu0 %v6501
    %v6569 = vpop.f32.mrb[0].mxu0
    %v6570 = vadd.f32 0.0, %v6569
    %v6571 = vpop.f32.mrb[0].mxu0
    %v6572 = vadd.f32 0.0, %v6571
    %6573 = vdwg.mxu0
    %v6574 = vadd.f32 %v6496, %v6570
    %v6575 = vadd.f32 %v6497, %v6572
    %s6576 = scalar_lea.vmem %s8, 32
    %v6577 = vld [vmem:[%s6576] sm:$0xff]
    %v6579 = vsel %vm4046, %v6577, 0
    %6581 = vmatprep.subr.mxu0 %v5943
    %6582 = vmatpush1.msra.mxu0 %v5941
    %6583 = vmatprep.subr.mxu0 %v5949
    %6584 = vmatpush1.msra.mxu0 %v5947
    %6585 = vmatprep.subr.mxu0 0.0
    %6586 = vmatpush1.msra.mxu0 0.0
    %6587 = vmatprep.subr.mxu0 0.0
    %6588 = vmatpush1.msra.mxu0 0.0
    %6589 = vmatprep.subr.mxu0 0.0
    %6590 = vmatpush1.msra.mxu0 0.0
    %6591 = vmatprep.subr.mxu0 0.0
    %6592 = vmatpush1.msra.mxu0 0.0
    %6593 = vmatprep.subr.mxu0 0.0
    %6594 = vmatpush1.msra.mxu0 0.0
    %6595 = vmatprep.subr.mxu0 0.0
    %6596 = vmatpush1.msra.mxu0 0.0
    %6597 = vmatprep.subr.mxu0 0.0
    %6598 = vmatpush1.msra.mxu0 0.0
    %6599 = vmatprep.subr.mxu0 0.0
    %6600 = vmatpush1.msra.mxu0 0.0
    %6601 = vmatprep.subr.mxu0 0.0
    %6602 = vmatpush1.msra.mxu0 0.0
    %6603 = vmatprep.subr.mxu0 0.0
    %6604 = vmatpush1.msra.mxu0 0.0
    %6605 = vmatprep.subr.mxu0 0.0
    %6606 = vmatpush1.msra.mxu0 0.0
    %6607 = vmatprep.subr.mxu0 0.0
    %6608 = vmatpush1.msra.mxu0 0.0
    %6609 = vmatprep.subr.mxu0 0.0
    %6610 = vmatpush1.msra.mxu0 0.0
    %6611 = vmatprep.subr.mxu0 0.0
    %6612 = vmatpush1.msra.mxu0 0.0
    %6613 = vmatprep.subr.mxu0 0.0
    %6614 = vmatpush1.msra.mxu0 0.0
    %6615 = vmatprep.subr.mxu0 0.0
    %6616 = vmatpush1.msra.mxu0 0.0
    %6617 = vmatprep.subr.mxu0 0.0
    %6618 = vmatpush1.msra.mxu0 0.0
    %6619 = vmatprep.subr.mxu0 0.0
    %6620 = vmatpush1.msra.mxu0 0.0
    %6621 = vmatprep.subr.mxu0 0.0
    %6622 = vmatpush1.msra.mxu0 0.0
    %6623 = vmatprep.subr.mxu0 0.0
    %6624 = vmatpush1.msra.mxu0 0.0
    %6625 = vmatprep.subr.mxu0 0.0
    %6626 = vmatpush1.msra.mxu0 0.0
    %6627 = vmatprep.subr.mxu0 0.0
    %6628 = vmatpush1.msra.mxu0 0.0
    %6629 = vmatprep.subr.mxu0 0.0
    %6630 = vmatpush1.msra.mxu0 0.0
    %6631 = vmatprep.subr.mxu0 0.0
    %6632 = vmatpush1.msra.mxu0 0.0
    %6633 = vmatprep.subr.mxu0 0.0
    %6634 = vmatpush1.msra.mxu0 0.0
    %6635 = vmatprep.subr.mxu0 0.0
    %6636 = vmatpush1.msra.mxu0 0.0
    %6637 = vmatprep.subr.mxu0 0.0
    %6638 = vmatpush1.msra.mxu0 0.0
    %6639 = vmatprep.subr.mxu0 0.0
    %6640 = vmatpush1.msra.mxu0 0.0
    %6641 = vmatprep.subr.mxu0 0.0
    %6642 = vmatpush1.msra.mxu0 0.0
    %6643 = vmatprep.subr.mxu0 0.0
    %6644 = vmatpush1.msra.mxu0 0.0
    %6645 = vmatprep.mubr.f32.mxu0 0.0
    %6646 = vmatmul.mubr.f32.gmra.mrb[0].mxu0 %v6579
    %v6647 = vpop.f32.mrb[0].mxu0
    %v6648 = vadd.f32 0.0, %v6647
    %v6649 = vpop.f32.mrb[0].mxu0
    %v6650 = vadd.f32 0.0, %v6649
    %6651 = vdwg.mxu0
    %v6652 = vadd.f32 %v6574, %v6648
    %v6653 = vadd.f32 %v6575, %v6650
    %s6654 = scalar_lea.vmem %s8, 40
    %v6655 = vld [vmem:[%s6654] sm:$0xff]
    %v6657 = vsel %vm4046, %v6655, 0
    %6659 = vmatprep.subr.mxu0 %v6020
    %6660 = vmatpush1.msra.mxu0 %v6018
    %6661 = vmatprep.subr.mxu0 %v6026
    %6662 = vmatpush1.msra.mxu0 %v6024
    %6663 = vmatprep.subr.mxu0 0.0
    %6664 = vmatpush1.msra.mxu0 0.0
    %6665 = vmatprep.subr.mxu0 0.0
    %6666 = vmatpush1.msra.mxu0 0.0
    %6667 = vmatprep.subr.mxu0 0.0
    %6668 = vmatpush1.msra.mxu0 0.0
    %6669 = vmatprep.subr.mxu0 0.0
    %6670 = vmatpush1.msra.mxu0 0.0
    %6671 = vmatprep.subr.mxu0 0.0
    %6672 = vmatpush1.msra.mxu0 0.0
    %6673 = vmatprep.subr.mxu0 0.0
    %6674 = vmatpush1.msra.mxu0 0.0
    %6675 = vmatprep.subr.mxu0 0.0
    %6676 = vmatpush1.msra.mxu0 0.0
    %6677 = vmatprep.subr.mxu0 0.0
    %6678 = vmatpush1.msra.mxu0 0.0
    %6679 = vmatprep.subr.mxu0 0.0
    %6680 = vmatpush1.msra.mxu0 0.0
    %6681 = vmatprep.subr.mxu0 0.0
    %6682 = vmatpush1.msra.mxu0 0.0
    %6683 = vmatprep.subr.mxu0 0.0
    %6684 = vmatpush1.msra.mxu0 0.0
    %6685 = vmatprep.subr.mxu0 0.0
    %6686 = vmatpush1.msra.mxu0 0.0
    %6687 = vmatprep.subr.mxu0 0.0
    %6688 = vmatpush1.msra.mxu0 0.0
    %6689 = vmatprep.subr.mxu0 0.0
    %6690 = vmatpush1.msra.mxu0 0.0
    %6691 = vmatprep.subr.mxu0 0.0
    %6692 = vmatpush1.msra.mxu0 0.0
    %6693 = vmatprep.subr.mxu0 0.0
    %6694 = vmatpush1.msra.mxu0 0.0
    %6695 = vmatprep.subr.mxu0 0.0
    %6696 = vmatpush1.msra.mxu0 0.0
    %6697 = vmatprep.subr.mxu0 0.0
    %6698 = vmatpush1.msra.mxu0 0.0
    %6699 = vmatprep.subr.mxu0 0.0
    %6700 = vmatpush1.msra.mxu0 0.0
    %6701 = vmatprep.subr.mxu0 0.0
    %6702 = vmatpush1.msra.mxu0 0.0
    %6703 = vmatprep.subr.mxu0 0.0
    %6704 = vmatpush1.msra.mxu0 0.0
    %6705 = vmatprep.subr.mxu0 0.0
    %6706 = vmatpush1.msra.mxu0 0.0
    %6707 = vmatprep.subr.mxu0 0.0
    %6708 = vmatpush1.msra.mxu0 0.0
    %6709 = vmatprep.subr.mxu0 0.0
    %6710 = vmatpush1.msra.mxu0 0.0
    %6711 = vmatprep.subr.mxu0 0.0
    %6712 = vmatpush1.msra.mxu0 0.0
    %6713 = vmatprep.subr.mxu0 0.0
    %6714 = vmatpush1.msra.mxu0 0.0
    %6715 = vmatprep.subr.mxu0 0.0
    %6716 = vmatpush1.msra.mxu0 0.0
    %6717 = vmatprep.subr.mxu0 0.0
    %6718 = vmatpush1.msra.mxu0 0.0
    %6719 = vmatprep.subr.mxu0 0.0
    %6720 = vmatpush1.msra.mxu0 0.0
    %6721 = vmatprep.subr.mxu0 0.0
    %6722 = vmatpush1.msra.mxu0 0.0
    %6723 = vmatprep.mubr.f32.mxu0 0.0
    %6724 = vmatmul.mubr.f32.gmra.mrb[0].mxu0 %v6657
    %v6725 = vpop.f32.mrb[0].mxu0
    %v6726 = vadd.f32 0.0, %v6725
    %v6727 = vpop.f32.mrb[0].mxu0
    %v6728 = vadd.f32 0.0, %v6727
    %6729 = vdwg.mxu0
    %v6730 = vadd.f32 %v6652, %v6726
    %v6731 = vadd.f32 %v6653, %v6728
    %s6732 = scalar_lea.vmem %s8, 48
    %v6733 = vld [vmem:[%s6732] sm:$0xff]
    %v6735 = vsel %vm4046, %v6733, 0
    %6737 = vmatprep.subr.mxu0 %v6097
    %6738 = vmatpush1.msra.mxu0 %v6095
    %6739 = vmatprep.subr.mxu0 %v6103
    %6740 = vmatpush1.msra.mxu0 %v6101
    %6741 = vmatprep.subr.mxu0 0.0
    %6742 = vmatpush1.msra.mxu0 0.0
    %6743 = vmatprep.subr.mxu0 0.0
    %6744 = vmatpush1.msra.mxu0 0.0
    %6745 = vmatprep.subr.mxu0 0.0
    %6746 = vmatpush1.msra.mxu0 0.0
    %6747 = vmatprep.subr.mxu0 0.0
    %6748 = vmatpush1.msra.mxu0 0.0
    %6749 = vmatprep.subr.mxu0 0.0
    %6750 = vmatpush1.msra.mxu0 0.0
    %6751 = vmatprep.subr.mxu0 0.0
    %6752 = vmatpush1.msra.mxu0 0.0
    %6753 = vmatprep.subr.mxu0 0.0
    %6754 = vmatpush1.msra.mxu0 0.0
    %6755 = vmatprep.subr.mxu0 0.0
    %6756 = vmatpush1.msra.mxu0 0.0
    %6757 = vmatprep.subr.mxu0 0.0
    %6758 = vmatpush1.msra.mxu0 0.0
    %6759 = vmatprep.subr.mxu0 0.0
    %6760 = vmatpush1.msra.mxu0 0.0
    %6761 = vmatprep.subr.mxu0 0.0
    %6762 = vmatpush1.msra.mxu0 0.0
    %6763 = vmatprep.subr.mxu0 0.0
    %6764 = vmatpush1.msra.mxu0 0.0
    %6765 = vmatprep.subr.mxu0 0.0
    %6766 = vmatpush1.msra.mxu0 0.0
    %6767 = vmatprep.subr.mxu0 0.0
    %6768 = vmatpush1.msra.mxu0 0.0
    %6769 = vmatprep.subr.mxu0 0.0
    %6770 = vmatpush1.msra.mxu0 0.0
    %6771 = vmatprep.subr.mxu0 0.0
    %6772 = vmatpush1.msra.mxu0 0.0
    %6773 = vmatprep.subr.mxu0 0.0
    %6774 = vmatpush1.msra.mxu0 0.0
    %6775 = vmatprep.subr.mxu0 0.0
    %6776 = vmatpush1.msra.mxu0 0.0
    %6777 = vmatprep.subr.mxu0 0.0
    %6778 = vmatpush1.msra.mxu0 0.0
    %6779 = vmatprep.subr.mxu0 0.0
    %6780 = vmatpush1.msra.mxu0 0.0
    %6781 = vmatprep.subr.mxu0 0.0
    %6782 = vmatpush1.msra.mxu0 0.0
    %6783 = vmatprep.subr.mxu0 0.0
    %6784 = vmatpush1.msra.mxu0 0.0
    %6785 = vmatprep.subr.mxu0 0.0
    %6786 = vmatpush1.msra.mxu0 0.0
    %6787 = vmatprep.subr.mxu0 0.0
    %6788 = vmatpush1.msra.mxu0 0.0
    %6789 = vmatprep.subr.mxu0 0.0
    %6790 = vmatpush1.msra.mxu0 0.0
    %6791 = vmatprep.subr.mxu0 0.0
    %6792 = vmatpush1.msra.mxu0 0.0
    %6793 = vmatprep.subr.mxu0 0.0
    %6794 = vmatpush1.msra.mxu0 0.0
    %6795 = vmatprep.subr.mxu0 0.0
    %6796 = vmatpush1.msra.mxu0 0.0
    %6797 = vmatprep.subr.mxu0 0.0
    %6798 = vmatpush1.msra.mxu0 0.0
    %6799 = vmatprep.subr.mxu0 0.0
    %6800 = vmatpush1.msra.mxu0 0.0
    %6801 = vmatprep.mubr.f32.mxu0 0.0
    %6802 = vmatmul.mubr.f32.gmra.mrb[0].mxu0 %v6735
    %v6803 = vpop.f32.mrb[0].mxu0
    %v6804 = vadd.f32 0.0, %v6803
    %v6805 = vpop.f32.mrb[0].mxu0
    %v6806 = vadd.f32 0.0, %v6805
    %6807 = vdwg.mxu0
    %v6808 = vadd.f32 %v6730, %v6804
    %v6809 = vadd.f32 %v6731, %v6806
    %s6810 = scalar_lea.vmem %s8, 56
    %v6811 = vld [vmem:[%s6810] sm:$0xff]
    %v6813 = vsel %vm4046, %v6811, 0
    %6815 = vmatprep.subr.mxu0 %v6174
    %6816 = vmatpush1.msra.mxu0 %v6172
    %6817 = vmatprep.subr.mxu0 %v6180
    %6818 = vmatpush1.msra.mxu0 %v6178
    %6819 = vmatprep.subr.mxu0 0.0
    %6820 = vmatpush1.msra.mxu0 0.0
    %6821 = vmatprep.subr.mxu0 0.0
    %6822 = vmatpush1.msra.mxu0 0.0
    %6823 = vmatprep.subr.mxu0 0.0
    %6824 = vmatpush1.msra.mxu0 0.0
    %6825 = vmatprep.subr.mxu0 0.0
    %6826 = vmatpush1.msra.mxu0 0.0
    %6827 = vmatprep.subr.mxu0 0.0
    %6828 = vmatpush1.msra.mxu0 0.0
    %6829 = vmatprep.subr.mxu0 0.0
    %6830 = vmatpush1.msra.mxu0 0.0
    %6831 = vmatprep.subr.mxu0 0.0
    %6832 = vmatpush1.msra.mxu0 0.0
    %6833 = vmatprep.subr.mxu0 0.0
    %6834 = vmatpush1.msra.mxu0 0.0
    %6835 = vmatprep.subr.mxu0 0.0
    %6836 = vmatpush1.msra.mxu0 0.0
    %6837 = vmatprep.subr.mxu0 0.0
    %6838 = vmatpush1.msra.mxu0 0.0
    %6839 = vmatprep.subr.mxu0 0.0
    %6840 = vmatpush1.msra.mxu0 0.0
    %6841 = vmatprep.subr.mxu0 0.0
    %6842 = vmatpush1.msra.mxu0 0.0
    %6843 = vmatprep.subr.mxu0 0.0
    %6844 = vmatpush1.msra.mxu0 0.0
    %6845 = vmatprep.subr.mxu0 0.0
    %6846 = vmatpush1.msra.mxu0 0.0
    %6847 = vmatprep.subr.mxu0 0.0
    %6848 = vmatpush1.msra.mxu0 0.0
    %6849 = vmatprep.subr.mxu0 0.0
    %6850 = vmatpush1.msra.mxu0 0.0
    %6851 = vmatprep.subr.mxu0 0.0
    %6852 = vmatpush1.msra.mxu0 0.0
    %6853 = vmatprep.subr.mxu0 0.0
    %6854 = vmatpush1.msra.mxu0 0.0
    %6855 = vmatprep.subr.mxu0 0.0
    %6856 = vmatpush1.msra.mxu0 0.0
    %6857 = vmatprep.subr.mxu0 0.0
    %6858 = vmatpush1.msra.mxu0 0.0
    %6859 = vmatprep.subr.mxu0 0.0
    %6860 = vmatpush1.msra.mxu0 0.0
    %6861 = vmatprep.subr.mxu0 0.0
    %6862 = vmatpush1.msra.mxu0 0.0
    %6863 = vmatprep.subr.mxu0 0.0
    %6864 = vmatpush1.msra.mxu0 0.0
    %6865 = vmatprep.subr.mxu0 0.0
    %6866 = vmatpush1.msra.mxu0 0.0
    %6867 = vmatprep.subr.mxu0 0.0
    %6868 = vmatpush1.msra.mxu0 0.0
    %6869 = vmatprep.subr.mxu0 0.0
    %6870 = vmatpush1.msra.mxu0 0.0
    %6871 = vmatprep.subr.mxu0 0.0
    %6872 = vmatpush1.msra.mxu0 0.0
    %6873 = vmatprep.subr.mxu0 0.0
    %6874 = vmatpush1.msra.mxu0 0.0
    %6875 = vmatprep.subr.mxu0 0.0
    %6876 = vmatpush1.msra.mxu0 0.0
    %6877 = vmatprep.subr.mxu0 0.0
    %6878 = vmatpush1.msra.mxu0 0.0
    %6879 = vmatprep.mubr.f32.mxu0 0.0
    %6880 = vmatmul.mubr.f32.gmra.mrb[0].mxu0 %v6813
    %v6881 = vpop.f32.mrb[0].mxu0
    %v6882 = vadd.f32 0.0, %v6881
    %v6883 = vpop.f32.mrb[0].mxu0
    %v6884 = vadd.f32 0.0, %v6883
    %6885 = vdwg.mxu0
    %v6886 = vadd.f32 %v6808, %v6882
    %v6887 = vadd.f32 %v6809, %v6884
    %s6888 = scalar_lea.vmem %s8, 64
    %v6889 = vld [vmem:[%s6888] sm:$0xff]
    %v6891 = vsel %vm4046, %v6889, 0
    %6893 = vmatprep.subr.mxu0 %v6251
    %6894 = vmatpush1.msra.mxu0 %v6249
    %6895 = vmatprep.subr.mxu0 %v6257
    %6896 = vmatpush1.msra.mxu0 %v6255
    %6897 = vmatprep.subr.mxu0 0.0
    %6898 = vmatpush1.msra.mxu0 0.0
    %6899 = vmatprep.subr.mxu0 0.0
    %6900 = vmatpush1.msra.mxu0 0.0
    %6901 = vmatprep.subr.mxu0 0.0
    %6902 = vmatpush1.msra.mxu0 0.0
    %6903 = vmatprep.subr.mxu0 0.0
    %6904 = vmatpush1.msra.mxu0 0.0
    %6905 = vmatprep.subr.mxu0 0.0
    %6906 = vmatpush1.msra.mxu0 0.0
    %6907 = vmatprep.subr.mxu0 0.0
    %6908 = vmatpush1.msra.mxu0 0.0
    %6909 = vmatprep.subr.mxu0 0.0
    %6910 = vmatpush1.msra.mxu0 0.0
    %6911 = vmatprep.subr.mxu0 0.0
    %6912 = vmatpush1.msra.mxu0 0.0
    %6913 = vmatprep.subr.mxu0 0.0
    %6914 = vmatpush1.msra.mxu0 0.0
    %6915 = vmatprep.subr.mxu0 0.0
    %6916 = vmatpush1.msra.mxu0 0.0
    %6917 = vmatprep.subr.mxu0 0.0
    %6918 = vmatpush1.msra.mxu0 0.0
    %6919 = vmatprep.subr.mxu0 0.0
    %6920 = vmatpush1.msra.mxu0 0.0
    %6921 = vmatprep.subr.mxu0 0.0
    %6922 = vmatpush1.msra.mxu0 0.0
    %6923 = vmatprep.subr.mxu0 0.0
    %6924 = vmatpush1.msra.mxu0 0.0
    %6925 = vmatprep.subr.mxu0 0.0
    %6926 = vmatpush1.msra.mxu0 0.0
    %6927 = vmatprep.subr.mxu0 0.0
    %6928 = vmatpush1.msra.mxu0 0.0
    %6929 = vmatprep.subr.mxu0 0.0
    %6930 = vmatpush1.msra.mxu0 0.0
    %6931 = vmatprep.subr.mxu0 0.0
    %6932 = vmatpush1.msra.mxu0 0.0
    %6933 = vmatprep.subr.mxu0 0.0
    %6934 = vmatpush1.msra.mxu0 0.0
    %6935 = vmatprep.subr.mxu0 0.0
    %6936 = vmatpush1.msra.mxu0 0.0
    %6937 = vmatprep.subr.mxu0 0.0
    %6938 = vmatpush1.msra.mxu0 0.0
    %6939 = vmatprep.subr.mxu0 0.0
    %6940 = vmatpush1.msra.mxu0 0.0
    %6941 = vmatprep.subr.mxu0 0.0
    %6942 = vmatpush1.msra.mxu0 0.0
    %6943 = vmatprep.subr.mxu0 0.0
    %6944 = vmatpush1.msra.mxu0 0.0
    %6945 = vmatprep.subr.mxu0 0.0
    %6946 = vmatpush1.msra.mxu0 0.0
    %6947 = vmatprep.subr.mxu0 0.0
    %6948 = vmatpush1.msra.mxu0 0.0
    %6949 = vmatprep.subr.mxu0 0.0
    %6950 = vmatpush1.msra.mxu0 0.0
    %6951 = vmatprep.subr.mxu0 0.0
    %6952 = vmatpush1.msra.mxu0 0.0
    %6953 = vmatprep.subr.mxu0 0.0
    %6954 = vmatpush1.msra.mxu0 0.0
    %6955 = vmatprep.subr.mxu0 0.0
    %6956 = vmatpush1.msra.mxu0 0.0
    %6957 = vmatprep.mubr.f32.mxu0 0.0
    %6958 = vmatmul.mubr.f32.gmra.mrb[0].mxu0 %v6891
    %v6959 = vpop.f32.mrb[0].mxu0
    %v6960 = vadd.f32 0.0, %v6959
    %v6961 = vpop.f32.mrb[0].mxu0
    %v6962 = vadd.f32 0.0, %v6961
    %6963 = vdwg.mxu0
    %v6964 = vadd.f32 %v6886, %v6960
    %v6965 = vadd.f32 %v6887, %v6962
    %6966 = vmatprep.subr.mxu0 %v2116
    %6967 = vmatpush1.msra.mxu0 %v2115
    %6968 = vmatprep.subr.mxu0 %v2124
    %6969 = vmatpush1.msra.mxu0 %v2123
    %6970 = vmatprep.subr.mxu0 %v2132
    %6971 = vmatpush1.msra.mxu0 %v2131
    %6972 = vmatprep.subr.mxu0 %v2140
    %6973 = vmatpush1.msra.mxu0 %v2139
    %6974 = vmatprep.subr.mxu0 %v2148
    %6975 = vmatpush1.msra.mxu0 %v2147
    %6976 = vmatprep.subr.mxu0 %v2156
    %6977 = vmatpush1.msra.mxu0 %v2155
    %6978 = vmatprep.subr.mxu0 %v2164
    %6979 = vmatpush1.msra.mxu0 %v2163
    %6980 = vmatprep.subr.mxu0 %v2172
    %6981 = vmatpush1.msra.mxu0 %v2171
    %6982 = vmatprep.subr.mxu0 %v2180
    %6983 = vmatpush1.msra.mxu0 %v2179
    %6984 = vmatprep.subr.mxu0 %v2188
    %6985 = vmatpush1.msra.mxu0 %v2187
    %6986 = vmatprep.subr.mxu0 %v2196
    %6987 = vmatpush1.msra.mxu0 %v2195
    %6988 = vmatprep.subr.mxu0 %v2204
    %6989 = vmatpush1.msra.mxu0 %v2203
    %6990 = vmatprep.subr.mxu0 %v2212
    %6991 = vmatpush1.msra.mxu0 %v2211
    %6992 = vmatprep.subr.mxu0 %v2220
    %6993 = vmatpush1.msra.mxu0 %v2219
    %6994 = vmatprep.subr.mxu0 %v2228
    %6995 = vmatpush1.msra.mxu0 %v2227
    %6996 = vmatprep.subr.mxu0 %v2236
    %6997 = vmatpush1.msra.mxu0 %v2235
    %6998 = vmatprep.subr.mxu0 %v2244
    %6999 = vmatpush1.msra.mxu0 %v2243
    %7000 = vmatprep.subr.mxu0 %v2252
    %7001 = vmatpush1.msra.mxu0 %v2251
    %7002 = vmatprep.subr.mxu0 %v2260
    %7003 = vmatpush1.msra.mxu0 %v2259
    %7004 = vmatprep.subr.mxu0 %v2268
    %7005 = vmatpush1.msra.mxu0 %v2267
    %7006 = vmatprep.subr.mxu0 %v2276
    %7007 = vmatpush1.msra.mxu0 %v2275
    %7008 = vmatprep.subr.mxu0 %v2284
    %7009 = vmatpush1.msra.mxu0 %v2283
    %7010 = vmatprep.subr.mxu0 %v2292
    %7011 = vmatpush1.msra.mxu0 %v2291
    %7012 = vmatprep.subr.mxu0 %v2300
    %7013 = vmatpush1.msra.mxu0 %v2299
    %7014 = vmatprep.subr.mxu0 %v2308
    %7015 = vmatpush1.msra.mxu0 %v2307
    %7016 = vmatprep.subr.mxu0 %v2316
    %7017 = vmatpush1.msra.mxu0 %v2315
    %7018 = vmatprep.subr.mxu0 %v2324
    %7019 = vmatpush1.msra.mxu0 %v2323
    %7020 = vmatprep.subr.mxu0 %v2332
    %7021 = vmatpush1.msra.mxu0 %v2331
    %7022 = vmatprep.subr.mxu0 %v2340
    %7023 = vmatpush1.msra.mxu0 %v2339
    %7024 = vmatprep.subr.mxu0 %v2348
    %7025 = vmatpush1.msra.mxu0 %v2347
    %7026 = vmatprep.subr.mxu0 %v2356
    %7027 = vmatpush1.msra.mxu0 %v2355
    %7028 = vmatprep.subr.mxu0 %v2364
    %7029 = vmatpush1.msra.mxu0 %v2363
    %7030 = vmatprep.mubr.f32.mxu0 %v6965
    %7031 = vmatmul.mubr.f32.gmra.mrb[0].mxu0 %v6964
    %v7032 = vpop.f32.mrb[0].mxu0
    %v7033 = vadd.f32 0.0, %v7032
    %v7034 = vpop.f32.mrb[0].mxu0
    %v7035 = vadd.f32 0.0, %v7034
    %7036 = vdwg.mxu0
    %7037 = vmatprep.subr.mxu0 %v2118
    %7038 = vmatpush1.msra.mxu0 %v2117
    %7039 = vmatprep.subr.mxu0 %v2126
    %7040 = vmatpush1.msra.mxu0 %v2125
    %7041 = vmatprep.subr.mxu0 %v2134
    %7042 = vmatpush1.msra.mxu0 %v2133
    %7043 = vmatprep.subr.mxu0 %v2142
    %7044 = vmatpush1.msra.mxu0 %v2141
    %7045 = vmatprep.subr.mxu0 %v2150
    %7046 = vmatpush1.msra.mxu0 %v2149
    %7047 = vmatprep.subr.mxu0 %v2158
    %7048 = vmatpush1.msra.mxu0 %v2157
    %7049 = vmatprep.subr.mxu0 %v2166
    %7050 = vmatpush1.msra.mxu0 %v2165
    %7051 = vmatprep.subr.mxu0 %v2174
    %7052 = vmatpush1.msra.mxu0 %v2173
    %7053 = vmatprep.subr.mxu0 %v2182
    %7054 = vmatpush1.msra.mxu0 %v2181
    %7055 = vmatprep.subr.mxu0 %v2190
    %7056 = vmatpush1.msra.mxu0 %v2189
    %7057 = vmatprep.subr.mxu0 %v2198
    %7058 = vmatpush1.msra.mxu0 %v2197
    %7059 = vmatprep.subr.mxu0 %v2206
    %7060 = vmatpush1.msra.mxu0 %v2205
    %7061 = vmatprep.subr.mxu0 %v2214
    %7062 = vmatpush1.msra.mxu0 %v2213
    %7063 = vmatprep.subr.mxu0 %v2222
    %7064 = vmatpush1.msra.mxu0 %v2221
    %7065 = vmatprep.subr.mxu0 %v2230
    %7066 = vmatpush1.msra.mxu0 %v2229
    %7067 = vmatprep.subr.mxu0 %v2238
    %7068 = vmatpush1.msra.mxu0 %v2237
    %7069 = vmatprep.subr.mxu0 %v2246
    %7070 = vmatpush1.msra.mxu0 %v2245
    %7071 = vmatprep.subr.mxu0 %v2254
    %7072 = vmatpush1.msra.mxu0 %v2253
    %7073 = vmatprep.subr.mxu0 %v2262
    %7074 = vmatpush1.msra.mxu0 %v2261
    %7075 = vmatprep.subr.mxu0 %v2270
    %7076 = vmatpush1.msra.mxu0 %v2269
    %7077 = vmatprep.subr.mxu0 %v2278
    %7078 = vmatpush1.msra.mxu0 %v2277
    %7079 = vmatprep.subr.mxu0 %v2286
    %7080 = vmatpush1.msra.mxu0 %v2285
    %7081 = vmatprep.subr.mxu0 %v2294
    %7082 = vmatpush1.msra.mxu0 %v2293
    %7083 = vmatprep.subr.mxu0 %v2302
    %7084 = vmatpush1.msra.mxu0 %v2301
    %7085 = vmatprep.subr.mxu0 %v2310
    %7086 = vmatpush1.msra.mxu0 %v2309
    %7087 = vmatprep.subr.mxu0 %v2318
    %7088 = vmatpush1.msra.mxu0 %v2317
    %7089 = vmatprep.subr.mxu0 %v2326
    %7090 = vmatpush1.msra.mxu0 %v2325
    %7091 = vmatprep.subr.mxu0 %v2334
    %7092 = vmatpush1.msra.mxu0 %v2333
    %7093 = vmatprep.subr.mxu0 %v2342
    %7094 = vmatpush1.msra.mxu0 %v2341
    %7095 = vmatprep.subr.mxu0 %v2350
    %7096 = vmatpush1.msra.mxu0 %v2349
    %7097 = vmatprep.subr.mxu0 %v2358
    %7098 = vmatpush1.msra.mxu0 %v2357
    %7099 = vmatprep.subr.mxu0 %v2366
    %7100 = vmatpush1.msra.mxu0 %v2365
    %7101 = vmatprep.mubr.f32.mxu0 %v6965
    %7102 = vmatmul.mubr.f32.gmra.mrb[0].mxu0 %v6964
    %v7103 = vpop.f32.mrb[0].mxu0
    %v7104 = vadd.f32 0.0, %v7103
    %v7105 = vpop.f32.mrb[0].mxu0
    %v7106 = vadd.f32 0.0, %v7105
    %7107 = vdwg.mxu0
    %7108 = vmatprep.subr.mxu0 %v2120
    %7109 = vmatpush1.msra.mxu0 %v2119
    %7110 = vmatprep.subr.mxu0 %v2128
    %7111 = vmatpush1.msra.mxu0 %v2127
    %7112 = vmatprep.subr.mxu0 %v2136
    %7113 = vmatpush1.msra.mxu0 %v2135
    %7114 = vmatprep.subr.mxu0 %v2144
    %7115 = vmatpush1.msra.mxu0 %v2143
    %7116 = vmatprep.subr.mxu0 %v2152
    %7117 = vmatpush1.msra.mxu0 %v2151
    %7118 = vmatprep.subr.mxu0 %v2160
    %7119 = vmatpush1.msra.mxu0 %v2159
    %7120 = vmatprep.subr.mxu0 %v2168
    %7121 = vmatpush1.msra.mxu0 %v2167
    %7122 = vmatprep.subr.mxu0 %v2176
    %7123 = vmatpush1.msra.mxu0 %v2175
    %7124 = vmatprep.subr.mxu0 %v2184
    %7125 = vmatpush1.msra.mxu0 %v2183
    %7126 = vmatprep.subr.mxu0 %v2192
    %7127 = vmatpush1.msra.mxu0 %v2191
    %7128 = vmatprep.subr.mxu0 %v2200
    %7129 = vmatpush1.msra.mxu0 %v2199
    %7130 = vmatprep.subr.mxu0 %v2208
    %7131 = vmatpush1.msra.mxu0 %v2207
    %7132 = vmatprep.subr.mxu0 %v2216
    %7133 = vmatpush1.msra.mxu0 %v2215
    %7134 = vmatprep.subr.mxu0 %v2224
    %7135 = vmatpush1.msra.mxu0 %v2223
    %7136 = vmatprep.subr.mxu0 %v2232
    %7137 = vmatpush1.msra.mxu0 %v2231
    %7138 = vmatprep.subr.mxu0 %v2240
    %7139 = vmatpush1.msra.mxu0 %v2239
    %7140 = vmatprep.subr.mxu0 %v2248
    %7141 = vmatpush1.msra.mxu0 %v2247
    %7142 = vmatprep.subr.mxu0 %v2256
    %7143 = vmatpush1.msra.mxu0 %v2255
    %7144 = vmatprep.subr.mxu0 %v2264
    %7145 = vmatpush1.msra.mxu0 %v2263
    %7146 = vmatprep.subr.mxu0 %v2272
    %7147 = vmatpush1.msra.mxu0 %v2271
    %7148 = vmatprep.subr.mxu0 %v2280
    %7149 = vmatpush1.msra.mxu0 %v2279
    %7150 = vmatprep.subr.mxu0 %v2288
    %7151 = vmatpush1.msra.mxu0 %v2287
    %7152 = vmatprep.subr.mxu0 %v2296
    %7153 = vmatpush1.msra.mxu0 %v2295
    %7154 = vmatprep.subr.mxu0 %v2304
    %7155 = vmatpush1.msra.mxu0 %v2303
    %7156 = vmatprep.subr.mxu0 %v2312
    %7157 = vmatpush1.msra.mxu0 %v2311
    %7158 = vmatprep.subr.mxu0 %v2320
    %7159 = vmatpush1.msra.mxu0 %v2319
    %7160 = vmatprep.subr.mxu0 %v2328
    %7161 = vmatpush1.msra.mxu0 %v2327
    %7162 = vmatprep.subr.mxu0 %v2336
    %7163 = vmatpush1.msra.mxu0 %v2335
    %7164 = vmatprep.subr.mxu0 %v2344
    %7165 = vmatpush1.msra.mxu0 %v2343
    %7166 = vmatprep.subr.mxu0 %v2352
    %7167 = vmatpush1.msra.mxu0 %v2351
    %7168 = vmatprep.subr.mxu0 %v2360
    %7169 = vmatpush1.msra.mxu0 %v2359
    %7170 = vmatprep.subr.mxu0 %v2368
    %7171 = vmatpush1.msra.mxu0 %v2367
    %7172 = vmatprep.mubr.f32.mxu0 %v6965
    %7173 = vmatmul.mubr.f32.gmra.mrb[0].mxu0 %v6964
    %v7174 = vpop.f32.mrb[0].mxu0
    %v7175 = vadd.f32 0.0, %v7174
    %v7176 = vpop.f32.mrb[0].mxu0
    %v7177 = vadd.f32 0.0, %v7176
    %7178 = vdwg.mxu0
    %7179 = vmatprep.subr.mxu0 %v2122
    %7180 = vmatpush1.msra.mxu0 %v2121
    %7181 = vmatprep.subr.mxu0 %v2130
    %7182 = vmatpush1.msra.mxu0 %v2129
    %7183 = vmatprep.subr.mxu0 %v2138
    %7184 = vmatpush1.msra.mxu0 %v2137
    %7185 = vmatprep.subr.mxu0 %v2146
    %7186 = vmatpush1.msra.mxu0 %v2145
    %7187 = vmatprep.subr.mxu0 %v2154
    %7188 = vmatpush1.msra.mxu0 %v2153
    %7189 = vmatprep.subr.mxu0 %v2162
    %7190 = vmatpush1.msra.mxu0 %v2161
    %7191 = vmatprep.subr.mxu0 %v2170
    %7192 = vmatpush1.msra.mxu0 %v2169
    %7193 = vmatprep.subr.mxu0 %v2178
    %7194 = vmatpush1.msra.mxu0 %v2177
    %7195 = vmatprep.subr.mxu0 %v2186
    %7196 = vmatpush1.msra.mxu0 %v2185
    %7197 = vmatprep.subr.mxu0 %v2194
    %7198 = vmatpush1.msra.mxu0 %v2193
    %7199 = vmatprep.subr.mxu0 %v2202
    %7200 = vmatpush1.msra.mxu0 %v2201
    %7201 = vmatprep.subr.mxu0 %v2210
    %7202 = vmatpush1.msra.mxu0 %v2209
    %7203 = vmatprep.subr.mxu0 %v2218
    %7204 = vmatpush1.msra.mxu0 %v2217
    %7205 = vmatprep.subr.mxu0 %v2226
    %7206 = vmatpush1.msra.mxu0 %v2225
    %7207 = vmatprep.subr.mxu0 %v2234
    %7208 = vmatpush1.msra.mxu0 %v2233
    %7209 = vmatprep.subr.mxu0 %v2242
    %7210 = vmatpush1.msra.mxu0 %v2241
    %7211 = vmatprep.subr.mxu0 %v2250
    %7212 = vmatpush1.msra.mxu0 %v2249
    %7213 = vmatprep.subr.mxu0 %v2258
    %7214 = vmatpush1.msra.mxu0 %v2257
    %7215 = vmatprep.subr.mxu0 %v2266
    %7216 = vmatpush1.msra.mxu0 %v2265
    %7217 = vmatprep.subr.mxu0 %v2274
    %7218 = vmatpush1.msra.mxu0 %v2273
    %7219 = vmatprep.subr.mxu0 %v2282
    %7220 = vmatpush1.msra.mxu0 %v2281
    %7221 = vmatprep.subr.mxu0 %v2290
    %7222 = vmatpush1.msra.mxu0 %v2289
    %7223 = vmatprep.subr.mxu0 %v2298
    %7224 = vmatpush1.msra.mxu0 %v2297
    %7225 = vmatprep.subr.mxu0 %v2306
    %7226 = vmatpush1.msra.mxu0 %v2305
    %7227 = vmatprep.subr.mxu0 %v2314
    %7228 = vmatpush1.msra.mxu0 %v2313
    %7229 = vmatprep.subr.mxu0 %v2322
    %7230 = vmatpush1.msra.mxu0 %v2321
    %7231 = vmatprep.subr.mxu0 %v2330
    %7232 = vmatpush1.msra.mxu0 %v2329
    %7233 = vmatprep.subr.mxu0 %v2338
    %7234 = vmatpush1.msra.mxu0 %v2337
    %7235 = vmatprep.subr.mxu0 %v2346
    %7236 = vmatpush1.msra.mxu0 %v2345
    %7237 = vmatprep.subr.mxu0 %v2354
    %7238 = vmatpush1.msra.mxu0 %v2353
    %7239 = vmatprep.subr.mxu0 %v2362
    %7240 = vmatpush1.msra.mxu0 %v2361
    %7241 = vmatprep.subr.mxu0 %v2370
    %7242 = vmatpush1.msra.mxu0 %v2369
    %7243 = vmatprep.mubr.f32.mxu0 %v6965
    %7244 = vmatmul.mubr.f32.gmra.mrb[0].mxu0 %v6964
    %v7245 = vpop.f32.mrb[0].mxu0
    %v7246 = vadd.f32 0.0, %v7245
    %v7247 = vpop.f32.mrb[0].mxu0
    %v7248 = vadd.f32 0.0, %v7247
    %7249 = vdwg.mxu0
    %vm7250 = vcmp.gt.f32.partialorder %v7033, 0.0
    %vm7251 = vcmp.gt.f32.partialorder %v7035, 0.0
    %vm7252 = vcmp.gt.f32.partialorder %v7104, 0.0
    %vm7253 = vcmp.gt.f32.partialorder %v7106, 0.0
    %vm7254 = vcmp.gt.f32.partialorder %v7175, 0.0
    %vm7255 = vcmp.gt.f32.partialorder %v7177, 0.0
    %vm7256 = vcmp.gt.f32.partialorder %v7246, 0.0
    %vm7257 = vcmp.gt.f32.partialorder %v7248, 0.0
    %v7258 = vmin.f32 %v7033, 0.0
    %v7259 = vmin.f32 %v7035, 0.0
    %v7260 = vmin.f32 %v7104, 0.0
    %v7261 = vmin.f32 %v7106, 0.0
    %v7262 = vmin.f32 %v7175, 0.0
    %v7263 = vmin.f32 %v7177, 0.0
    %v7264 = vmin.f32 %v7246, 0.0
    %v7265 = vmin.f32 %v7248, 0.0
    %v7266 = vmul.f32 %v7258, 1.442695
    %v7267 = vpow.pop %v7266
    %v7268 = vmul.f32 %v7259, 1.442695
    %v7269 = vpow.pop %v7268
    %v7270 = vmul.f32 %v7260, 1.442695
    %v7271 = vpow.pop %v7270
    %v7272 = vmul.f32 %v7261, 1.442695
    %v7273 = vpow.pop %v7272
    %v7274 = vmul.f32 %v7262, 1.442695
    %v7275 = vpow.pop %v7274
    %v7276 = vmul.f32 %v7263, 1.442695
    %v7277 = vpow.pop %v7276
    %v7278 = vmul.f32 %v7264, 1.442695
    %v7279 = vpow.pop %v7278
    %v7280 = vmul.f32 %v7265, 1.442695
    %v7281 = vpow.pop %v7280
    %v7282 = vsub.f32 %v7267, 1.0
    %v7283 = vsub.f32 %v7269, 1.0
    %v7284 = vsub.f32 %v7271, 1.0
    %v7285 = vsub.f32 %v7273, 1.0
    %v7286 = vsub.f32 %v7275, 1.0
    %v7287 = vsub.f32 %v7277, 1.0
    %v7288 = vsub.f32 %v7279, 1.0
    %v7289 = vsub.f32 %v7281, 1.0
    %v7290 = vsel %vm7250, %v7033, %v7282
    %v7291 = vsel %vm7251, %v7035, %v7283
    %v7292 = vsel %vm7252, %v7104, %v7284
    %v7293 = vsel %vm7253, %v7106, %v7285
    %v7294 = vsel %vm7254, %v7175, %v7286
    %v7295 = vsel %vm7255, %v7177, %v7287
    %v7296 = vsel %vm7256, %v7246, %v7288
    %v7297 = vsel %vm7257, %v7248, %v7289
    %7298 = vmatprep.subr.mxu0 %v2776
    %7299 = vmatpush1.msra.mxu0 %v2775
    %7300 = vmatprep.subr.mxu0 %v2778
    %7301 = vmatpush1.msra.mxu0 %v2777
    %7302 = vmatprep.subr.mxu0 %v2780
    %7303 = vmatpush1.msra.mxu0 %v2779
    %7304 = vmatprep.subr.mxu0 %v2782
    %7305 = vmatpush1.msra.mxu0 %v2781
    %7306 = vmatprep.subr.mxu0 %v2784
    %7307 = vmatpush1.msra.mxu0 %v2783
    %7308 = vmatprep.subr.mxu0 %v2786
    %7309 = vmatpush1.msra.mxu0 %v2785
    %7310 = vmatprep.subr.mxu0 %v2788
    %7311 = vmatpush1.msra.mxu0 %v2787
    %7312 = vmatprep.subr.mxu0 %v2790
    %7313 = vmatpush1.msra.mxu0 %v2789
    %7314 = vmatprep.subr.mxu0 %v2792
    %7315 = vmatpush1.msra.mxu0 %v2791
    %7316 = vmatprep.subr.mxu0 %v2794
    %7317 = vmatpush1.msra.mxu0 %v2793
    %7318 = vmatprep.subr.mxu0 %v2796
    %7319 = vmatpush1.msra.mxu0 %v2795
    %7320 = vmatprep.subr.mxu0 %v2798
    %7321 = vmatpush1.msra.mxu0 %v2797
    %7322 = vmatprep.subr.mxu0 %v2800
    %7323 = vmatpush1.msra.mxu0 %v2799
    %7324 = vmatprep.subr.mxu0 %v2802
    %7325 = vmatpush1.msra.mxu0 %v2801
    %7326 = vmatprep.subr.mxu0 %v2804
    %7327 = vmatpush1.msra.mxu0 %v2803
    %7328 = vmatprep.subr.mxu0 %v2806
    %7329 = vmatpush1.msra.mxu0 %v2805
    %7330 = vmatprep.subr.mxu0 %v2808
    %7331 = vmatpush1.msra.mxu0 %v2807
    %7332 = vmatprep.subr.mxu0 %v2810
    %7333 = vmatpush1.msra.mxu0 %v2809
    %7334 = vmatprep.subr.mxu0 %v2812
    %7335 = vmatpush1.msra.mxu0 %v2811
    %7336 = vmatprep.subr.mxu0 %v2814
    %7337 = vmatpush1.msra.mxu0 %v2813
    %7338 = vmatprep.subr.mxu0 %v2816
    %7339 = vmatpush1.msra.mxu0 %v2815
    %7340 = vmatprep.subr.mxu0 %v2818
    %7341 = vmatpush1.msra.mxu0 %v2817
    %7342 = vmatprep.subr.mxu0 %v2820
    %7343 = vmatpush1.msra.mxu0 %v2819
    %7344 = vmatprep.subr.mxu0 %v2822
    %7345 = vmatpush1.msra.mxu0 %v2821
    %7346 = vmatprep.subr.mxu0 %v2824
    %7347 = vmatpush1.msra.mxu0 %v2823
    %7348 = vmatprep.subr.mxu0 %v2826
    %7349 = vmatpush1.msra.mxu0 %v2825
    %7350 = vmatprep.subr.mxu0 %v2828
    %7351 = vmatpush1.msra.mxu0 %v2827
    %7352 = vmatprep.subr.mxu0 %v2830
    %7353 = vmatpush1.msra.mxu0 %v2829
    %7354 = vmatprep.subr.mxu0 %v2832
    %7355 = vmatpush1.msra.mxu0 %v2831
    %7356 = vmatprep.subr.mxu0 %v2834
    %7357 = vmatpush1.msra.mxu0 %v2833
    %7358 = vmatprep.subr.mxu0 %v2836
    %7359 = vmatpush1.msra.mxu0 %v2835
    %7360 = vmatprep.subr.mxu0 %v2838
    %7361 = vmatpush1.msra.mxu0 %v2837
    %7362 = vmatprep.mubr.f32.mxu0 %v7291
    %7363 = vmatmul.mubr.f32.gmra.mrb[0].mxu0 %v7290
    %v7364 = vpop.f32.mrb[0].mxu0
    %v7365 = vadd.f32 %v76, %v7364
    %v7366 = vpop.f32.mrb[0].mxu0
    %v7367 = vadd.f32 %v77, %v7366
    %7368 = vdwg.mxu0
    %7369 = vmatprep.subr.mxu0 %v2840
    %7370 = vmatpush1.msra.mxu0 %v2839
    %7371 = vmatprep.subr.mxu0 %v2842
    %7372 = vmatpush1.msra.mxu0 %v2841
    %7373 = vmatprep.subr.mxu0 %v2844
    %7374 = vmatpush1.msra.mxu0 %v2843
    %7375 = vmatprep.subr.mxu0 %v2846
    %7376 = vmatpush1.msra.mxu0 %v2845
    %7377 = vmatprep.subr.mxu0 %v2848
    %7378 = vmatpush1.msra.mxu0 %v2847
    %7379 = vmatprep.subr.mxu0 %v2850
    %7380 = vmatpush1.msra.mxu0 %v2849
    %7381 = vmatprep.subr.mxu0 %v2852
    %7382 = vmatpush1.msra.mxu0 %v2851
    %7383 = vmatprep.subr.mxu0 %v2854
    %7384 = vmatpush1.msra.mxu0 %v2853
    %7385 = vmatprep.subr.mxu0 %v2856
    %7386 = vmatpush1.msra.mxu0 %v2855
    %7387 = vmatprep.subr.mxu0 %v2858
    %7388 = vmatpush1.msra.mxu0 %v2857
    %7389 = vmatprep.subr.mxu0 %v2860
    %7390 = vmatpush1.msra.mxu0 %v2859
    %7391 = vmatprep.subr.mxu0 %v2862
    %7392 = vmatpush1.msra.mxu0 %v2861
    %7393 = vmatprep.subr.mxu0 %v2864
    %7394 = vmatpush1.msra.mxu0 %v2863
    %7395 = vmatprep.subr.mxu0 %v2866
    %7396 = vmatpush1.msra.mxu0 %v2865
    %7397 = vmatprep.subr.mxu0 %v2868
    %7398 = vmatpush1.msra.mxu0 %v2867
    %7399 = vmatprep.subr.mxu0 %v2870
    %7400 = vmatpush1.msra.mxu0 %v2869
    %7401 = vmatprep.subr.mxu0 %v2872
    %7402 = vmatpush1.msra.mxu0 %v2871
    %7403 = vmatprep.subr.mxu0 %v2874
    %7404 = vmatpush1.msra.mxu0 %v2873
    %7405 = vmatprep.subr.mxu0 %v2876
    %7406 = vmatpush1.msra.mxu0 %v2875
    %7407 = vmatprep.subr.mxu0 %v2878
    %7408 = vmatpush1.msra.mxu0 %v2877
    %7409 = vmatprep.subr.mxu0 %v2880
    %7410 = vmatpush1.msra.mxu0 %v2879
    %7411 = vmatprep.subr.mxu0 %v2882
    %7412 = vmatpush1.msra.mxu0 %v2881
    %7413 = vmatprep.subr.mxu0 %v2884
    %7414 = vmatpush1.msra.mxu0 %v2883
    %7415 = vmatprep.subr.mxu0 %v2886
    %7416 = vmatpush1.msra.mxu0 %v2885
    %7417 = vmatprep.subr.mxu0 %v2888
    %7418 = vmatpush1.msra.mxu0 %v2887
    %7419 = vmatprep.subr.mxu0 %v2890
    %7420 = vmatpush1.msra.mxu0 %v2889
    %7421 = vmatprep.subr.mxu0 %v2892
    %7422 = vmatpush1.msra.mxu0 %v2891
    %7423 = vmatprep.subr.mxu0 %v2894
    %7424 = vmatpush1.msra.mxu0 %v2893
    %7425 = vmatprep.subr.mxu0 %v2896
    %7426 = vmatpush1.msra.mxu0 %v2895
    %7427 = vmatprep.subr.mxu0 %v2898
    %7428 = vmatpush1.msra.mxu0 %v2897
    %7429 = vmatprep.subr.mxu0 %v2900
    %7430 = vmatpush1.msra.mxu0 %v2899
    %7431 = vmatprep.subr.mxu0 %v2902
    %7432 = vmatpush1.msra.mxu0 %v2901
    %7433 = vmatprep.mubr.f32.mxu0 %v7293
    %7434 = vmatmul.mubr.f32.gmra.mrb[0].mxu0 %v7292
    %v7435 = vpop.f32.mrb[0].mxu0
    %v7436 = vadd.f32 %v7365, %v7435
    %v7437 = vpop.f32.mrb[0].mxu0
    %v7438 = vadd.f32 %v7367, %v7437
    %7439 = vdwg.mxu0
    %7440 = vmatprep.subr.mxu0 %v2904
    %7441 = vmatpush1.msra.mxu0 %v2903
    %7442 = vmatprep.subr.mxu0 %v2906
    %7443 = vmatpush1.msra.mxu0 %v2905
    %7444 = vmatprep.subr.mxu0 %v2908
    %7445 = vmatpush1.msra.mxu0 %v2907
    %7446 = vmatprep.subr.mxu0 %v2910
    %7447 = vmatpush1.msra.mxu0 %v2909
    %7448 = vmatprep.subr.mxu0 %v2912
    %7449 = vmatpush1.msra.mxu0 %v2911
    %7450 = vmatprep.subr.mxu0 %v2914
    %7451 = vmatpush1.msra.mxu0 %v2913
    %7452 = vmatprep.subr.mxu0 %v2916
    %7453 = vmatpush1.msra.mxu0 %v2915
    %7454 = vmatprep.subr.mxu0 %v2918
    %7455 = vmatpush1.msra.mxu0 %v2917
    %7456 = vmatprep.subr.mxu0 %v2920
    %7457 = vmatpush1.msra.mxu0 %v2919
    %7458 = vmatprep.subr.mxu0 %v2922
    %7459 = vmatpush1.msra.mxu0 %v2921
    %7460 = vmatprep.subr.mxu0 %v2924
    %7461 = vmatpush1.msra.mxu0 %v2923
    %7462 = vmatprep.subr.mxu0 %v2926
    %7463 = vmatpush1.msra.mxu0 %v2925
    %7464 = vmatprep.subr.mxu0 %v2928
    %7465 = vmatpush1.msra.mxu0 %v2927
    %7466 = vmatprep.subr.mxu0 %v2930
    %7467 = vmatpush1.msra.mxu0 %v2929
    %7468 = vmatprep.subr.mxu0 %v2932
    %7469 = vmatpush1.msra.mxu0 %v2931
    %7470 = vmatprep.subr.mxu0 %v2934
    %7471 = vmatpush1.msra.mxu0 %v2933
    %7472 = vmatprep.subr.mxu0 %v2936
    %7473 = vmatpush1.msra.mxu0 %v2935
    %7474 = vmatprep.subr.mxu0 %v2938
    %7475 = vmatpush1.msra.mxu0 %v2937
    %7476 = vmatprep.subr.mxu0 %v2940
    %7477 = vmatpush1.msra.mxu0 %v2939
    %7478 = vmatprep.subr.mxu0 %v2942
    %7479 = vmatpush1.msra.mxu0 %v2941
    %7480 = vmatprep.subr.mxu0 %v2944
    %7481 = vmatpush1.msra.mxu0 %v2943
    %7482 = vmatprep.subr.mxu0 %v2946
    %7483 = vmatpush1.msra.mxu0 %v2945
    %7484 = vmatprep.subr.mxu0 %v2948
    %7485 = vmatpush1.msra.mxu0 %v2947
    %7486 = vmatprep.subr.mxu0 %v2950
    %7487 = vmatpush1.msra.mxu0 %v2949
    %7488 = vmatprep.subr.mxu0 %v2952
    %7489 = vmatpush1.msra.mxu0 %v2951
    %7490 = vmatprep.subr.mxu0 %v2954
    %7491 = vmatpush1.msra.mxu0 %v2953
    %7492 = vmatprep.subr.mxu0 %v2956
    %7493 = vmatpush1.msra.mxu0 %v2955
    %7494 = vmatprep.subr.mxu0 %v2958
    %7495 = vmatpush1.msra.mxu0 %v2957
    %7496 = vmatprep.subr.mxu0 %v2960
    %7497 = vmatpush1.msra.mxu0 %v2959
    %7498 = vmatprep.subr.mxu0 %v2962
    %7499 = vmatpush1.msra.mxu0 %v2961
    %7500 = vmatprep.subr.mxu0 %v2964
    %7501 = vmatpush1.msra.mxu0 %v2963
    %7502 = vmatprep.subr.mxu0 %v2966
    %7503 = vmatpush1.msra.mxu0 %v2965
    %7504 = vmatprep.mubr.f32.mxu0 %v7295
    %7505 = vmatmul.mubr.f32.gmra.mrb[0].mxu0 %v7294
    %v7506 = vpop.f32.mrb[0].mxu0
    %v7507 = vadd.f32 %v7436, %v7506
    %v7508 = vpop.f32.mrb[0].mxu0
    %v7509 = vadd.f32 %v7438, %v7508
    %7510 = vdwg.mxu0
    %7511 = vmatprep.subr.mxu0 %v2968
    %7512 = vmatpush1.msra.mxu0 %v2967
    %7513 = vmatprep.subr.mxu0 %v2970
    %7514 = vmatpush1.msra.mxu0 %v2969
    %7515 = vmatprep.subr.mxu0 %v2972
    %7516 = vmatpush1.msra.mxu0 %v2971
    %7517 = vmatprep.subr.mxu0 %v2974
    %7518 = vmatpush1.msra.mxu0 %v2973
    %7519 = vmatprep.subr.mxu0 %v2976
    %7520 = vmatpush1.msra.mxu0 %v2975
    %7521 = vmatprep.subr.mxu0 %v2978
    %7522 = vmatpush1.msra.mxu0 %v2977
    %7523 = vmatprep.subr.mxu0 %v2980
    %7524 = vmatpush1.msra.mxu0 %v2979
    %7525 = vmatprep.subr.mxu0 %v2982
    %7526 = vmatpush1.msra.mxu0 %v2981
    %7527 = vmatprep.subr.mxu0 %v2984
    %7528 = vmatpush1.msra.mxu0 %v2983
    %7529 = vmatprep.subr.mxu0 %v2986
    %7530 = vmatpush1.msra.mxu0 %v2985
    %7531 = vmatprep.subr.mxu0 %v2988
    %7532 = vmatpush1.msra.mxu0 %v2987
    %7533 = vmatprep.subr.mxu0 %v2990
    %7534 = vmatpush1.msra.mxu0 %v2989
    %7535 = vmatprep.subr.mxu0 %v2992
    %7536 = vmatpush1.msra.mxu0 %v2991
    %7537 = vmatprep.subr.mxu0 %v2994
    %7538 = vmatpush1.msra.mxu0 %v2993
    %7539 = vmatprep.subr.mxu0 %v2996
    %7540 = vmatpush1.msra.mxu0 %v2995
    %7541 = vmatprep.subr.mxu0 %v2998
    %7542 = vmatpush1.msra.mxu0 %v2997
    %7543 = vmatprep.subr.mxu0 %v3000
    %7544 = vmatpush1.msra.mxu0 %v2999
    %7545 = vmatprep.subr.mxu0 %v3002
    %7546 = vmatpush1.msra.mxu0 %v3001
    %7547 = vmatprep.subr.mxu0 %v3004
    %7548 = vmatpush1.msra.mxu0 %v3003
    %7549 = vmatprep.subr.mxu0 %v3006
    %7550 = vmatpush1.msra.mxu0 %v3005
    %7551 = vmatprep.subr.mxu0 %v3008
    %7552 = vmatpush1.msra.mxu0 %v3007
    %7553 = vmatprep.subr.mxu0 %v3010
    %7554 = vmatpush1.msra.mxu0 %v3009
    %7555 = vmatprep.subr.mxu0 %v3012
    %7556 = vmatpush1.msra.mxu0 %v3011
    %7557 = vmatprep.subr.mxu0 %v3014
    %7558 = vmatpush1.msra.mxu0 %v3013
    %7559 = vmatprep.subr.mxu0 %v3016
    %7560 = vmatpush1.msra.mxu0 %v3015
    %7561 = vmatprep.subr.mxu0 %v3018
    %7562 = vmatpush1.msra.mxu0 %v3017
    %7563 = vmatprep.subr.mxu0 %v3020
    %7564 = vmatpush1.msra.mxu0 %v3019
    %7565 = vmatprep.subr.mxu0 %v3022
    %7566 = vmatpush1.msra.mxu0 %v3021
    %7567 = vmatprep.subr.mxu0 %v3024
    %7568 = vmatpush1.msra.mxu0 %v3023
    %7569 = vmatprep.subr.mxu0 %v3026
    %7570 = vmatpush1.msra.mxu0 %v3025
    %7571 = vmatprep.subr.mxu0 %v3028
    %7572 = vmatpush1.msra.mxu0 %v3027
    %7573 = vmatprep.subr.mxu0 %v3030
    %7574 = vmatpush1.msra.mxu0 %v3029
    %7575 = vmatprep.mubr.f32.mxu0 %v7297
    %7576 = vmatmul.mubr.f32.gmra.mrb[0].mxu0 %v7296
    %v7577 = vpop.f32.mrb[0].mxu0
    %v7578 = vadd.f32 %v7507, %v7577
    %v7579 = vpop.f32.mrb[0].mxu0
    %v7580 = vadd.f32 %v7509, %v7579
    %7581 = vdwg.mxu0
    %7582 = vst [vmem:[%s10] sm:$0xff] %v7578
    %7583 = vst [vmem:[%s10 + $0x8] sm:$0xff] %v7580
    // Predicated region
    $region54: #{alias_free_res.1} parent=1 // pred_check
      _
    $region55: #{alias_free_res.1} parent=1 // pred_check_branch
      %7585 = sbr.rel (0) target = $region57
    $region56: #{alias_free_res.1} parent=1 // pred_region
      _
    $region57: #{alias_free_res.1} parent=1 // pred_fallthru
      _
    // Predicated region
    $region58: #{alias_free_res.1} parent=1 // pred_check
      _
    $region59: #{alias_free_res.1} parent=1 // pred_check_branch
      %7587 = sbr.rel (0) target = $region61
    $region60: #{alias_free_res.1} parent=1 // pred_region
      _
    $region61: #{alias_free_res.1} parent=1 // pred_fallthru
      _
    %7588 = vsyncpa [#allocation3], 1
    %7589 = vsyncpa [#allocation5], 1

</llo_original>
